<compile_context>
chip_gen: v7x
topology: tpu7x:2x2x1
jax: 0.10.0
libtpu: 0.0.40
codegen_flags: <defaults>
</compile_context>

<pallas_src>
import functools

import jax
import jax.numpy as jnp
from jax.experimental import pallas as pl
from jax.experimental.pallas import tpu as pltpu

_LEFT_PAD = 8          # left halo width (sublane-aligned interior store)
_ROW_TILE_TARGET = 32  # target output rows per grid step


def _vmem_limit_bytes():
    """Generation-aware scoped-VMEM limit (~80% of physical capacity)."""
    try:
        cap = pltpu.get_tpu_info().vmem_capacity_bytes
    except Exception:
        cap = 64 * 1024 * 1024
    return int(cap * 0.8)


def _pick_row_tile(h, target=_ROW_TILE_TARGET):
    """Largest divisor of h that is <= target (whole image if already small)."""
    if h <= target:
        return h
    for th in range(target, 0, -1):
        if h % th == 0:
            return th
    return h


# ---------------------------------------------------------------------------
# Pallas kernels
# ---------------------------------------------------------------------------

def _conv3x3_stats_kernel(x_ref, xtop_ref, xbot_ref, w_ref, scale_ref, shift_ref,
                          y_ref, sum_ref, m2_ref, xpad_ref, *, input_affine):
    """Fused (input affine+ReLU) -> zero-halo fill -> 9-tap conv -> BN partials.

    x_ref:     (1, TH, W, Cin) bf16 row tile
    xtop_ref:  (1, 1, W, Cin)  bf16 row above the tile (clamped at image top)
    xbot_ref:  (1, 1, W, Cin)  bf16 row below the tile (clamped at image bottom)
    w_ref:     (9, Cin, Cout)  bf16 weights, tap t = 3*dy + dx
    scale_ref: (1, Cin) f32    input-path BN scale  (unused for layer 1)
    shift_ref: (1, Cin) f32    input-path BN shift  (unused for layer 1)
    y_ref:     (1, TH, W, Cout) bf16 conv output (pre-BN)
    sum_ref:   (1, 1, 1, Cout) f32 per-channel tile sum
    m2_ref:    (1, 1, 1, Cout) f32 per-channel tile centered sum of squares
    xpad_ref:  (TH+2, W+16, Cin) bf16 zero-halo scratch
    """
    TH, W = y_ref.shape[1], y_ref.shape[2]
    Cin = x_ref.shape[3]
    Cout = y_ref.shape[3]
    L = _LEFT_PAD

    r = pl.program_id(1)
    last_r = pl.num_programs(1) - 1

    def prep(v):
        # Optional fused BN(prev layer) + ReLU on the input path; bf16 result.
        if input_affine:
            v = v.astype(jnp.float32) * scale_ref[0] + shift_ref[0]
            v = jnp.maximum(v, 0.0)
        return v.astype(jnp.bfloat16)

    # Zero only the two 8-wide halo strips (sublane-aligned stores); the
    # interior and the top/bottom halo rows are fully overwritten below.
    xpad_ref[:, 0:L, :] = jnp.zeros((TH + 2, L, Cin), jnp.bfloat16)
    xpad_ref[:, L + W:, :] = jnp.zeros((TH + 2, L, Cin), jnp.bfloat16)

    # Interior rows: single whole-tile expression, aligned store at offset L.
    xpad_ref[1:TH + 1, L:L + W, :] = prep(x_ref[0])

    # Halo rows: neighbouring image rows, zeroed at the image boundary.
    top = prep(xtop_ref[0, 0])
    top = jnp.where(r > 0, top, jnp.zeros_like(top))
    xpad_ref[0, L:L + W, :] = top

    bot = prep(xbot_ref[0, 0])
    bot = jnp.where(r < last_r, bot, jnp.zeros_like(bot))
    xpad_ref[TH + 1, L:L + W, :] = bot

    # 9 shifted-window dots accumulated in f32 (no im2col slab).
    acc = None
    for t in range(9):
        dy, dx = divmod(t, 3)
        win = xpad_ref[dy:dy + TH, L - 1 + dx:L - 1 + dx + W, :]
        win = win.reshape(TH * W, Cin)
        part = jnp.dot(win, w_ref[t], preferred_element_type=jnp.float32)
        acc = part if acc is None else acc + part

    # Per-tile BatchNorm partials: channel sum and centered sum of squares.
    csum = jnp.sum(acc, axis=0, keepdims=True)               # (1, Cout)
    mean = csum * (1.0 / (TH * W))
    centered = acc - mean
    sum_ref[0, 0] = csum
    m2_ref[0, 0] = jnp.sum(centered * centered, axis=0, keepdims=True)

    y_ref[0] = acc.reshape(TH, W, Cout).astype(y_ref.dtype)


def _bn_relu_kernel(z_ref, scale_ref, shift_ref, o_ref):
    """Final BN + ReLU: y = max(z * scale + shift, 0), f32 elementwise math."""
    z = z_ref[0].astype(jnp.float32)                         # (TH, W, C)
    o_ref[0] = jnp.maximum(z * scale_ref[0] + shift_ref[0], 0.0).astype(o_ref.dtype)


# ---------------------------------------------------------------------------
# pallas_call wrappers
# ---------------------------------------------------------------------------

def _conv_block(x, w9, scale, shift, *, input_affine, row_tile, vmem_limit):
    N, H, W, Cin = x.shape
    _, _, Cout = w9.shape
    TH = row_tile
    R = H // TH

    kernel = functools.partial(_conv3x3_stats_kernel, input_affine=input_affine)

    return pl.pallas_call(
        kernel,
        out_shape=(
            jax.ShapeDtypeStruct((N, H, W, Cout), jnp.bfloat16),
            jax.ShapeDtypeStruct((N, R, 1, Cout), jnp.float32),
            jax.ShapeDtypeStruct((N, R, 1, Cout), jnp.float32),
        ),
        grid_spec=pltpu.PrefetchScalarGridSpec(
            num_scalar_prefetch=0,
            grid=(N, R),
            in_specs=[
                pl.BlockSpec((1, TH, W, Cin), lambda n, r: (n, r, 0, 0)),
                # row above the tile (block size 1 along H => element index)
                pl.BlockSpec((1, 1, W, Cin),
                             lambda n, r: (n, jnp.maximum(r * TH - 1, 0), 0, 0)),
                # row below the tile
                pl.BlockSpec((1, 1, W, Cin),
                             lambda n, r: (n, jnp.minimum((r + 1) * TH, H - 1), 0, 0)),
                pl.BlockSpec((9, Cin, Cout), lambda n, r: (0, 0, 0)),   # resident
                pl.BlockSpec((1, Cin), lambda n, r: (0, 0)),
                pl.BlockSpec((1, Cin), lambda n, r: (0, 0)),
            ],
            out_specs=[
                pl.BlockSpec((1, TH, W, Cout), lambda n, r: (n, r, 0, 0)),
                pl.BlockSpec((1, 1, 1, Cout), lambda n, r: (n, r, 0, 0)),
                pl.BlockSpec((1, 1, 1, Cout), lambda n, r: (n, r, 0, 0)),
            ],
            scratch_shapes=[
                pltpu.VMEM((TH + 2, W + 2 * _LEFT_PAD, Cin), jnp.bfloat16),
            ],
        ),
        compiler_params=pltpu.CompilerParams(
            dimension_semantics=("parallel", "parallel"),
            vmem_limit_bytes=vmem_limit,
        ),
    )(x, x, x, w9, scale.reshape(1, Cin), shift.reshape(1, Cin))


def _bn_relu(z, scale, shift, *, row_tile, vmem_limit):
    N, H, W, C = z.shape
    TH = row_tile
    R = H // TH
    return pl.pallas_call(
        _bn_relu_kernel,
        out_shape=jax.ShapeDtypeStruct((N, H, W, C), jnp.float32),
        grid_spec=pltpu.PrefetchScalarGridSpec(
            num_scalar_prefetch=0,
            grid=(N, R),
            in_specs=[
                pl.BlockSpec((1, TH, W, C), lambda n, r: (n, r, 0, 0)),
                pl.BlockSpec((1, C), lambda n, r: (0, 0)),
                pl.BlockSpec((1, C), lambda n, r: (0, 0)),
            ],
            out_specs=pl.BlockSpec((1, TH, W, C), lambda n, r: (n, r, 0, 0)),
        ),
        compiler_params=pltpu.CompilerParams(
            dimension_semantics=("parallel", "parallel"),
            vmem_limit_bytes=vmem_limit,
        ),
    )(z, scale.reshape(1, C), shift.reshape(1, C))


# ---------------------------------------------------------------------------
# Parameter packing & forward glue
# ---------------------------------------------------------------------------

def init_double_conv_params(key, in_channels, out_channels, mid_channels=None):
    if not mid_channels:
        mid_channels = out_channels
    k1, k2 = jax.random.split(key, 2)
    fan1, fan2 = in_channels * 9, mid_channels * 9
    # Conv biases intentionally omitted: training-mode BatchNorm subtracts the
    # batch mean, so a conv bias cancels exactly in the forward output.
    return {
        "w1": jax.random.normal(k1, (3, 3, in_channels, mid_channels),
                                jnp.float32) * (1.0 / jnp.sqrt(fan1)),
        "w2": jax.random.normal(k2, (3, 3, mid_channels, out_channels),
                                jnp.float32) * (1.0 / jnp.sqrt(fan2)),
        "gamma1": jnp.ones((mid_channels,), jnp.float32),
        "beta1": jnp.zeros((mid_channels,), jnp.float32),
        "gamma2": jnp.ones((out_channels,), jnp.float32),
        "beta2": jnp.zeros((out_channels,), jnp.float32),
    }


def _bn_scale_shift(psum, pm2, tile_count, total_count, gamma, beta, eps):
    """Combine per-tile (sum, centered M2) partials (Chan's parallel formula)."""
    c = psum.shape[-1]
    psum = psum.reshape(-1, c).astype(jnp.float32)
    pm2 = pm2.reshape(-1, c).astype(jnp.float32)
    mean_t = psum / tile_count
    mean = jnp.sum(psum, axis=0) / total_count
    m2 = jnp.sum(pm2, axis=0) + tile_count * jnp.sum((mean_t - mean) ** 2, axis=0)
    var = jnp.maximum(m2 / total_count, 0.0)          # biased (training mode)
    scale = gamma * jax.lax.rsqrt(var + eps)
    shift = beta - mean * scale
    return scale, shift


def double_conv_forward(x_nchw, params, eps=1e-5):
    # NCHW -> NHWC, bf16 at the boundary (halves layer-1 HBM reads).
    x = jnp.transpose(x_nchw, (0, 2, 3, 1)).astype(jnp.bfloat16)
    N, H, W, Cin = x.shape
    Cmid = params["gamma1"].shape[0]
    Cout = params["gamma2"].shape[0]

    vmem_limit = _vmem_limit_bytes()
    TH = _pick_row_tile(H)

    # Weights as (9, Cin, Cout) bf16; real (unpadded) channel counts throughout.
    w1 = params["w1"].reshape(9, Cin, Cmid).astype(jnp.bfloat16)
    w2 = params["w2"].reshape(9, Cmid, Cout).astype(jnp.bfloat16)

    tile_count = jnp.float32(TH * W)
    total_count = jnp.float32(N * H * W)

    # --- layer 1: conv1 (+ per-tile BN partials); no input affine pass ---
    one_in = jnp.ones((Cin,), jnp.float32)
    zero_in = jnp.zeros((Cin,), jnp.float32)
    y1, s1, m1 = _conv_block(x, w1, one_in, zero_in, input_affine=False,
                             row_tile=TH, vmem_limit=vmem_limit)
    scale1, shift1 = _bn_scale_shift(s1, m1, tile_count, total_count,
                                     params["gamma1"], params["beta1"], eps)

    # --- layer 2: BN1+ReLU fused into conv2's input path, + partials ---
    y2, s2, m2 = _conv_block(y1, w2, scale1, shift1, input_affine=True,
                             row_tile=TH, vmem_limit=vmem_limit)
    scale2, shift2 = _bn_scale_shift(s2, m2, tile_count, total_count,
                                     params["gamma2"], params["beta2"], eps)

    # --- final BN2 + ReLU ---
    out = _bn_relu(y2, scale2, shift2, row_tile=TH, vmem_limit=vmem_limit)
    return jnp.transpose(out, (0, 3, 1, 2))            # NHWC -> NCHW (f32)


# ---------------------------------------------------------------------------
# Pure-JAX reference (correctness self-check)
# ---------------------------------------------------------------------------

def _reference_double_conv(x_nchw, params, eps=1e-5):
    x = jnp.transpose(x_nchw, (0, 2, 3, 1))

    def conv(a, w):
        return jax.lax.conv_general_dilated(
            a, w, window_strides=(1, 1), padding="SAME",
            dimension_numbers=("NHWC", "HWIO", "NHWC"))

    def bn_relu(y, gamma, beta):
        mean = jnp.mean(y, axis=(0, 1, 2))
        var = jnp.var(y, axis=(0, 1, 2))
        yn = (y - mean) * jax.lax.rsqrt(var + eps) * gamma + beta
        return jnp.maximum(yn, 0.0)

    a = bn_relu(conv(x, params["w1"]), params["gamma1"], params["beta1"])
    b = bn_relu(conv(a, params["w2"]), params["gamma2"], params["beta2"])
    return jnp.transpose(b, (0, 3, 1, 2))


if __name__ == "__main__":
    key = jax.random.PRNGKey(0)
    kx, kp = jax.random.split(key)

    # Small shapes consistent with the module: N=2, Cin=4, H=W=16, Cout=8.
    in_channels, out_channels = 4, 8
    x = jax.random.normal(kx, (2, in_channels, 16, 16), jnp.float32)
    params = init_double_conv_params(kp, in_channels, out_channels)

    out = jax.jit(double_conv_forward)(x, params)
    out = jax.block_until_ready(out)

    assert out.shape == (2, out_channels, 16, 16)
    assert bool(jnp.all(out >= 0.0))                    # ReLU output

    ref = _reference_double_conv(x, params)
    per_ch_err = jnp.max(jnp.abs(out - ref), axis=(0, 2, 3))
    per_ch_ref = jnp.max(jnp.abs(ref), axis=(0, 2, 3)) + 1e-6
    rel = float(jnp.max(per_ch_err / per_ch_ref))       # per-channel rel. tol.
    assert rel < 0.08, f"per-channel relative mismatch vs reference: {rel}"

    print("KERNEL_OK")
</pallas_src>

<mosaic_0001>
module attributes {stable_mosaic.version = 11 : i64} {
  func.func @_conv3x3_stats_kernel(%arg0: i32, %arg1: i32, %arg2: memref<1x16x16x4xbf16, #tpu.memory_space<vmem>>, %arg3: memref<1x1x16x4xbf16, #tpu.memory_space<vmem>>, %arg4: memref<1x1x16x4xbf16, #tpu.memory_space<vmem>>, %arg5: memref<9x4x8xbf16, #tpu.memory_space<vmem>>, %arg6: memref<1x4xf32, #tpu.memory_space<vmem>>, %arg7: memref<1x4xf32, #tpu.memory_space<vmem>>, %arg8: memref<1x16x16x8xbf16, #tpu.memory_space<vmem>>, %arg9: memref<1x1x1x8xf32, #tpu.memory_space<vmem>>, %arg10: memref<1x1x1x8xf32, #tpu.memory_space<vmem>>, %arg11: memref<18x32x4xbf16, #tpu.memory_space<vmem>>) attributes {dimension_semantics = [#tpu.dimension_semantics<parallel>, #tpu.dimension_semantics<parallel>], iteration_bounds = array<i64: 2, 1>, scalar_prefetch = 0 : i64, scratch_operands = 1 : i64, tpu.core_type = #tpu.core_type<tc>, window_params = [{transform_indices = @transform_0, window_bounds = array<i64: 1, 16, 16, 4>}, {transform_indices = @transform_1, window_bounds = array<i64: 1, 1, 16, 4>}, {transform_indices = @transform_2, window_bounds = array<i64: 1, 1, 16, 4>}, {pipeline_mode = #tpu.pipeline_mode<synchronous>, transform_indices = @transform_3, window_bounds = array<i64: 9, 4, 8>}, {pipeline_mode = #tpu.pipeline_mode<synchronous>, transform_indices = @transform_4, window_bounds = array<i64: 1, 4>}, {pipeline_mode = #tpu.pipeline_mode<synchronous>, transform_indices = @transform_5, window_bounds = array<i64: 1, 4>}, {transform_indices = @transform_6, window_bounds = array<i64: 1, 16, 16, 8>}, {transform_indices = @transform_7, window_bounds = array<i64: 1, 1, 1, 8>}, {transform_indices = @transform_8, window_bounds = array<i64: 1, 1, 1, 8>}]} {
    %cst = arith.constant 0.000000e+00 : bf16
    %0 = vector.broadcast %cst : bf16 to vector<18x8x4xbf16>
    %c0 = arith.constant 0 : index
    %c0_0 = arith.constant 0 : index
    %c0_1 = arith.constant 0 : index
    %1 = vector.load %arg11[%c0, %c0_0, %c0_1] : memref<18x32x4xbf16, #tpu.memory_space<vmem>>, vector<18x8x4xbf16>
    tpu.vector_store %arg11[%c0, %c0_0, %c0_1], %0 {strides = array<i32>} : memref<18x32x4xbf16, #tpu.memory_space<vmem>>, vector<18x8x4xbf16>,
    %cst_2 = arith.constant 0.000000e+00 : bf16
    %2 = vector.broadcast %cst_2 : bf16 to vector<18x8x4xbf16>
    %c0_3 = arith.constant 0 : index
    %c24 = arith.constant 24 : index
    %c0_4 = arith.constant 0 : index
    %3 = vector.load %arg11[%c0_3, %c24, %c0_4] : memref<18x32x4xbf16, #tpu.memory_space<vmem>>, vector<18x8x4xbf16>
    tpu.vector_store %arg11[%c0_3, %c24, %c0_4], %2 {strides = array<i32>} : memref<18x32x4xbf16, #tpu.memory_space<vmem>>, vector<18x8x4xbf16>,
    %c0_5 = arith.constant 0 : index
    %c0_6 = arith.constant 0 : index
    %c0_7 = arith.constant 0 : index
    %c0_8 = arith.constant 0 : index
    %4 = vector.load %arg2[%c0_5, %c0_6, %c0_7, %c0_8] : memref<1x16x16x4xbf16, #tpu.memory_space<vmem>>, vector<1x16x16x4xbf16>
    %5 = vector.shape_cast %4 : vector<1x16x16x4xbf16> to vector<16x16x4xbf16>
    %c1 = arith.constant 1 : index
    %c8 = arith.constant 8 : index
    %c0_9 = arith.constant 0 : index
    %6 = vector.load %arg11[%c1, %c8, %c0_9] : memref<18x32x4xbf16, #tpu.memory_space<vmem>>, vector<16x16x4xbf16>
    tpu.vector_store %arg11[%c1, %c8, %c0_9], %5 {strides = array<i32>} : memref<18x32x4xbf16, #tpu.memory_space<vmem>>, vector<16x16x4xbf16>,
    %c0_10 = arith.constant 0 : index
    %c0_11 = arith.constant 0 : index
    %c0_12 = arith.constant 0 : index
    %c0_13 = arith.constant 0 : index
    %7 = vector.load %arg3[%c0_10, %c0_11, %c0_12, %c0_13] : memref<1x1x16x4xbf16, #tpu.memory_space<vmem>>, vector<1x1x16x4xbf16>
    %8 = vector.shape_cast %7 : vector<1x1x16x4xbf16> to vector<16x4xbf16>
    %c0_i32 = arith.constant 0 : i32
    %9 = arith.cmpi sgt, %arg1, %c0_i32 : i32
    %cst_14 = arith.constant 0.000000e+00 : bf16
    %10 = vector.broadcast %cst_14 : bf16 to vector<16x4xbf16>
    %11 = arith.select %9, %8, %10 : vector<16x4xbf16>
    %c0_15 = arith.constant 0 : index
    %c8_16 = arith.constant 8 : index
    %c0_17 = arith.constant 0 : index
    %12 = vector.load %arg11[%c0_15, %c8_16, %c0_17] : memref<18x32x4xbf16, #tpu.memory_space<vmem>>, vector<1x16x4xbf16>
    %13 = vector.shape_cast %12 : vector<1x16x4xbf16> to vector<16x4xbf16>
    %14 = vector.shape_cast %11 : vector<16x4xbf16> to vector<1x16x4xbf16>
    tpu.vector_store %arg11[%c0_15, %c8_16, %c0_17], %14 {strides = array<i32>} : memref<18x32x4xbf16, #tpu.memory_space<vmem>>, vector<1x16x4xbf16>,
    %c0_18 = arith.constant 0 : index
    %c0_19 = arith.constant 0 : index
    %c0_20 = arith.constant 0 : index
    %c0_21 = arith.constant 0 : index
    %15 = vector.load %arg4[%c0_18, %c0_19, %c0_20, %c0_21] : memref<1x1x16x4xbf16, #tpu.memory_space<vmem>>, vector<1x1x16x4xbf16>
    %16 = vector.shape_cast %15 : vector<1x1x16x4xbf16> to vector<16x4xbf16>
    %c0_i32_22 = arith.constant 0 : i32
    %17 = arith.cmpi slt, %arg1, %c0_i32_22 : i32
    %cst_23 = arith.constant 0.000000e+00 : bf16
    %18 = vector.broadcast %cst_23 : bf16 to vector<16x4xbf16>
    %19 = arith.select %17, %16, %18 : vector<16x4xbf16>
    %c17 = arith.constant 17 : index
    %c8_24 = arith.constant 8 : index
    %c0_25 = arith.constant 0 : index
    %20 = vector.load %arg11[%c17, %c8_24, %c0_25] : memref<18x32x4xbf16, #tpu.memory_space<vmem>>, vector<1x16x4xbf16>
    %21 = vector.shape_cast %20 : vector<1x16x4xbf16> to vector<16x4xbf16>
    %22 = vector.shape_cast %19 : vector<16x4xbf16> to vector<1x16x4xbf16>
    tpu.vector_store %arg11[%c17, %c8_24, %c0_25], %22 {strides = array<i32>} : memref<18x32x4xbf16, #tpu.memory_space<vmem>>, vector<1x16x4xbf16>,
    %c0_26 = arith.constant 0 : index
    %c7 = arith.constant 7 : index
    %c0_27 = arith.constant 0 : index
    %23 = vector.load %arg11[%c0_26, %c7, %c0_27] : memref<18x32x4xbf16, #tpu.memory_space<vmem>>, vector<16x16x4xbf16>
    %24 = vector.shape_cast %23 : vector<16x16x4xbf16> to vector<256x4xbf16>
    %c0_28 = arith.constant 0 : index
    %c0_29 = arith.constant 0 : index
    %c0_30 = arith.constant 0 : index
    %25 = vector.load %arg5[%c0_28, %c0_29, %c0_30] : memref<9x4x8xbf16, #tpu.memory_space<vmem>>, vector<1x4x8xbf16>
    %26 = vector.shape_cast %25 : vector<1x4x8xbf16> to vector<4x8xbf16>
    %cst_31 = arith.constant dense<0.000000e+00> : vector<256x8xf32>
    %27 = tpu.matmul %24, %26, %cst_31 {dimension_numbers = #tpu.dot_dimension_numbers<[1], [0], [0], [1], [0, 0, 1, 1], [], []>} : vector<256x4xbf16>, vector<4x8xbf16>, vector<256x8xf32> -> vector<256x8xf32>
    %c0_32 = arith.constant 0 : index
    %c8_33 = arith.constant 8 : index
    %c0_34 = arith.constant 0 : index
    %28 = vector.load %arg11[%c0_32, %c8_33, %c0_34] : memref<18x32x4xbf16, #tpu.memory_space<vmem>>, vector<16x16x4xbf16>
    %29 = vector.shape_cast %28 : vector<16x16x4xbf16> to vector<256x4xbf16>
    %c1_35 = arith.constant 1 : index
    %c0_36 = arith.constant 0 : index
    %c0_37 = arith.constant 0 : index
    %30 = vector.load %arg5[%c1_35, %c0_36, %c0_37] : memref<9x4x8xbf16, #tpu.memory_space<vmem>>, vector<1x4x8xbf16>
    %31 = vector.shape_cast %30 : vector<1x4x8xbf16> to vector<4x8xbf16>
    %cst_38 = arith.constant dense<0.000000e+00> : vector<256x8xf32>
    %32 = tpu.matmul %29, %31, %cst_38 {dimension_numbers = #tpu.dot_dimension_numbers<[1], [0], [0], [1], [0, 0, 1, 1], [], []>} : vector<256x4xbf16>, vector<4x8xbf16>, vector<256x8xf32> -> vector<256x8xf32>
    %33 = arith.addf %27, %32 : vector<256x8xf32>
    %c0_39 = arith.constant 0 : index
    %c9 = arith.constant 9 : index
    %c0_40 = arith.constant 0 : index
    %34 = vector.load %arg11[%c0_39, %c9, %c0_40] : memref<18x32x4xbf16, #tpu.memory_space<vmem>>, vector<16x16x4xbf16>
    %35 = vector.shape_cast %34 : vector<16x16x4xbf16> to vector<256x4xbf16>
    %c2 = arith.constant 2 : index
    %c0_41 = arith.constant 0 : index
    %c0_42 = arith.constant 0 : index
    %36 = vector.load %arg5[%c2, %c0_41, %c0_42] : memref<9x4x8xbf16, #tpu.memory_space<vmem>>, vector<1x4x8xbf16>
    %37 = vector.shape_cast %36 : vector<1x4x8xbf16> to vector<4x8xbf16>
    %cst_43 = arith.constant dense<0.000000e+00> : vector<256x8xf32>
    %38 = tpu.matmul %35, %37, %cst_43 {dimension_numbers = #tpu.dot_dimension_numbers<[1], [0], [0], [1], [0, 0, 1, 1], [], []>} : vector<256x4xbf16>, vector<4x8xbf16>, vector<256x8xf32> -> vector<256x8xf32>
    %39 = arith.addf %33, %38 : vector<256x8xf32>
    %c1_44 = arith.constant 1 : index
    %c7_45 = arith.constant 7 : index
    %c0_46 = arith.constant 0 : index
    %40 = vector.load %arg11[%c1_44, %c7_45, %c0_46] : memref<18x32x4xbf16, #tpu.memory_space<vmem>>, vector<16x16x4xbf16>
    %41 = vector.shape_cast %40 : vector<16x16x4xbf16> to vector<256x4xbf16>
    %c3 = arith.constant 3 : index
    %c0_47 = arith.constant 0 : index
    %c0_48 = arith.constant 0 : index
    %42 = vector.load %arg5[%c3, %c0_47, %c0_48] : memref<9x4x8xbf16, #tpu.memory_space<vmem>>, vector<1x4x8xbf16>
    %43 = vector.shape_cast %42 : vector<1x4x8xbf16> to vector<4x8xbf16>
    %cst_49 = arith.constant dense<0.000000e+00> : vector<256x8xf32>
    %44 = tpu.matmul %41, %43, %cst_49 {dimension_numbers = #tpu.dot_dimension_numbers<[1], [0], [0], [1], [0, 0, 1, 1], [], []>} : vector<256x4xbf16>, vector<4x8xbf16>, vector<256x8xf32> -> vector<256x8xf32>
    %45 = arith.addf %39, %44 : vector<256x8xf32>
    %c1_50 = arith.constant 1 : index
    %c8_51 = arith.constant 8 : index
    %c0_52 = arith.constant 0 : index
    %46 = vector.load %arg11[%c1_50, %c8_51, %c0_52] : memref<18x32x4xbf16, #tpu.memory_space<vmem>>, vector<16x16x4xbf16>
    %47 = vector.shape_cast %46 : vector<16x16x4xbf16> to vector<256x4xbf16>
    %c4 = arith.constant 4 : index
    %c0_53 = arith.constant 0 : index
    %c0_54 = arith.constant 0 : index
    %48 = vector.load %arg5[%c4, %c0_53, %c0_54] : memref<9x4x8xbf16, #tpu.memory_space<vmem>>, vector<1x4x8xbf16>
    %49 = vector.shape_cast %48 : vector<1x4x8xbf16> to vector<4x8xbf16>
    %cst_55 = arith.constant dense<0.000000e+00> : vector<256x8xf32>
    %50 = tpu.matmul %47, %49, %cst_55 {dimension_numbers = #tpu.dot_dimension_numbers<[1], [0], [0], [1], [0, 0, 1, 1], [], []>} : vector<256x4xbf16>, vector<4x8xbf16>, vector<256x8xf32> -> vector<256x8xf32>
    %51 = arith.addf %45, %50 : vector<256x8xf32>
    %c1_56 = arith.constant 1 : index
    %c9_57 = arith.constant 9 : index
    %c0_58 = arith.constant 0 : index
    %52 = vector.load %arg11[%c1_56, %c9_57, %c0_58] : memref<18x32x4xbf16, #tpu.memory_space<vmem>>, vector<16x16x4xbf16>
    %53 = vector.shape_cast %52 : vector<16x16x4xbf16> to vector<256x4xbf16>
    %c5 = arith.constant 5 : index
    %c0_59 = arith.constant 0 : index
    %c0_60 = arith.constant 0 : index
    %54 = vector.load %arg5[%c5, %c0_59, %c0_60] : memref<9x4x8xbf16, #tpu.memory_space<vmem>>, vector<1x4x8xbf16>
    %55 = vector.shape_cast %54 : vector<1x4x8xbf16> to vector<4x8xbf16>
    %cst_61 = arith.constant dense<0.000000e+00> : vector<256x8xf32>
    %56 = tpu.matmul %53, %55, %cst_61 {dimension_numbers = #tpu.dot_dimension_numbers<[1], [0], [0], [1], [0, 0, 1, 1], [], []>} : vector<256x4xbf16>, vector<4x8xbf16>, vector<256x8xf32> -> vector<256x8xf32>
    %57 = arith.addf %51, %56 : vector<256x8xf32>
    %c2_62 = arith.constant 2 : index
    %c7_63 = arith.constant 7 : index
    %c0_64 = arith.constant 0 : index
    %58 = vector.load %arg11[%c2_62, %c7_63, %c0_64] : memref<18x32x4xbf16, #tpu.memory_space<vmem>>, vector<16x16x4xbf16>
    %59 = vector.shape_cast %58 : vector<16x16x4xbf16> to vector<256x4xbf16>
    %c6 = arith.constant 6 : index
    %c0_65 = arith.constant 0 : index
    %c0_66 = arith.constant 0 : index
    %60 = vector.load %arg5[%c6, %c0_65, %c0_66] : memref<9x4x8xbf16, #tpu.memory_space<vmem>>, vector<1x4x8xbf16>
    %61 = vector.shape_cast %60 : vector<1x4x8xbf16> to vector<4x8xbf16>
    %cst_67 = arith.constant dense<0.000000e+00> : vector<256x8xf32>
    %62 = tpu.matmul %59, %61, %cst_67 {dimension_numbers = #tpu.dot_dimension_numbers<[1], [0], [0], [1], [0, 0, 1, 1], [], []>} : vector<256x4xbf16>, vector<4x8xbf16>, vector<256x8xf32> -> vector<256x8xf32>
    %63 = arith.addf %57, %62 : vector<256x8xf32>
    %c2_68 = arith.constant 2 : index
    %c8_69 = arith.constant 8 : index
    %c0_70 = arith.constant 0 : index
    %64 = vector.load %arg11[%c2_68, %c8_69, %c0_70] : memref<18x32x4xbf16, #tpu.memory_space<vmem>>, vector<16x16x4xbf16>
    %65 = vector.shape_cast %64 : vector<16x16x4xbf16> to vector<256x4xbf16>
    %c7_71 = arith.constant 7 : index
    %c0_72 = arith.constant 0 : index
    %c0_73 = arith.constant 0 : index
    %66 = vector.load %arg5[%c7_71, %c0_72, %c0_73] : memref<9x4x8xbf16, #tpu.memory_space<vmem>>, vector<1x4x8xbf16>
    %67 = vector.shape_cast %66 : vector<1x4x8xbf16> to vector<4x8xbf16>
    %cst_74 = arith.constant dense<0.000000e+00> : vector<256x8xf32>
    %68 = tpu.matmul %65, %67, %cst_74 {dimension_numbers = #tpu.dot_dimension_numbers<[1], [0], [0], [1], [0, 0, 1, 1], [], []>} : vector<256x4xbf16>, vector<4x8xbf16>, vector<256x8xf32> -> vector<256x8xf32>
    %69 = arith.addf %63, %68 : vector<256x8xf32>
    %c2_75 = arith.constant 2 : index
    %c9_76 = arith.constant 9 : index
    %c0_77 = arith.constant 0 : index
    %70 = vector.load %arg11[%c2_75, %c9_76, %c0_77] : memref<18x32x4xbf16, #tpu.memory_space<vmem>>, vector<16x16x4xbf16>
    %71 = vector.shape_cast %70 : vector<16x16x4xbf16> to vector<256x4xbf16>
    %c8_78 = arith.constant 8 : index
    %c0_79 = arith.constant 0 : index
    %c0_80 = arith.constant 0 : index
    %72 = vector.load %arg5[%c8_78, %c0_79, %c0_80] : memref<9x4x8xbf16, #tpu.memory_space<vmem>>, vector<1x4x8xbf16>
    %73 = vector.shape_cast %72 : vector<1x4x8xbf16> to vector<4x8xbf16>
    %cst_81 = arith.constant dense<0.000000e+00> : vector<256x8xf32>
    %74 = tpu.matmul %71, %73, %cst_81 {dimension_numbers = #tpu.dot_dimension_numbers<[1], [0], [0], [1], [0, 0, 1, 1], [], []>} : vector<256x4xbf16>, vector<4x8xbf16>, vector<256x8xf32> -> vector<256x8xf32>
    %75 = arith.addf %69, %74 : vector<256x8xf32>
    %cst_82 = arith.constant dense<0.000000e+00> : vector<8xf32>
    %76 = vector.multi_reduction <add>, %75, %cst_82 [0] : vector<256x8xf32> to vector<8xf32>
    %77 = vector.shape_cast %76 : vector<8xf32> to vector<1x8xf32>
    %cst_83 = arith.constant 3.906250e-03 : f32
    %78 = vector.broadcast %cst_83 : f32 to vector<1x8xf32>
    %79 = arith.mulf %77, %78 : vector<1x8xf32>
    %80 = vector.broadcast %79 : vector<1x8xf32> to vector<256x8xf32>
    %81 = arith.subf %75, %80 : vector<256x8xf32>
    %c0_84 = arith.constant 0 : index
    %c0_85 = arith.constant 0 : index
    %c0_86 = arith.constant 0 : index
    %c0_87 = arith.constant 0 : index
    %82 = vector.load %arg9[%c0_84, %c0_85, %c0_86, %c0_87] : memref<1x1x1x8xf32, #tpu.memory_space<vmem>>, vector<1x1x1x8xf32>
    %83 = vector.shape_cast %82 : vector<1x1x1x8xf32> to vector<1x8xf32>
    %84 = vector.shape_cast %77 : vector<1x8xf32> to vector<1x1x1x8xf32>
    tpu.vector_store %arg9[%c0_84, %c0_85, %c0_86, %c0_87], %84 {strides = array<i32>} : memref<1x1x1x8xf32, #tpu.memory_space<vmem>>, vector<1x1x1x8xf32>,
    %85 = arith.mulf %81, %81 : vector<256x8xf32>
    %cst_88 = arith.constant dense<0.000000e+00> : vector<8xf32>
    %86 = vector.multi_reduction <add>, %85, %cst_88 [0] : vector<256x8xf32> to vector<8xf32>
    %87 = vector.shape_cast %86 : vector<8xf32> to vector<1x8xf32>
    %c0_89 = arith.constant 0 : index
    %c0_90 = arith.constant 0 : index
    %c0_91 = arith.constant 0 : index
    %c0_92 = arith.constant 0 : index
    %88 = vector.load %arg10[%c0_89, %c0_90, %c0_91, %c0_92] : memref<1x1x1x8xf32, #tpu.memory_space<vmem>>, vector<1x1x1x8xf32>
    %89 = vector.shape_cast %88 : vector<1x1x1x8xf32> to vector<1x8xf32>
    %90 = vector.shape_cast %87 : vector<1x8xf32> to vector<1x1x1x8xf32>
    tpu.vector_store %arg10[%c0_89, %c0_90, %c0_91, %c0_92], %90 {strides = array<i32>} : memref<1x1x1x8xf32, #tpu.memory_space<vmem>>, vector<1x1x1x8xf32>,
    %91 = vector.shape_cast %75 : vector<256x8xf32> to vector<16x16x8xf32>
    %92 = arith.truncf %91 : vector<16x16x8xf32> to vector<16x16x8xbf16>
    %c0_93 = arith.constant 0 : index
    %c0_94 = arith.constant 0 : index
    %c0_95 = arith.constant 0 : index
    %c0_96 = arith.constant 0 : index
    %93 = vector.load %arg8[%c0_93, %c0_94, %c0_95, %c0_96] : memref<1x16x16x8xbf16, #tpu.memory_space<vmem>>, vector<1x16x16x8xbf16>
    %94 = vector.shape_cast %93 : vector<1x16x16x8xbf16> to vector<16x16x8xbf16>
    %95 = vector.shape_cast %92 : vector<16x16x8xbf16> to vector<1x16x16x8xbf16>
    tpu.vector_store %arg8[%c0_93, %c0_94, %c0_95, %c0_96], %95 {strides = array<i32>} : memref<1x16x16x8xbf16, #tpu.memory_space<vmem>>, vector<1x16x16x8xbf16>,
    return
  }
  func.func @transform_0(%arg0: i32, %arg1: i32) -> (i32, i32, i32, i32) {
    %c0_i32 = arith.constant 0 : i32
    %c0_i32_0 = arith.constant 0 : i32
    %c0_i32_1 = arith.constant 0 : i32
    return %arg0, %arg1, %c0_i32, %c0_i32_0 : i32, i32, i32, i32
  }
  func.func @transform_1(%arg0: i32, %arg1: i32) -> (i32, i32, i32, i32) {
    %c16_i32 = arith.constant 16 : i32
    %0 = arith.muli %arg1, %c16_i32 : i32
    %c1_i32 = arith.constant 1 : i32
    %1 = arith.subi %0, %c1_i32 : i32
    %c0_i32 = arith.constant 0 : i32
    %2 = arith.maxsi %1, %c0_i32 : i32
    %c0_i32_0 = arith.constant 0 : i32
    %c0_i32_1 = arith.constant 0 : i32
    %c0_i32_2 = arith.constant 0 : i32
    return %arg0, %2, %c0_i32_0, %c0_i32_1 : i32, i32, i32, i32
  }
  func.func @transform_2(%arg0: i32, %arg1: i32) -> (i32, i32, i32, i32) {
    %c1_i32 = arith.constant 1 : i32
    %0 = arith.addi %arg1, %c1_i32 : i32
    %c16_i32 = arith.constant 16 : i32
    %1 = arith.muli %0, %c16_i32 : i32
    %c15_i32 = arith.constant 15 : i32
    %2 = arith.minsi %1, %c15_i32 : i32
    %c0_i32 = arith.constant 0 : i32
    %c0_i32_0 = arith.constant 0 : i32
    %c0_i32_1 = arith.constant 0 : i32
    return %arg0, %2, %c0_i32, %c0_i32_0 : i32, i32, i32, i32
  }
  func.func @transform_3(%arg0: i32, %arg1: i32) -> (i32, i32, i32) {
    %c0_i32 = arith.constant 0 : i32
    %c0_i32_0 = arith.constant 0 : i32
    %c0_i32_1 = arith.constant 0 : i32
    %c0_i32_2 = arith.constant 0 : i32
    return %c0_i32, %c0_i32_0, %c0_i32_1 : i32, i32, i32
  }
  func.func @transform_4(%arg0: i32, %arg1: i32) -> (i32, i32) {
    %c0_i32 = arith.constant 0 : i32
    %c0_i32_0 = arith.constant 0 : i32
    %c0_i32_1 = arith.constant 0 : i32
    return %c0_i32, %c0_i32_0 : i32, i32
  }
  func.func @transform_5(%arg0: i32, %arg1: i32) -> (i32, i32) {
    %c0_i32 = arith.constant 0 : i32
    %c0_i32_0 = arith.constant 0 : i32
    %c0_i32_1 = arith.constant 0 : i32
    return %c0_i32, %c0_i32_0 : i32, i32
  }
  func.func @transform_6(%arg0: i32, %arg1: i32) -> (i32, i32, i32, i32) {
    %c0_i32 = arith.constant 0 : i32
    %c0_i32_0 = arith.constant 0 : i32
    %c0_i32_1 = arith.constant 0 : i32
    return %arg0, %arg1, %c0_i32, %c0_i32_0 : i32, i32, i32, i32
  }
  func.func @transform_7(%arg0: i32, %arg1: i32) -> (i32, i32, i32, i32) {
    %c0_i32 = arith.constant 0 : i32
    %c0_i32_0 = arith.constant 0 : i32
    %c0_i32_1 = arith.constant 0 : i32
    return %arg0, %arg1, %c0_i32, %c0_i32_0 : i32, i32, i32, i32
  }
  func.func @transform_8(%arg0: i32, %arg1: i32) -> (i32, i32, i32, i32) {
    %c0_i32 = arith.constant 0 : i32
    %c0_i32_0 = arith.constant 0 : i32
    %c0_i32_1 = arith.constant 0 : i32
    return %arg0, %arg1, %c0_i32, %c0_i32_0 : i32, i32, i32, i32
  }
}

module attributes {stable_mosaic.version = 11 : i64} {
  func.func @_bn_relu_kernel(%arg0: i32, %arg1: i32, %arg2: memref<1x16x16x8xbf16, #tpu.memory_space<vmem>>, %arg3: memref<1x8xf32, #tpu.memory_space<vmem>>, %arg4: memref<1x8xf32, #tpu.memory_space<vmem>>, %arg5: memref<1x16x16x8xf32, #tpu.memory_space<vmem>>) attributes {dimension_semantics = [#tpu.dimension_semantics<parallel>, #tpu.dimension_semantics<parallel>], iteration_bounds = array<i64: 2, 1>, scalar_prefetch = 0 : i64, scratch_operands = 0 : i64, tpu.core_type = #tpu.core_type<tc>, window_params = [{transform_indices = @transform_0, window_bounds = array<i64: 1, 16, 16, 8>}, {pipeline_mode = #tpu.pipeline_mode<synchronous>, transform_indices = @transform_1, window_bounds = array<i64: 1, 8>}, {pipeline_mode = #tpu.pipeline_mode<synchronous>, transform_indices = @transform_2, window_bounds = array<i64: 1, 8>}, {transform_indices = @transform_3, window_bounds = array<i64: 1, 16, 16, 8>}]} {
    %c0 = arith.constant 0 : index
    %c0_0 = arith.constant 0 : index
    %c0_1 = arith.constant 0 : index
    %c0_2 = arith.constant 0 : index
    %0 = vector.load %arg2[%c0, %c0_0, %c0_1, %c0_2] : memref<1x16x16x8xbf16, #tpu.memory_space<vmem>>, vector<1x16x16x8xbf16>
    %1 = vector.shape_cast %0 : vector<1x16x16x8xbf16> to vector<16x16x8xbf16>
    %2 = arith.extf %1 : vector<16x16x8xbf16> to vector<16x16x8xf32>
    %c0_3 = arith.constant 0 : index
    %c0_4 = arith.constant 0 : index
    %3 = vector.load %arg3[%c0_3, %c0_4] : memref<1x8xf32, #tpu.memory_space<vmem>>, vector<1x8xf32>
    %4 = vector.shape_cast %3 : vector<1x8xf32> to vector<8xf32>
    %5 = vector.shape_cast %4 : vector<8xf32> to vector<1x1x8xf32>
    %6 = vector.broadcast %5 : vector<1x1x8xf32> to vector<16x16x8xf32>
    %7 = arith.mulf %2, %6 : vector<16x16x8xf32>
    %c0_5 = arith.constant 0 : index
    %c0_6 = arith.constant 0 : index
    %8 = vector.load %arg4[%c0_5, %c0_6] : memref<1x8xf32, #tpu.memory_space<vmem>>, vector<1x8xf32>
    %9 = vector.shape_cast %8 : vector<1x8xf32> to vector<8xf32>
    %10 = vector.shape_cast %9 : vector<8xf32> to vector<1x1x8xf32>
    %11 = vector.broadcast %10 : vector<1x1x8xf32> to vector<16x16x8xf32>
    %12 = arith.addf %7, %11 : vector<16x16x8xf32>
    %cst = arith.constant 0.000000e+00 : f32
    %13 = vector.broadcast %cst : f32 to vector<16x16x8xf32>
    %14 = arith.maximumf %12, %13 : vector<16x16x8xf32>
    %c0_7 = arith.constant 0 : index
    %c0_8 = arith.constant 0 : index
    %c0_9 = arith.constant 0 : index
    %c0_10 = arith.constant 0 : index
    %15 = vector.load %arg5[%c0_7, %c0_8, %c0_9, %c0_10] : memref<1x16x16x8xf32, #tpu.memory_space<vmem>>, vector<1x16x16x8xf32>
    %16 = vector.shape_cast %15 : vector<1x16x16x8xf32> to vector<16x16x8xf32>
    %17 = vector.shape_cast %14 : vector<16x16x8xf32> to vector<1x16x16x8xf32>
    tpu.vector_store %arg5[%c0_7, %c0_8, %c0_9, %c0_10], %17 {strides = array<i32>} : memref<1x16x16x8xf32, #tpu.memory_space<vmem>>, vector<1x16x16x8xf32>,
    return
  }
  func.func @transform_0(%arg0: i32, %arg1: i32) -> (i32, i32, i32, i32) {
    %c0_i32 = arith.constant 0 : i32
    %c0_i32_0 = arith.constant 0 : i32
    %c0_i32_1 = arith.constant 0 : i32
    return %arg0, %arg1, %c0_i32, %c0_i32_0 : i32, i32, i32, i32
  }
  func.func @transform_1(%arg0: i32, %arg1: i32) -> (i32, i32) {
    %c0_i32 = arith.constant 0 : i32
    %c0_i32_0 = arith.constant 0 : i32
    %c0_i32_1 = arith.constant 0 : i32
    return %c0_i32, %c0_i32_0 : i32, i32
  }
  func.func @transform_2(%arg0: i32, %arg1: i32) -> (i32, i32) {
    %c0_i32 = arith.constant 0 : i32
    %c0_i32_0 = arith.constant 0 : i32
    %c0_i32_1 = arith.constant 0 : i32
    return %c0_i32, %c0_i32_0 : i32, i32
  }
  func.func @transform_3(%arg0: i32, %arg1: i32) -> (i32, i32, i32, i32) {
    %c0_i32 = arith.constant 0 : i32
    %c0_i32_0 = arith.constant 0 : i32
    %c0_i32_1 = arith.constant 0 : i32
    return %arg0, %arg1, %c0_i32, %c0_i32_0 : i32, i32, i32, i32
  }
}

module attributes {stable_mosaic.version = 11 : i64} {
  func.func @_conv3x3_stats_kernel(%arg0: i32, %arg1: i32, %arg2: memref<1x16x16x8xbf16, #tpu.memory_space<vmem>>, %arg3: memref<1x1x16x8xbf16, #tpu.memory_space<vmem>>, %arg4: memref<1x1x16x8xbf16, #tpu.memory_space<vmem>>, %arg5: memref<9x8x8xbf16, #tpu.memory_space<vmem>>, %arg6: memref<1x8xf32, #tpu.memory_space<vmem>>, %arg7: memref<1x8xf32, #tpu.memory_space<vmem>>, %arg8: memref<1x16x16x8xbf16, #tpu.memory_space<vmem>>, %arg9: memref<1x1x1x8xf32, #tpu.memory_space<vmem>>, %arg10: memref<1x1x1x8xf32, #tpu.memory_space<vmem>>, %arg11: memref<18x32x8xbf16, #tpu.memory_space<vmem>>) attributes {dimension_semantics = [#tpu.dimension_semantics<parallel>, #tpu.dimension_semantics<parallel>], iteration_bounds = array<i64: 2, 1>, scalar_prefetch = 0 : i64, scratch_operands = 1 : i64, tpu.core_type = #tpu.core_type<tc>, window_params = [{transform_indices = @transform_0, window_bounds = array<i64: 1, 16, 16, 8>}, {transform_indices = @transform_1, window_bounds = array<i64: 1, 1, 16, 8>}, {transform_indices = @transform_2, window_bounds = array<i64: 1, 1, 16, 8>}, {pipeline_mode = #tpu.pipeline_mode<synchronous>, transform_indices = @transform_3, window_bounds = array<i64: 9, 8, 8>}, {pipeline_mode = #tpu.pipeline_mode<synchronous>, transform_indices = @transform_4, window_bounds = array<i64: 1, 8>}, {pipeline_mode = #tpu.pipeline_mode<synchronous>, transform_indices = @transform_5, window_bounds = array<i64: 1, 8>}, {transform_indices = @transform_6, window_bounds = array<i64: 1, 16, 16, 8>}, {transform_indices = @transform_7, window_bounds = array<i64: 1, 1, 1, 8>}, {transform_indices = @transform_8, window_bounds = array<i64: 1, 1, 1, 8>}]} {
    %cst = arith.constant 0.000000e+00 : bf16
    %0 = vector.broadcast %cst : bf16 to vector<18x8x8xbf16>
    %c0 = arith.constant 0 : index
    %c0_0 = arith.constant 0 : index
    %c0_1 = arith.constant 0 : index
    %1 = vector.load %arg11[%c0, %c0_0, %c0_1] : memref<18x32x8xbf16, #tpu.memory_space<vmem>>, vector<18x8x8xbf16>
    tpu.vector_store %arg11[%c0, %c0_0, %c0_1], %0 {strides = array<i32>} : memref<18x32x8xbf16, #tpu.memory_space<vmem>>, vector<18x8x8xbf16>,
    %cst_2 = arith.constant 0.000000e+00 : bf16
    %2 = vector.broadcast %cst_2 : bf16 to vector<18x8x8xbf16>
    %c0_3 = arith.constant 0 : index
    %c24 = arith.constant 24 : index
    %c0_4 = arith.constant 0 : index
    %3 = vector.load %arg11[%c0_3, %c24, %c0_4] : memref<18x32x8xbf16, #tpu.memory_space<vmem>>, vector<18x8x8xbf16>
    tpu.vector_store %arg11[%c0_3, %c24, %c0_4], %2 {strides = array<i32>} : memref<18x32x8xbf16, #tpu.memory_space<vmem>>, vector<18x8x8xbf16>,
    %c0_5 = arith.constant 0 : index
    %c0_6 = arith.constant 0 : index
    %c0_7 = arith.constant 0 : index
    %c0_8 = arith.constant 0 : index
    %4 = vector.load %arg2[%c0_5, %c0_6, %c0_7, %c0_8] : memref<1x16x16x8xbf16, #tpu.memory_space<vmem>>, vector<1x16x16x8xbf16>
    %5 = vector.shape_cast %4 : vector<1x16x16x8xbf16> to vector<16x16x8xbf16>
    %6 = arith.extf %5 : vector<16x16x8xbf16> to vector<16x16x8xf32>
    %c0_9 = arith.constant 0 : index
    %c0_10 = arith.constant 0 : index
    %7 = vector.load %arg6[%c0_9, %c0_10] : memref<1x8xf32, #tpu.memory_space<vmem>>, vector<1x8xf32>
    %8 = vector.shape_cast %7 : vector<1x8xf32> to vector<8xf32>
    %9 = vector.shape_cast %8 : vector<8xf32> to vector<1x1x8xf32>
    %10 = vector.broadcast %9 : vector<1x1x8xf32> to vector<16x16x8xf32>
    %11 = arith.mulf %6, %10 : vector<16x16x8xf32>
    %c0_11 = arith.constant 0 : index
    %c0_12 = arith.constant 0 : index
    %12 = vector.load %arg7[%c0_11, %c0_12] : memref<1x8xf32, #tpu.memory_space<vmem>>, vector<1x8xf32>
    %13 = vector.shape_cast %12 : vector<1x8xf32> to vector<8xf32>
    %14 = vector.shape_cast %13 : vector<8xf32> to vector<1x1x8xf32>
    %15 = vector.broadcast %14 : vector<1x1x8xf32> to vector<16x16x8xf32>
    %16 = arith.addf %11, %15 : vector<16x16x8xf32>
    %cst_13 = arith.constant 0.000000e+00 : f32
    %17 = vector.broadcast %cst_13 : f32 to vector<16x16x8xf32>
    %18 = arith.maximumf %16, %17 : vector<16x16x8xf32>
    %19 = arith.truncf %18 : vector<16x16x8xf32> to vector<16x16x8xbf16>
    %c1 = arith.constant 1 : index
    %c8 = arith.constant 8 : index
    %c0_14 = arith.constant 0 : index
    %20 = vector.load %arg11[%c1, %c8, %c0_14] : memref<18x32x8xbf16, #tpu.memory_space<vmem>>, vector<16x16x8xbf16>
    tpu.vector_store %arg11[%c1, %c8, %c0_14], %19 {strides = array<i32>} : memref<18x32x8xbf16, #tpu.memory_space<vmem>>, vector<16x16x8xbf16>,
    %c0_15 = arith.constant 0 : index
    %c0_16 = arith.constant 0 : index
    %c0_17 = arith.constant 0 : index
    %c0_18 = arith.constant 0 : index
    %21 = vector.load %arg3[%c0_15, %c0_16, %c0_17, %c0_18] : memref<1x1x16x8xbf16, #tpu.memory_space<vmem>>, vector<1x1x16x8xbf16>
    %22 = vector.shape_cast %21 : vector<1x1x16x8xbf16> to vector<16x8xbf16>
    %23 = arith.extf %22 : vector<16x8xbf16> to vector<16x8xf32>
    %c0_19 = arith.constant 0 : index
    %c0_20 = arith.constant 0 : index
    %24 = vector.load %arg6[%c0_19, %c0_20] : memref<1x8xf32, #tpu.memory_space<vmem>>, vector<1x8xf32>
    %25 = vector.shape_cast %24 : vector<1x8xf32> to vector<8xf32>
    %26 = vector.shape_cast %25 : vector<8xf32> to vector<1x8xf32>
    %27 = vector.broadcast %26 : vector<1x8xf32> to vector<16x8xf32>
    %28 = arith.mulf %23, %27 : vector<16x8xf32>
    %c0_21 = arith.constant 0 : index
    %c0_22 = arith.constant 0 : index
    %29 = vector.load %arg7[%c0_21, %c0_22] : memref<1x8xf32, #tpu.memory_space<vmem>>, vector<1x8xf32>
    %30 = vector.shape_cast %29 : vector<1x8xf32> to vector<8xf32>
    %31 = vector.shape_cast %30 : vector<8xf32> to vector<1x8xf32>
    %32 = vector.broadcast %31 : vector<1x8xf32> to vector<16x8xf32>
    %33 = arith.addf %28, %32 : vector<16x8xf32>
    %cst_23 = arith.constant 0.000000e+00 : f32
    %34 = vector.broadcast %cst_23 : f32 to vector<16x8xf32>
    %35 = arith.maximumf %33, %34 : vector<16x8xf32>
    %36 = arith.truncf %35 : vector<16x8xf32> to vector<16x8xbf16>
    %c0_i32 = arith.constant 0 : i32
    %37 = arith.cmpi sgt, %arg1, %c0_i32 : i32
    %cst_24 = arith.constant 0.000000e+00 : bf16
    %38 = vector.broadcast %cst_24 : bf16 to vector<16x8xbf16>
    %39 = arith.select %37, %36, %38 : vector<16x8xbf16>
    %c0_25 = arith.constant 0 : index
    %c8_26 = arith.constant 8 : index
    %c0_27 = arith.constant 0 : index
    %40 = vector.load %arg11[%c0_25, %c8_26, %c0_27] : memref<18x32x8xbf16, #tpu.memory_space<vmem>>, vector<1x16x8xbf16>
    %41 = vector.shape_cast %40 : vector<1x16x8xbf16> to vector<16x8xbf16>
    %42 = vector.shape_cast %39 : vector<16x8xbf16> to vector<1x16x8xbf16>
    tpu.vector_store %arg11[%c0_25, %c8_26, %c0_27], %42 {strides = array<i32>} : memref<18x32x8xbf16, #tpu.memory_space<vmem>>, vector<1x16x8xbf16>,
    %c0_28 = arith.constant 0 : index
    %c0_29 = arith.constant 0 : index
    %c0_30 = arith.constant 0 : index
    %c0_31 = arith.constant 0 : index
    %43 = vector.load %arg4[%c0_28, %c0_29, %c0_30, %c0_31] : memref<1x1x16x8xbf16, #tpu.memory_space<vmem>>, vector<1x1x16x8xbf16>
    %44 = vector.shape_cast %43 : vector<1x1x16x8xbf16> to vector<16x8xbf16>
    %45 = arith.extf %44 : vector<16x8xbf16> to vector<16x8xf32>
    %c0_32 = arith.constant 0 : index
    %c0_33 = arith.constant 0 : index
    %46 = vector.load %arg6[%c0_32, %c0_33] : memref<1x8xf32, #tpu.memory_space<vmem>>, vector<1x8xf32>
    %47 = vector.shape_cast %46 : vector<1x8xf32> to vector<8xf32>
    %48 = vector.shape_cast %47 : vector<8xf32> to vector<1x8xf32>
    %49 = vector.broadcast %48 : vector<1x8xf32> to vector<16x8xf32>
    %50 = arith.mulf %45, %49 : vector<16x8xf32>
    %c0_34 = arith.constant 0 : index
    %c0_35 = arith.constant 0 : index
    %51 = vector.load %arg7[%c0_34, %c0_35] : memref<1x8xf32, #tpu.memory_space<vmem>>, vector<1x8xf32>
    %52 = vector.shape_cast %51 : vector<1x8xf32> to vector<8xf32>
    %53 = vector.shape_cast %52 : vector<8xf32> to vector<1x8xf32>
    %54 = vector.broadcast %53 : vector<1x8xf32> to vector<16x8xf32>
    %55 = arith.addf %50, %54 : vector<16x8xf32>
    %cst_36 = arith.constant 0.000000e+00 : f32
    %56 = vector.broadcast %cst_36 : f32 to vector<16x8xf32>
    %57 = arith.maximumf %55, %56 : vector<16x8xf32>
    %58 = arith.truncf %57 : vector<16x8xf32> to vector<16x8xbf16>
    %c0_i32_37 = arith.constant 0 : i32
    %59 = arith.cmpi slt, %arg1, %c0_i32_37 : i32
    %cst_38 = arith.constant 0.000000e+00 : bf16
    %60 = vector.broadcast %cst_38 : bf16 to vector<16x8xbf16>
    %61 = arith.select %59, %58, %60 : vector<16x8xbf16>
    %c17 = arith.constant 17 : index
    %c8_39 = arith.constant 8 : index
    %c0_40 = arith.constant 0 : index
    %62 = vector.load %arg11[%c17, %c8_39, %c0_40] : memref<18x32x8xbf16, #tpu.memory_space<vmem>>, vector<1x16x8xbf16>
    %63 = vector.shape_cast %62 : vector<1x16x8xbf16> to vector<16x8xbf16>
    %64 = vector.shape_cast %61 : vector<16x8xbf16> to vector<1x16x8xbf16>
    tpu.vector_store %arg11[%c17, %c8_39, %c0_40], %64 {strides = array<i32>} : memref<18x32x8xbf16, #tpu.memory_space<vmem>>, vector<1x16x8xbf16>,
    %c0_41 = arith.constant 0 : index
    %c7 = arith.constant 7 : index
    %c0_42 = arith.constant 0 : index
    %65 = vector.load %arg11[%c0_41, %c7, %c0_42] : memref<18x32x8xbf16, #tpu.memory_space<vmem>>, vector<16x16x8xbf16>
    %66 = vector.shape_cast %65 : vector<16x16x8xbf16> to vector<256x8xbf16>
    %c0_43 = arith.constant 0 : index
    %c0_44 = arith.constant 0 : index
    %c0_45 = arith.constant 0 : index
    %67 = vector.load %arg5[%c0_43, %c0_44, %c0_45] : memref<9x8x8xbf16, #tpu.memory_space<vmem>>, vector<1x8x8xbf16>
    %68 = vector.shape_cast %67 : vector<1x8x8xbf16> to vector<8x8xbf16>
    %cst_46 = arith.constant dense<0.000000e+00> : vector<256x8xf32>
    %69 = tpu.matmul %66, %68, %cst_46 {dimension_numbers = #tpu.dot_dimension_numbers<[1], [0], [0], [1], [0, 0, 1, 1], [], []>} : vector<256x8xbf16>, vector<8x8xbf16>, vector<256x8xf32> -> vector<256x8xf32>
    %c0_47 = arith.constant 0 : index
    %c8_48 = arith.constant 8 : index
    %c0_49 = arith.constant 0 : index
    %70 = vector.load %arg11[%c0_47, %c8_48, %c0_49] : memref<18x32x8xbf16, #tpu.memory_space<vmem>>, vector<16x16x8xbf16>
    %71 = vector.shape_cast %70 : vector<16x16x8xbf16> to vector<256x8xbf16>
    %c1_50 = arith.constant 1 : index
    %c0_51 = arith.constant 0 : index
    %c0_52 = arith.constant 0 : index
    %72 = vector.load %arg5[%c1_50, %c0_51, %c0_52] : memref<9x8x8xbf16, #tpu.memory_space<vmem>>, vector<1x8x8xbf16>
    %73 = vector.shape_cast %72 : vector<1x8x8xbf16> to vector<8x8xbf16>
    %cst_53 = arith.constant dense<0.000000e+00> : vector<256x8xf32>
    %74 = tpu.matmul %71, %73, %cst_53 {dimension_numbers = #tpu.dot_dimension_numbers<[1], [0], [0], [1], [0, 0, 1, 1], [], []>} : vector<256x8xbf16>, vector<8x8xbf16>, vector<256x8xf32> -> vector<256x8xf32>
    %75 = arith.addf %69, %74 : vector<256x8xf32>
    %c0_54 = arith.constant 0 : index
    %c9 = arith.constant 9 : index
    %c0_55 = arith.constant 0 : index
    %76 = vector.load %arg11[%c0_54, %c9, %c0_55] : memref<18x32x8xbf16, #tpu.memory_space<vmem>>, vector<16x16x8xbf16>
    %77 = vector.shape_cast %76 : vector<16x16x8xbf16> to vector<256x8xbf16>
    %c2 = arith.constant 2 : index
    %c0_56 = arith.constant 0 : index
    %c0_57 = arith.constant 0 : index
    %78 = vector.load %arg5[%c2, %c0_56, %c0_57] : memref<9x8x8xbf16, #tpu.memory_space<vmem>>, vector<1x8x8xbf16>
    %79 = vector.shape_cast %78 : vector<1x8x8xbf16> to vector<8x8xbf16>
    %cst_58 = arith.constant dense<0.000000e+00> : vector<256x8xf32>
    %80 = tpu.matmul %77, %79, %cst_58 {dimension_numbers = #tpu.dot_dimension_numbers<[1], [0], [0], [1], [0, 0, 1, 1], [], []>} : vector<256x8xbf16>, vector<8x8xbf16>, vector<256x8xf32> -> vector<256x8xf32>
    %81 = arith.addf %75, %80 : vector<256x8xf32>
    %c1_59 = arith.constant 1 : index
    %c7_60 = arith.constant 7 : index
    %c0_61 = arith.constant 0 : index
    %82 = vector.load %arg11[%c1_59, %c7_60, %c0_61] : memref<18x32x8xbf16, #tpu.memory_space<vmem>>, vector<16x16x8xbf16>
    %83 = vector.shape_cast %82 : vector<16x16x8xbf16> to vector<256x8xbf16>
    %c3 = arith.constant 3 : index
    %c0_62 = arith.constant 0 : index
    %c0_63 = arith.constant 0 : index
    %84 = vector.load %arg5[%c3, %c0_62, %c0_63] : memref<9x8x8xbf16, #tpu.memory_space<vmem>>, vector<1x8x8xbf16>
    %85 = vector.shape_cast %84 : vector<1x8x8xbf16> to vector<8x8xbf16>
    %cst_64 = arith.constant dense<0.000000e+00> : vector<256x8xf32>
    %86 = tpu.matmul %83, %85, %cst_64 {dimension_numbers = #tpu.dot_dimension_numbers<[1], [0], [0], [1], [0, 0, 1, 1], [], []>} : vector<256x8xbf16>, vector<8x8xbf16>, vector<256x8xf32> -> vector<256x8xf32>
    %87 = arith.addf %81, %86 : vector<256x8xf32>
    %c1_65 = arith.constant 1 : index
    %c8_66 = arith.constant 8 : index
    %c0_67 = arith.constant 0 : index
    %88 = vector.load %arg11[%c1_65, %c8_66, %c0_67] : memref<18x32x8xbf16, #tpu.memory_space<vmem>>, vector<16x16x8xbf16>
    %89 = vector.shape_cast %88 : vector<16x16x8xbf16> to vector<256x8xbf16>
    %c4 = arith.constant 4 : index
    %c0_68 = arith.constant 0 : index
    %c0_69 = arith.constant 0 : index
    %90 = vector.load %arg5[%c4, %c0_68, %c0_69] : memref<9x8x8xbf16, #tpu.memory_space<vmem>>, vector<1x8x8xbf16>
    %91 = vector.shape_cast %90 : vector<1x8x8xbf16> to vector<8x8xbf16>
    %cst_70 = arith.constant dense<0.000000e+00> : vector<256x8xf32>
    %92 = tpu.matmul %89, %91, %cst_70 {dimension_numbers = #tpu.dot_dimension_numbers<[1], [0], [0], [1], [0, 0, 1, 1], [], []>} : vector<256x8xbf16>, vector<8x8xbf16>, vector<256x8xf32> -> vector<256x8xf32>
    %93 = arith.addf %87, %92 : vector<256x8xf32>
    %c1_71 = arith.constant 1 : index
    %c9_72 = arith.constant 9 : index
    %c0_73 = arith.constant 0 : index
    %94 = vector.load %arg11[%c1_71, %c9_72, %c0_73] : memref<18x32x8xbf16, #tpu.memory_space<vmem>>, vector<16x16x8xbf16>
    %95 = vector.shape_cast %94 : vector<16x16x8xbf16> to vector<256x8xbf16>
    %c5 = arith.constant 5 : index
    %c0_74 = arith.constant 0 : index
    %c0_75 = arith.constant 0 : index
    %96 = vector.load %arg5[%c5, %c0_74, %c0_75] : memref<9x8x8xbf16, #tpu.memory_space<vmem>>, vector<1x8x8xbf16>
    %97 = vector.shape_cast %96 : vector<1x8x8xbf16> to vector<8x8xbf16>
    %cst_76 = arith.constant dense<0.000000e+00> : vector<256x8xf32>
    %98 = tpu.matmul %95, %97, %cst_76 {dimension_numbers = #tpu.dot_dimension_numbers<[1], [0], [0], [1], [0, 0, 1, 1], [], []>} : vector<256x8xbf16>, vector<8x8xbf16>, vector<256x8xf32> -> vector<256x8xf32>
    %99 = arith.addf %93, %98 : vector<256x8xf32>
    %c2_77 = arith.constant 2 : index
    %c7_78 = arith.constant 7 : index
    %c0_79 = arith.constant 0 : index
    %100 = vector.load %arg11[%c2_77, %c7_78, %c0_79] : memref<18x32x8xbf16, #tpu.memory_space<vmem>>, vector<16x16x8xbf16>
    %101 = vector.shape_cast %100 : vector<16x16x8xbf16> to vector<256x8xbf16>
    %c6 = arith.constant 6 : index
    %c0_80 = arith.constant 0 : index
    %c0_81 = arith.constant 0 : index
    %102 = vector.load %arg5[%c6, %c0_80, %c0_81] : memref<9x8x8xbf16, #tpu.memory_space<vmem>>, vector<1x8x8xbf16>
    %103 = vector.shape_cast %102 : vector<1x8x8xbf16> to vector<8x8xbf16>
    %cst_82 = arith.constant dense<0.000000e+00> : vector<256x8xf32>
    %104 = tpu.matmul %101, %103, %cst_82 {dimension_numbers = #tpu.dot_dimension_numbers<[1], [0], [0], [1], [0, 0, 1, 1], [], []>} : vector<256x8xbf16>, vector<8x8xbf16>, vector<256x8xf32> -> vector<256x8xf32>
    %105 = arith.addf %99, %104 : vector<256x8xf32>
    %c2_83 = arith.constant 2 : index
    %c8_84 = arith.constant 8 : index
    %c0_85 = arith.constant 0 : index
    %106 = vector.load %arg11[%c2_83, %c8_84, %c0_85] : memref<18x32x8xbf16, #tpu.memory_space<vmem>>, vector<16x16x8xbf16>
    %107 = vector.shape_cast %106 : vector<16x16x8xbf16> to vector<256x8xbf16>
    %c7_86 = arith.constant 7 : index
    %c0_87 = arith.constant 0 : index
    %c0_88 = arith.constant 0 : index
    %108 = vector.load %arg5[%c7_86, %c0_87, %c0_88] : memref<9x8x8xbf16, #tpu.memory_space<vmem>>, vector<1x8x8xbf16>
    %109 = vector.shape_cast %108 : vector<1x8x8xbf16> to vector<8x8xbf16>
    %cst_89 = arith.constant dense<0.000000e+00> : vector<256x8xf32>
    %110 = tpu.matmul %107, %109, %cst_89 {dimension_numbers = #tpu.dot_dimension_numbers<[1], [0], [0], [1], [0, 0, 1, 1], [], []>} : vector<256x8xbf16>, vector<8x8xbf16>, vector<256x8xf32> -> vector<256x8xf32>
    %111 = arith.addf %105, %110 : vector<256x8xf32>
    %c2_90 = arith.constant 2 : index
    %c9_91 = arith.constant 9 : index
    %c0_92 = arith.constant 0 : index
    %112 = vector.load %arg11[%c2_90, %c9_91, %c0_92] : memref<18x32x8xbf16, #tpu.memory_space<vmem>>, vector<16x16x8xbf16>
    %113 = vector.shape_cast %112 : vector<16x16x8xbf16> to vector<256x8xbf16>
    %c8_93 = arith.constant 8 : index
    %c0_94 = arith.constant 0 : index
    %c0_95 = arith.constant 0 : index
    %114 = vector.load %arg5[%c8_93, %c0_94, %c0_95] : memref<9x8x8xbf16, #tpu.memory_space<vmem>>, vector<1x8x8xbf16>
    %115 = vector.shape_cast %114 : vector<1x8x8xbf16> to vector<8x8xbf16>
    %cst_96 = arith.constant dense<0.000000e+00> : vector<256x8xf32>
    %116 = tpu.matmul %113, %115, %cst_96 {dimension_numbers = #tpu.dot_dimension_numbers<[1], [0], [0], [1], [0, 0, 1, 1], [], []>} : vector<256x8xbf16>, vector<8x8xbf16>, vector<256x8xf32> -> vector<256x8xf32>
    %117 = arith.addf %111, %116 : vector<256x8xf32>
    %cst_97 = arith.constant dense<0.000000e+00> : vector<8xf32>
    %118 = vector.multi_reduction <add>, %117, %cst_97 [0] : vector<256x8xf32> to vector<8xf32>
    %119 = vector.shape_cast %118 : vector<8xf32> to vector<1x8xf32>
    %cst_98 = arith.constant 3.906250e-03 : f32
    %120 = vector.broadcast %cst_98 : f32 to vector<1x8xf32>
    %121 = arith.mulf %119, %120 : vector<1x8xf32>
    %122 = vector.broadcast %121 : vector<1x8xf32> to vector<256x8xf32>
    %123 = arith.subf %117, %122 : vector<256x8xf32>
    %c0_99 = arith.constant 0 : index
    %c0_100 = arith.constant 0 : index
    %c0_101 = arith.constant 0 : index
    %c0_102 = arith.constant 0 : index
    %124 = vector.load %arg9[%c0_99, %c0_100, %c0_101, %c0_102] : memref<1x1x1x8xf32, #tpu.memory_space<vmem>>, vector<1x1x1x8xf32>
    %125 = vector.shape_cast %124 : vector<1x1x1x8xf32> to vector<1x8xf32>
    %126 = vector.shape_cast %119 : vector<1x8xf32> to vector<1x1x1x8xf32>
    tpu.vector_store %arg9[%c0_99, %c0_100, %c0_101, %c0_102], %126 {strides = array<i32>} : memref<1x1x1x8xf32, #tpu.memory_space<vmem>>, vector<1x1x1x8xf32>,
    %127 = arith.mulf %123, %123 : vector<256x8xf32>
    %cst_103 = arith.constant dense<0.000000e+00> : vector<8xf32>
    %128 = vector.multi_reduction <add>, %127, %cst_103 [0] : vector<256x8xf32> to vector<8xf32>
    %129 = vector.shape_cast %128 : vector<8xf32> to vector<1x8xf32>
    %c0_104 = arith.constant 0 : index
    %c0_105 = arith.constant 0 : index
    %c0_106 = arith.constant 0 : index
    %c0_107 = arith.constant 0 : index
    %130 = vector.load %arg10[%c0_104, %c0_105, %c0_106, %c0_107] : memref<1x1x1x8xf32, #tpu.memory_space<vmem>>, vector<1x1x1x8xf32>
    %131 = vector.shape_cast %130 : vector<1x1x1x8xf32> to vector<1x8xf32>
    %132 = vector.shape_cast %129 : vector<1x8xf32> to vector<1x1x1x8xf32>
    tpu.vector_store %arg10[%c0_104, %c0_105, %c0_106, %c0_107], %132 {strides = array<i32>} : memref<1x1x1x8xf32, #tpu.memory_space<vmem>>, vector<1x1x1x8xf32>,
    %133 = vector.shape_cast %117 : vector<256x8xf32> to vector<16x16x8xf32>
    %134 = arith.truncf %133 : vector<16x16x8xf32> to vector<16x16x8xbf16>
    %c0_108 = arith.constant 0 : index
    %c0_109 = arith.constant 0 : index
    %c0_110 = arith.constant 0 : index
    %c0_111 = arith.constant 0 : index
    %135 = vector.load %arg8[%c0_108, %c0_109, %c0_110, %c0_111] : memref<1x16x16x8xbf16, #tpu.memory_space<vmem>>, vector<1x16x16x8xbf16>
    %136 = vector.shape_cast %135 : vector<1x16x16x8xbf16> to vector<16x16x8xbf16>
    %137 = vector.shape_cast %134 : vector<16x16x8xbf16> to vector<1x16x16x8xbf16>
    tpu.vector_store %arg8[%c0_108, %c0_109, %c0_110, %c0_111], %137 {strides = array<i32>} : memref<1x16x16x8xbf16, #tpu.memory_space<vmem>>, vector<1x16x16x8xbf16>,
    return
  }
  func.func @transform_0(%arg0: i32, %arg1: i32) -> (i32, i32, i32, i32) {
    %c0_i32 = arith.constant 0 : i32
    %c0_i32_0 = arith.constant 0 : i32
    %c0_i32_1 = arith.constant 0 : i32
    return %arg0, %arg1, %c0_i32, %c0_i32_0 : i32, i32, i32, i32
  }
  func.func @transform_1(%arg0: i32, %arg1: i32) -> (i32, i32, i32, i32) {
    %c16_i32 = arith.constant 16 : i32
    %0 = arith.muli %arg1, %c16_i32 : i32
    %c1_i32 = arith.constant 1 : i32
    %1 = arith.subi %0, %c1_i32 : i32
    %c0_i32 = arith.constant 0 : i32
    %2 = arith.maxsi %1, %c0_i32 : i32
    %c0_i32_0 = arith.constant 0 : i32
    %c0_i32_1 = arith.constant 0 : i32
    %c0_i32_2 = arith.constant 0 : i32
    return %arg0, %2, %c0_i32_0, %c0_i32_1 : i32, i32, i32, i32
  }
  func.func @transform_2(%arg0: i32, %arg1: i32) -> (i32, i32, i32, i32) {
    %c1_i32 = arith.constant 1 : i32
    %0 = arith.addi %arg1, %c1_i32 : i32
    %c16_i32 = arith.constant 16 : i32
    %1 = arith.muli %0, %c16_i32 : i32
    %c15_i32 = arith.constant 15 : i32
    %2 = arith.minsi %1, %c15_i32 : i32
    %c0_i32 = arith.constant 0 : i32
    %c0_i32_0 = arith.constant 0 : i32
    %c0_i32_1 = arith.constant 0 : i32
    return %arg0, %2, %c0_i32, %c0_i32_0 : i32, i32, i32, i32
  }
  func.func @transform_3(%arg0: i32, %arg1: i32) -> (i32, i32, i32) {
    %c0_i32 = arith.constant 0 : i32
    %c0_i32_0 = arith.constant 0 : i32
    %c0_i32_1 = arith.constant 0 : i32
    %c0_i32_2 = arith.constant 0 : i32
    return %c0_i32, %c0_i32_0, %c0_i32_1 : i32, i32, i32
  }
  func.func @transform_4(%arg0: i32, %arg1: i32) -> (i32, i32) {
    %c0_i32 = arith.constant 0 : i32
    %c0_i32_0 = arith.constant 0 : i32
    %c0_i32_1 = arith.constant 0 : i32
    return %c0_i32, %c0_i32_0 : i32, i32
  }
  func.func @transform_5(%arg0: i32, %arg1: i32) -> (i32, i32) {
    %c0_i32 = arith.constant 0 : i32
    %c0_i32_0 = arith.constant 0 : i32
    %c0_i32_1 = arith.constant 0 : i32
    return %c0_i32, %c0_i32_0 : i32, i32
  }
  func.func @transform_6(%arg0: i32, %arg1: i32) -> (i32, i32, i32, i32) {
    %c0_i32 = arith.constant 0 : i32
    %c0_i32_0 = arith.constant 0 : i32
    %c0_i32_1 = arith.constant 0 : i32
    return %arg0, %arg1, %c0_i32, %c0_i32_0 : i32, i32, i32, i32
  }
  func.func @transform_7(%arg0: i32, %arg1: i32) -> (i32, i32, i32, i32) {
    %c0_i32 = arith.constant 0 : i32
    %c0_i32_0 = arith.constant 0 : i32
    %c0_i32_1 = arith.constant 0 : i32
    return %arg0, %arg1, %c0_i32, %c0_i32_0 : i32, i32, i32, i32
  }
  func.func @transform_8(%arg0: i32, %arg1: i32) -> (i32, i32, i32, i32) {
    %c0_i32 = arith.constant 0 : i32
    %c0_i32_0 = arith.constant 0 : i32
    %c0_i32_1 = arith.constant 0 : i32
    return %arg0, %arg1, %c0_i32, %c0_i32_0 : i32, i32, i32, i32
  }
}

</mosaic_0001>

<llo_original>
// kernel: double_conv_forward.5
$region0: #{double_conv_forward.5}
  #allocation0 [shape = 'u32[]', space=smem, size = 0x4, offset = 0x4, fixed_abs, tag = 'smem constant byte address 0x4 - core index']
  #allocation1 [shape = 'u32[144,128]{1,0:T(1,128)}', space=vmem, size = 0x12000, scoped, tag = 'internal scratch']
  %s0 = inlined_call_operand.vmem [shape: bf16[2,16,16,8], index: 0, kind: input, shape index: {}]
  %s1 = inlined_call_operand.vmem [shape: f32[1,8], index: 1, kind: input, shape index: {}]
  %s2 = inlined_call_operand.vmem [shape: f32[1,8], index: 2, kind: input, shape index: {}]
  %s3 = inlined_call_operand.vmem [shape: f32[2,16,16,8], index: 3, kind: output, shape index: {}]
  %s4 = sld [smem:[#allocation0]]
  $region45: #{double_conv_forward.5} parent=0
    _
  %s6 = ssub.s32 1, %s4
  %s7 = scalar_select 0, %s6, %s4
  loop: start=0, step=1, limit=4
  $region2: #{double_conv_forward.5} parent=0 // loop_pre_header
    _
  $region3: #{double_conv_forward.5} parent=0 // loop_header
    %s9 = sphi 0, %s13
    %p10 = scmp.ge.s32.totalorder %s9, 4
    %s16 = sphi 0, %s28
    %s17 = sphi 0, %s24
    %s18 = sphi 0, %s16
    %s19 = sphi 0, %s17
    %s20 = sphi 0, %s18
    %s21 = sphi 0, %s19
    %s33 = sphi 0, %s35
    %s36 = sphi 0, %s33
    %s37 = sphi 0, %s36
    %s53 = sphi 0, %s37
    %s57 = sphi 0, %s57
    %s59 = sphi 0, %s57
    %s60 = sphi 0, %s59
    %s74 = sphi 0, %s60
    %s78 = sphi 0, %s78
    %s80 = sphi 0, %s78
    %s81 = sphi 0, %s80
    %s95 = sphi 0, %s81
    %s103 = sphi 0, %s105
    %s106 = sphi 0, %s103
    %s107 = sphi 0, %s106
    %s123 = sphi 0, %s107
  $region4: #{double_conv_forward.5} parent=0 // loop_header_branch
    %12 = sbr.rel (%p10) target = $region8
  $region5: #{double_conv_forward.5} parent=0 // loop_body
    %s14 = ssub.s32 %s9, 1
    %s15 = ssub.s32 %s9, 2
    %s22 = sadd.s32 1, %s17
    %p23 = scmp.ge.s32.totalorder %s22, 1
    %s24 = scalar_select %p23, 0, %s22
    %s25 = sadd.s32 1, %s16
    %s26 = scalar_select %p23, %s25, %s16
    %p27 = scmp.ge.s32.totalorder %s26, 2
    %s28 = scalar_select %p27, 0, %s26
    %s29 = ssub.s32 %s16, %s28
    %s30 = ssub.s32 %s17, %s24
    %s31 = sor.u32 %s29, %s30
    %p32 = scmp.eq.s32.totalorder %s31, 0
    %s34 = sadd.s32 %s33, 1
    %s35 = scalar_select %p32, %s33, %s34
    %p38 = pneg %p32
    %p39 = scmp.eq.s32.totalorder %s9, 1
    %p40 = por %p38, %p39
    %p41 = scmp.ne.s32.totalorder %s33, %s36
    %p42 = scmp.eq.s32.totalorder %s9, 0
    %p43 = por %p41, %p42
    %p44 = scmp.ne.s32.totalorder %s33, %s36
    %p45 = scmp.eq.s32.totalorder %s14, 1
    %p46 = por %p44, %p45
    %p47 = scmp.ne.s32.totalorder %s36, %s37
    %p48 = scmp.eq.s32.totalorder %s14, 0
    %p49 = por %p47, %p48
    %p50 = scmp.ne.s32.totalorder %s36, %s37
    %p51 = scmp.eq.s32.totalorder %s15, 1
    %p52 = por %p50, %p51
    %p54 = scmp.ne.s32.totalorder %s37, %s53
    %p55 = scmp.eq.s32.totalorder %s15, 0
    %p56 = por %p54, %p55
    %s58 = sadd.s32 %s57, 1
    %p61 = scmp.eq.s32.totalorder %s9, 1
    %p62 = scmp.ne.s32.totalorder %s57, %s59
    %p63 = scmp.eq.s32.totalorder %s9, 0
    %p64 = por %p62, %p63
    %p65 = scmp.ne.s32.totalorder %s57, %s59
    %p66 = scmp.eq.s32.totalorder %s14, 1
    %p67 = por %p65, %p66
    %p68 = scmp.ne.s32.totalorder %s59, %s60
    %p69 = scmp.eq.s32.totalorder %s14, 0
    %p70 = por %p68, %p69
    %p71 = scmp.ne.s32.totalorder %s59, %s60
    %p72 = scmp.eq.s32.totalorder %s15, 1
    %p73 = por %p71, %p72
    %p75 = scmp.ne.s32.totalorder %s60, %s74
    %p76 = scmp.eq.s32.totalorder %s15, 0
    %p77 = por %p75, %p76
    %s79 = sadd.s32 %s78, 1
    %p82 = scmp.eq.s32.totalorder %s9, 1
    %p83 = scmp.ne.s32.totalorder %s78, %s80
    %p84 = scmp.eq.s32.totalorder %s9, 0
    %p85 = por %p83, %p84
    %p86 = scmp.ne.s32.totalorder %s78, %s80
    %p87 = scmp.eq.s32.totalorder %s14, 1
    %p88 = por %p86, %p87
    %p89 = scmp.ne.s32.totalorder %s80, %s81
    %p90 = scmp.eq.s32.totalorder %s14, 0
    %p91 = por %p89, %p90
    %p92 = scmp.ne.s32.totalorder %s80, %s81
    %p93 = scmp.eq.s32.totalorder %s15, 1
    %p94 = por %p92, %p93
    %p96 = scmp.ne.s32.totalorder %s81, %s95
    %p97 = scmp.eq.s32.totalorder %s15, 0
    %p98 = por %p96, %p97
    %s99 = ssub.s32 %s16, %s28
    %s100 = ssub.s32 %s17, %s24
    %s101 = sor.u32 %s99, %s100
    %p102 = scmp.eq.s32.totalorder %s101, 0
    %s104 = sadd.s32 %s103, 1
    %s105 = scalar_select %p102, %s103, %s104
    %p108 = pneg %p102
    %p109 = scmp.eq.s32.totalorder %s9, 1
    %p110 = por %p108, %p109
    %p111 = scmp.ne.s32.totalorder %s103, %s106
    %p112 = scmp.eq.s32.totalorder %s9, 0
    %p113 = por %p111, %p112
    %p114 = scmp.ne.s32.totalorder %s103, %s106
    %p115 = scmp.eq.s32.totalorder %s14, 1
    %p116 = por %p114, %p115
    %p117 = scmp.ne.s32.totalorder %s106, %s107
    %p118 = scmp.eq.s32.totalorder %s14, 0
    %p119 = por %p117, %p118
    %p120 = scmp.ne.s32.totalorder %s106, %s107
    %p121 = scmp.eq.s32.totalorder %s15, 1
    %p122 = por %p120, %p121
    %p124 = scmp.ne.s32.totalorder %s107, %s123
    %p125 = scmp.eq.s32.totalorder %s15, 0
    %p126 = por %p124, %p125
    %p127 = scmp.le.s32.totalorder 1, %s9
    %p128 = scmp.lt.s32.totalorder %s9, 3
    %p129 = pnand %p127, %p128
    %p130 = pneg %p129
    // Predicated region
    $region9: #{double_conv_forward.5} parent=5 // pred_check
      _
    $region10: #{double_conv_forward.5} parent=5 // pred_check_branch
      %132 = sbr.rel (%p129) target = $region12
    $region11: #{double_conv_forward.5} parent=5 // pred_region
      %s133 = ssub.s32 %s9, 1
      // Predicated region
      $region13: #{double_conv_forward.5} parent=11 // pred_check
        %p134 = pneg %p70
      $region14: #{double_conv_forward.5} parent=11 // pred_check_branch
        %136 = sbr.rel (%p134) target = $region16
      $region15: #{double_conv_forward.5} parent=11 // pred_region
        _
      $region16: #{double_conv_forward.5} parent=11 // pred_fallthru
        _
      // Predicated region
      $region17: #{double_conv_forward.5} parent=11 // pred_check
        %p137 = pneg %p91
      $region18: #{double_conv_forward.5} parent=11 // pred_check_branch
        %139 = sbr.rel (%p137) target = $region20
      $region19: #{double_conv_forward.5} parent=11 // pred_region
        _
      $region20: #{double_conv_forward.5} parent=11 // pred_fallthru
        _
    $region12: #{double_conv_forward.5} parent=5 // pred_fallthru
      _
    %p140 = scmp.lt.s32.totalorder %s9, 2
    // Predicated region
    $region21: #{double_conv_forward.5} parent=5 // pred_check
      %p141 = pneg %p140
    $region22: #{double_conv_forward.5} parent=5 // pred_check_branch
      %143 = sbr.rel (%p141) target = $region24
    $region23: #{double_conv_forward.5} parent=5 // pred_region
      // Predicated region
      $region25: #{double_conv_forward.5} parent=23 // pred_check
        %p144 = pneg %p43
      $region26: #{double_conv_forward.5} parent=23 // pred_check_branch
        %146 = sbr.rel (%p144) target = $region28
      $region27: #{double_conv_forward.5} parent=23 // pred_region
        %s147 = smul.u32 16, %s17
        %p148 = scmp.lt.s32.totalorder %s16, 1
        %s149 = scalar_select %p148, %s16, 1
        %p150 = scmp.lt.s32.totalorder %s147, 15
        %s151 = scalar_select %p150, %s147, 15
        %s152 = smul.addr %s151, 2
        %s153 = smul.addr %s149, 32
        %s154 = sadd.s32 %s152, %s153
        %s155 = smul.addr %s154, 4
        %s156 = scalar_lea.vmem %s0, %s155
        %s157 = smul.u32 16, %s17
      $region28: #{double_conv_forward.5} parent=23 // pred_fallthru
        _
    $region24: #{double_conv_forward.5} parent=5 // pred_fallthru
      _
    %p158 = scmp.le.s32.totalorder 1, %s9
    %p159 = scmp.lt.s32.totalorder %s9, 3
    %p160 = pnand %p158, %p159
    %p161 = pneg %p160
    // Predicated region
    $region29: #{double_conv_forward.5} parent=5 // pred_check
      _
    $region30: #{double_conv_forward.5} parent=5 // pred_check_branch
      %163 = sbr.rel (%p160) target = $region32
    $region31: #{double_conv_forward.5} parent=5 // pred_region
      %s164 = ssub.s32 %s9, 1
      %s165 = smul.u32 16, %s19
      %p166 = scmp.lt.s32.totalorder %s18, 1
      %s167 = scalar_select %p166, %s18, 1
      %p168 = scmp.lt.s32.totalorder %s165, 15
      %s169 = scalar_select %p168, %s165, 15
      %s170 = smul.addr %s169, 2
      %s171 = smul.addr %s167, 32
      %s172 = sadd.s32 %s170, %s171
      %s173 = smul.addr %s172, 4
      %s174 = scalar_lea.vmem %s0, %s173
      %p175 = pneg %p49
      %p176 = pneg %p46
      %p177 = pneg %p70
      %p178 = pneg %p67
      %p179 = pneg %p91
      %p180 = pneg %p88
      %p181 = pneg %p119
      %p182 = pneg %p116
      %s183 = smul.u32 16, %s19
      %p184 = scmp.lt.s32.totalorder %s18, 1
      %s185 = scalar_select %p184, %s18, 1
      %p186 = scmp.lt.s32.totalorder %s183, 15
      %s187 = scalar_select %p186, %s183, 15
      %s188 = smul.addr %s187, 2
      %s189 = smul.addr %s185, 32
      %s190 = sadd.s32 %s188, %s189
      %s191 = smul.addr %s190, 8
      %s192 = scalar_lea.vmem %s3, %s191
      %s193 = smul.u32 16, %s19
      %p194 = scmp.lt.s32.totalorder %s18, 1
      %s195 = scalar_select %p194, %s18, 1
      %p196 = scmp.lt.s32.totalorder %s193, 15
      %s197 = scalar_select %p196, %s193, 15
      %s198 = smul.addr %s197, 2
      %s199 = smul.addr %s195, 32
      %s200 = sadd.s32 %s198, %s199
      %s201 = smul.addr %s200, 4
      %s202 = scalar_lea.vmem %s0, %s201
      %s203 = smul.u32 16, %s19
      %s204 = smul.u32 16, %s19
      %p205 = scmp.lt.s32.totalorder %s18, 1
      %s206 = scalar_select %p205, %s18, 1
      %p207 = scmp.lt.s32.totalorder %s204, 15
      %s208 = scalar_select %p207, %s204, 15
      %s209 = smul.addr %s208, 2
      %s210 = smul.addr %s206, 32
      %s211 = sadd.s32 %s209, %s210
      %s212 = smul.addr %s211, 8
      %s213 = scalar_lea.vmem %s3, %s212
      %s214 = smul.u32 16, %s19
      %v215 = vld [vmem:[%s202] sm:$0xf]
      %v216 = vld [vmem:[%s202 + $0x4] sm:$0xf]
      %v217 = vld [vmem:[%s202 + $0x8] sm:$0xf]
      %v218 = vld [vmem:[%s202 + $0xc] sm:$0xf]
      %v219 = vld [vmem:[%s202 + $0x10] sm:$0xf]
      %v220 = vld [vmem:[%s202 + $0x14] sm:$0xf]
      %v221 = vld [vmem:[%s202 + $0x18] sm:$0xf]
      %v222 = vld [vmem:[%s202 + $0x1c] sm:$0xf]
      %v223 = vld [vmem:[%s202 + $0x20] sm:$0xf]
      %v224 = vld [vmem:[%s202 + $0x24] sm:$0xf]
      %v225 = vld [vmem:[%s202 + $0x28] sm:$0xf]
      %v226 = vld [vmem:[%s202 + $0x2c] sm:$0xf]
      %v227 = vld [vmem:[%s202 + $0x30] sm:$0xf]
      %v228 = vld [vmem:[%s202 + $0x34] sm:$0xf]
      %v229 = vld [vmem:[%s202 + $0x38] sm:$0xf]
      %v230 = vld [vmem:[%s202 + $0x3c] sm:$0xf]
      %v231 = vld [vmem:[%s202 + $0x40] sm:$0xf]
      %v232 = vld [vmem:[%s202 + $0x44] sm:$0xf]
      %v233 = vld [vmem:[%s202 + $0x48] sm:$0xf]
      %v234 = vld [vmem:[%s202 + $0x4c] sm:$0xf]
      %v235 = vld [vmem:[%s202 + $0x50] sm:$0xf]
      %v236 = vld [vmem:[%s202 + $0x54] sm:$0xf]
      %v237 = vld [vmem:[%s202 + $0x58] sm:$0xf]
      %v238 = vld [vmem:[%s202 + $0x5c] sm:$0xf]
      %v239 = vld [vmem:[%s202 + $0x60] sm:$0xf]
      %v240 = vld [vmem:[%s202 + $0x64] sm:$0xf]
      %v241 = vld [vmem:[%s202 + $0x68] sm:$0xf]
      %v242 = vld [vmem:[%s202 + $0x6c] sm:$0xf]
      %v243 = vld [vmem:[%s202 + $0x70] sm:$0xf]
      %v244 = vld [vmem:[%s202 + $0x74] sm:$0xf]
      %v245 = vld [vmem:[%s202 + $0x78] sm:$0xf]
      %v246 = vld [vmem:[%s202 + $0x7c] sm:$0xf]
      %v247 = vunpack.c.l.bf16 %v215
      %v248 = vunpack.c.l.bf16 %v216
      %v249 = vunpack.c.l.bf16 %v217
      %v250 = vunpack.c.l.bf16 %v218
      %v251 = vunpack.c.l.bf16 %v219
      %v252 = vunpack.c.l.bf16 %v220
      %v253 = vunpack.c.l.bf16 %v221
      %v254 = vunpack.c.l.bf16 %v222
      %v255 = vunpack.c.l.bf16 %v223
      %v256 = vunpack.c.l.bf16 %v224
      %v257 = vunpack.c.l.bf16 %v225
      %v258 = vunpack.c.l.bf16 %v226
      %v259 = vunpack.c.l.bf16 %v227
      %v260 = vunpack.c.l.bf16 %v228
      %v261 = vunpack.c.l.bf16 %v229
      %v262 = vunpack.c.l.bf16 %v230
      %v263 = vunpack.c.l.bf16 %v231
      %v264 = vunpack.c.l.bf16 %v232
      %v265 = vunpack.c.l.bf16 %v233
      %v266 = vunpack.c.l.bf16 %v234
      %v267 = vunpack.c.l.bf16 %v235
      %v268 = vunpack.c.l.bf16 %v236
      %v269 = vunpack.c.l.bf16 %v237
      %v270 = vunpack.c.l.bf16 %v238
      %v271 = vunpack.c.l.bf16 %v239
      %v272 = vunpack.c.l.bf16 %v240
      %v273 = vunpack.c.l.bf16 %v241
      %v274 = vunpack.c.l.bf16 %v242
      %v275 = vunpack.c.l.bf16 %v243
      %v276 = vunpack.c.l.bf16 %v244
      %v277 = vunpack.c.l.bf16 %v245
      %v278 = vunpack.c.l.bf16 %v246
      %v279 = vld [vmem:[%s1] sm:$0x1]
      %v281 = vlaneseq
      %v282 = vshrl.u32 %v281, 7
      %v283 = vsub.s32 0, %v282
      %v284 = vrot.slane %v279, %v283
      %v286 = vmul.f32 %v247, %v284
      %v287 = vmul.f32 %v248, %v284
      %v288 = vmul.f32 %v249, %v284
      %v289 = vmul.f32 %v250, %v284
      %v290 = vmul.f32 %v251, %v284
      %v291 = vmul.f32 %v252, %v284
      %v292 = vmul.f32 %v253, %v284
      %v293 = vmul.f32 %v254, %v284
      %v294 = vmul.f32 %v255, %v284
      %v295 = vmul.f32 %v256, %v284
      %v296 = vmul.f32 %v257, %v284
      %v297 = vmul.f32 %v258, %v284
      %v298 = vmul.f32 %v259, %v284
      %v299 = vmul.f32 %v260, %v284
      %v300 = vmul.f32 %v261, %v284
      %v301 = vmul.f32 %v262, %v284
      %v302 = vmul.f32 %v263, %v284
      %v303 = vmul.f32 %v264, %v284
      %v304 = vmul.f32 %v265, %v284
      %v305 = vmul.f32 %v266, %v284
      %v306 = vmul.f32 %v267, %v284
      %v307 = vmul.f32 %v268, %v284
      %v308 = vmul.f32 %v269, %v284
      %v309 = vmul.f32 %v270, %v284
      %v310 = vmul.f32 %v271, %v284
      %v311 = vmul.f32 %v272, %v284
      %v312 = vmul.f32 %v273, %v284
      %v313 = vmul.f32 %v274, %v284
      %v314 = vmul.f32 %v275, %v284
      %v315 = vmul.f32 %v276, %v284
      %v316 = vmul.f32 %v277, %v284
      %v317 = vmul.f32 %v278, %v284
      %v318 = vld [vmem:[%s2] sm:$0x1]
      %v320 = vlaneseq
      %v321 = vshrl.u32 %v320, 7
      %v322 = vsub.s32 0, %v321
      %v323 = vrot.slane %v318, %v322
      %v325 = vadd.f32 %v286, %v323
      %v326 = vadd.f32 %v287, %v323
      %v327 = vadd.f32 %v288, %v323
      %v328 = vadd.f32 %v289, %v323
      %v329 = vadd.f32 %v290, %v323
      %v330 = vadd.f32 %v291, %v323
      %v331 = vadd.f32 %v292, %v323
      %v332 = vadd.f32 %v293, %v323
      %v333 = vadd.f32 %v294, %v323
      %v334 = vadd.f32 %v295, %v323
      %v335 = vadd.f32 %v296, %v323
      %v336 = vadd.f32 %v297, %v323
      %v337 = vadd.f32 %v298, %v323
      %v338 = vadd.f32 %v299, %v323
      %v339 = vadd.f32 %v300, %v323
      %v340 = vadd.f32 %v301, %v323
      %v341 = vadd.f32 %v302, %v323
      %v342 = vadd.f32 %v303, %v323
      %v343 = vadd.f32 %v304, %v323
      %v344 = vadd.f32 %v305, %v323
      %v345 = vadd.f32 %v306, %v323
      %v346 = vadd.f32 %v307, %v323
      %v347 = vadd.f32 %v308, %v323
      %v348 = vadd.f32 %v309, %v323
      %v349 = vadd.f32 %v310, %v323
      %v350 = vadd.f32 %v311, %v323
      %v351 = vadd.f32 %v312, %v323
      %v352 = vadd.f32 %v313, %v323
      %v353 = vadd.f32 %v314, %v323
      %v354 = vadd.f32 %v315, %v323
      %v355 = vadd.f32 %v316, %v323
      %v356 = vadd.f32 %v317, %v323
      %v357 = vmax.f32 %v325, 0.0
      %v358 = vmax.f32 %v326, 0.0
      %v359 = vmax.f32 %v327, 0.0
      %v360 = vmax.f32 %v328, 0.0
      %v361 = vmax.f32 %v329, 0.0
      %v362 = vmax.f32 %v330, 0.0
      %v363 = vmax.f32 %v331, 0.0
      %v364 = vmax.f32 %v332, 0.0
      %v365 = vmax.f32 %v333, 0.0
      %v366 = vmax.f32 %v334, 0.0
      %v367 = vmax.f32 %v335, 0.0
      %v368 = vmax.f32 %v336, 0.0
      %v369 = vmax.f32 %v337, 0.0
      %v370 = vmax.f32 %v338, 0.0
      %v371 = vmax.f32 %v339, 0.0
      %v372 = vmax.f32 %v340, 0.0
      %v373 = vmax.f32 %v341, 0.0
      %v374 = vmax.f32 %v342, 0.0
      %v375 = vmax.f32 %v343, 0.0
      %v376 = vmax.f32 %v344, 0.0
      %v377 = vmax.f32 %v345, 0.0
      %v378 = vmax.f32 %v346, 0.0
      %v379 = vmax.f32 %v347, 0.0
      %v380 = vmax.f32 %v348, 0.0
      %v381 = vmax.f32 %v349, 0.0
      %v382 = vmax.f32 %v350, 0.0
      %v383 = vmax.f32 %v351, 0.0
      %v384 = vmax.f32 %v352, 0.0
      %v385 = vmax.f32 %v353, 0.0
      %v386 = vmax.f32 %v354, 0.0
      %v387 = vmax.f32 %v355, 0.0
      %v388 = vmax.f32 %v356, 0.0
      %vm389 = vcmask 64512
      %390 = vst.msk [vmem:[%s213] sm:$0xff] %vm389, %v357
      %391 = vst.msk [vmem:[%s213 + $0x8] sm:$0xff] %vm389, %v358
      %392 = vst.msk [vmem:[%s213 + $0x10] sm:$0xff] %vm389, %v359
      %393 = vst.msk [vmem:[%s213 + $0x18] sm:$0xff] %vm389, %v360
      %394 = vst.msk [vmem:[%s213 + $0x20] sm:$0xff] %vm389, %v361
      %395 = vst.msk [vmem:[%s213 + $0x28] sm:$0xff] %vm389, %v362
      %396 = vst.msk [vmem:[%s213 + $0x30] sm:$0xff] %vm389, %v363
      %397 = vst.msk [vmem:[%s213 + $0x38] sm:$0xff] %vm389, %v364
      %398 = vst.msk [vmem:[%s213 + $0x40] sm:$0xff] %vm389, %v365
      %399 = vst.msk [vmem:[%s213 + $0x48] sm:$0xff] %vm389, %v366
      %400 = vst.msk [vmem:[%s213 + $0x50] sm:$0xff] %vm389, %v367
      %401 = vst.msk [vmem:[%s213 + $0x58] sm:$0xff] %vm389, %v368
      %402 = vst.msk [vmem:[%s213 + $0x60] sm:$0xff] %vm389, %v369
      %403 = vst.msk [vmem:[%s213 + $0x68] sm:$0xff] %vm389, %v370
      %404 = vst.msk [vmem:[%s213 + $0x70] sm:$0xff] %vm389, %v371
      %405 = vst.msk [vmem:[%s213 + $0x78] sm:$0xff] %vm389, %v372
      %406 = vst.msk [vmem:[%s213 + $0x80] sm:$0xff] %vm389, %v373
      %407 = vst.msk [vmem:[%s213 + $0x88] sm:$0xff] %vm389, %v374
      %408 = vst.msk [vmem:[%s213 + $0x90] sm:$0xff] %vm389, %v375
      %409 = vst.msk [vmem:[%s213 + $0x98] sm:$0xff] %vm389, %v376
      %410 = vst.msk [vmem:[%s213 + $0xa0] sm:$0xff] %vm389, %v377
      %411 = vst.msk [vmem:[%s213 + $0xa8] sm:$0xff] %vm389, %v378
      %412 = vst.msk [vmem:[%s213 + $0xb0] sm:$0xff] %vm389, %v379
      %413 = vst.msk [vmem:[%s213 + $0xb8] sm:$0xff] %vm389, %v380
      %414 = vst.msk [vmem:[%s213 + $0xc0] sm:$0xff] %vm389, %v381
      %415 = vst.msk [vmem:[%s213 + $0xc8] sm:$0xff] %vm389, %v382
      %416 = vst.msk [vmem:[%s213 + $0xd0] sm:$0xff] %vm389, %v383
      %417 = vst.msk [vmem:[%s213 + $0xd8] sm:$0xff] %vm389, %v384
      %418 = vst.msk [vmem:[%s213 + $0xe0] sm:$0xff] %vm389, %v385
      %419 = vst.msk [vmem:[%s213 + $0xe8] sm:$0xff] %vm389, %v386
      %420 = vst.msk [vmem:[%s213 + $0xf0] sm:$0xff] %vm389, %v387
      %421 = vst.msk [vmem:[%s213 + $0xf8] sm:$0xff] %vm389, %v388
      %s422 = smul.u32 16, %s19
      %p423 = scmp.lt.s32.totalorder %s18, 1
      %s424 = scalar_select %p423, %s18, 1
      %p425 = scmp.lt.s32.totalorder %s422, 15
      %s426 = scalar_select %p425, %s422, 15
      %s427 = smul.addr %s426, 2
      %s428 = smul.addr %s424, 32
      %s429 = sadd.s32 %s427, %s428
      %s430 = smul.addr %s429, 8
      %s431 = scalar_lea.vmem %s3, %s430
      // Predicated region
      $region33: #{double_conv_forward.5} parent=31 // pred_check
        %p432 = pneg %p116
      $region34: #{double_conv_forward.5} parent=31 // pred_check_branch
        %434 = sbr.rel (%p432) target = $region36
      $region35: #{double_conv_forward.5} parent=31 // pred_region
        %s435 = smul.u32 16, %s19
      $region36: #{double_conv_forward.5} parent=31 // pred_fallthru
        _
    $region32: #{double_conv_forward.5} parent=5 // pred_fallthru
      _
    %p436 = scmp.le.s32.totalorder 2, %s9
    // Predicated region
    $region37: #{double_conv_forward.5} parent=5 // pred_check
      %p437 = pneg %p436
    $region38: #{double_conv_forward.5} parent=5 // pred_check_branch
      %439 = sbr.rel (%p437) target = $region40
    $region39: #{double_conv_forward.5} parent=5 // pred_region
      %s440 = ssub.s32 %s9, 2
      // Predicated region
      $region41: #{double_conv_forward.5} parent=39 // pred_check
        %p441 = pneg %p122
      $region42: #{double_conv_forward.5} parent=39 // pred_check_branch
        %443 = sbr.rel (%p441) target = $region44
      $region43: #{double_conv_forward.5} parent=39 // pred_region
        %s444 = smul.u32 16, %s21
        %p445 = scmp.lt.s32.totalorder %s20, 1
        %s446 = scalar_select %p445, %s20, 1
        %p447 = scmp.lt.s32.totalorder %s444, 15
        %s448 = scalar_select %p447, %s444, 15
        %s449 = smul.addr %s448, 2
        %s450 = smul.addr %s446, 32
        %s451 = sadd.s32 %s449, %s450
        %s452 = smul.addr %s451, 8
        %s453 = scalar_lea.vmem %s3, %s452
      $region44: #{double_conv_forward.5} parent=39 // pred_fallthru
        _
    $region40: #{double_conv_forward.5} parent=5 // pred_fallthru
      _
  $region6: #{double_conv_forward.5} parent=0 // loop_footer
    %s13 = sadd.s32 1, %s9
  $region7: #{double_conv_forward.5} parent=0 // loop_footer_branch
    %8 = sbr.rel target = $region3
  $region8: #{double_conv_forward.5} parent=0 // loop_exit
    _

// kernel: double_conv_forward.3
$region0: #{double_conv_forward.3}
  #allocation0 [shape = 'u32[]', space=smem, size = 0x4, offset = 0x4, fixed_abs, tag = 'smem constant byte address 0x4 - core index']
  #allocation1 [shape = 'u32[144,128]{1,0:T(1,128)}', space=vmem, size = 0x12000, scoped, tag = 'internal scratch']
  #allocation2 [shape = 'bf16[18,32,4]{2,1,0:T(16,128)(2,1)}', space=vmem, size = 0x24000, scoped, tag = 'scratch operand']
  %s0 = inlined_call_operand.vmem [shape: bf16[2,16,16,4], index: 0, kind: input, shape index: {}, may-alias: {0,1,2}]
  %s1 = inlined_call_operand.vmem [shape: bf16[2,16,16,4], index: 1, kind: input, shape index: {}, may-alias: {0,1,2}]
  %s2 = inlined_call_operand.vmem [shape: bf16[2,16,16,4], index: 2, kind: input, shape index: {}, may-alias: {0,1,2}]
  %s3 = inlined_call_operand.vmem [shape: bf16[9,4,8], index: 3, kind: input, shape index: {}]
  %s4 = inlined_call_operand.vmem [shape: f32[1,4], index: 4, kind: input, shape index: {}]
  %s5 = inlined_call_operand.vmem [shape: f32[1,4], index: 5, kind: input, shape index: {}]
  %s6 = inlined_call_operand.vmem [shape: bf16[2,16,16,8], index: 6, kind: output, shape index: {0}]
  %s7 = inlined_call_operand.vmem [shape: f32[2,1,1,8], index: 7, kind: output, shape index: {1}]
  %s8 = inlined_call_operand.vmem [shape: f32[2,1,1,8], index: 8, kind: output, shape index: {2}]
  %9 = xla_tuple %s6, %s7, %s8
  %s10 = sld [smem:[#allocation0]]
  $region73: #{double_conv_forward.3} parent=0
    _
  %s12 = ssub.s32 1, %s10
  %s13 = scalar_select 0, %s12, %s10
  loop: start=0, step=1, limit=4
  $region2: #{double_conv_forward.3} parent=0 // loop_pre_header
    _
  $region3: #{double_conv_forward.3} parent=0 // loop_header
    %s15 = sphi 0, %s19
    %p16 = scmp.ge.s32.totalorder %s15, 4
    %s22 = sphi 0, %s34
    %s23 = sphi 0, %s30
    %s24 = sphi 0, %s22
    %s25 = sphi 0, %s23
    %s26 = sphi 0, %s24
    %s27 = sphi 0, %s25
    %s39 = sphi 0, %s41
    %s42 = sphi 0, %s39
    %s43 = sphi 0, %s42
    %s59 = sphi 0, %s43
    %s75 = sphi 0, %s77
    %s78 = sphi 0, %s75
    %s79 = sphi 0, %s78
    %s95 = sphi 0, %s79
    %s111 = sphi 0, %s113
    %s114 = sphi 0, %s111
    %s115 = sphi 0, %s114
    %s131 = sphi 0, %s115
    %s135 = sphi 0, %s135
    %s137 = sphi 0, %s135
    %s138 = sphi 0, %s137
    %s152 = sphi 0, %s138
    %s156 = sphi 0, %s156
    %s158 = sphi 0, %s156
    %s159 = sphi 0, %s158
    %s173 = sphi 0, %s159
    %s177 = sphi 0, %s177
    %s179 = sphi 0, %s177
    %s180 = sphi 0, %s179
    %s194 = sphi 0, %s180
    %s202 = sphi 0, %s204
    %s205 = sphi 0, %s202
    %s206 = sphi 0, %s205
    %s222 = sphi 0, %s206
    %s230 = sphi 0, %s232
    %s233 = sphi 0, %s230
    %s234 = sphi 0, %s233
    %s250 = sphi 0, %s234
    %s258 = sphi 0, %s260
    %s261 = sphi 0, %s258
    %s262 = sphi 0, %s261
    %s278 = sphi 0, %s262
  $region4: #{double_conv_forward.3} parent=0 // loop_header_branch
    %18 = sbr.rel (%p16) target = $region8
  $region5: #{double_conv_forward.3} parent=0 // loop_body
    %s20 = ssub.s32 %s15, 1
    %s21 = ssub.s32 %s15, 2
    %s28 = sadd.s32 1, %s23
    %p29 = scmp.ge.s32.totalorder %s28, 1
    %s30 = scalar_select %p29, 0, %s28
    %s31 = sadd.s32 1, %s22
    %s32 = scalar_select %p29, %s31, %s22
    %p33 = scmp.ge.s32.totalorder %s32, 2
    %s34 = scalar_select %p33, 0, %s32
    %s35 = ssub.s32 %s22, %s34
    %s36 = ssub.s32 %s23, %s30
    %s37 = sor.u32 %s35, %s36
    %p38 = scmp.eq.s32.totalorder %s37, 0
    %s40 = sadd.s32 %s39, 1
    %s41 = scalar_select %p38, %s39, %s40
    %p44 = pneg %p38
    %p45 = scmp.eq.s32.totalorder %s15, 1
    %p46 = por %p44, %p45
    %p47 = scmp.ne.s32.totalorder %s39, %s42
    %p48 = scmp.eq.s32.totalorder %s15, 0
    %p49 = por %p47, %p48
    %p50 = scmp.ne.s32.totalorder %s39, %s42
    %p51 = scmp.eq.s32.totalorder %s20, 1
    %p52 = por %p50, %p51
    %p53 = scmp.ne.s32.totalorder %s42, %s43
    %p54 = scmp.eq.s32.totalorder %s20, 0
    %p55 = por %p53, %p54
    %p56 = scmp.ne.s32.totalorder %s42, %s43
    %p57 = scmp.eq.s32.totalorder %s21, 1
    %p58 = por %p56, %p57
    %p60 = scmp.ne.s32.totalorder %s43, %s59
    %p61 = scmp.eq.s32.totalorder %s21, 0
    %p62 = por %p60, %p61
    %s63 = smul.u32 %s23, 16
    %s64 = ssub.s32 %s63, 1
    %p65 = scmp.gt.s32.totalorder %s64, 0
    %s66 = scalar_select %p65, %s64, 0
    %s67 = smul.u32 %s30, 16
    %s68 = ssub.s32 %s67, 1
    %p69 = scmp.gt.s32.totalorder %s68, 0
    %s70 = scalar_select %p69, %s68, 0
    %s71 = ssub.s32 %s22, %s34
    %s72 = ssub.s32 %s66, %s70
    %s73 = sor.u32 %s71, %s72
    %p74 = scmp.eq.s32.totalorder %s73, 0
    %s76 = sadd.s32 %s75, 1
    %s77 = scalar_select %p74, %s75, %s76
    %p80 = pneg %p74
    %p81 = scmp.eq.s32.totalorder %s15, 1
    %p82 = por %p80, %p81
    %p83 = scmp.ne.s32.totalorder %s75, %s78
    %p84 = scmp.eq.s32.totalorder %s15, 0
    %p85 = por %p83, %p84
    %p86 = scmp.ne.s32.totalorder %s75, %s78
    %p87 = scmp.eq.s32.totalorder %s20, 1
    %p88 = por %p86, %p87
    %p89 = scmp.ne.s32.totalorder %s78, %s79
    %p90 = scmp.eq.s32.totalorder %s20, 0
    %p91 = por %p89, %p90
    %p92 = scmp.ne.s32.totalorder %s78, %s79
    %p93 = scmp.eq.s32.totalorder %s21, 1
    %p94 = por %p92, %p93
    %p96 = scmp.ne.s32.totalorder %s79, %s95
    %p97 = scmp.eq.s32.totalorder %s21, 0
    %p98 = por %p96, %p97
    %s99 = sadd.s32 %s23, 1
    %s100 = smul.u32 %s99, 16
    %p101 = scmp.lt.s32.totalorder %s100, 15
    %s102 = scalar_select %p101, %s100, 15
    %s103 = sadd.s32 %s30, 1
    %s104 = smul.u32 %s103, 16
    %p105 = scmp.lt.s32.totalorder %s104, 15
    %s106 = scalar_select %p105, %s104, 15
    %s107 = ssub.s32 %s22, %s34
    %s108 = ssub.s32 %s102, %s106
    %s109 = sor.u32 %s107, %s108
    %p110 = scmp.eq.s32.totalorder %s109, 0
    %s112 = sadd.s32 %s111, 1
    %s113 = scalar_select %p110, %s111, %s112
    %p116 = pneg %p110
    %p117 = scmp.eq.s32.totalorder %s15, 1
    %p118 = por %p116, %p117
    %p119 = scmp.ne.s32.totalorder %s111, %s114
    %p120 = scmp.eq.s32.totalorder %s15, 0
    %p121 = por %p119, %p120
    %p122 = scmp.ne.s32.totalorder %s111, %s114
    %p123 = scmp.eq.s32.totalorder %s20, 1
    %p124 = por %p122, %p123
    %p125 = scmp.ne.s32.totalorder %s114, %s115
    %p126 = scmp.eq.s32.totalorder %s20, 0
    %p127 = por %p125, %p126
    %p128 = scmp.ne.s32.totalorder %s114, %s115
    %p129 = scmp.eq.s32.totalorder %s21, 1
    %p130 = por %p128, %p129
    %p132 = scmp.ne.s32.totalorder %s115, %s131
    %p133 = scmp.eq.s32.totalorder %s21, 0
    %p134 = por %p132, %p133
    %s136 = sadd.s32 %s135, 1
    %p139 = scmp.eq.s32.totalorder %s15, 1
    %p140 = scmp.ne.s32.totalorder %s135, %s137
    %p141 = scmp.eq.s32.totalorder %s15, 0
    %p142 = por %p140, %p141
    %p143 = scmp.ne.s32.totalorder %s135, %s137
    %p144 = scmp.eq.s32.totalorder %s20, 1
    %p145 = por %p143, %p144
    %p146 = scmp.ne.s32.totalorder %s137, %s138
    %p147 = scmp.eq.s32.totalorder %s20, 0
    %p148 = por %p146, %p147
    %p149 = scmp.ne.s32.totalorder %s137, %s138
    %p150 = scmp.eq.s32.totalorder %s21, 1
    %p151 = por %p149, %p150
    %p153 = scmp.ne.s32.totalorder %s138, %s152
    %p154 = scmp.eq.s32.totalorder %s21, 0
    %p155 = por %p153, %p154
    %s157 = sadd.s32 %s156, 1
    %p160 = scmp.eq.s32.totalorder %s15, 1
    %p161 = scmp.ne.s32.totalorder %s156, %s158
    %p162 = scmp.eq.s32.totalorder %s15, 0
    %p163 = por %p161, %p162
    %p164 = scmp.ne.s32.totalorder %s156, %s158
    %p165 = scmp.eq.s32.totalorder %s20, 1
    %p166 = por %p164, %p165
    %p167 = scmp.ne.s32.totalorder %s158, %s159
    %p168 = scmp.eq.s32.totalorder %s20, 0
    %p169 = por %p167, %p168
    %p170 = scmp.ne.s32.totalorder %s158, %s159
    %p171 = scmp.eq.s32.totalorder %s21, 1
    %p172 = por %p170, %p171
    %p174 = scmp.ne.s32.totalorder %s159, %s173
    %p175 = scmp.eq.s32.totalorder %s21, 0
    %p176 = por %p174, %p175
    %s178 = sadd.s32 %s177, 1
    %p181 = scmp.eq.s32.totalorder %s15, 1
    %p182 = scmp.ne.s32.totalorder %s177, %s179
    %p183 = scmp.eq.s32.totalorder %s15, 0
    %p184 = por %p182, %p183
    %p185 = scmp.ne.s32.totalorder %s177, %s179
    %p186 = scmp.eq.s32.totalorder %s20, 1
    %p187 = por %p185, %p186
    %p188 = scmp.ne.s32.totalorder %s179, %s180
    %p189 = scmp.eq.s32.totalorder %s20, 0
    %p190 = por %p188, %p189
    %p191 = scmp.ne.s32.totalorder %s179, %s180
    %p192 = scmp.eq.s32.totalorder %s21, 1
    %p193 = por %p191, %p192
    %p195 = scmp.ne.s32.totalorder %s180, %s194
    %p196 = scmp.eq.s32.totalorder %s21, 0
    %p197 = por %p195, %p196
    %s198 = ssub.s32 %s22, %s34
    %s199 = ssub.s32 %s23, %s30
    %s200 = sor.u32 %s198, %s199
    %p201 = scmp.eq.s32.totalorder %s200, 0
    %s203 = sadd.s32 %s202, 1
    %s204 = scalar_select %p201, %s202, %s203
    %p207 = pneg %p201
    %p208 = scmp.eq.s32.totalorder %s15, 1
    %p209 = por %p207, %p208
    %p210 = scmp.ne.s32.totalorder %s202, %s205
    %p211 = scmp.eq.s32.totalorder %s15, 0
    %p212 = por %p210, %p211
    %p213 = scmp.ne.s32.totalorder %s202, %s205
    %p214 = scmp.eq.s32.totalorder %s20, 1
    %p215 = por %p213, %p214
    %p216 = scmp.ne.s32.totalorder %s205, %s206
    %p217 = scmp.eq.s32.totalorder %s20, 0
    %p218 = por %p216, %p217
    %p219 = scmp.ne.s32.totalorder %s205, %s206
    %p220 = scmp.eq.s32.totalorder %s21, 1
    %p221 = por %p219, %p220
    %p223 = scmp.ne.s32.totalorder %s206, %s222
    %p224 = scmp.eq.s32.totalorder %s21, 0
    %p225 = por %p223, %p224
    %s226 = ssub.s32 %s22, %s34
    %s227 = ssub.s32 %s23, %s30
    %s228 = sor.u32 %s226, %s227
    %p229 = scmp.eq.s32.totalorder %s228, 0
    %s231 = sadd.s32 %s230, 1
    %s232 = scalar_select %p229, %s230, %s231
    %p235 = pneg %p229
    %p236 = scmp.eq.s32.totalorder %s15, 1
    %p237 = por %p235, %p236
    %p238 = scmp.ne.s32.totalorder %s230, %s233
    %p239 = scmp.eq.s32.totalorder %s15, 0
    %p240 = por %p238, %p239
    %p241 = scmp.ne.s32.totalorder %s230, %s233
    %p242 = scmp.eq.s32.totalorder %s20, 1
    %p243 = por %p241, %p242
    %p244 = scmp.ne.s32.totalorder %s233, %s234
    %p245 = scmp.eq.s32.totalorder %s20, 0
    %p246 = por %p244, %p245
    %p247 = scmp.ne.s32.totalorder %s233, %s234
    %p248 = scmp.eq.s32.totalorder %s21, 1
    %p249 = por %p247, %p248
    %p251 = scmp.ne.s32.totalorder %s234, %s250
    %p252 = scmp.eq.s32.totalorder %s21, 0
    %p253 = por %p251, %p252
    %s254 = ssub.s32 %s22, %s34
    %s255 = ssub.s32 %s23, %s30
    %s256 = sor.u32 %s254, %s255
    %p257 = scmp.eq.s32.totalorder %s256, 0
    %s259 = sadd.s32 %s258, 1
    %s260 = scalar_select %p257, %s258, %s259
    %p263 = pneg %p257
    %p264 = scmp.eq.s32.totalorder %s15, 1
    %p265 = por %p263, %p264
    %p266 = scmp.ne.s32.totalorder %s258, %s261
    %p267 = scmp.eq.s32.totalorder %s15, 0
    %p268 = por %p266, %p267
    %p269 = scmp.ne.s32.totalorder %s258, %s261
    %p270 = scmp.eq.s32.totalorder %s20, 1
    %p271 = por %p269, %p270
    %p272 = scmp.ne.s32.totalorder %s261, %s262
    %p273 = scmp.eq.s32.totalorder %s20, 0
    %p274 = por %p272, %p273
    %p275 = scmp.ne.s32.totalorder %s261, %s262
    %p276 = scmp.eq.s32.totalorder %s21, 1
    %p277 = por %p275, %p276
    %p279 = scmp.ne.s32.totalorder %s262, %s278
    %p280 = scmp.eq.s32.totalorder %s21, 0
    %p281 = por %p279, %p280
    %p282 = scmp.le.s32.totalorder 1, %s15
    %p283 = scmp.lt.s32.totalorder %s15, 3
    %p284 = pnand %p282, %p283
    %p285 = pneg %p284
    // Predicated region
    $region9: #{double_conv_forward.3} parent=5 // pred_check
      _
    $region10: #{double_conv_forward.3} parent=5 // pred_check_branch
      %287 = sbr.rel (%p284) target = $region12
    $region11: #{double_conv_forward.3} parent=5 // pred_region
      %s288 = ssub.s32 %s15, 1
      // Predicated region
      $region13: #{double_conv_forward.3} parent=11 // pred_check
        %p289 = pneg %p148
      $region14: #{double_conv_forward.3} parent=11 // pred_check_branch
        %291 = sbr.rel (%p289) target = $region16
      $region15: #{double_conv_forward.3} parent=11 // pred_region
        _
      $region16: #{double_conv_forward.3} parent=11 // pred_fallthru
        _
      // Predicated region
      $region17: #{double_conv_forward.3} parent=11 // pred_check
        %p292 = pneg %p169
      $region18: #{double_conv_forward.3} parent=11 // pred_check_branch
        %294 = sbr.rel (%p292) target = $region20
      $region19: #{double_conv_forward.3} parent=11 // pred_region
        _
      $region20: #{double_conv_forward.3} parent=11 // pred_fallthru
        _
      // Predicated region
      $region21: #{double_conv_forward.3} parent=11 // pred_check
        %p295 = pneg %p190
      $region22: #{double_conv_forward.3} parent=11 // pred_check_branch
        %297 = sbr.rel (%p295) target = $region24
      $region23: #{double_conv_forward.3} parent=11 // pred_region
        _
      $region24: #{double_conv_forward.3} parent=11 // pred_fallthru
        _
    $region12: #{double_conv_forward.3} parent=5 // pred_fallthru
      _
    %p298 = scmp.lt.s32.totalorder %s15, 2
    // Predicated region
    $region25: #{double_conv_forward.3} parent=5 // pred_check
      %p299 = pneg %p298
    $region26: #{double_conv_forward.3} parent=5 // pred_check_branch
      %301 = sbr.rel (%p299) target = $region28
    $region27: #{double_conv_forward.3} parent=5 // pred_region
      // Predicated region
      $region29: #{double_conv_forward.3} parent=27 // pred_check
        %p302 = pneg %p49
      $region30: #{double_conv_forward.3} parent=27 // pred_check_branch
        %304 = sbr.rel (%p302) target = $region32
      $region31: #{double_conv_forward.3} parent=27 // pred_region
        %s305 = smul.u32 16, %s23
        %p306 = scmp.lt.s32.totalorder %s22, 1
        %s307 = scalar_select %p306, %s22, 1
        %p308 = scmp.lt.s32.totalorder %s305, 15
        %s309 = scalar_select %p308, %s305, 15
        %s310 = smul.addr %s309, 2
        %s311 = smul.addr %s307, 32
        %s312 = sadd.s32 %s310, %s311
        %s313 = smul.addr %s312, 4
        %s314 = scalar_lea.vmem %s0, %s313
        %s315 = smul.u32 16, %s23
      $region32: #{double_conv_forward.3} parent=27 // pred_fallthru
        _
      // Predicated region
      $region33: #{double_conv_forward.3} parent=27 // pred_check
        %p316 = pneg %p85
      $region34: #{double_conv_forward.3} parent=27 // pred_check_branch
        %318 = sbr.rel (%p316) target = $region36
      $region35: #{double_conv_forward.3} parent=27 // pred_region
        %s319 = smul.u32 %s23, 16
        %s320 = ssub.s32 %s319, 1
        %p321 = scmp.gt.s32.totalorder %s320, 0
        %s322 = scalar_select %p321, %s320, 0
        %p323 = scmp.lt.s32.totalorder %s22, 1
        %s324 = scalar_select %p323, %s22, 1
        %p325 = scmp.lt.s32.totalorder %s322, 15
        %s326 = scalar_select %p325, %s322, 15
        %s327 = smul.addr %s326, 2
        %s328 = smul.addr %s324, 32
        %s329 = sadd.s32 %s327, %s328
        %s330 = smul.addr %s329, 4
        %s331 = scalar_lea.vmem %s1, %s330
        %s332 = smul.u32 %s23, 16
        %s333 = ssub.s32 %s332, 1
        %p334 = scmp.gt.s32.totalorder %s333, 0
        %s335 = scalar_select %p334, %s333, 0
      $region36: #{double_conv_forward.3} parent=27 // pred_fallthru
        _
      // Predicated region
      $region37: #{double_conv_forward.3} parent=27 // pred_check
        %p336 = pneg %p121
      $region38: #{double_conv_forward.3} parent=27 // pred_check_branch
        %338 = sbr.rel (%p336) target = $region40
      $region39: #{double_conv_forward.3} parent=27 // pred_region
        %s339 = sadd.s32 %s23, 1
        %s340 = smul.u32 %s339, 16
        %p341 = scmp.lt.s32.totalorder %s340, 15
        %s342 = scalar_select %p341, %s340, 15
        %p343 = scmp.lt.s32.totalorder %s22, 1
        %s344 = scalar_select %p343, %s22, 1
        %p345 = scmp.lt.s32.totalorder %s342, 15
        %s346 = scalar_select %p345, %s342, 15
        %s347 = smul.addr %s346, 2
        %s348 = smul.addr %s344, 32
        %s349 = sadd.s32 %s347, %s348
        %s350 = smul.addr %s349, 4
        %s351 = scalar_lea.vmem %s2, %s350
        %s352 = sadd.s32 %s23, 1
        %s353 = smul.u32 %s352, 16
        %p354 = scmp.lt.s32.totalorder %s353, 15
        %s355 = scalar_select %p354, %s353, 15
      $region40: #{double_conv_forward.3} parent=27 // pred_fallthru
        _
    $region28: #{double_conv_forward.3} parent=5 // pred_fallthru
      _
    %p356 = scmp.le.s32.totalorder 1, %s15
    %p357 = scmp.lt.s32.totalorder %s15, 3
    %p358 = pnand %p356, %p357
    %p359 = pneg %p358
    // Predicated region
    $region41: #{double_conv_forward.3} parent=5 // pred_check
      _
    $region42: #{double_conv_forward.3} parent=5 // pred_check_branch
      %361 = sbr.rel (%p358) target = $region44
    $region43: #{double_conv_forward.3} parent=5 // pred_region
      %s362 = ssub.s32 %s15, 1
      %s363 = smul.u32 16, %s25
      %p364 = scmp.lt.s32.totalorder %s24, 1
      %s365 = scalar_select %p364, %s24, 1
      %p366 = scmp.lt.s32.totalorder %s363, 15
      %s367 = scalar_select %p366, %s363, 15
      %s368 = smul.addr %s367, 2
      %s369 = smul.addr %s365, 32
      %s370 = sadd.s32 %s368, %s369
      %s371 = smul.addr %s370, 4
      %s372 = scalar_lea.vmem %s0, %s371
      %p373 = pneg %p55
      %p374 = pneg %p52
      %s375 = smul.u32 %s25, 16
      %s376 = ssub.s32 %s375, 1
      %p377 = scmp.gt.s32.totalorder %s376, 0
      %s378 = scalar_select %p377, %s376, 0
      %p379 = scmp.lt.s32.totalorder %s24, 1
      %s380 = scalar_select %p379, %s24, 1
      %p381 = scmp.lt.s32.totalorder %s378, 15
      %s382 = scalar_select %p381, %s378, 15
      %s383 = smul.addr %s382, 2
      %s384 = smul.addr %s380, 32
      %s385 = sadd.s32 %s383, %s384
      %s386 = smul.addr %s385, 4
      %s387 = scalar_lea.vmem %s1, %s386
      %p388 = pneg %p91
      %p389 = pneg %p88
      %s390 = sadd.s32 %s25, 1
      %s391 = smul.u32 %s390, 16
      %p392 = scmp.lt.s32.totalorder %s391, 15
      %s393 = scalar_select %p392, %s391, 15
      %p394 = scmp.lt.s32.totalorder %s24, 1
      %s395 = scalar_select %p394, %s24, 1
      %p396 = scmp.lt.s32.totalorder %s393, 15
      %s397 = scalar_select %p396, %s393, 15
      %s398 = smul.addr %s397, 2
      %s399 = smul.addr %s395, 32
      %s400 = sadd.s32 %s398, %s399
      %s401 = smul.addr %s400, 4
      %s402 = scalar_lea.vmem %s2, %s401
      %p403 = pneg %p127
      %p404 = pneg %p124
      %p405 = pneg %p148
      %p406 = pneg %p145
      %p407 = pneg %p169
      %p408 = pneg %p166
      %p409 = pneg %p190
      %p410 = pneg %p187
      %p411 = pneg %p218
      %p412 = pneg %p215
      %s413 = smul.u32 16, %s25
      %p414 = scmp.lt.s32.totalorder %s24, 1
      %s415 = scalar_select %p414, %s24, 1
      %p416 = scmp.lt.s32.totalorder %s413, 15
      %s417 = scalar_select %p416, %s413, 15
      %s418 = smul.addr %s417, 2
      %s419 = smul.addr %s415, 32
      %s420 = sadd.s32 %s418, %s419
      %s421 = smul.addr %s420, 4
      %s422 = scalar_lea.vmem %s6, %s421
      %p423 = pneg %p246
      %p424 = pneg %p243
      %p425 = scmp.lt.s32.totalorder %s24, 1
      %s426 = scalar_select %p425, %s24, 1
      %p427 = scmp.lt.s32.totalorder %s25, 0
      %s428 = scalar_select %p427, %s25, 0
      %s429 = sadd.s32 %s428, %s426
      %s430 = scalar_lea.vmem %s7, %s429
      %p431 = pneg %p274
      %p432 = pneg %p271
      %p433 = scmp.lt.s32.totalorder %s24, 1
      %s434 = scalar_select %p433, %s24, 1
      %p435 = scmp.lt.s32.totalorder %s25, 0
      %s436 = scalar_select %p435, %s25, 0
      %s437 = sadd.s32 %s436, %s434
      %s438 = scalar_lea.vmem %s8, %s437
      %s439 = smul.u32 16, %s25
      %p440 = scmp.lt.s32.totalorder %s24, 1
      %s441 = scalar_select %p440, %s24, 1
      %p442 = scmp.lt.s32.totalorder %s439, 15
      %s443 = scalar_select %p442, %s439, 15
      %s444 = smul.addr %s443, 2
      %s445 = smul.addr %s441, 32
      %s446 = sadd.s32 %s444, %s445
      %s447 = smul.addr %s446, 4
      %s448 = scalar_lea.vmem %s0, %s447
      %s449 = smul.u32 16, %s25
      %s450 = smul.u32 %s25, 16
      %s451 = ssub.s32 %s450, 1
      %p452 = scmp.gt.s32.totalorder %s451, 0
      %s453 = scalar_select %p452, %s451, 0
      %p454 = scmp.lt.s32.totalorder %s24, 1
      %s455 = scalar_select %p454, %s24, 1
      %p456 = scmp.lt.s32.totalorder %s453, 15
      %s457 = scalar_select %p456, %s453, 15
      %s458 = smul.addr %s457, 2
      %s459 = smul.addr %s455, 32
      %s460 = sadd.s32 %s458, %s459
      %s461 = smul.addr %s460, 4
      %s462 = scalar_lea.vmem %s1, %s461
      %s463 = smul.u32 %s25, 16
      %s464 = ssub.s32 %s463, 1
      %p465 = scmp.gt.s32.totalorder %s464, 0
      %s466 = scalar_select %p465, %s464, 0
      %s467 = sadd.s32 %s25, 1
      %s468 = smul.u32 %s467, 16
      %p469 = scmp.lt.s32.totalorder %s468, 15
      %s470 = scalar_select %p469, %s468, 15
      %p471 = scmp.lt.s32.totalorder %s24, 1
      %s472 = scalar_select %p471, %s24, 1
      %p473 = scmp.lt.s32.totalorder %s470, 15
      %s474 = scalar_select %p473, %s470, 15
      %s475 = smul.addr %s474, 2
      %s476 = smul.addr %s472, 32
      %s477 = sadd.s32 %s475, %s476
      %s478 = smul.addr %s477, 4
      %s479 = scalar_lea.vmem %s2, %s478
      %s480 = sadd.s32 %s25, 1
      %s481 = smul.u32 %s480, 16
      %p482 = scmp.lt.s32.totalorder %s481, 15
      %s483 = scalar_select %p482, %s481, 15
      %s484 = smul.u32 16, %s25
      %p485 = scmp.lt.s32.totalorder %s24, 1
      %s486 = scalar_select %p485, %s24, 1
      %p487 = scmp.lt.s32.totalorder %s484, 15
      %s488 = scalar_select %p487, %s484, 15
      %s489 = smul.addr %s488, 2
      %s490 = smul.addr %s486, 32
      %s491 = sadd.s32 %s489, %s490
      %s492 = smul.addr %s491, 4
      %s493 = scalar_lea.vmem %s6, %s492
      %s494 = smul.u32 16, %s25
      %p495 = scmp.lt.s32.totalorder %s24, 1
      %s496 = scalar_select %p495, %s24, 1
      %p497 = scmp.lt.s32.totalorder %s25, 0
      %s498 = scalar_select %p497, %s25, 0
      %s499 = sadd.s32 %s498, %s496
      %s500 = scalar_lea.vmem %s7, %s499
      %p501 = scmp.lt.s32.totalorder %s24, 1
      %s502 = scalar_select %p501, %s24, 1
      %p503 = scmp.lt.s32.totalorder %s25, 0
      %s504 = scalar_select %p503, %s25, 0
      %s505 = sadd.s32 %s504, %s502
      %s506 = scalar_lea.vmem %s8, %s505
      %vm508 = vcmask 27648
      %509 = vst.msk [vmem:[#allocation2] sm:$0xf] %vm508, 0
      %510 = vst.msk [vmem:[#allocation2 + $0x10] sm:$0xf] %vm508, 0
      %511 = vst.msk [vmem:[#allocation2 + $0x20] sm:$0xf] %vm508, 0
      %512 = vst.msk [vmem:[#allocation2 + $0x30] sm:$0xf] %vm508, 0
      %513 = vst.msk [vmem:[#allocation2 + $0x40] sm:$0xf] %vm508, 0
      %514 = vst.msk [vmem:[#allocation2 + $0x50] sm:$0xf] %vm508, 0
      %515 = vst.msk [vmem:[#allocation2 + $0x60] sm:$0xf] %vm508, 0
      %516 = vst.msk [vmem:[#allocation2 + $0x70] sm:$0xf] %vm508, 0
      %517 = vst.msk [vmem:[#allocation2 + $0x80] sm:$0xf] %vm508, 0
      %518 = vst.msk [vmem:[#allocation2 + $0x90] sm:$0xf] %vm508, 0
      %519 = vst.msk [vmem:[#allocation2 + $0xa0] sm:$0xf] %vm508, 0
      %520 = vst.msk [vmem:[#allocation2 + $0xb0] sm:$0xf] %vm508, 0
      %521 = vst.msk [vmem:[#allocation2 + $0xc0] sm:$0xf] %vm508, 0
      %522 = vst.msk [vmem:[#allocation2 + $0xd0] sm:$0xf] %vm508, 0
      %523 = vst.msk [vmem:[#allocation2 + $0xe0] sm:$0xf] %vm508, 0
      %524 = vst.msk [vmem:[#allocation2 + $0xf0] sm:$0xf] %vm508, 0
      %525 = vst.msk [vmem:[#allocation2 + $0x100] sm:$0xf] %vm508, 0
      %526 = vst.msk [vmem:[#allocation2 + $0x110] sm:$0xf] %vm508, 0
      %vm527 = vcmask 31748
      %528 = vst.msk [vmem:[#allocation2 + $0x8] sm:$0xf0] %vm527, 0
      %529 = vst.msk [vmem:[#allocation2 + $0x18] sm:$0xf0] %vm527, 0
      %530 = vst.msk [vmem:[#allocation2 + $0x28] sm:$0xf0] %vm527, 0
      %531 = vst.msk [vmem:[#allocation2 + $0x38] sm:$0xf0] %vm527, 0
      %532 = vst.msk [vmem:[#allocation2 + $0x48] sm:$0xf0] %vm527, 0
      %533 = vst.msk [vmem:[#allocation2 + $0x58] sm:$0xf0] %vm527, 0
      %534 = vst.msk [vmem:[#allocation2 + $0x68] sm:$0xf0] %vm527, 0
      %535 = vst.msk [vmem:[#allocation2 + $0x78] sm:$0xf0] %vm527, 0
      %536 = vst.msk [vmem:[#allocation2 + $0x88] sm:$0xf0] %vm527, 0
      %537 = vst.msk [vmem:[#allocation2 + $0x98] sm:$0xf0] %vm527, 0
      %538 = vst.msk [vmem:[#allocation2 + $0xa8] sm:$0xf0] %vm527, 0
      %539 = vst.msk [vmem:[#allocation2 + $0xb8] sm:$0xf0] %vm527, 0
      %540 = vst.msk [vmem:[#allocation2 + $0xc8] sm:$0xf0] %vm527, 0
      %541 = vst.msk [vmem:[#allocation2 + $0xd8] sm:$0xf0] %vm527, 0
      %542 = vst.msk [vmem:[#allocation2 + $0xe8] sm:$0xf0] %vm527, 0
      %543 = vst.msk [vmem:[#allocation2 + $0xf8] sm:$0xf0] %vm527, 0
      %544 = vst.msk [vmem:[#allocation2 + $0x108] sm:$0xf0] %vm527, 0
      %545 = vst.msk [vmem:[#allocation2 + $0x118] sm:$0xf0] %vm527, 0
      %v546 = vld [vmem:[%s448] sm:$0xf]
      %v547 = vld [vmem:[%s448 + $0x4] sm:$0xf]
      %v548 = vld [vmem:[%s448 + $0x8] sm:$0xf]
      %v549 = vld [vmem:[%s448 + $0xc] sm:$0xf]
      %v550 = vld [vmem:[%s448 + $0x10] sm:$0xf]
      %v551 = vld [vmem:[%s448 + $0x14] sm:$0xf]
      %v552 = vld [vmem:[%s448 + $0x18] sm:$0xf]
      %v553 = vld [vmem:[%s448 + $0x1c] sm:$0xf]
      %v554 = vld [vmem:[%s448 + $0x20] sm:$0xf]
      %v555 = vld [vmem:[%s448 + $0x24] sm:$0xf]
      %v556 = vld [vmem:[%s448 + $0x28] sm:$0xf]
      %v557 = vld [vmem:[%s448 + $0x2c] sm:$0xf]
      %v558 = vld [vmem:[%s448 + $0x30] sm:$0xf]
      %v559 = vld [vmem:[%s448 + $0x34] sm:$0xf]
      %v560 = vld [vmem:[%s448 + $0x38] sm:$0xf]
      %v561 = vld [vmem:[%s448 + $0x3c] sm:$0xf]
      %v562 = vld [vmem:[%s448 + $0x40] sm:$0xf]
      %v563 = vld [vmem:[%s448 + $0x44] sm:$0xf]
      %v564 = vld [vmem:[%s448 + $0x48] sm:$0xf]
      %v565 = vld [vmem:[%s448 + $0x4c] sm:$0xf]
      %v566 = vld [vmem:[%s448 + $0x50] sm:$0xf]
      %v567 = vld [vmem:[%s448 + $0x54] sm:$0xf]
      %v568 = vld [vmem:[%s448 + $0x58] sm:$0xf]
      %v569 = vld [vmem:[%s448 + $0x5c] sm:$0xf]
      %v570 = vld [vmem:[%s448 + $0x60] sm:$0xf]
      %v571 = vld [vmem:[%s448 + $0x64] sm:$0xf]
      %v572 = vld [vmem:[%s448 + $0x68] sm:$0xf]
      %v573 = vld [vmem:[%s448 + $0x6c] sm:$0xf]
      %v574 = vld [vmem:[%s448 + $0x70] sm:$0xf]
      %v575 = vld [vmem:[%s448 + $0x74] sm:$0xf]
      %v576 = vld [vmem:[%s448 + $0x78] sm:$0xf]
      %v577 = vld [vmem:[%s448 + $0x7c] sm:$0xf]
      %v610 = vunpack.c.l.b16 %v546
      %v611 = vunpack.c.l.b16 %v547
      %v612 = vunpack.c.l.b16 %v548
      %v613 = vunpack.c.l.b16 %v549
      %v614 = vunpack.c.l.b16 %v550
      %v615 = vunpack.c.l.b16 %v551
      %v616 = vunpack.c.l.b16 %v552
      %v617 = vunpack.c.l.b16 %v553
      %v618 = vunpack.c.l.b16 %v554
      %v619 = vunpack.c.l.b16 %v555
      %v620 = vunpack.c.l.b16 %v556
      %v621 = vunpack.c.l.b16 %v557
      %v622 = vunpack.c.l.b16 %v558
      %v623 = vunpack.c.l.b16 %v559
      %v624 = vunpack.c.l.b16 %v560
      %v625 = vunpack.c.l.b16 %v561
      %v626 = vunpack.c.l.b16 %v562
      %v627 = vunpack.c.l.b16 %v563
      %v628 = vunpack.c.l.b16 %v564
      %v629 = vunpack.c.l.b16 %v565
      %v630 = vunpack.c.l.b16 %v566
      %v631 = vunpack.c.l.b16 %v567
      %v632 = vunpack.c.l.b16 %v568
      %v633 = vunpack.c.l.b16 %v569
      %v634 = vunpack.c.l.b16 %v570
      %v635 = vunpack.c.l.b16 %v571
      %v636 = vunpack.c.l.b16 %v572
      %v637 = vunpack.c.l.b16 %v573
      %v638 = vunpack.c.l.b16 %v574
      %v639 = vunpack.c.l.b16 %v575
      %v640 = vunpack.c.l.b16 %v576
      %v641 = vunpack.c.l.b16 %v577
      %v642 = vpack.c.b16 %v610, %v610
      %v643 = vpack.c.b16 %v611, %v611
      %v644 = vpack.c.b16 %v612, %v612
      %v645 = vpack.c.b16 %v613, %v613
      %v646 = vpack.c.b16 %v614, %v614
      %v647 = vpack.c.b16 %v615, %v615
      %v648 = vpack.c.b16 %v616, %v616
      %v649 = vpack.c.b16 %v617, %v617
      %v650 = vpack.c.b16 %v618, %v618
      %v651 = vpack.c.b16 %v619, %v619
      %v652 = vpack.c.b16 %v620, %v620
      %v653 = vpack.c.b16 %v621, %v621
      %v654 = vpack.c.b16 %v622, %v622
      %v655 = vpack.c.b16 %v623, %v623
      %v656 = vpack.c.b16 %v624, %v624
      %v657 = vpack.c.b16 %v625, %v625
      %v658 = vpack.c.b16 %v626, %v626
      %v659 = vpack.c.b16 %v627, %v627
      %v660 = vpack.c.b16 %v628, %v628
      %v661 = vpack.c.b16 %v629, %v629
      %v662 = vpack.c.b16 %v630, %v630
      %v663 = vpack.c.b16 %v631, %v631
      %v664 = vpack.c.b16 %v632, %v632
      %v665 = vpack.c.b16 %v633, %v633
      %v666 = vpack.c.b16 %v634, %v634
      %v667 = vpack.c.b16 %v635, %v635
      %v668 = vpack.c.b16 %v636, %v636
      %v669 = vpack.c.b16 %v637, %v637
      %v670 = vpack.c.b16 %v638, %v638
      %v671 = vpack.c.b16 %v639, %v639
      %v672 = vpack.c.b16 %v640, %v640
      %v673 = vpack.c.b16 %v641, %v641
      %s706 = scalar_lea.vmem [#allocation2], 16
      %707 = vst.msk [vmem:[%s706] sm:$0xf0] %vm527, %v642
      %708 = vst.msk [vmem:[%s706 + $0x8] sm:$0xf] %vm508, %v643
      %709 = vst.msk [vmem:[%s706 + $0x10] sm:$0xf0] %vm527, %v644
      %710 = vst.msk [vmem:[%s706 + $0x18] sm:$0xf] %vm508, %v645
      %711 = vst.msk [vmem:[%s706 + $0x20] sm:$0xf0] %vm527, %v646
      %712 = vst.msk [vmem:[%s706 + $0x28] sm:$0xf] %vm508, %v647
      %713 = vst.msk [vmem:[%s706 + $0x30] sm:$0xf0] %vm527, %v648
      %714 = vst.msk [vmem:[%s706 + $0x38] sm:$0xf] %vm508, %v649
      %715 = vst.msk [vmem:[%s706 + $0x40] sm:$0xf0] %vm527, %v650
      %716 = vst.msk [vmem:[%s706 + $0x48] sm:$0xf] %vm508, %v651
      %717 = vst.msk [vmem:[%s706 + $0x50] sm:$0xf0] %vm527, %v652
      %718 = vst.msk [vmem:[%s706 + $0x58] sm:$0xf] %vm508, %v653
      %719 = vst.msk [vmem:[%s706 + $0x60] sm:$0xf0] %vm527, %v654
      %720 = vst.msk [vmem:[%s706 + $0x68] sm:$0xf] %vm508, %v655
      %721 = vst.msk [vmem:[%s706 + $0x70] sm:$0xf0] %vm527, %v656
      %722 = vst.msk [vmem:[%s706 + $0x78] sm:$0xf] %vm508, %v657
      %723 = vst.msk [vmem:[%s706 + $0x80] sm:$0xf0] %vm527, %v658
      %724 = vst.msk [vmem:[%s706 + $0x88] sm:$0xf] %vm508, %v659
      %725 = vst.msk [vmem:[%s706 + $0x90] sm:$0xf0] %vm527, %v660
      %726 = vst.msk [vmem:[%s706 + $0x98] sm:$0xf] %vm508, %v661
      %727 = vst.msk [vmem:[%s706 + $0xa0] sm:$0xf0] %vm527, %v662
      %728 = vst.msk [vmem:[%s706 + $0xa8] sm:$0xf] %vm508, %v663
      %729 = vst.msk [vmem:[%s706 + $0xb0] sm:$0xf0] %vm527, %v664
      %730 = vst.msk [vmem:[%s706 + $0xb8] sm:$0xf] %vm508, %v665
      %731 = vst.msk [vmem:[%s706 + $0xc0] sm:$0xf0] %vm527, %v666
      %732 = vst.msk [vmem:[%s706 + $0xc8] sm:$0xf] %vm508, %v667
      %733 = vst.msk [vmem:[%s706 + $0xd0] sm:$0xf0] %vm527, %v668
      %734 = vst.msk [vmem:[%s706 + $0xd8] sm:$0xf] %vm508, %v669
      %735 = vst.msk [vmem:[%s706 + $0xe0] sm:$0xf0] %vm527, %v670
      %736 = vst.msk [vmem:[%s706 + $0xe8] sm:$0xf] %vm508, %v671
      %737 = vst.msk [vmem:[%s706 + $0xf0] sm:$0xf0] %vm527, %v672
      %738 = vst.msk [vmem:[%s706 + $0xf8] sm:$0xf] %vm508, %v673
      %v739 = vld [vmem:[%s462] sm:$0xf]
      %v740 = vld [vmem:[%s462 + $0x4] sm:$0xf]
      %p741 = scmp.gt.s32.totalorder %s25, 0
      %s742 = scalar_select %p741, 1, 0
      %v743 = vstv %s742
      %vm744 = vcmp.eq.s32.totalorder %v743, 1
      %v745 = vsel %vm744, %v739, 0
      %v746 = vsel %vm744, %v740, 0
      %v749 = vunpack.c.l.b16 %v745
      %v750 = vunpack.c.l.b16 %v746
      %v751 = vpack.c.b16 %v749, %v749
      %v752 = vpack.c.b16 %v750, %v750
      %755 = vst.msk [vmem:[#allocation2] sm:$0xf0] %vm527, %v751
      %756 = vst.msk [vmem:[#allocation2 + $0x8] sm:$0xf] %vm508, %v752
      %v757 = vld [vmem:[%s479] sm:$0xf]
      %v758 = vld [vmem:[%s479 + $0x4] sm:$0xf]
      %p759 = scmp.lt.s32.totalorder %s25, 0
      %s760 = scalar_select %p759, 1, 0
      %v761 = vstv %s760
      %vm762 = vcmp.eq.s32.totalorder %v761, 1
      %v763 = vsel %vm762, %v757, 0
      %v764 = vsel %vm762, %v758, 0
      %v767 = vunpack.c.l.b16 %v763
      %v768 = vunpack.c.l.b16 %v764
      %v769 = vpack.c.b16 %v767, %v767
      %v770 = vpack.c.b16 %v768, %v768
      %s773 = scalar_lea.vmem [#allocation2], 272
      %774 = vst.msk [vmem:[%s773] sm:$0xf0] %vm527, %v769
      %775 = vst.msk [vmem:[%s773 + $0x8] sm:$0xf] %vm508, %v770
      %v776 = vld [vmem:[#allocation2] sm:$0xf8]
      %v777 = vld [vmem:[#allocation2 + $0x8] sm:$0xf]
      %v778 = vld [vmem:[#allocation2 + $0x10] sm:$0xf8]
      %v779 = vld [vmem:[#allocation2 + $0x18] sm:$0xf]
      %v780 = vld [vmem:[#allocation2 + $0x20] sm:$0xf8]
      %v781 = vld [vmem:[#allocation2 + $0x28] sm:$0xf]
      %v782 = vld [vmem:[#allocation2 + $0x30] sm:$0xf8]
      %v783 = vld [vmem:[#allocation2 + $0x38] sm:$0xf]
      %v784 = vld [vmem:[#allocation2 + $0x40] sm:$0xf8]
      %v785 = vld [vmem:[#allocation2 + $0x48] sm:$0xf]
      %v786 = vld [vmem:[#allocation2 + $0x50] sm:$0xf8]
      %v787 = vld [vmem:[#allocation2 + $0x58] sm:$0xf]
      %v788 = vld [vmem:[#allocation2 + $0x60] sm:$0xf8]
      %v789 = vld [vmem:[#allocation2 + $0x68] sm:$0xf]
      %v790 = vld [vmem:[#allocation2 + $0x70] sm:$0xf8]
      %v791 = vld [vmem:[#allocation2 + $0x78] sm:$0xf]
      %v792 = vld [vmem:[#allocation2 + $0x80] sm:$0xf8]
      %v793 = vld [vmem:[#allocation2 + $0x88] sm:$0xf]
      %v794 = vld [vmem:[#allocation2 + $0x90] sm:$0xf8]
      %v795 = vld [vmem:[#allocation2 + $0x98] sm:$0xf]
      %v796 = vld [vmem:[#allocation2 + $0xa0] sm:$0xf8]
      %v797 = vld [vmem:[#allocation2 + $0xa8] sm:$0xf]
      %v798 = vld [vmem:[#allocation2 + $0xb0] sm:$0xf8]
      %v799 = vld [vmem:[#allocation2 + $0xb8] sm:$0xf]
      %v800 = vld [vmem:[#allocation2 + $0xc0] sm:$0xf8]
      %v801 = vld [vmem:[#allocation2 + $0xc8] sm:$0xf]
      %v802 = vld [vmem:[#allocation2 + $0xd0] sm:$0xf8]
      %v803 = vld [vmem:[#allocation2 + $0xd8] sm:$0xf]
      %v804 = vld [vmem:[#allocation2 + $0xe0] sm:$0xf8]
      %v805 = vld [vmem:[#allocation2 + $0xe8] sm:$0xf]
      %v806 = vld [vmem:[#allocation2 + $0xf0] sm:$0xf8]
      %v807 = vld [vmem:[#allocation2 + $0xf8] sm:$0xf]
      %vm808 = vsmask.f32 4352
      %v810 = vshrl.u32 %v776, 16
      %v812 = vrot.slane %v810, 3
      %v813 = vshll.u32 %v776, 16
      %v815 = vrot.slane %v813, 4
      %v816 = vor.u32 %v812, %v815
      %v818 = vshrl.u32 %v777, 16
      %v820 = vrot.slane %v818, 3
      %v821 = vshll.u32 %v777, 16
      %v823 = vrot.slane %v821, 4
      %v824 = vor.u32 %v820, %v823
      %v825 = vsel %vm808, %v816, %v824
      %v827 = vshrl.u32 %v778, 16
      %v829 = vrot.slane %v827, 3
      %v830 = vshll.u32 %v778, 16
      %v832 = vrot.slane %v830, 4
      %v833 = vor.u32 %v829, %v832
      %v835 = vshrl.u32 %v779, 16
      %v837 = vrot.slane %v835, 3
      %v838 = vshll.u32 %v779, 16
      %v840 = vrot.slane %v838, 4
      %v841 = vor.u32 %v837, %v840
      %v842 = vsel %vm808, %v833, %v841
      %v844 = vshrl.u32 %v780, 16
      %v846 = vrot.slane %v844, 3
      %v847 = vshll.u32 %v780, 16
      %v849 = vrot.slane %v847, 4
      %v850 = vor.u32 %v846, %v849
      %v852 = vshrl.u32 %v781, 16
      %v854 = vrot.slane %v852, 3
      %v855 = vshll.u32 %v781, 16
      %v857 = vrot.slane %v855, 4
      %v858 = vor.u32 %v854, %v857
      %v859 = vsel %vm808, %v850, %v858
      %v861 = vshrl.u32 %v782, 16
      %v863 = vrot.slane %v861, 3
      %v864 = vshll.u32 %v782, 16
      %v866 = vrot.slane %v864, 4
      %v867 = vor.u32 %v863, %v866
      %v869 = vshrl.u32 %v783, 16
      %v871 = vrot.slane %v869, 3
      %v872 = vshll.u32 %v783, 16
      %v874 = vrot.slane %v872, 4
      %v875 = vor.u32 %v871, %v874
      %v876 = vsel %vm808, %v867, %v875
      %v878 = vshrl.u32 %v784, 16
      %v880 = vrot.slane %v878, 3
      %v881 = vshll.u32 %v784, 16
      %v883 = vrot.slane %v881, 4
      %v884 = vor.u32 %v880, %v883
      %v886 = vshrl.u32 %v785, 16
      %v888 = vrot.slane %v886, 3
      %v889 = vshll.u32 %v785, 16
      %v891 = vrot.slane %v889, 4
      %v892 = vor.u32 %v888, %v891
      %v893 = vsel %vm808, %v884, %v892
      %v895 = vshrl.u32 %v786, 16
      %v897 = vrot.slane %v895, 3
      %v898 = vshll.u32 %v786, 16
      %v900 = vrot.slane %v898, 4
      %v901 = vor.u32 %v897, %v900
      %v903 = vshrl.u32 %v787, 16
      %v905 = vrot.slane %v903, 3
      %v906 = vshll.u32 %v787, 16
      %v908 = vrot.slane %v906, 4
      %v909 = vor.u32 %v905, %v908
      %v910 = vsel %vm808, %v901, %v909
      %v912 = vshrl.u32 %v788, 16
      %v914 = vrot.slane %v912, 3
      %v915 = vshll.u32 %v788, 16
      %v917 = vrot.slane %v915, 4
      %v918 = vor.u32 %v914, %v917
      %v920 = vshrl.u32 %v789, 16
      %v922 = vrot.slane %v920, 3
      %v923 = vshll.u32 %v789, 16
      %v925 = vrot.slane %v923, 4
      %v926 = vor.u32 %v922, %v925
      %v927 = vsel %vm808, %v918, %v926
      %v929 = vshrl.u32 %v790, 16
      %v931 = vrot.slane %v929, 3
      %v932 = vshll.u32 %v790, 16
      %v934 = vrot.slane %v932, 4
      %v935 = vor.u32 %v931, %v934
      %v937 = vshrl.u32 %v791, 16
      %v939 = vrot.slane %v937, 3
      %v940 = vshll.u32 %v791, 16
      %v942 = vrot.slane %v940, 4
      %v943 = vor.u32 %v939, %v942
      %v944 = vsel %vm808, %v935, %v943
      %v946 = vshrl.u32 %v792, 16
      %v948 = vrot.slane %v946, 3
      %v949 = vshll.u32 %v792, 16
      %v951 = vrot.slane %v949, 4
      %v952 = vor.u32 %v948, %v951
      %v954 = vshrl.u32 %v793, 16
      %v956 = vrot.slane %v954, 3
      %v957 = vshll.u32 %v793, 16
      %v959 = vrot.slane %v957, 4
      %v960 = vor.u32 %v956, %v959
      %v961 = vsel %vm808, %v952, %v960
      %v963 = vshrl.u32 %v794, 16
      %v965 = vrot.slane %v963, 3
      %v966 = vshll.u32 %v794, 16
      %v968 = vrot.slane %v966, 4
      %v969 = vor.u32 %v965, %v968
      %v971 = vshrl.u32 %v795, 16
      %v973 = vrot.slane %v971, 3
      %v974 = vshll.u32 %v795, 16
      %v976 = vrot.slane %v974, 4
      %v977 = vor.u32 %v973, %v976
      %v978 = vsel %vm808, %v969, %v977
      %v980 = vshrl.u32 %v796, 16
      %v982 = vrot.slane %v980, 3
      %v983 = vshll.u32 %v796, 16
      %v985 = vrot.slane %v983, 4
      %v986 = vor.u32 %v982, %v985
      %v988 = vshrl.u32 %v797, 16
      %v990 = vrot.slane %v988, 3
      %v991 = vshll.u32 %v797, 16
      %v993 = vrot.slane %v991, 4
      %v994 = vor.u32 %v990, %v993
      %v995 = vsel %vm808, %v986, %v994
      %v997 = vshrl.u32 %v798, 16
      %v999 = vrot.slane %v997, 3
      %v1000 = vshll.u32 %v798, 16
      %v1002 = vrot.slane %v1000, 4
      %v1003 = vor.u32 %v999, %v1002
      %v1005 = vshrl.u32 %v799, 16
      %v1007 = vrot.slane %v1005, 3
      %v1008 = vshll.u32 %v799, 16
      %v1010 = vrot.slane %v1008, 4
      %v1011 = vor.u32 %v1007, %v1010
      %v1012 = vsel %vm808, %v1003, %v1011
      %v1014 = vshrl.u32 %v800, 16
      %v1016 = vrot.slane %v1014, 3
      %v1017 = vshll.u32 %v800, 16
      %v1019 = vrot.slane %v1017, 4
      %v1020 = vor.u32 %v1016, %v1019
      %v1022 = vshrl.u32 %v801, 16
      %v1024 = vrot.slane %v1022, 3
      %v1025 = vshll.u32 %v801, 16
      %v1027 = vrot.slane %v1025, 4
      %v1028 = vor.u32 %v1024, %v1027
      %v1029 = vsel %vm808, %v1020, %v1028
      %v1031 = vshrl.u32 %v802, 16
      %v1033 = vrot.slane %v1031, 3
      %v1034 = vshll.u32 %v802, 16
      %v1036 = vrot.slane %v1034, 4
      %v1037 = vor.u32 %v1033, %v1036
      %v1039 = vshrl.u32 %v803, 16
      %v1041 = vrot.slane %v1039, 3
      %v1042 = vshll.u32 %v803, 16
      %v1044 = vrot.slane %v1042, 4
      %v1045 = vor.u32 %v1041, %v1044
      %v1046 = vsel %vm808, %v1037, %v1045
      %v1048 = vshrl.u32 %v804, 16
      %v1050 = vrot.slane %v1048, 3
      %v1051 = vshll.u32 %v804, 16
      %v1053 = vrot.slane %v1051, 4
      %v1054 = vor.u32 %v1050, %v1053
      %v1056 = vshrl.u32 %v805, 16
      %v1058 = vrot.slane %v1056, 3
      %v1059 = vshll.u32 %v805, 16
      %v1061 = vrot.slane %v1059, 4
      %v1062 = vor.u32 %v1058, %v1061
      %v1063 = vsel %vm808, %v1054, %v1062
      %v1065 = vshrl.u32 %v806, 16
      %v1067 = vrot.slane %v1065, 3
      %v1068 = vshll.u32 %v806, 16
      %v1070 = vrot.slane %v1068, 4
      %v1071 = vor.u32 %v1067, %v1070
      %v1073 = vshrl.u32 %v807, 16
      %v1075 = vrot.slane %v1073, 3
      %v1076 = vshll.u32 %v807, 16
      %v1078 = vrot.slane %v1076, 4
      %v1079 = vor.u32 %v1075, %v1078
      %v1080 = vsel %vm808, %v1071, %v1079
      %v1081 = vld [vmem:[%s3] sm:$0x3]
      %v1082 = vld [vmem:[#allocation2] sm:$0xf0]
      %v1083 = vld [vmem:[#allocation2 + $0x10] sm:$0xf0]
      %v1084 = vld [vmem:[#allocation2 + $0x20] sm:$0xf0]
      %v1085 = vld [vmem:[#allocation2 + $0x30] sm:$0xf0]
      %v1086 = vld [vmem:[#allocation2 + $0x40] sm:$0xf0]
      %v1087 = vld [vmem:[#allocation2 + $0x50] sm:$0xf0]
      %v1088 = vld [vmem:[#allocation2 + $0x60] sm:$0xf0]
      %v1089 = vld [vmem:[#allocation2 + $0x70] sm:$0xf0]
      %v1090 = vld [vmem:[#allocation2 + $0x80] sm:$0xf0]
      %v1091 = vld [vmem:[#allocation2 + $0x90] sm:$0xf0]
      %v1092 = vld [vmem:[#allocation2 + $0xa0] sm:$0xf0]
      %v1093 = vld [vmem:[#allocation2 + $0xb0] sm:$0xf0]
      %v1094 = vld [vmem:[#allocation2 + $0xc0] sm:$0xf0]
      %v1095 = vld [vmem:[#allocation2 + $0xd0] sm:$0xf0]
      %v1096 = vld [vmem:[#allocation2 + $0xe0] sm:$0xf0]
      %v1097 = vld [vmem:[#allocation2 + $0xf0] sm:$0xf0]
      %vm1130 = vcmask 1043456
      %v1131 = vrot.slane %v1082, 4
      %v1132 = vrot.slane %v777, 4
      %v1133 = vsel %vm1130, %v1131, %v1132
      %v1134 = vrot.slane %v1083, 4
      %v1135 = vrot.slane %v779, 4
      %v1136 = vsel %vm1130, %v1134, %v1135
      %v1137 = vrot.slane %v1084, 4
      %v1138 = vrot.slane %v781, 4
      %v1139 = vsel %vm1130, %v1137, %v1138
      %v1140 = vrot.slane %v1085, 4
      %v1141 = vrot.slane %v783, 4
      %v1142 = vsel %vm1130, %v1140, %v1141
      %v1143 = vrot.slane %v1086, 4
      %v1144 = vrot.slane %v785, 4
      %v1145 = vsel %vm1130, %v1143, %v1144
      %v1146 = vrot.slane %v1087, 4
      %v1147 = vrot.slane %v787, 4
      %v1148 = vsel %vm1130, %v1146, %v1147
      %v1149 = vrot.slane %v1088, 4
      %v1150 = vrot.slane %v789, 4
      %v1151 = vsel %vm1130, %v1149, %v1150
      %v1152 = vrot.slane %v1089, 4
      %v1153 = vrot.slane %v791, 4
      %v1154 = vsel %vm1130, %v1152, %v1153
      %v1155 = vrot.slane %v1090, 4
      %v1156 = vrot.slane %v793, 4
      %v1157 = vsel %vm1130, %v1155, %v1156
      %v1158 = vrot.slane %v1091, 4
      %v1159 = vrot.slane %v795, 4
      %v1160 = vsel %vm1130, %v1158, %v1159
      %v1161 = vrot.slane %v1092, 4
      %v1162 = vrot.slane %v797, 4
      %v1163 = vsel %vm1130, %v1161, %v1162
      %v1164 = vrot.slane %v1093, 4
      %v1165 = vrot.slane %v799, 4
      %v1166 = vsel %vm1130, %v1164, %v1165
      %v1167 = vrot.slane %v1094, 4
      %v1168 = vrot.slane %v801, 4
      %v1169 = vsel %vm1130, %v1167, %v1168
      %v1170 = vrot.slane %v1095, 4
      %v1171 = vrot.slane %v803, 4
      %v1172 = vsel %vm1130, %v1170, %v1171
      %v1173 = vrot.slane %v1096, 4
      %v1174 = vrot.slane %v805, 4
      %v1175 = vsel %vm1130, %v1173, %v1174
      %v1176 = vrot.slane %v1097, 4
      %v1177 = vrot.slane %v807, 4
      %v1178 = vsel %vm1130, %v1176, %v1177
      %s1179 = scalar_lea.vmem %s3, 2
      %v1180 = vld [vmem:[%s1179] sm:$0x3]
      %vm1181 = vcmask 31744
      %v1183 = vsel %vm1181, %v1133, 0
      %v1186 = vsel %vm1181, %v1136, 0
      %v1189 = vsel %vm1181, %v1139, 0
      %v1192 = vsel %vm1181, %v1142, 0
      %v1195 = vsel %vm1181, %v1145, 0
      %v1198 = vsel %vm1181, %v1148, 0
      %v1201 = vsel %vm1181, %v1151, 0
      %v1204 = vsel %vm1181, %v1154, 0
      %v1207 = vsel %vm1181, %v1157, 0
      %v1210 = vsel %vm1181, %v1160, 0
      %v1213 = vsel %vm1181, %v1163, 0
      %v1216 = vsel %vm1181, %v1166, 0
      %v1219 = vsel %vm1181, %v1169, 0
      %v1222 = vsel %vm1181, %v1172, 0
      %v1225 = vsel %vm1181, %v1175, 0
      %v1228 = vsel %vm1181, %v1178, 0
      %vm1230 = vcmask 1041408
      %v1232 = vsel %vm1230, %v1180, 0
      %1234 = vmatprep.subr.bf16.mxu0 0
      %1235 = vmatpush1.bf16.msra.mxu0 %v1232
      %1236 = vmatprep.subr.bf16.mxu0 0
      %1237 = vmatpush1.bf16.msra.mxu0 0
      %1238 = vmatprep.subr.bf16.mxu0 0
      %1239 = vmatpush1.bf16.msra.mxu0 0
      %1240 = vmatprep.subr.bf16.mxu0 0
      %1241 = vmatpush1.bf16.msra.mxu0 0
      %1242 = vmatprep.subr.bf16.mxu0 0
      %1243 = vmatpush1.bf16.msra.mxu0 0
      %1244 = vmatprep.subr.bf16.mxu0 0
      %1245 = vmatpush1.bf16.msra.mxu0 0
      %1246 = vmatprep.subr.bf16.mxu0 0
      %1247 = vmatpush1.bf16.msra.mxu0 0
      %1248 = vmatprep.subr.bf16.mxu0 0
      %1249 = vmatpush1.bf16.msra.mxu0 0
      %1250 = vmatprep.subr.bf16.mxu0 0
      %1251 = vmatpush1.bf16.msra.mxu0 0
      %1252 = vmatprep.subr.bf16.mxu0 0
      %1253 = vmatpush1.bf16.msra.mxu0 0
      %1254 = vmatprep.subr.bf16.mxu0 0
      %1255 = vmatpush1.bf16.msra.mxu0 0
      %1256 = vmatprep.subr.bf16.mxu0 0
      %1257 = vmatpush1.bf16.msra.mxu0 0
      %1258 = vmatprep.subr.bf16.mxu0 0
      %1259 = vmatpush1.bf16.msra.mxu0 0
      %1260 = vmatprep.subr.bf16.mxu0 0
      %1261 = vmatpush1.bf16.msra.mxu0 0
      %1262 = vmatprep.subr.bf16.mxu0 0
      %1263 = vmatpush1.bf16.msra.mxu0 0
      %1264 = vmatprep.subr.bf16.mxu0 0
      %1265 = vmatpush1.bf16.msra.mxu0 0
      %1266 = vmatprep.mubr.bf16.mxu0 0
      %1267 = vmatmul.mubr.bf16.gmra.mrb[0].mxu0 %v1183
      %v1268 = vpop.f32.mrb[0].mxu0
      %v1269 = vadd.f32 0.0, %v1268
      %v1270 = vpop.f32.mrb[0].mxu0
      %v1271 = vpop.f32.mrb[0].mxu0
      %v1272 = vadd.f32 0.0, %v1271
      %v1273 = vpop.f32.mrb[0].mxu0
      %1274 = vmatprep.mubr.bf16.mxu0 0
      %1275 = vmatmul.mubr.bf16.gmra.mrb[0].mxu0 %v1186
      %v1276 = vpop.f32.mrb[0].mxu0
      %v1277 = vadd.f32 0.0, %v1276
      %v1278 = vpop.f32.mrb[0].mxu0
      %v1279 = vpop.f32.mrb[0].mxu0
      %v1280 = vadd.f32 0.0, %v1279
      %v1281 = vpop.f32.mrb[0].mxu0
      %1282 = vmatprep.mubr.bf16.mxu0 0
      %1283 = vmatmul.mubr.bf16.gmra.mrb[0].mxu0 %v1189
      %v1284 = vpop.f32.mrb[0].mxu0
      %v1285 = vadd.f32 0.0, %v1284
      %v1286 = vpop.f32.mrb[0].mxu0
      %v1287 = vpop.f32.mrb[0].mxu0
      %v1288 = vadd.f32 0.0, %v1287
      %v1289 = vpop.f32.mrb[0].mxu0
      %1290 = vmatprep.mubr.bf16.mxu0 0
      %1291 = vmatmul.mubr.bf16.gmra.mrb[0].mxu0 %v1192
      %v1292 = vpop.f32.mrb[0].mxu0
      %v1293 = vadd.f32 0.0, %v1292
      %v1294 = vpop.f32.mrb[0].mxu0
      %v1295 = vpop.f32.mrb[0].mxu0
      %v1296 = vadd.f32 0.0, %v1295
      %v1297 = vpop.f32.mrb[0].mxu0
      %1298 = vmatprep.mubr.bf16.mxu0 0
      %1299 = vmatmul.mubr.bf16.gmra.mrb[0].mxu0 %v1195
      %v1300 = vpop.f32.mrb[0].mxu0
      %v1301 = vadd.f32 0.0, %v1300
      %v1302 = vpop.f32.mrb[0].mxu0
      %v1303 = vpop.f32.mrb[0].mxu0
      %v1304 = vadd.f32 0.0, %v1303
      %v1305 = vpop.f32.mrb[0].mxu0
      %1306 = vmatprep.mubr.bf16.mxu0 0
      %1307 = vmatmul.mubr.bf16.gmra.mrb[0].mxu0 %v1198
      %v1308 = vpop.f32.mrb[0].mxu0
      %v1309 = vadd.f32 0.0, %v1308
      %v1310 = vpop.f32.mrb[0].mxu0
      %v1311 = vpop.f32.mrb[0].mxu0
      %v1312 = vadd.f32 0.0, %v1311
      %v1313 = vpop.f32.mrb[0].mxu0
      %1314 = vmatprep.mubr.bf16.mxu0 0
      %1315 = vmatmul.mubr.bf16.gmra.mrb[0].mxu0 %v1201
      %v1316 = vpop.f32.mrb[0].mxu0
      %v1317 = vadd.f32 0.0, %v1316
      %v1318 = vpop.f32.mrb[0].mxu0
      %v1319 = vpop.f32.mrb[0].mxu0
      %v1320 = vadd.f32 0.0, %v1319
      %v1321 = vpop.f32.mrb[0].mxu0
      %1322 = vmatprep.mubr.bf16.mxu0 0
      %1323 = vmatmul.mubr.bf16.gmra.mrb[0].mxu0 %v1204
      %v1324 = vpop.f32.mrb[0].mxu0
      %v1325 = vadd.f32 0.0, %v1324
      %v1326 = vpop.f32.mrb[0].mxu0
      %v1327 = vpop.f32.mrb[0].mxu0
      %v1328 = vadd.f32 0.0, %v1327
      %v1329 = vpop.f32.mrb[0].mxu0
      %1330 = vmatprep.mubr.bf16.mxu0 0
      %1331 = vmatmul.mubr.bf16.gmra.mrb[0].mxu0 %v1207
      %v1332 = vpop.f32.mrb[0].mxu0
      %v1333 = vadd.f32 0.0, %v1332
      %v1334 = vpop.f32.mrb[0].mxu0
      %v1335 = vpop.f32.mrb[0].mxu0
      %v1336 = vadd.f32 0.0, %v1335
      %v1337 = vpop.f32.mrb[0].mxu0
      %1338 = vmatprep.mubr.bf16.mxu0 0
      %1339 = vmatmul.mubr.bf16.gmra.mrb[0].mxu0 %v1210
      %v1340 = vpop.f32.mrb[0].mxu0
      %v1341 = vadd.f32 0.0, %v1340
      %v1342 = vpop.f32.mrb[0].mxu0
      %v1343 = vpop.f32.mrb[0].mxu0
      %v1344 = vadd.f32 0.0, %v1343
      %v1345 = vpop.f32.mrb[0].mxu0
      %1346 = vmatprep.mubr.bf16.mxu0 0
      %1347 = vmatmul.mubr.bf16.gmra.mrb[0].mxu0 %v1213
      %v1348 = vpop.f32.mrb[0].mxu0
      %v1349 = vadd.f32 0.0, %v1348
      %v1350 = vpop.f32.mrb[0].mxu0
      %v1351 = vpop.f32.mrb[0].mxu0
      %v1352 = vadd.f32 0.0, %v1351
      %v1353 = vpop.f32.mrb[0].mxu0
      %1354 = vmatprep.mubr.bf16.mxu0 0
      %1355 = vmatmul.mubr.bf16.gmra.mrb[0].mxu0 %v1216
      %v1356 = vpop.f32.mrb[0].mxu0
      %v1357 = vadd.f32 0.0, %v1356
      %v1358 = vpop.f32.mrb[0].mxu0
      %v1359 = vpop.f32.mrb[0].mxu0
      %v1360 = vadd.f32 0.0, %v1359
      %v1361 = vpop.f32.mrb[0].mxu0
      %1362 = vmatprep.mubr.bf16.mxu0 0
      %1363 = vmatmul.mubr.bf16.gmra.mrb[0].mxu0 %v1219
      %v1364 = vpop.f32.mrb[0].mxu0
      %v1365 = vadd.f32 0.0, %v1364
      %v1366 = vpop.f32.mrb[0].mxu0
      %v1367 = vpop.f32.mrb[0].mxu0
      %v1368 = vadd.f32 0.0, %v1367
      %v1369 = vpop.f32.mrb[0].mxu0
      %1370 = vmatprep.mubr.bf16.mxu0 0
      %1371 = vmatmul.mubr.bf16.gmra.mrb[0].mxu0 %v1222
      %v1372 = vpop.f32.mrb[0].mxu0
      %v1373 = vadd.f32 0.0, %v1372
      %v1374 = vpop.f32.mrb[0].mxu0
      %v1375 = vpop.f32.mrb[0].mxu0
      %v1376 = vadd.f32 0.0, %v1375
      %v1377 = vpop.f32.mrb[0].mxu0
      %1378 = vmatprep.mubr.bf16.mxu0 0
      %1379 = vmatmul.mubr.bf16.gmra.mrb[0].mxu0 %v1225
      %v1380 = vpop.f32.mrb[0].mxu0
      %v1381 = vadd.f32 0.0, %v1380
      %v1382 = vpop.f32.mrb[0].mxu0
      %v1383 = vpop.f32.mrb[0].mxu0
      %v1384 = vadd.f32 0.0, %v1383
      %v1385 = vpop.f32.mrb[0].mxu0
      %1386 = vmatprep.mubr.bf16.mxu0 0
      %1387 = vmatmul.mubr.bf16.gmra.mrb[0].mxu0 %v1228
      %v1388 = vpop.f32.mrb[0].mxu0
      %v1389 = vadd.f32 0.0, %v1388
      %v1390 = vpop.f32.mrb[0].mxu0
      %v1391 = vpop.f32.mrb[0].mxu0
      %v1392 = vadd.f32 0.0, %v1391
      %v1393 = vpop.f32.mrb[0].mxu0
      %1394 = vdwg.mxu0
      %v1396 = vsel %vm1181, %v825, 0
      %v1399 = vsel %vm1181, %v842, 0
      %v1402 = vsel %vm1181, %v859, 0
      %v1405 = vsel %vm1181, %v876, 0
      %v1408 = vsel %vm1181, %v893, 0
      %v1411 = vsel %vm1181, %v910, 0
      %v1414 = vsel %vm1181, %v927, 0
      %v1417 = vsel %vm1181, %v944, 0
      %v1420 = vsel %vm1181, %v961, 0
      %v1423 = vsel %vm1181, %v978, 0
      %v1426 = vsel %vm1181, %v995, 0
      %v1429 = vsel %vm1181, %v1012, 0
      %v1432 = vsel %vm1181, %v1029, 0
      %v1435 = vsel %vm1181, %v1046, 0
      %v1438 = vsel %vm1181, %v1063, 0
      %v1441 = vsel %vm1181, %v1080, 0
      %v1444 = vsel %vm1230, %v1081, 0
      %1446 = vmatprep.subr.bf16.mxu0 0
      %1447 = vmatpush1.bf16.msra.mxu0 %v1444
      %1448 = vmatprep.subr.bf16.mxu0 0
      %1449 = vmatpush1.bf16.msra.mxu0 0
      %1450 = vmatprep.subr.bf16.mxu0 0
      %1451 = vmatpush1.bf16.msra.mxu0 0
      %1452 = vmatprep.subr.bf16.mxu0 0
      %1453 = vmatpush1.bf16.msra.mxu0 0
      %1454 = vmatprep.subr.bf16.mxu0 0
      %1455 = vmatpush1.bf16.msra.mxu0 0
      %1456 = vmatprep.subr.bf16.mxu0 0
      %1457 = vmatpush1.bf16.msra.mxu0 0
      %1458 = vmatprep.subr.bf16.mxu0 0
      %1459 = vmatpush1.bf16.msra.mxu0 0
      %1460 = vmatprep.subr.bf16.mxu0 0
      %1461 = vmatpush1.bf16.msra.mxu0 0
      %1462 = vmatprep.subr.bf16.mxu0 0
      %1463 = vmatpush1.bf16.msra.mxu0 0
      %1464 = vmatprep.subr.bf16.mxu0 0
      %1465 = vmatpush1.bf16.msra.mxu0 0
      %1466 = vmatprep.subr.bf16.mxu0 0
      %1467 = vmatpush1.bf16.msra.mxu0 0
      %1468 = vmatprep.subr.bf16.mxu0 0
      %1469 = vmatpush1.bf16.msra.mxu0 0
      %1470 = vmatprep.subr.bf16.mxu0 0
      %1471 = vmatpush1.bf16.msra.mxu0 0
      %1472 = vmatprep.subr.bf16.mxu0 0
      %1473 = vmatpush1.bf16.msra.mxu0 0
      %1474 = vmatprep.subr.bf16.mxu0 0
      %1475 = vmatpush1.bf16.msra.mxu0 0
      %1476 = vmatprep.subr.bf16.mxu0 0
      %1477 = vmatpush1.bf16.msra.mxu0 0
      %1478 = vmatprep.mubr.bf16.mxu0 0
      %1479 = vmatmul.mubr.bf16.gmra.mrb[0].mxu0 %v1396
      %v1480 = vpop.f32.mrb[0].mxu0
      %v1481 = vadd.f32 %v1269, %v1480
      %v1482 = vpop.f32.mrb[0].mxu0
      %v1483 = vpop.f32.mrb[0].mxu0
      %v1484 = vadd.f32 %v1272, %v1483
      %v1485 = vpop.f32.mrb[0].mxu0
      %1486 = vmatprep.mubr.bf16.mxu0 0
      %1487 = vmatmul.mubr.bf16.gmra.mrb[0].mxu0 %v1399
      %v1488 = vpop.f32.mrb[0].mxu0
      %v1489 = vadd.f32 %v1277, %v1488
      %v1490 = vpop.f32.mrb[0].mxu0
      %v1491 = vpop.f32.mrb[0].mxu0
      %v1492 = vadd.f32 %v1280, %v1491
      %v1493 = vpop.f32.mrb[0].mxu0
      %1494 = vmatprep.mubr.bf16.mxu0 0
      %1495 = vmatmul.mubr.bf16.gmra.mrb[0].mxu0 %v1402
      %v1496 = vpop.f32.mrb[0].mxu0
      %v1497 = vadd.f32 %v1285, %v1496
      %v1498 = vpop.f32.mrb[0].mxu0
      %v1499 = vpop.f32.mrb[0].mxu0
      %v1500 = vadd.f32 %v1288, %v1499
      %v1501 = vpop.f32.mrb[0].mxu0
      %1502 = vmatprep.mubr.bf16.mxu0 0
      %1503 = vmatmul.mubr.bf16.gmra.mrb[0].mxu0 %v1405
      %v1504 = vpop.f32.mrb[0].mxu0
      %v1505 = vadd.f32 %v1293, %v1504
      %v1506 = vpop.f32.mrb[0].mxu0
      %v1507 = vpop.f32.mrb[0].mxu0
      %v1508 = vadd.f32 %v1296, %v1507
      %v1509 = vpop.f32.mrb[0].mxu0
      %1510 = vmatprep.mubr.bf16.mxu0 0
      %1511 = vmatmul.mubr.bf16.gmra.mrb[0].mxu0 %v1408
      %v1512 = vpop.f32.mrb[0].mxu0
      %v1513 = vadd.f32 %v1301, %v1512
      %v1514 = vpop.f32.mrb[0].mxu0
      %v1515 = vpop.f32.mrb[0].mxu0
      %v1516 = vadd.f32 %v1304, %v1515
      %v1517 = vpop.f32.mrb[0].mxu0
      %1518 = vmatprep.mubr.bf16.mxu0 0
      %1519 = vmatmul.mubr.bf16.gmra.mrb[0].mxu0 %v1411
      %v1520 = vpop.f32.mrb[0].mxu0
      %v1521 = vadd.f32 %v1309, %v1520
      %v1522 = vpop.f32.mrb[0].mxu0
      %v1523 = vpop.f32.mrb[0].mxu0
      %v1524 = vadd.f32 %v1312, %v1523
      %v1525 = vpop.f32.mrb[0].mxu0
      %1526 = vmatprep.mubr.bf16.mxu0 0
      %1527 = vmatmul.mubr.bf16.gmra.mrb[0].mxu0 %v1414
      %v1528 = vpop.f32.mrb[0].mxu0
      %v1529 = vadd.f32 %v1317, %v1528
      %v1530 = vpop.f32.mrb[0].mxu0
      %v1531 = vpop.f32.mrb[0].mxu0
      %v1532 = vadd.f32 %v1320, %v1531
      %v1533 = vpop.f32.mrb[0].mxu0
      %1534 = vmatprep.mubr.bf16.mxu0 0
      %1535 = vmatmul.mubr.bf16.gmra.mrb[0].mxu0 %v1417
      %v1536 = vpop.f32.mrb[0].mxu0
      %v1537 = vadd.f32 %v1325, %v1536
      %v1538 = vpop.f32.mrb[0].mxu0
      %v1539 = vpop.f32.mrb[0].mxu0
      %v1540 = vadd.f32 %v1328, %v1539
      %v1541 = vpop.f32.mrb[0].mxu0
      %1542 = vmatprep.mubr.bf16.mxu0 0
      %1543 = vmatmul.mubr.bf16.gmra.mrb[0].mxu0 %v1420
      %v1544 = vpop.f32.mrb[0].mxu0
      %v1545 = vadd.f32 %v1333, %v1544
      %v1546 = vpop.f32.mrb[0].mxu0
      %v1547 = vpop.f32.mrb[0].mxu0
      %v1548 = vadd.f32 %v1336, %v1547
      %v1549 = vpop.f32.mrb[0].mxu0
      %1550 = vmatprep.mubr.bf16.mxu0 0
      %1551 = vmatmul.mubr.bf16.gmra.mrb[0].mxu0 %v1423
      %v1552 = vpop.f32.mrb[0].mxu0
      %v1553 = vadd.f32 %v1341, %v1552
      %v1554 = vpop.f32.mrb[0].mxu0
      %v1555 = vpop.f32.mrb[0].mxu0
      %v1556 = vadd.f32 %v1344, %v1555
      %v1557 = vpop.f32.mrb[0].mxu0
      %1558 = vmatprep.mubr.bf16.mxu0 0
      %1559 = vmatmul.mubr.bf16.gmra.mrb[0].mxu0 %v1426
      %v1560 = vpop.f32.mrb[0].mxu0
      %v1561 = vadd.f32 %v1349, %v1560
      %v1562 = vpop.f32.mrb[0].mxu0
      %v1563 = vpop.f32.mrb[0].mxu0
      %v1564 = vadd.f32 %v1352, %v1563
      %v1565 = vpop.f32.mrb[0].mxu0
      %1566 = vmatprep.mubr.bf16.mxu0 0
      %1567 = vmatmul.mubr.bf16.gmra.mrb[0].mxu0 %v1429
      %v1568 = vpop.f32.mrb[0].mxu0
      %v1569 = vadd.f32 %v1357, %v1568
      %v1570 = vpop.f32.mrb[0].mxu0
      %v1571 = vpop.f32.mrb[0].mxu0
      %v1572 = vadd.f32 %v1360, %v1571
      %v1573 = vpop.f32.mrb[0].mxu0
      %1574 = vmatprep.mubr.bf16.mxu0 0
      %1575 = vmatmul.mubr.bf16.gmra.mrb[0].mxu0 %v1432
      %v1576 = vpop.f32.mrb[0].mxu0
      %v1577 = vadd.f32 %v1365, %v1576
      %v1578 = vpop.f32.mrb[0].mxu0
      %v1579 = vpop.f32.mrb[0].mxu0
      %v1580 = vadd.f32 %v1368, %v1579
      %v1581 = vpop.f32.mrb[0].mxu0
      %1582 = vmatprep.mubr.bf16.mxu0 0
      %1583 = vmatmul.mubr.bf16.gmra.mrb[0].mxu0 %v1435
      %v1584 = vpop.f32.mrb[0].mxu0
      %v1585 = vadd.f32 %v1373, %v1584
      %v1586 = vpop.f32.mrb[0].mxu0
      %v1587 = vpop.f32.mrb[0].mxu0
      %v1588 = vadd.f32 %v1376, %v1587
      %v1589 = vpop.f32.mrb[0].mxu0
      %1590 = vmatprep.mubr.bf16.mxu0 0
      %1591 = vmatmul.mubr.bf16.gmra.mrb[0].mxu0 %v1438
      %v1592 = vpop.f32.mrb[0].mxu0
      %v1593 = vadd.f32 %v1381, %v1592
      %v1594 = vpop.f32.mrb[0].mxu0
      %v1595 = vpop.f32.mrb[0].mxu0
      %v1596 = vadd.f32 %v1384, %v1595
      %v1597 = vpop.f32.mrb[0].mxu0
      %1598 = vmatprep.mubr.bf16.mxu0 0
      %1599 = vmatmul.mubr.bf16.gmra.mrb[0].mxu0 %v1441
      %v1600 = vpop.f32.mrb[0].mxu0
      %v1601 = vadd.f32 %v1389, %v1600
      %v1602 = vpop.f32.mrb[0].mxu0
      %v1603 = vpop.f32.mrb[0].mxu0
      %v1604 = vadd.f32 %v1392, %v1603
      %v1605 = vpop.f32.mrb[0].mxu0
      %1606 = vdwg.mxu0
      %v1607 = vld [vmem:[#allocation2 + $0x8] sm:$0x1f]
      %v1608 = vld [vmem:[#allocation2 + $0x18] sm:$0x1f]
      %v1609 = vld [vmem:[#allocation2 + $0x28] sm:$0x1f]
      %v1610 = vld [vmem:[#allocation2 + $0x38] sm:$0x1f]
      %v1611 = vld [vmem:[#allocation2 + $0x48] sm:$0x1f]
      %v1612 = vld [vmem:[#allocation2 + $0x58] sm:$0x1f]
      %v1613 = vld [vmem:[#allocation2 + $0x68] sm:$0x1f]
      %v1614 = vld [vmem:[#allocation2 + $0x78] sm:$0x1f]
      %v1615 = vld [vmem:[#allocation2 + $0x88] sm:$0x1f]
      %v1616 = vld [vmem:[#allocation2 + $0x98] sm:$0x1f]
      %v1617 = vld [vmem:[#allocation2 + $0xa8] sm:$0x1f]
      %v1618 = vld [vmem:[#allocation2 + $0xb8] sm:$0x1f]
      %v1619 = vld [vmem:[#allocation2 + $0xc8] sm:$0x1f]
      %v1620 = vld [vmem:[#allocation2 + $0xd8] sm:$0x1f]
      %v1621 = vld [vmem:[#allocation2 + $0xe8] sm:$0x1f]
      %v1622 = vld [vmem:[#allocation2 + $0xf8] sm:$0x1f]
      %vm1623 = vsmask.f32 3328
      %v1625 = vshrl.u32 %v1082, 16
      %v1627 = vrot.slane %v1625, 4
      %v1628 = vshll.u32 %v1082, 16
      %v1630 = vrot.slane %v1628, 5
      %v1631 = vor.u32 %v1627, %v1630
      %v1633 = vshrl.u32 %v1607, 16
      %v1635 = vrot.slane %v1633, 4
      %v1636 = vshll.u32 %v1607, 16
      %v1638 = vrot.slane %v1636, 5
      %v1639 = vor.u32 %v1635, %v1638
      %v1640 = vsel %vm1623, %v1631, %v1639
      %v1642 = vshrl.u32 %v1083, 16
      %v1644 = vrot.slane %v1642, 4
      %v1645 = vshll.u32 %v1083, 16
      %v1647 = vrot.slane %v1645, 5
      %v1648 = vor.u32 %v1644, %v1647
      %v1650 = vshrl.u32 %v1608, 16
      %v1652 = vrot.slane %v1650, 4
      %v1653 = vshll.u32 %v1608, 16
      %v1655 = vrot.slane %v1653, 5
      %v1656 = vor.u32 %v1652, %v1655
      %v1657 = vsel %vm1623, %v1648, %v1656
      %v1659 = vshrl.u32 %v1084, 16
      %v1661 = vrot.slane %v1659, 4
      %v1662 = vshll.u32 %v1084, 16
      %v1664 = vrot.slane %v1662, 5
      %v1665 = vor.u32 %v1661, %v1664
      %v1667 = vshrl.u32 %v1609, 16
      %v1669 = vrot.slane %v1667, 4
      %v1670 = vshll.u32 %v1609, 16
      %v1672 = vrot.slane %v1670, 5
      %v1673 = vor.u32 %v1669, %v1672
      %v1674 = vsel %vm1623, %v1665, %v1673
      %v1676 = vshrl.u32 %v1085, 16
      %v1678 = vrot.slane %v1676, 4
      %v1679 = vshll.u32 %v1085, 16
      %v1681 = vrot.slane %v1679, 5
      %v1682 = vor.u32 %v1678, %v1681
      %v1684 = vshrl.u32 %v1610, 16
      %v1686 = vrot.slane %v1684, 4
      %v1687 = vshll.u32 %v1610, 16
      %v1689 = vrot.slane %v1687, 5
      %v1690 = vor.u32 %v1686, %v1689
      %v1691 = vsel %vm1623, %v1682, %v1690
      %v1693 = vshrl.u32 %v1086, 16
      %v1695 = vrot.slane %v1693, 4
      %v1696 = vshll.u32 %v1086, 16
      %v1698 = vrot.slane %v1696, 5
      %v1699 = vor.u32 %v1695, %v1698
      %v1701 = vshrl.u32 %v1611, 16
      %v1703 = vrot.slane %v1701, 4
      %v1704 = vshll.u32 %v1611, 16
      %v1706 = vrot.slane %v1704, 5
      %v1707 = vor.u32 %v1703, %v1706
      %v1708 = vsel %vm1623, %v1699, %v1707
      %v1710 = vshrl.u32 %v1087, 16
      %v1712 = vrot.slane %v1710, 4
      %v1713 = vshll.u32 %v1087, 16
      %v1715 = vrot.slane %v1713, 5
      %v1716 = vor.u32 %v1712, %v1715
      %v1718 = vshrl.u32 %v1612, 16
      %v1720 = vrot.slane %v1718, 4
      %v1721 = vshll.u32 %v1612, 16
      %v1723 = vrot.slane %v1721, 5
      %v1724 = vor.u32 %v1720, %v1723
      %v1725 = vsel %vm1623, %v1716, %v1724
      %v1727 = vshrl.u32 %v1088, 16
      %v1729 = vrot.slane %v1727, 4
      %v1730 = vshll.u32 %v1088, 16
      %v1732 = vrot.slane %v1730, 5
      %v1733 = vor.u32 %v1729, %v1732
      %v1735 = vshrl.u32 %v1613, 16
      %v1737 = vrot.slane %v1735, 4
      %v1738 = vshll.u32 %v1613, 16
      %v1740 = vrot.slane %v1738, 5
      %v1741 = vor.u32 %v1737, %v1740
      %v1742 = vsel %vm1623, %v1733, %v1741
      %v1744 = vshrl.u32 %v1089, 16
      %v1746 = vrot.slane %v1744, 4
      %v1747 = vshll.u32 %v1089, 16
      %v1749 = vrot.slane %v1747, 5
      %v1750 = vor.u32 %v1746, %v1749
      %v1752 = vshrl.u32 %v1614, 16
      %v1754 = vrot.slane %v1752, 4
      %v1755 = vshll.u32 %v1614, 16
      %v1757 = vrot.slane %v1755, 5
      %v1758 = vor.u32 %v1754, %v1757
      %v1759 = vsel %vm1623, %v1750, %v1758
      %v1761 = vshrl.u32 %v1090, 16
      %v1763 = vrot.slane %v1761, 4
      %v1764 = vshll.u32 %v1090, 16
      %v1766 = vrot.slane %v1764, 5
      %v1767 = vor.u32 %v1763, %v1766
      %v1769 = vshrl.u32 %v1615, 16
      %v1771 = vrot.slane %v1769, 4
      %v1772 = vshll.u32 %v1615, 16
      %v1774 = vrot.slane %v1772, 5
      %v1775 = vor.u32 %v1771, %v1774
      %v1776 = vsel %vm1623, %v1767, %v1775
      %v1778 = vshrl.u32 %v1091, 16
      %v1780 = vrot.slane %v1778, 4
      %v1781 = vshll.u32 %v1091, 16
      %v1783 = vrot.slane %v1781, 5
      %v1784 = vor.u32 %v1780, %v1783
      %v1786 = vshrl.u32 %v1616, 16
      %v1788 = vrot.slane %v1786, 4
      %v1789 = vshll.u32 %v1616, 16
      %v1791 = vrot.slane %v1789, 5
      %v1792 = vor.u32 %v1788, %v1791
      %v1793 = vsel %vm1623, %v1784, %v1792
      %v1795 = vshrl.u32 %v1092, 16
      %v1797 = vrot.slane %v1795, 4
      %v1798 = vshll.u32 %v1092, 16
      %v1800 = vrot.slane %v1798, 5
      %v1801 = vor.u32 %v1797, %v1800
      %v1803 = vshrl.u32 %v1617, 16
      %v1805 = vrot.slane %v1803, 4
      %v1806 = vshll.u32 %v1617, 16
      %v1808 = vrot.slane %v1806, 5
      %v1809 = vor.u32 %v1805, %v1808
      %v1810 = vsel %vm1623, %v1801, %v1809
      %v1812 = vshrl.u32 %v1093, 16
      %v1814 = vrot.slane %v1812, 4
      %v1815 = vshll.u32 %v1093, 16
      %v1817 = vrot.slane %v1815, 5
      %v1818 = vor.u32 %v1814, %v1817
      %v1820 = vshrl.u32 %v1618, 16
      %v1822 = vrot.slane %v1820, 4
      %v1823 = vshll.u32 %v1618, 16
      %v1825 = vrot.slane %v1823, 5
      %v1826 = vor.u32 %v1822, %v1825
      %v1827 = vsel %vm1623, %v1818, %v1826
      %v1829 = vshrl.u32 %v1094, 16
      %v1831 = vrot.slane %v1829, 4
      %v1832 = vshll.u32 %v1094, 16
      %v1834 = vrot.slane %v1832, 5
      %v1835 = vor.u32 %v1831, %v1834
      %v1837 = vshrl.u32 %v1619, 16
      %v1839 = vrot.slane %v1837, 4
      %v1840 = vshll.u32 %v1619, 16
      %v1842 = vrot.slane %v1840, 5
      %v1843 = vor.u32 %v1839, %v1842
      %v1844 = vsel %vm1623, %v1835, %v1843
      %v1846 = vshrl.u32 %v1095, 16
      %v1848 = vrot.slane %v1846, 4
      %v1849 = vshll.u32 %v1095, 16
      %v1851 = vrot.slane %v1849, 5
      %v1852 = vor.u32 %v1848, %v1851
      %v1854 = vshrl.u32 %v1620, 16
      %v1856 = vrot.slane %v1854, 4
      %v1857 = vshll.u32 %v1620, 16
      %v1859 = vrot.slane %v1857, 5
      %v1860 = vor.u32 %v1856, %v1859
      %v1861 = vsel %vm1623, %v1852, %v1860
      %v1863 = vshrl.u32 %v1096, 16
      %v1865 = vrot.slane %v1863, 4
      %v1866 = vshll.u32 %v1096, 16
      %v1868 = vrot.slane %v1866, 5
      %v1869 = vor.u32 %v1865, %v1868
      %v1871 = vshrl.u32 %v1621, 16
      %v1873 = vrot.slane %v1871, 4
      %v1874 = vshll.u32 %v1621, 16
      %v1876 = vrot.slane %v1874, 5
      %v1877 = vor.u32 %v1873, %v1876
      %v1878 = vsel %vm1623, %v1869, %v1877
      %v1880 = vshrl.u32 %v1097, 16
      %v1882 = vrot.slane %v1880, 4
      %v1883 = vshll.u32 %v1097, 16
      %v1885 = vrot.slane %v1883, 5
      %v1886 = vor.u32 %v1882, %v1885
      %v1888 = vshrl.u32 %v1622, 16
      %v1890 = vrot.slane %v1888, 4
      %v1891 = vshll.u32 %v1622, 16
      %v1893 = vrot.slane %v1891, 5
      %v1894 = vor.u32 %v1890, %v1893
      %v1895 = vsel %vm1623, %v1886, %v1894
      %s1896 = scalar_lea.vmem %s3, 4
      %v1897 = vld [vmem:[%s1896] sm:$0x3]
      %v1899 = vsel %vm1181, %v1640, 0
      %v1902 = vsel %vm1181, %v1657, 0
      %v1905 = vsel %vm1181, %v1674, 0
      %v1908 = vsel %vm1181, %v1691, 0
      %v1911 = vsel %vm1181, %v1708, 0
      %v1914 = vsel %vm1181, %v1725, 0
      %v1917 = vsel %vm1181, %v1742, 0
      %v1920 = vsel %vm1181, %v1759, 0
      %v1923 = vsel %vm1181, %v1776, 0
      %v1926 = vsel %vm1181, %v1793, 0
      %v1929 = vsel %vm1181, %v1810, 0
      %v1932 = vsel %vm1181, %v1827, 0
      %v1935 = vsel %vm1181, %v1844, 0
      %v1938 = vsel %vm1181, %v1861, 0
      %v1941 = vsel %vm1181, %v1878, 0
      %v1944 = vsel %vm1181, %v1895, 0
      %v1947 = vsel %vm1230, %v1897, 0
      %1949 = vmatprep.subr.bf16.mxu0 0
      %1950 = vmatpush1.bf16.msra.mxu0 %v1947
      %1951 = vmatprep.subr.bf16.mxu0 0
      %1952 = vmatpush1.bf16.msra.mxu0 0
      %1953 = vmatprep.subr.bf16.mxu0 0
      %1954 = vmatpush1.bf16.msra.mxu0 0
      %1955 = vmatprep.subr.bf16.mxu0 0
      %1956 = vmatpush1.bf16.msra.mxu0 0
      %1957 = vmatprep.subr.bf16.mxu0 0
      %1958 = vmatpush1.bf16.msra.mxu0 0
      %1959 = vmatprep.subr.bf16.mxu0 0
      %1960 = vmatpush1.bf16.msra.mxu0 0
      %1961 = vmatprep.subr.bf16.mxu0 0
      %1962 = vmatpush1.bf16.msra.mxu0 0
      %1963 = vmatprep.subr.bf16.mxu0 0
      %1964 = vmatpush1.bf16.msra.mxu0 0
      %1965 = vmatprep.subr.bf16.mxu0 0
      %1966 = vmatpush1.bf16.msra.mxu0 0
      %1967 = vmatprep.subr.bf16.mxu0 0
      %1968 = vmatpush1.bf16.msra.mxu0 0
      %1969 = vmatprep.subr.bf16.mxu0 0
      %1970 = vmatpush1.bf16.msra.mxu0 0
      %1971 = vmatprep.subr.bf16.mxu0 0
      %1972 = vmatpush1.bf16.msra.mxu0 0
      %1973 = vmatprep.subr.bf16.mxu0 0
      %1974 = vmatpush1.bf16.msra.mxu0 0
      %1975 = vmatprep.subr.bf16.mxu0 0
      %1976 = vmatpush1.bf16.msra.mxu0 0
      %1977 = vmatprep.subr.bf16.mxu0 0
      %1978 = vmatpush1.bf16.msra.mxu0 0
      %1979 = vmatprep.subr.bf16.mxu0 0
      %1980 = vmatpush1.bf16.msra.mxu0 0
      %1981 = vmatprep.mubr.bf16.mxu0 0
      %1982 = vmatmul.mubr.bf16.gmra.mrb[0].mxu0 %v1899
      %v1983 = vpop.f32.mrb[0].mxu0
      %v1984 = vadd.f32 0.0, %v1983
      %v1985 = vpop.f32.mrb[0].mxu0
      %v1986 = vpop.f32.mrb[0].mxu0
      %v1987 = vadd.f32 0.0, %v1986
      %v1988 = vpop.f32.mrb[0].mxu0
      %1989 = vmatprep.mubr.bf16.mxu0 0
      %1990 = vmatmul.mubr.bf16.gmra.mrb[0].mxu0 %v1902
      %v1991 = vpop.f32.mrb[0].mxu0
      %v1992 = vadd.f32 0.0, %v1991
      %v1993 = vpop.f32.mrb[0].mxu0
      %v1994 = vpop.f32.mrb[0].mxu0
      %v1995 = vadd.f32 0.0, %v1994
      %v1996 = vpop.f32.mrb[0].mxu0
      %1997 = vmatprep.mubr.bf16.mxu0 0
      %1998 = vmatmul.mubr.bf16.gmra.mrb[0].mxu0 %v1905
      %v1999 = vpop.f32.mrb[0].mxu0
      %v2000 = vadd.f32 0.0, %v1999
      %v2001 = vpop.f32.mrb[0].mxu0
      %v2002 = vpop.f32.mrb[0].mxu0
      %v2003 = vadd.f32 0.0, %v2002
      %v2004 = vpop.f32.mrb[0].mxu0
      %2005 = vmatprep.mubr.bf16.mxu0 0
      %2006 = vmatmul.mubr.bf16.gmra.mrb[0].mxu0 %v1908
      %v2007 = vpop.f32.mrb[0].mxu0
      %v2008 = vadd.f32 0.0, %v2007
      %v2009 = vpop.f32.mrb[0].mxu0
      %v2010 = vpop.f32.mrb[0].mxu0
      %v2011 = vadd.f32 0.0, %v2010
      %v2012 = vpop.f32.mrb[0].mxu0
      %2013 = vmatprep.mubr.bf16.mxu0 0
      %2014 = vmatmul.mubr.bf16.gmra.mrb[0].mxu0 %v1911
      %v2015 = vpop.f32.mrb[0].mxu0
      %v2016 = vadd.f32 0.0, %v2015
      %v2017 = vpop.f32.mrb[0].mxu0
      %v2018 = vpop.f32.mrb[0].mxu0
      %v2019 = vadd.f32 0.0, %v2018
      %v2020 = vpop.f32.mrb[0].mxu0
      %2021 = vmatprep.mubr.bf16.mxu0 0
      %2022 = vmatmul.mubr.bf16.gmra.mrb[0].mxu0 %v1914
      %v2023 = vpop.f32.mrb[0].mxu0
      %v2024 = vadd.f32 0.0, %v2023
      %v2025 = vpop.f32.mrb[0].mxu0
      %v2026 = vpop.f32.mrb[0].mxu0
      %v2027 = vadd.f32 0.0, %v2026
      %v2028 = vpop.f32.mrb[0].mxu0
      %2029 = vmatprep.mubr.bf16.mxu0 0
      %2030 = vmatmul.mubr.bf16.gmra.mrb[0].mxu0 %v1917
      %v2031 = vpop.f32.mrb[0].mxu0
      %v2032 = vadd.f32 0.0, %v2031
      %v2033 = vpop.f32.mrb[0].mxu0
      %v2034 = vpop.f32.mrb[0].mxu0
      %v2035 = vadd.f32 0.0, %v2034
      %v2036 = vpop.f32.mrb[0].mxu0
      %2037 = vmatprep.mubr.bf16.mxu0 0
      %2038 = vmatmul.mubr.bf16.gmra.mrb[0].mxu0 %v1920
      %v2039 = vpop.f32.mrb[0].mxu0
      %v2040 = vadd.f32 0.0, %v2039
      %v2041 = vpop.f32.mrb[0].mxu0
      %v2042 = vpop.f32.mrb[0].mxu0
      %v2043 = vadd.f32 0.0, %v2042
      %v2044 = vpop.f32.mrb[0].mxu0
      %2045 = vmatprep.mubr.bf16.mxu0 0
      %2046 = vmatmul.mubr.bf16.gmra.mrb[0].mxu0 %v1923
      %v2047 = vpop.f32.mrb[0].mxu0
      %v2048 = vadd.f32 0.0, %v2047
      %v2049 = vpop.f32.mrb[0].mxu0
      %v2050 = vpop.f32.mrb[0].mxu0
      %v2051 = vadd.f32 0.0, %v2050
      %v2052 = vpop.f32.mrb[0].mxu0
      %2053 = vmatprep.mubr.bf16.mxu0 0
      %2054 = vmatmul.mubr.bf16.gmra.mrb[0].mxu0 %v1926
      %v2055 = vpop.f32.mrb[0].mxu0
      %v2056 = vadd.f32 0.0, %v2055
      %v2057 = vpop.f32.mrb[0].mxu0
      %v2058 = vpop.f32.mrb[0].mxu0
      %v2059 = vadd.f32 0.0, %v2058
      %v2060 = vpop.f32.mrb[0].mxu0
      %2061 = vmatprep.mubr.bf16.mxu0 0
      %2062 = vmatmul.mubr.bf16.gmra.mrb[0].mxu0 %v1929
      %v2063 = vpop.f32.mrb[0].mxu0
      %v2064 = vadd.f32 0.0, %v2063
      %v2065 = vpop.f32.mrb[0].mxu0
      %v2066 = vpop.f32.mrb[0].mxu0
      %v2067 = vadd.f32 0.0, %v2066
      %v2068 = vpop.f32.mrb[0].mxu0
      %2069 = vmatprep.mubr.bf16.mxu0 0
      %2070 = vmatmul.mubr.bf16.gmra.mrb[0].mxu0 %v1932
      %v2071 = vpop.f32.mrb[0].mxu0
      %v2072 = vadd.f32 0.0, %v2071
      %v2073 = vpop.f32.mrb[0].mxu0
      %v2074 = vpop.f32.mrb[0].mxu0
      %v2075 = vadd.f32 0.0, %v2074
      %v2076 = vpop.f32.mrb[0].mxu0
      %2077 = vmatprep.mubr.bf16.mxu0 0
      %2078 = vmatmul.mubr.bf16.gmra.mrb[0].mxu0 %v1935
      %v2079 = vpop.f32.mrb[0].mxu0
      %v2080 = vadd.f32 0.0, %v2079
      %v2081 = vpop.f32.mrb[0].mxu0
      %v2082 = vpop.f32.mrb[0].mxu0
      %v2083 = vadd.f32 0.0, %v2082
      %v2084 = vpop.f32.mrb[0].mxu0
      %2085 = vmatprep.mubr.bf16.mxu0 0
      %2086 = vmatmul.mubr.bf16.gmra.mrb[0].mxu0 %v1938
      %v2087 = vpop.f32.mrb[0].mxu0
      %v2088 = vadd.f32 0.0, %v2087
      %v2089 = vpop.f32.mrb[0].mxu0
      %v2090 = vpop.f32.mrb[0].mxu0
      %v2091 = vadd.f32 0.0, %v2090
      %v2092 = vpop.f32.mrb[0].mxu0
      %2093 = vmatprep.mubr.bf16.mxu0 0
      %2094 = vmatmul.mubr.bf16.gmra.mrb[0].mxu0 %v1941
      %v2095 = vpop.f32.mrb[0].mxu0
      %v2096 = vadd.f32 0.0, %v2095
      %v2097 = vpop.f32.mrb[0].mxu0
      %v2098 = vpop.f32.mrb[0].mxu0
      %v2099 = vadd.f32 0.0, %v2098
      %v2100 = vpop.f32.mrb[0].mxu0
      %2101 = vmatprep.mubr.bf16.mxu0 0
      %2102 = vmatmul.mubr.bf16.gmra.mrb[0].mxu0 %v1944
      %v2103 = vpop.f32.mrb[0].mxu0
      %v2104 = vadd.f32 0.0, %v2103
      %v2105 = vpop.f32.mrb[0].mxu0
      %v2106 = vpop.f32.mrb[0].mxu0
      %v2107 = vadd.f32 0.0, %v2106
      %v2108 = vpop.f32.mrb[0].mxu0
      %2109 = vdwg.mxu0
      %v2110 = vadd.f32 %v1481, %v1984
      %v2111 = vadd.f32 %v1484, %v1987
      %v2112 = vadd.f32 %v1489, %v1992
      %v2113 = vadd.f32 %v1492, %v1995
      %v2114 = vadd.f32 %v1497, %v2000
      %v2115 = vadd.f32 %v1500, %v2003
      %v2116 = vadd.f32 %v1505, %v2008
      %v2117 = vadd.f32 %v1508, %v2011
      %v2118 = vadd.f32 %v1513, %v2016
      %v2119 = vadd.f32 %v1516, %v2019
      %v2120 = vadd.f32 %v1521, %v2024
      %v2121 = vadd.f32 %v1524, %v2027
      %v2122 = vadd.f32 %v1529, %v2032
      %v2123 = vadd.f32 %v1532, %v2035
      %v2124 = vadd.f32 %v1537, %v2040
      %v2125 = vadd.f32 %v1540, %v2043
      %v2126 = vadd.f32 %v1545, %v2048
      %v2127 = vadd.f32 %v1548, %v2051
      %v2128 = vadd.f32 %v1553, %v2056
      %v2129 = vadd.f32 %v1556, %v2059
      %v2130 = vadd.f32 %v1561, %v2064
      %v2131 = vadd.f32 %v1564, %v2067
      %v2132 = vadd.f32 %v1569, %v2072
      %v2133 = vadd.f32 %v1572, %v2075
      %v2134 = vadd.f32 %v1577, %v2080
      %v2135 = vadd.f32 %v1580, %v2083
      %v2136 = vadd.f32 %v1585, %v2088
      %v2137 = vadd.f32 %v1588, %v2091
      %v2138 = vadd.f32 %v1593, %v2096
      %v2139 = vadd.f32 %v1596, %v2099
      %v2140 = vadd.f32 %v1601, %v2104
      %v2141 = vadd.f32 %v1604, %v2107
      %v2142 = vld [vmem:[%s706] sm:$0xf8]
      %v2143 = vld [vmem:[%s706 + $0x8] sm:$0xf]
      %v2144 = vld [vmem:[%s706 + $0x10] sm:$0xf8]
      %v2145 = vld [vmem:[%s706 + $0x18] sm:$0xf]
      %v2146 = vld [vmem:[%s706 + $0x20] sm:$0xf8]
      %v2147 = vld [vmem:[%s706 + $0x28] sm:$0xf]
      %v2148 = vld [vmem:[%s706 + $0x30] sm:$0xf8]
      %v2149 = vld [vmem:[%s706 + $0x38] sm:$0xf]
      %v2150 = vld [vmem:[%s706 + $0x40] sm:$0xf8]
      %v2151 = vld [vmem:[%s706 + $0x48] sm:$0xf]
      %v2152 = vld [vmem:[%s706 + $0x50] sm:$0xf8]
      %v2153 = vld [vmem:[%s706 + $0x58] sm:$0xf]
      %v2154 = vld [vmem:[%s706 + $0x60] sm:$0xf8]
      %v2155 = vld [vmem:[%s706 + $0x68] sm:$0xf]
      %v2156 = vld [vmem:[%s706 + $0x70] sm:$0xf8]
      %v2157 = vld [vmem:[%s706 + $0x78] sm:$0xf]
      %v2158 = vld [vmem:[%s706 + $0x80] sm:$0xf8]
      %v2159 = vld [vmem:[%s706 + $0x88] sm:$0xf]
      %v2160 = vld [vmem:[%s706 + $0x90] sm:$0xf8]
      %v2161 = vld [vmem:[%s706 + $0x98] sm:$0xf]
      %v2162 = vld [vmem:[%s706 + $0xa0] sm:$0xf8]
      %v2163 = vld [vmem:[%s706 + $0xa8] sm:$0xf]
      %v2164 = vld [vmem:[%s706 + $0xb0] sm:$0xf8]
      %v2165 = vld [vmem:[%s706 + $0xb8] sm:$0xf]
      %v2166 = vld [vmem:[%s706 + $0xc0] sm:$0xf8]
      %v2167 = vld [vmem:[%s706 + $0xc8] sm:$0xf]
      %v2168 = vld [vmem:[%s706 + $0xd0] sm:$0xf8]
      %v2169 = vld [vmem:[%s706 + $0xd8] sm:$0xf]
      %v2170 = vld [vmem:[%s706 + $0xe0] sm:$0xf8]
      %v2171 = vld [vmem:[%s706 + $0xe8] sm:$0xf]
      %v2172 = vld [vmem:[%s706 + $0xf0] sm:$0xf8]
      %v2173 = vld [vmem:[%s706 + $0xf8] sm:$0xf]
      %v2175 = vshrl.u32 %v2142, 16
      %v2177 = vrot.slane %v2175, 3
      %v2178 = vshll.u32 %v2142, 16
      %v2180 = vrot.slane %v2178, 4
      %v2181 = vor.u32 %v2177, %v2180
      %v2183 = vshrl.u32 %v2143, 16
      %v2185 = vrot.slane %v2183, 3
      %v2186 = vshll.u32 %v2143, 16
      %v2188 = vrot.slane %v2186, 4
      %v2189 = vor.u32 %v2185, %v2188
      %v2190 = vsel %vm808, %v2181, %v2189
      %v2192 = vshrl.u32 %v2144, 16
      %v2194 = vrot.slane %v2192, 3
      %v2195 = vshll.u32 %v2144, 16
      %v2197 = vrot.slane %v2195, 4
      %v2198 = vor.u32 %v2194, %v2197
      %v2200 = vshrl.u32 %v2145, 16
      %v2202 = vrot.slane %v2200, 3
      %v2203 = vshll.u32 %v2145, 16
      %v2205 = vrot.slane %v2203, 4
      %v2206 = vor.u32 %v2202, %v2205
      %v2207 = vsel %vm808, %v2198, %v2206
      %v2209 = vshrl.u32 %v2146, 16
      %v2211 = vrot.slane %v2209, 3
      %v2212 = vshll.u32 %v2146, 16
      %v2214 = vrot.slane %v2212, 4
      %v2215 = vor.u32 %v2211, %v2214
      %v2217 = vshrl.u32 %v2147, 16
      %v2219 = vrot.slane %v2217, 3
      %v2220 = vshll.u32 %v2147, 16
      %v2222 = vrot.slane %v2220, 4
      %v2223 = vor.u32 %v2219, %v2222
      %v2224 = vsel %vm808, %v2215, %v2223
      %v2226 = vshrl.u32 %v2148, 16
      %v2228 = vrot.slane %v2226, 3
      %v2229 = vshll.u32 %v2148, 16
      %v2231 = vrot.slane %v2229, 4
      %v2232 = vor.u32 %v2228, %v2231
      %v2234 = vshrl.u32 %v2149, 16
      %v2236 = vrot.slane %v2234, 3
      %v2237 = vshll.u32 %v2149, 16
      %v2239 = vrot.slane %v2237, 4
      %v2240 = vor.u32 %v2236, %v2239
      %v2241 = vsel %vm808, %v2232, %v2240
      %v2243 = vshrl.u32 %v2150, 16
      %v2245 = vrot.slane %v2243, 3
      %v2246 = vshll.u32 %v2150, 16
      %v2248 = vrot.slane %v2246, 4
      %v2249 = vor.u32 %v2245, %v2248
      %v2251 = vshrl.u32 %v2151, 16
      %v2253 = vrot.slane %v2251, 3
      %v2254 = vshll.u32 %v2151, 16
      %v2256 = vrot.slane %v2254, 4
      %v2257 = vor.u32 %v2253, %v2256
      %v2258 = vsel %vm808, %v2249, %v2257
      %v2260 = vshrl.u32 %v2152, 16
      %v2262 = vrot.slane %v2260, 3
      %v2263 = vshll.u32 %v2152, 16
      %v2265 = vrot.slane %v2263, 4
      %v2266 = vor.u32 %v2262, %v2265
      %v2268 = vshrl.u32 %v2153, 16
      %v2270 = vrot.slane %v2268, 3
      %v2271 = vshll.u32 %v2153, 16
      %v2273 = vrot.slane %v2271, 4
      %v2274 = vor.u32 %v2270, %v2273
      %v2275 = vsel %vm808, %v2266, %v2274
      %v2277 = vshrl.u32 %v2154, 16
      %v2279 = vrot.slane %v2277, 3
      %v2280 = vshll.u32 %v2154, 16
      %v2282 = vrot.slane %v2280, 4
      %v2283 = vor.u32 %v2279, %v2282
      %v2285 = vshrl.u32 %v2155, 16
      %v2287 = vrot.slane %v2285, 3
      %v2288 = vshll.u32 %v2155, 16
      %v2290 = vrot.slane %v2288, 4
      %v2291 = vor.u32 %v2287, %v2290
      %v2292 = vsel %vm808, %v2283, %v2291
      %v2294 = vshrl.u32 %v2156, 16
      %v2296 = vrot.slane %v2294, 3
      %v2297 = vshll.u32 %v2156, 16
      %v2299 = vrot.slane %v2297, 4
      %v2300 = vor.u32 %v2296, %v2299
      %v2302 = vshrl.u32 %v2157, 16
      %v2304 = vrot.slane %v2302, 3
      %v2305 = vshll.u32 %v2157, 16
      %v2307 = vrot.slane %v2305, 4
      %v2308 = vor.u32 %v2304, %v2307
      %v2309 = vsel %vm808, %v2300, %v2308
      %v2311 = vshrl.u32 %v2158, 16
      %v2313 = vrot.slane %v2311, 3
      %v2314 = vshll.u32 %v2158, 16
      %v2316 = vrot.slane %v2314, 4
      %v2317 = vor.u32 %v2313, %v2316
      %v2319 = vshrl.u32 %v2159, 16
      %v2321 = vrot.slane %v2319, 3
      %v2322 = vshll.u32 %v2159, 16
      %v2324 = vrot.slane %v2322, 4
      %v2325 = vor.u32 %v2321, %v2324
      %v2326 = vsel %vm808, %v2317, %v2325
      %v2328 = vshrl.u32 %v2160, 16
      %v2330 = vrot.slane %v2328, 3
      %v2331 = vshll.u32 %v2160, 16
      %v2333 = vrot.slane %v2331, 4
      %v2334 = vor.u32 %v2330, %v2333
      %v2336 = vshrl.u32 %v2161, 16
      %v2338 = vrot.slane %v2336, 3
      %v2339 = vshll.u32 %v2161, 16
      %v2341 = vrot.slane %v2339, 4
      %v2342 = vor.u32 %v2338, %v2341
      %v2343 = vsel %vm808, %v2334, %v2342
      %v2345 = vshrl.u32 %v2162, 16
      %v2347 = vrot.slane %v2345, 3
      %v2348 = vshll.u32 %v2162, 16
      %v2350 = vrot.slane %v2348, 4
      %v2351 = vor.u32 %v2347, %v2350
      %v2353 = vshrl.u32 %v2163, 16
      %v2355 = vrot.slane %v2353, 3
      %v2356 = vshll.u32 %v2163, 16
      %v2358 = vrot.slane %v2356, 4
      %v2359 = vor.u32 %v2355, %v2358
      %v2360 = vsel %vm808, %v2351, %v2359
      %v2362 = vshrl.u32 %v2164, 16
      %v2364 = vrot.slane %v2362, 3
      %v2365 = vshll.u32 %v2164, 16
      %v2367 = vrot.slane %v2365, 4
      %v2368 = vor.u32 %v2364, %v2367
      %v2370 = vshrl.u32 %v2165, 16
      %v2372 = vrot.slane %v2370, 3
      %v2373 = vshll.u32 %v2165, 16
      %v2375 = vrot.slane %v2373, 4
      %v2376 = vor.u32 %v2372, %v2375
      %v2377 = vsel %vm808, %v2368, %v2376
      %v2379 = vshrl.u32 %v2166, 16
      %v2381 = vrot.slane %v2379, 3
      %v2382 = vshll.u32 %v2166, 16
      %v2384 = vrot.slane %v2382, 4
      %v2385 = vor.u32 %v2381, %v2384
      %v2387 = vshrl.u32 %v2167, 16
      %v2389 = vrot.slane %v2387, 3
      %v2390 = vshll.u32 %v2167, 16
      %v2392 = vrot.slane %v2390, 4
      %v2393 = vor.u32 %v2389, %v2392
      %v2394 = vsel %vm808, %v2385, %v2393
      %v2396 = vshrl.u32 %v2168, 16
      %v2398 = vrot.slane %v2396, 3
      %v2399 = vshll.u32 %v2168, 16
      %v2401 = vrot.slane %v2399, 4
      %v2402 = vor.u32 %v2398, %v2401
      %v2404 = vshrl.u32 %v2169, 16
      %v2406 = vrot.slane %v2404, 3
      %v2407 = vshll.u32 %v2169, 16
      %v2409 = vrot.slane %v2407, 4
      %v2410 = vor.u32 %v2406, %v2409
      %v2411 = vsel %vm808, %v2402, %v2410
      %v2413 = vshrl.u32 %v2170, 16
      %v2415 = vrot.slane %v2413, 3
      %v2416 = vshll.u32 %v2170, 16
      %v2418 = vrot.slane %v2416, 4
      %v2419 = vor.u32 %v2415, %v2418
      %v2421 = vshrl.u32 %v2171, 16
      %v2423 = vrot.slane %v2421, 3
      %v2424 = vshll.u32 %v2171, 16
      %v2426 = vrot.slane %v2424, 4
      %v2427 = vor.u32 %v2423, %v2426
      %v2428 = vsel %vm808, %v2419, %v2427
      %v2430 = vshrl.u32 %v2172, 16
      %v2432 = vrot.slane %v2430, 3
      %v2433 = vshll.u32 %v2172, 16
      %v2435 = vrot.slane %v2433, 4
      %v2436 = vor.u32 %v2432, %v2435
      %v2438 = vshrl.u32 %v2173, 16
      %v2440 = vrot.slane %v2438, 3
      %v2441 = vshll.u32 %v2173, 16
      %v2443 = vrot.slane %v2441, 4
      %v2444 = vor.u32 %v2440, %v2443
      %v2445 = vsel %vm808, %v2436, %v2444
      %s2446 = scalar_lea.vmem %s3, 6
      %v2447 = vld [vmem:[%s2446] sm:$0x3]
      %v2449 = vsel %vm1181, %v2190, 0
      %v2452 = vsel %vm1181, %v2207, 0
      %v2455 = vsel %vm1181, %v2224, 0
      %v2458 = vsel %vm1181, %v2241, 0
      %v2461 = vsel %vm1181, %v2258, 0
      %v2464 = vsel %vm1181, %v2275, 0
      %v2467 = vsel %vm1181, %v2292, 0
      %v2470 = vsel %vm1181, %v2309, 0
      %v2473 = vsel %vm1181, %v2326, 0
      %v2476 = vsel %vm1181, %v2343, 0
      %v2479 = vsel %vm1181, %v2360, 0
      %v2482 = vsel %vm1181, %v2377, 0
      %v2485 = vsel %vm1181, %v2394, 0
      %v2488 = vsel %vm1181, %v2411, 0
      %v2491 = vsel %vm1181, %v2428, 0
      %v2494 = vsel %vm1181, %v2445, 0
      %v2497 = vsel %vm1230, %v2447, 0
      %2499 = vmatprep.subr.bf16.mxu0 0
      %2500 = vmatpush1.bf16.msra.mxu0 %v2497
      %2501 = vmatprep.subr.bf16.mxu0 0
      %2502 = vmatpush1.bf16.msra.mxu0 0
      %2503 = vmatprep.subr.bf16.mxu0 0
      %2504 = vmatpush1.bf16.msra.mxu0 0
      %2505 = vmatprep.subr.bf16.mxu0 0
      %2506 = vmatpush1.bf16.msra.mxu0 0
      %2507 = vmatprep.subr.bf16.mxu0 0
      %2508 = vmatpush1.bf16.msra.mxu0 0
      %2509 = vmatprep.subr.bf16.mxu0 0
      %2510 = vmatpush1.bf16.msra.mxu0 0
      %2511 = vmatprep.subr.bf16.mxu0 0
      %2512 = vmatpush1.bf16.msra.mxu0 0
      %2513 = vmatprep.subr.bf16.mxu0 0
      %2514 = vmatpush1.bf16.msra.mxu0 0
      %2515 = vmatprep.subr.bf16.mxu0 0
      %2516 = vmatpush1.bf16.msra.mxu0 0
      %2517 = vmatprep.subr.bf16.mxu0 0
      %2518 = vmatpush1.bf16.msra.mxu0 0
      %2519 = vmatprep.subr.bf16.mxu0 0
      %2520 = vmatpush1.bf16.msra.mxu0 0
      %2521 = vmatprep.subr.bf16.mxu0 0
      %2522 = vmatpush1.bf16.msra.mxu0 0
      %2523 = vmatprep.subr.bf16.mxu0 0
      %2524 = vmatpush1.bf16.msra.mxu0 0
      %2525 = vmatprep.subr.bf16.mxu0 0
      %2526 = vmatpush1.bf16.msra.mxu0 0
      %2527 = vmatprep.subr.bf16.mxu0 0
      %2528 = vmatpush1.bf16.msra.mxu0 0
      %2529 = vmatprep.subr.bf16.mxu0 0
      %2530 = vmatpush1.bf16.msra.mxu0 0
      %2531 = vmatprep.mubr.bf16.mxu0 0
      %2532 = vmatmul.mubr.bf16.gmra.mrb[0].mxu0 %v2449
      %v2533 = vpop.f32.mrb[0].mxu0
      %v2534 = vadd.f32 0.0, %v2533
      %v2535 = vpop.f32.mrb[0].mxu0
      %v2536 = vpop.f32.mrb[0].mxu0
      %v2537 = vadd.f32 0.0, %v2536
      %v2538 = vpop.f32.mrb[0].mxu0
      %2539 = vmatprep.mubr.bf16.mxu0 0
      %2540 = vmatmul.mubr.bf16.gmra.mrb[0].mxu0 %v2452
      %v2541 = vpop.f32.mrb[0].mxu0
      %v2542 = vadd.f32 0.0, %v2541
      %v2543 = vpop.f32.mrb[0].mxu0
      %v2544 = vpop.f32.mrb[0].mxu0
      %v2545 = vadd.f32 0.0, %v2544
      %v2546 = vpop.f32.mrb[0].mxu0
      %2547 = vmatprep.mubr.bf16.mxu0 0
      %2548 = vmatmul.mubr.bf16.gmra.mrb[0].mxu0 %v2455
      %v2549 = vpop.f32.mrb[0].mxu0
      %v2550 = vadd.f32 0.0, %v2549
      %v2551 = vpop.f32.mrb[0].mxu0
      %v2552 = vpop.f32.mrb[0].mxu0
      %v2553 = vadd.f32 0.0, %v2552
      %v2554 = vpop.f32.mrb[0].mxu0
      %2555 = vmatprep.mubr.bf16.mxu0 0
      %2556 = vmatmul.mubr.bf16.gmra.mrb[0].mxu0 %v2458
      %v2557 = vpop.f32.mrb[0].mxu0
      %v2558 = vadd.f32 0.0, %v2557
      %v2559 = vpop.f32.mrb[0].mxu0
      %v2560 = vpop.f32.mrb[0].mxu0
      %v2561 = vadd.f32 0.0, %v2560
      %v2562 = vpop.f32.mrb[0].mxu0
      %2563 = vmatprep.mubr.bf16.mxu0 0
      %2564 = vmatmul.mubr.bf16.gmra.mrb[0].mxu0 %v2461
      %v2565 = vpop.f32.mrb[0].mxu0
      %v2566 = vadd.f32 0.0, %v2565
      %v2567 = vpop.f32.mrb[0].mxu0
      %v2568 = vpop.f32.mrb[0].mxu0
      %v2569 = vadd.f32 0.0, %v2568
      %v2570 = vpop.f32.mrb[0].mxu0
      %2571 = vmatprep.mubr.bf16.mxu0 0
      %2572 = vmatmul.mubr.bf16.gmra.mrb[0].mxu0 %v2464
      %v2573 = vpop.f32.mrb[0].mxu0
      %v2574 = vadd.f32 0.0, %v2573
      %v2575 = vpop.f32.mrb[0].mxu0
      %v2576 = vpop.f32.mrb[0].mxu0
      %v2577 = vadd.f32 0.0, %v2576
      %v2578 = vpop.f32.mrb[0].mxu0
      %2579 = vmatprep.mubr.bf16.mxu0 0
      %2580 = vmatmul.mubr.bf16.gmra.mrb[0].mxu0 %v2467
      %v2581 = vpop.f32.mrb[0].mxu0
      %v2582 = vadd.f32 0.0, %v2581
      %v2583 = vpop.f32.mrb[0].mxu0
      %v2584 = vpop.f32.mrb[0].mxu0
      %v2585 = vadd.f32 0.0, %v2584
      %v2586 = vpop.f32.mrb[0].mxu0
      %2587 = vmatprep.mubr.bf16.mxu0 0
      %2588 = vmatmul.mubr.bf16.gmra.mrb[0].mxu0 %v2470
      %v2589 = vpop.f32.mrb[0].mxu0
      %v2590 = vadd.f32 0.0, %v2589
      %v2591 = vpop.f32.mrb[0].mxu0
      %v2592 = vpop.f32.mrb[0].mxu0
      %v2593 = vadd.f32 0.0, %v2592
      %v2594 = vpop.f32.mrb[0].mxu0
      %2595 = vmatprep.mubr.bf16.mxu0 0
      %2596 = vmatmul.mubr.bf16.gmra.mrb[0].mxu0 %v2473
      %v2597 = vpop.f32.mrb[0].mxu0
      %v2598 = vadd.f32 0.0, %v2597
      %v2599 = vpop.f32.mrb[0].mxu0
      %v2600 = vpop.f32.mrb[0].mxu0
      %v2601 = vadd.f32 0.0, %v2600
      %v2602 = vpop.f32.mrb[0].mxu0
      %2603 = vmatprep.mubr.bf16.mxu0 0
      %2604 = vmatmul.mubr.bf16.gmra.mrb[0].mxu0 %v2476
      %v2605 = vpop.f32.mrb[0].mxu0
      %v2606 = vadd.f32 0.0, %v2605
      %v2607 = vpop.f32.mrb[0].mxu0
      %v2608 = vpop.f32.mrb[0].mxu0
      %v2609 = vadd.f32 0.0, %v2608
      %v2610 = vpop.f32.mrb[0].mxu0
      %2611 = vmatprep.mubr.bf16.mxu0 0
      %2612 = vmatmul.mubr.bf16.gmra.mrb[0].mxu0 %v2479
      %v2613 = vpop.f32.mrb[0].mxu0
      %v2614 = vadd.f32 0.0, %v2613
      %v2615 = vpop.f32.mrb[0].mxu0
      %v2616 = vpop.f32.mrb[0].mxu0
      %v2617 = vadd.f32 0.0, %v2616
      %v2618 = vpop.f32.mrb[0].mxu0
      %2619 = vmatprep.mubr.bf16.mxu0 0
      %2620 = vmatmul.mubr.bf16.gmra.mrb[0].mxu0 %v2482
      %v2621 = vpop.f32.mrb[0].mxu0
      %v2622 = vadd.f32 0.0, %v2621
      %v2623 = vpop.f32.mrb[0].mxu0
      %v2624 = vpop.f32.mrb[0].mxu0
      %v2625 = vadd.f32 0.0, %v2624
      %v2626 = vpop.f32.mrb[0].mxu0
      %2627 = vmatprep.mubr.bf16.mxu0 0
      %2628 = vmatmul.mubr.bf16.gmra.mrb[0].mxu0 %v2485
      %v2629 = vpop.f32.mrb[0].mxu0
      %v2630 = vadd.f32 0.0, %v2629
      %v2631 = vpop.f32.mrb[0].mxu0
      %v2632 = vpop.f32.mrb[0].mxu0
      %v2633 = vadd.f32 0.0, %v2632
      %v2634 = vpop.f32.mrb[0].mxu0
      %2635 = vmatprep.mubr.bf16.mxu0 0
      %2636 = vmatmul.mubr.bf16.gmra.mrb[0].mxu0 %v2488
      %v2637 = vpop.f32.mrb[0].mxu0
      %v2638 = vadd.f32 0.0, %v2637
      %v2639 = vpop.f32.mrb[0].mxu0
      %v2640 = vpop.f32.mrb[0].mxu0
      %v2641 = vadd.f32 0.0, %v2640
      %v2642 = vpop.f32.mrb[0].mxu0
      %2643 = vmatprep.mubr.bf16.mxu0 0
      %2644 = vmatmul.mubr.bf16.gmra.mrb[0].mxu0 %v2491
      %v2645 = vpop.f32.mrb[0].mxu0
      %v2646 = vadd.f32 0.0, %v2645
      %v2647 = vpop.f32.mrb[0].mxu0
      %v2648 = vpop.f32.mrb[0].mxu0
      %v2649 = vadd.f32 0.0, %v2648
      %v2650 = vpop.f32.mrb[0].mxu0
      %2651 = vmatprep.mubr.bf16.mxu0 0
      %2652 = vmatmul.mubr.bf16.gmra.mrb[0].mxu0 %v2494
      %v2653 = vpop.f32.mrb[0].mxu0
      %v2654 = vadd.f32 0.0, %v2653
      %v2655 = vpop.f32.mrb[0].mxu0
      %v2656 = vpop.f32.mrb[0].mxu0
      %v2657 = vadd.f32 0.0, %v2656
      %v2658 = vpop.f32.mrb[0].mxu0
      %2659 = vdwg.mxu0
      %v2660 = vadd.f32 %v2110, %v2534
      %v2661 = vadd.f32 %v2111, %v2537
      %v2662 = vadd.f32 %v2112, %v2542
      %v2663 = vadd.f32 %v2113, %v2545
      %v2664 = vadd.f32 %v2114, %v2550
      %v2665 = vadd.f32 %v2115, %v2553
      %v2666 = vadd.f32 %v2116, %v2558
      %v2667 = vadd.f32 %v2117, %v2561
      %v2668 = vadd.f32 %v2118, %v2566
      %v2669 = vadd.f32 %v2119, %v2569
      %v2670 = vadd.f32 %v2120, %v2574
      %v2671 = vadd.f32 %v2121, %v2577
      %v2672 = vadd.f32 %v2122, %v2582
      %v2673 = vadd.f32 %v2123, %v2585
      %v2674 = vadd.f32 %v2124, %v2590
      %v2675 = vadd.f32 %v2125, %v2593
      %v2676 = vadd.f32 %v2126, %v2598
      %v2677 = vadd.f32 %v2127, %v2601
      %v2678 = vadd.f32 %v2128, %v2606
      %v2679 = vadd.f32 %v2129, %v2609
      %v2680 = vadd.f32 %v2130, %v2614
      %v2681 = vadd.f32 %v2131, %v2617
      %v2682 = vadd.f32 %v2132, %v2622
      %v2683 = vadd.f32 %v2133, %v2625
      %v2684 = vadd.f32 %v2134, %v2630
      %v2685 = vadd.f32 %v2135, %v2633
      %v2686 = vadd.f32 %v2136, %v2638
      %v2687 = vadd.f32 %v2137, %v2641
      %v2688 = vadd.f32 %v2138, %v2646
      %v2689 = vadd.f32 %v2139, %v2649
      %v2690 = vadd.f32 %v2140, %v2654
      %v2691 = vadd.f32 %v2141, %v2657
      %v2692 = vld [vmem:[%s706] sm:$0xf0]
      %v2693 = vld [vmem:[%s706 + $0x10] sm:$0xf0]
      %v2694 = vld [vmem:[%s706 + $0x20] sm:$0xf0]
      %v2695 = vld [vmem:[%s706 + $0x30] sm:$0xf0]
      %v2696 = vld [vmem:[%s706 + $0x40] sm:$0xf0]
      %v2697 = vld [vmem:[%s706 + $0x50] sm:$0xf0]
      %v2698 = vld [vmem:[%s706 + $0x60] sm:$0xf0]
      %v2699 = vld [vmem:[%s706 + $0x70] sm:$0xf0]
      %v2700 = vld [vmem:[%s706 + $0x80] sm:$0xf0]
      %v2701 = vld [vmem:[%s706 + $0x90] sm:$0xf0]
      %v2702 = vld [vmem:[%s706 + $0xa0] sm:$0xf0]
      %v2703 = vld [vmem:[%s706 + $0xb0] sm:$0xf0]
      %v2704 = vld [vmem:[%s706 + $0xc0] sm:$0xf0]
      %v2705 = vld [vmem:[%s706 + $0xd0] sm:$0xf0]
      %v2706 = vld [vmem:[%s706 + $0xe0] sm:$0xf0]
      %v2707 = vld [vmem:[%s706 + $0xf0] sm:$0xf0]
      %v2740 = vrot.slane %v2692, 4
      %v2741 = vrot.slane %v2143, 4
      %v2742 = vsel %vm1130, %v2740, %v2741
      %v2743 = vrot.slane %v2693, 4
      %v2744 = vrot.slane %v2145, 4
      %v2745 = vsel %vm1130, %v2743, %v2744
      %v2746 = vrot.slane %v2694, 4
      %v2747 = vrot.slane %v2147, 4
      %v2748 = vsel %vm1130, %v2746, %v2747
      %v2749 = vrot.slane %v2695, 4
      %v2750 = vrot.slane %v2149, 4
      %v2751 = vsel %vm1130, %v2749, %v2750
      %v2752 = vrot.slane %v2696, 4
      %v2753 = vrot.slane %v2151, 4
      %v2754 = vsel %vm1130, %v2752, %v2753
      %v2755 = vrot.slane %v2697, 4
      %v2756 = vrot.slane %v2153, 4
      %v2757 = vsel %vm1130, %v2755, %v2756
      %v2758 = vrot.slane %v2698, 4
      %v2759 = vrot.slane %v2155, 4
      %v2760 = vsel %vm1130, %v2758, %v2759
      %v2761 = vrot.slane %v2699, 4
      %v2762 = vrot.slane %v2157, 4
      %v2763 = vsel %vm1130, %v2761, %v2762
      %v2764 = vrot.slane %v2700, 4
      %v2765 = vrot.slane %v2159, 4
      %v2766 = vsel %vm1130, %v2764, %v2765
      %v2767 = vrot.slane %v2701, 4
      %v2768 = vrot.slane %v2161, 4
      %v2769 = vsel %vm1130, %v2767, %v2768
      %v2770 = vrot.slane %v2702, 4
      %v2771 = vrot.slane %v2163, 4
      %v2772 = vsel %vm1130, %v2770, %v2771
      %v2773 = vrot.slane %v2703, 4
      %v2774 = vrot.slane %v2165, 4
      %v2775 = vsel %vm1130, %v2773, %v2774
      %v2776 = vrot.slane %v2704, 4
      %v2777 = vrot.slane %v2167, 4
      %v2778 = vsel %vm1130, %v2776, %v2777
      %v2779 = vrot.slane %v2705, 4
      %v2780 = vrot.slane %v2169, 4
      %v2781 = vsel %vm1130, %v2779, %v2780
      %v2782 = vrot.slane %v2706, 4
      %v2783 = vrot.slane %v2171, 4
      %v2784 = vsel %vm1130, %v2782, %v2783
      %v2785 = vrot.slane %v2707, 4
      %v2786 = vrot.slane %v2173, 4
      %v2787 = vsel %vm1130, %v2785, %v2786
      %s2788 = scalar_lea.vmem %s3, 8
      %v2789 = vld [vmem:[%s2788] sm:$0x3]
      %v2791 = vsel %vm1181, %v2742, 0
      %v2794 = vsel %vm1181, %v2745, 0
      %v2797 = vsel %vm1181, %v2748, 0
      %v2800 = vsel %vm1181, %v2751, 0
      %v2803 = vsel %vm1181, %v2754, 0
      %v2806 = vsel %vm1181, %v2757, 0
      %v2809 = vsel %vm1181, %v2760, 0
      %v2812 = vsel %vm1181, %v2763, 0
      %v2815 = vsel %vm1181, %v2766, 0
      %v2818 = vsel %vm1181, %v2769, 0
      %v2821 = vsel %vm1181, %v2772, 0
      %v2824 = vsel %vm1181, %v2775, 0
      %v2827 = vsel %vm1181, %v2778, 0
      %v2830 = vsel %vm1181, %v2781, 0
      %v2833 = vsel %vm1181, %v2784, 0
      %v2836 = vsel %vm1181, %v2787, 0
      %v2839 = vsel %vm1230, %v2789, 0
      %2841 = vmatprep.subr.bf16.mxu0 0
      %2842 = vmatpush1.bf16.msra.mxu0 %v2839
      %2843 = vmatprep.subr.bf16.mxu0 0
      %2844 = vmatpush1.bf16.msra.mxu0 0
      %2845 = vmatprep.subr.bf16.mxu0 0
      %2846 = vmatpush1.bf16.msra.mxu0 0
      %2847 = vmatprep.subr.bf16.mxu0 0
      %2848 = vmatpush1.bf16.msra.mxu0 0
      %2849 = vmatprep.subr.bf16.mxu0 0
      %2850 = vmatpush1.bf16.msra.mxu0 0
      %2851 = vmatprep.subr.bf16.mxu0 0
      %2852 = vmatpush1.bf16.msra.mxu0 0
      %2853 = vmatprep.subr.bf16.mxu0 0
      %2854 = vmatpush1.bf16.msra.mxu0 0
      %2855 = vmatprep.subr.bf16.mxu0 0
      %2856 = vmatpush1.bf16.msra.mxu0 0
      %2857 = vmatprep.subr.bf16.mxu0 0
      %2858 = vmatpush1.bf16.msra.mxu0 0
      %2859 = vmatprep.subr.bf16.mxu0 0
      %2860 = vmatpush1.bf16.msra.mxu0 0
      %2861 = vmatprep.subr.bf16.mxu0 0
      %2862 = vmatpush1.bf16.msra.mxu0 0
      %2863 = vmatprep.subr.bf16.mxu0 0
      %2864 = vmatpush1.bf16.msra.mxu0 0
      %2865 = vmatprep.subr.bf16.mxu0 0
      %2866 = vmatpush1.bf16.msra.mxu0 0
      %2867 = vmatprep.subr.bf16.mxu0 0
      %2868 = vmatpush1.bf16.msra.mxu0 0
      %2869 = vmatprep.subr.bf16.mxu0 0
      %2870 = vmatpush1.bf16.msra.mxu0 0
      %2871 = vmatprep.subr.bf16.mxu0 0
      %2872 = vmatpush1.bf16.msra.mxu0 0
      %2873 = vmatprep.mubr.bf16.mxu0 0
      %2874 = vmatmul.mubr.bf16.gmra.mrb[0].mxu0 %v2791
      %v2875 = vpop.f32.mrb[0].mxu0
      %v2876 = vadd.f32 0.0, %v2875
      %v2877 = vpop.f32.mrb[0].mxu0
      %v2878 = vpop.f32.mrb[0].mxu0
      %v2879 = vadd.f32 0.0, %v2878
      %v2880 = vpop.f32.mrb[0].mxu0
      %2881 = vmatprep.mubr.bf16.mxu0 0
      %2882 = vmatmul.mubr.bf16.gmra.mrb[0].mxu0 %v2794
      %v2883 = vpop.f32.mrb[0].mxu0
      %v2884 = vadd.f32 0.0, %v2883
      %v2885 = vpop.f32.mrb[0].mxu0
      %v2886 = vpop.f32.mrb[0].mxu0
      %v2887 = vadd.f32 0.0, %v2886
      %v2888 = vpop.f32.mrb[0].mxu0
      %2889 = vmatprep.mubr.bf16.mxu0 0
      %2890 = vmatmul.mubr.bf16.gmra.mrb[0].mxu0 %v2797
      %v2891 = vpop.f32.mrb[0].mxu0
      %v2892 = vadd.f32 0.0, %v2891
      %v2893 = vpop.f32.mrb[0].mxu0
      %v2894 = vpop.f32.mrb[0].mxu0
      %v2895 = vadd.f32 0.0, %v2894
      %v2896 = vpop.f32.mrb[0].mxu0
      %2897 = vmatprep.mubr.bf16.mxu0 0
      %2898 = vmatmul.mubr.bf16.gmra.mrb[0].mxu0 %v2800
      %v2899 = vpop.f32.mrb[0].mxu0
      %v2900 = vadd.f32 0.0, %v2899
      %v2901 = vpop.f32.mrb[0].mxu0
      %v2902 = vpop.f32.mrb[0].mxu0
      %v2903 = vadd.f32 0.0, %v2902
      %v2904 = vpop.f32.mrb[0].mxu0
      %2905 = vmatprep.mubr.bf16.mxu0 0
      %2906 = vmatmul.mubr.bf16.gmra.mrb[0].mxu0 %v2803
      %v2907 = vpop.f32.mrb[0].mxu0
      %v2908 = vadd.f32 0.0, %v2907
      %v2909 = vpop.f32.mrb[0].mxu0
      %v2910 = vpop.f32.mrb[0].mxu0
      %v2911 = vadd.f32 0.0, %v2910
      %v2912 = vpop.f32.mrb[0].mxu0
      %2913 = vmatprep.mubr.bf16.mxu0 0
      %2914 = vmatmul.mubr.bf16.gmra.mrb[0].mxu0 %v2806
      %v2915 = vpop.f32.mrb[0].mxu0
      %v2916 = vadd.f32 0.0, %v2915
      %v2917 = vpop.f32.mrb[0].mxu0
      %v2918 = vpop.f32.mrb[0].mxu0
      %v2919 = vadd.f32 0.0, %v2918
      %v2920 = vpop.f32.mrb[0].mxu0
      %2921 = vmatprep.mubr.bf16.mxu0 0
      %2922 = vmatmul.mubr.bf16.gmra.mrb[0].mxu0 %v2809
      %v2923 = vpop.f32.mrb[0].mxu0
      %v2924 = vadd.f32 0.0, %v2923
      %v2925 = vpop.f32.mrb[0].mxu0
      %v2926 = vpop.f32.mrb[0].mxu0
      %v2927 = vadd.f32 0.0, %v2926
      %v2928 = vpop.f32.mrb[0].mxu0
      %2929 = vmatprep.mubr.bf16.mxu0 0
      %2930 = vmatmul.mubr.bf16.gmra.mrb[0].mxu0 %v2812
      %v2931 = vpop.f32.mrb[0].mxu0
      %v2932 = vadd.f32 0.0, %v2931
      %v2933 = vpop.f32.mrb[0].mxu0
      %v2934 = vpop.f32.mrb[0].mxu0
      %v2935 = vadd.f32 0.0, %v2934
      %v2936 = vpop.f32.mrb[0].mxu0
      %2937 = vmatprep.mubr.bf16.mxu0 0
      %2938 = vmatmul.mubr.bf16.gmra.mrb[0].mxu0 %v2815
      %v2939 = vpop.f32.mrb[0].mxu0
      %v2940 = vadd.f32 0.0, %v2939
      %v2941 = vpop.f32.mrb[0].mxu0
      %v2942 = vpop.f32.mrb[0].mxu0
      %v2943 = vadd.f32 0.0, %v2942
      %v2944 = vpop.f32.mrb[0].mxu0
      %2945 = vmatprep.mubr.bf16.mxu0 0
      %2946 = vmatmul.mubr.bf16.gmra.mrb[0].mxu0 %v2818
      %v2947 = vpop.f32.mrb[0].mxu0
      %v2948 = vadd.f32 0.0, %v2947
      %v2949 = vpop.f32.mrb[0].mxu0
      %v2950 = vpop.f32.mrb[0].mxu0
      %v2951 = vadd.f32 0.0, %v2950
      %v2952 = vpop.f32.mrb[0].mxu0
      %2953 = vmatprep.mubr.bf16.mxu0 0
      %2954 = vmatmul.mubr.bf16.gmra.mrb[0].mxu0 %v2821
      %v2955 = vpop.f32.mrb[0].mxu0
      %v2956 = vadd.f32 0.0, %v2955
      %v2957 = vpop.f32.mrb[0].mxu0
      %v2958 = vpop.f32.mrb[0].mxu0
      %v2959 = vadd.f32 0.0, %v2958
      %v2960 = vpop.f32.mrb[0].mxu0
      %2961 = vmatprep.mubr.bf16.mxu0 0
      %2962 = vmatmul.mubr.bf16.gmra.mrb[0].mxu0 %v2824
      %v2963 = vpop.f32.mrb[0].mxu0
      %v2964 = vadd.f32 0.0, %v2963
      %v2965 = vpop.f32.mrb[0].mxu0
      %v2966 = vpop.f32.mrb[0].mxu0
      %v2967 = vadd.f32 0.0, %v2966
      %v2968 = vpop.f32.mrb[0].mxu0
      %2969 = vmatprep.mubr.bf16.mxu0 0
      %2970 = vmatmul.mubr.bf16.gmra.mrb[0].mxu0 %v2827
      %v2971 = vpop.f32.mrb[0].mxu0
      %v2972 = vadd.f32 0.0, %v2971
      %v2973 = vpop.f32.mrb[0].mxu0
      %v2974 = vpop.f32.mrb[0].mxu0
      %v2975 = vadd.f32 0.0, %v2974
      %v2976 = vpop.f32.mrb[0].mxu0
      %2977 = vmatprep.mubr.bf16.mxu0 0
      %2978 = vmatmul.mubr.bf16.gmra.mrb[0].mxu0 %v2830
      %v2979 = vpop.f32.mrb[0].mxu0
      %v2980 = vadd.f32 0.0, %v2979
      %v2981 = vpop.f32.mrb[0].mxu0
      %v2982 = vpop.f32.mrb[0].mxu0
      %v2983 = vadd.f32 0.0, %v2982
      %v2984 = vpop.f32.mrb[0].mxu0
      %2985 = vmatprep.mubr.bf16.mxu0 0
      %2986 = vmatmul.mubr.bf16.gmra.mrb[0].mxu0 %v2833
      %v2987 = vpop.f32.mrb[0].mxu0
      %v2988 = vadd.f32 0.0, %v2987
      %v2989 = vpop.f32.mrb[0].mxu0
      %v2990 = vpop.f32.mrb[0].mxu0
      %v2991 = vadd.f32 0.0, %v2990
      %v2992 = vpop.f32.mrb[0].mxu0
      %2993 = vmatprep.mubr.bf16.mxu0 0
      %2994 = vmatmul.mubr.bf16.gmra.mrb[0].mxu0 %v2836
      %v2995 = vpop.f32.mrb[0].mxu0
      %v2996 = vadd.f32 0.0, %v2995
      %v2997 = vpop.f32.mrb[0].mxu0
      %v2998 = vpop.f32.mrb[0].mxu0
      %v2999 = vadd.f32 0.0, %v2998
      %v3000 = vpop.f32.mrb[0].mxu0
      %3001 = vdwg.mxu0
      %v3002 = vadd.f32 %v2660, %v2876
      %v3003 = vadd.f32 %v2661, %v2879
      %v3004 = vadd.f32 %v2662, %v2884
      %v3005 = vadd.f32 %v2663, %v2887
      %v3006 = vadd.f32 %v2664, %v2892
      %v3007 = vadd.f32 %v2665, %v2895
      %v3008 = vadd.f32 %v2666, %v2900
      %v3009 = vadd.f32 %v2667, %v2903
      %v3010 = vadd.f32 %v2668, %v2908
      %v3011 = vadd.f32 %v2669, %v2911
      %v3012 = vadd.f32 %v2670, %v2916
      %v3013 = vadd.f32 %v2671, %v2919
      %v3014 = vadd.f32 %v2672, %v2924
      %v3015 = vadd.f32 %v2673, %v2927
      %v3016 = vadd.f32 %v2674, %v2932
      %v3017 = vadd.f32 %v2675, %v2935
      %v3018 = vadd.f32 %v2676, %v2940
      %v3019 = vadd.f32 %v2677, %v2943
      %v3020 = vadd.f32 %v2678, %v2948
      %v3021 = vadd.f32 %v2679, %v2951
      %v3022 = vadd.f32 %v2680, %v2956
      %v3023 = vadd.f32 %v2681, %v2959
      %v3024 = vadd.f32 %v2682, %v2964
      %v3025 = vadd.f32 %v2683, %v2967
      %v3026 = vadd.f32 %v2684, %v2972
      %v3027 = vadd.f32 %v2685, %v2975
      %v3028 = vadd.f32 %v2686, %v2980
      %v3029 = vadd.f32 %v2687, %v2983
      %v3030 = vadd.f32 %v2688, %v2988
      %v3031 = vadd.f32 %v2689, %v2991
      %v3032 = vadd.f32 %v2690, %v2996
      %v3033 = vadd.f32 %v2691, %v2999
      %v3034 = vld [vmem:[%s706 + $0x8] sm:$0x1f]
      %v3035 = vld [vmem:[%s706 + $0x18] sm:$0x1f]
      %v3036 = vld [vmem:[%s706 + $0x28] sm:$0x1f]
      %v3037 = vld [vmem:[%s706 + $0x38] sm:$0x1f]
      %v3038 = vld [vmem:[%s706 + $0x48] sm:$0x1f]
      %v3039 = vld [vmem:[%s706 + $0x58] sm:$0x1f]
      %v3040 = vld [vmem:[%s706 + $0x68] sm:$0x1f]
      %v3041 = vld [vmem:[%s706 + $0x78] sm:$0x1f]
      %v3042 = vld [vmem:[%s706 + $0x88] sm:$0x1f]
      %v3043 = vld [vmem:[%s706 + $0x98] sm:$0x1f]
      %v3044 = vld [vmem:[%s706 + $0xa8] sm:$0x1f]
      %v3045 = vld [vmem:[%s706 + $0xb8] sm:$0x1f]
      %v3046 = vld [vmem:[%s706 + $0xc8] sm:$0x1f]
      %v3047 = vld [vmem:[%s706 + $0xd8] sm:$0x1f]
      %v3048 = vld [vmem:[%s706 + $0xe8] sm:$0x1f]
      %v3049 = vld [vmem:[%s706 + $0xf8] sm:$0x1f]
      %v3051 = vshrl.u32 %v2692, 16
      %v3053 = vrot.slane %v3051, 4
      %v3054 = vshll.u32 %v2692, 16
      %v3056 = vrot.slane %v3054, 5
      %v3057 = vor.u32 %v3053, %v3056
      %v3059 = vshrl.u32 %v3034, 16
      %v3061 = vrot.slane %v3059, 4
      %v3062 = vshll.u32 %v3034, 16
      %v3064 = vrot.slane %v3062, 5
      %v3065 = vor.u32 %v3061, %v3064
      %v3066 = vsel %vm1623, %v3057, %v3065
      %v3068 = vshrl.u32 %v2693, 16
      %v3070 = vrot.slane %v3068, 4
      %v3071 = vshll.u32 %v2693, 16
      %v3073 = vrot.slane %v3071, 5
      %v3074 = vor.u32 %v3070, %v3073
      %v3076 = vshrl.u32 %v3035, 16
      %v3078 = vrot.slane %v3076, 4
      %v3079 = vshll.u32 %v3035, 16
      %v3081 = vrot.slane %v3079, 5
      %v3082 = vor.u32 %v3078, %v3081
      %v3083 = vsel %vm1623, %v3074, %v3082
      %v3085 = vshrl.u32 %v2694, 16
      %v3087 = vrot.slane %v3085, 4
      %v3088 = vshll.u32 %v2694, 16
      %v3090 = vrot.slane %v3088, 5
      %v3091 = vor.u32 %v3087, %v3090
      %v3093 = vshrl.u32 %v3036, 16
      %v3095 = vrot.slane %v3093, 4
      %v3096 = vshll.u32 %v3036, 16
      %v3098 = vrot.slane %v3096, 5
      %v3099 = vor.u32 %v3095, %v3098
      %v3100 = vsel %vm1623, %v3091, %v3099
      %v3102 = vshrl.u32 %v2695, 16
      %v3104 = vrot.slane %v3102, 4
      %v3105 = vshll.u32 %v2695, 16
      %v3107 = vrot.slane %v3105, 5
      %v3108 = vor.u32 %v3104, %v3107
      %v3110 = vshrl.u32 %v3037, 16
      %v3112 = vrot.slane %v3110, 4
      %v3113 = vshll.u32 %v3037, 16
      %v3115 = vrot.slane %v3113, 5
      %v3116 = vor.u32 %v3112, %v3115
      %v3117 = vsel %vm1623, %v3108, %v3116
      %v3119 = vshrl.u32 %v2696, 16
      %v3121 = vrot.slane %v3119, 4
      %v3122 = vshll.u32 %v2696, 16
      %v3124 = vrot.slane %v3122, 5
      %v3125 = vor.u32 %v3121, %v3124
      %v3127 = vshrl.u32 %v3038, 16
      %v3129 = vrot.slane %v3127, 4
      %v3130 = vshll.u32 %v3038, 16
      %v3132 = vrot.slane %v3130, 5
      %v3133 = vor.u32 %v3129, %v3132
      %v3134 = vsel %vm1623, %v3125, %v3133
      %v3136 = vshrl.u32 %v2697, 16
      %v3138 = vrot.slane %v3136, 4
      %v3139 = vshll.u32 %v2697, 16
      %v3141 = vrot.slane %v3139, 5
      %v3142 = vor.u32 %v3138, %v3141
      %v3144 = vshrl.u32 %v3039, 16
      %v3146 = vrot.slane %v3144, 4
      %v3147 = vshll.u32 %v3039, 16
      %v3149 = vrot.slane %v3147, 5
      %v3150 = vor.u32 %v3146, %v3149
      %v3151 = vsel %vm1623, %v3142, %v3150
      %v3153 = vshrl.u32 %v2698, 16
      %v3155 = vrot.slane %v3153, 4
      %v3156 = vshll.u32 %v2698, 16
      %v3158 = vrot.slane %v3156, 5
      %v3159 = vor.u32 %v3155, %v3158
      %v3161 = vshrl.u32 %v3040, 16
      %v3163 = vrot.slane %v3161, 4
      %v3164 = vshll.u32 %v3040, 16
      %v3166 = vrot.slane %v3164, 5
      %v3167 = vor.u32 %v3163, %v3166
      %v3168 = vsel %vm1623, %v3159, %v3167
      %v3170 = vshrl.u32 %v2699, 16
      %v3172 = vrot.slane %v3170, 4
      %v3173 = vshll.u32 %v2699, 16
      %v3175 = vrot.slane %v3173, 5
      %v3176 = vor.u32 %v3172, %v3175
      %v3178 = vshrl.u32 %v3041, 16
      %v3180 = vrot.slane %v3178, 4
      %v3181 = vshll.u32 %v3041, 16
      %v3183 = vrot.slane %v3181, 5
      %v3184 = vor.u32 %v3180, %v3183
      %v3185 = vsel %vm1623, %v3176, %v3184
      %v3187 = vshrl.u32 %v2700, 16
      %v3189 = vrot.slane %v3187, 4
      %v3190 = vshll.u32 %v2700, 16
      %v3192 = vrot.slane %v3190, 5
      %v3193 = vor.u32 %v3189, %v3192
      %v3195 = vshrl.u32 %v3042, 16
      %v3197 = vrot.slane %v3195, 4
      %v3198 = vshll.u32 %v3042, 16
      %v3200 = vrot.slane %v3198, 5
      %v3201 = vor.u32 %v3197, %v3200
      %v3202 = vsel %vm1623, %v3193, %v3201
      %v3204 = vshrl.u32 %v2701, 16
      %v3206 = vrot.slane %v3204, 4
      %v3207 = vshll.u32 %v2701, 16
      %v3209 = vrot.slane %v3207, 5
      %v3210 = vor.u32 %v3206, %v3209
      %v3212 = vshrl.u32 %v3043, 16
      %v3214 = vrot.slane %v3212, 4
      %v3215 = vshll.u32 %v3043, 16
      %v3217 = vrot.slane %v3215, 5
      %v3218 = vor.u32 %v3214, %v3217
      %v3219 = vsel %vm1623, %v3210, %v3218
      %v3221 = vshrl.u32 %v2702, 16
      %v3223 = vrot.slane %v3221, 4
      %v3224 = vshll.u32 %v2702, 16
      %v3226 = vrot.slane %v3224, 5
      %v3227 = vor.u32 %v3223, %v3226
      %v3229 = vshrl.u32 %v3044, 16
      %v3231 = vrot.slane %v3229, 4
      %v3232 = vshll.u32 %v3044, 16
      %v3234 = vrot.slane %v3232, 5
      %v3235 = vor.u32 %v3231, %v3234
      %v3236 = vsel %vm1623, %v3227, %v3235
      %v3238 = vshrl.u32 %v2703, 16
      %v3240 = vrot.slane %v3238, 4
      %v3241 = vshll.u32 %v2703, 16
      %v3243 = vrot.slane %v3241, 5
      %v3244 = vor.u32 %v3240, %v3243
      %v3246 = vshrl.u32 %v3045, 16
      %v3248 = vrot.slane %v3246, 4
      %v3249 = vshll.u32 %v3045, 16
      %v3251 = vrot.slane %v3249, 5
      %v3252 = vor.u32 %v3248, %v3251
      %v3253 = vsel %vm1623, %v3244, %v3252
      %v3255 = vshrl.u32 %v2704, 16
      %v3257 = vrot.slane %v3255, 4
      %v3258 = vshll.u32 %v2704, 16
      %v3260 = vrot.slane %v3258, 5
      %v3261 = vor.u32 %v3257, %v3260
      %v3263 = vshrl.u32 %v3046, 16
      %v3265 = vrot.slane %v3263, 4
      %v3266 = vshll.u32 %v3046, 16
      %v3268 = vrot.slane %v3266, 5
      %v3269 = vor.u32 %v3265, %v3268
      %v3270 = vsel %vm1623, %v3261, %v3269
      %v3272 = vshrl.u32 %v2705, 16
      %v3274 = vrot.slane %v3272, 4
      %v3275 = vshll.u32 %v2705, 16
      %v3277 = vrot.slane %v3275, 5
      %v3278 = vor.u32 %v3274, %v3277
      %v3280 = vshrl.u32 %v3047, 16
      %v3282 = vrot.slane %v3280, 4
      %v3283 = vshll.u32 %v3047, 16
      %v3285 = vrot.slane %v3283, 5
      %v3286 = vor.u32 %v3282, %v3285
      %v3287 = vsel %vm1623, %v3278, %v3286
      %v3289 = vshrl.u32 %v2706, 16
      %v3291 = vrot.slane %v3289, 4
      %v3292 = vshll.u32 %v2706, 16
      %v3294 = vrot.slane %v3292, 5
      %v3295 = vor.u32 %v3291, %v3294
      %v3297 = vshrl.u32 %v3048, 16
      %v3299 = vrot.slane %v3297, 4
      %v3300 = vshll.u32 %v3048, 16
      %v3302 = vrot.slane %v3300, 5
      %v3303 = vor.u32 %v3299, %v3302
      %v3304 = vsel %vm1623, %v3295, %v3303
      %v3306 = vshrl.u32 %v2707, 16
      %v3308 = vrot.slane %v3306, 4
      %v3309 = vshll.u32 %v2707, 16
      %v3311 = vrot.slane %v3309, 5
      %v3312 = vor.u32 %v3308, %v3311
      %v3314 = vshrl.u32 %v3049, 16
      %v3316 = vrot.slane %v3314, 4
      %v3317 = vshll.u32 %v3049, 16
      %v3319 = vrot.slane %v3317, 5
      %v3320 = vor.u32 %v3316, %v3319
      %v3321 = vsel %vm1623, %v3312, %v3320
      %s3322 = scalar_lea.vmem %s3, 10
      %v3323 = vld [vmem:[%s3322] sm:$0x3]
      %v3325 = vsel %vm1181, %v3066, 0
      %v3328 = vsel %vm1181, %v3083, 0
      %v3331 = vsel %vm1181, %v3100, 0
      %v3334 = vsel %vm1181, %v3117, 0
      %v3337 = vsel %vm1181, %v3134, 0
      %v3340 = vsel %vm1181, %v3151, 0
      %v3343 = vsel %vm1181, %v3168, 0
      %v3346 = vsel %vm1181, %v3185, 0
      %v3349 = vsel %vm1181, %v3202, 0
      %v3352 = vsel %vm1181, %v3219, 0
      %v3355 = vsel %vm1181, %v3236, 0
      %v3358 = vsel %vm1181, %v3253, 0
      %v3361 = vsel %vm1181, %v3270, 0
      %v3364 = vsel %vm1181, %v3287, 0
      %v3367 = vsel %vm1181, %v3304, 0
      %v3370 = vsel %vm1181, %v3321, 0
      %v3373 = vsel %vm1230, %v3323, 0
      %3375 = vmatprep.subr.bf16.mxu0 0
      %3376 = vmatpush1.bf16.msra.mxu0 %v3373
      %3377 = vmatprep.subr.bf16.mxu0 0
      %3378 = vmatpush1.bf16.msra.mxu0 0
      %3379 = vmatprep.subr.bf16.mxu0 0
      %3380 = vmatpush1.bf16.msra.mxu0 0
      %3381 = vmatprep.subr.bf16.mxu0 0
      %3382 = vmatpush1.bf16.msra.mxu0 0
      %3383 = vmatprep.subr.bf16.mxu0 0
      %3384 = vmatpush1.bf16.msra.mxu0 0
      %3385 = vmatprep.subr.bf16.mxu0 0
      %3386 = vmatpush1.bf16.msra.mxu0 0
      %3387 = vmatprep.subr.bf16.mxu0 0
      %3388 = vmatpush1.bf16.msra.mxu0 0
      %3389 = vmatprep.subr.bf16.mxu0 0
      %3390 = vmatpush1.bf16.msra.mxu0 0
      %3391 = vmatprep.subr.bf16.mxu0 0
      %3392 = vmatpush1.bf16.msra.mxu0 0
      %3393 = vmatprep.subr.bf16.mxu0 0
      %3394 = vmatpush1.bf16.msra.mxu0 0
      %3395 = vmatprep.subr.bf16.mxu0 0
      %3396 = vmatpush1.bf16.msra.mxu0 0
      %3397 = vmatprep.subr.bf16.mxu0 0
      %3398 = vmatpush1.bf16.msra.mxu0 0
      %3399 = vmatprep.subr.bf16.mxu0 0
      %3400 = vmatpush1.bf16.msra.mxu0 0
      %3401 = vmatprep.subr.bf16.mxu0 0
      %3402 = vmatpush1.bf16.msra.mxu0 0
      %3403 = vmatprep.subr.bf16.mxu0 0
      %3404 = vmatpush1.bf16.msra.mxu0 0
      %3405 = vmatprep.subr.bf16.mxu0 0
      %3406 = vmatpush1.bf16.msra.mxu0 0
      %3407 = vmatprep.mubr.bf16.mxu0 0
      %3408 = vmatmul.mubr.bf16.gmra.mrb[0].mxu0 %v3325
      %v3409 = vpop.f32.mrb[0].mxu0
      %v3410 = vadd.f32 0.0, %v3409
      %v3411 = vpop.f32.mrb[0].mxu0
      %v3412 = vpop.f32.mrb[0].mxu0
      %v3413 = vadd.f32 0.0, %v3412
      %v3414 = vpop.f32.mrb[0].mxu0
      %3415 = vmatprep.mubr.bf16.mxu0 0
      %3416 = vmatmul.mubr.bf16.gmra.mrb[0].mxu0 %v3328
      %v3417 = vpop.f32.mrb[0].mxu0
      %v3418 = vadd.f32 0.0, %v3417
      %v3419 = vpop.f32.mrb[0].mxu0
      %v3420 = vpop.f32.mrb[0].mxu0
      %v3421 = vadd.f32 0.0, %v3420
      %v3422 = vpop.f32.mrb[0].mxu0
      %3423 = vmatprep.mubr.bf16.mxu0 0
      %3424 = vmatmul.mubr.bf16.gmra.mrb[0].mxu0 %v3331
      %v3425 = vpop.f32.mrb[0].mxu0
      %v3426 = vadd.f32 0.0, %v3425
      %v3427 = vpop.f32.mrb[0].mxu0
      %v3428 = vpop.f32.mrb[0].mxu0
      %v3429 = vadd.f32 0.0, %v3428
      %v3430 = vpop.f32.mrb[0].mxu0
      %3431 = vmatprep.mubr.bf16.mxu0 0
      %3432 = vmatmul.mubr.bf16.gmra.mrb[0].mxu0 %v3334
      %v3433 = vpop.f32.mrb[0].mxu0
      %v3434 = vadd.f32 0.0, %v3433
      %v3435 = vpop.f32.mrb[0].mxu0
      %v3436 = vpop.f32.mrb[0].mxu0
      %v3437 = vadd.f32 0.0, %v3436
      %v3438 = vpop.f32.mrb[0].mxu0
      %3439 = vmatprep.mubr.bf16.mxu0 0
      %3440 = vmatmul.mubr.bf16.gmra.mrb[0].mxu0 %v3337
      %v3441 = vpop.f32.mrb[0].mxu0
      %v3442 = vadd.f32 0.0, %v3441
      %v3443 = vpop.f32.mrb[0].mxu0
      %v3444 = vpop.f32.mrb[0].mxu0
      %v3445 = vadd.f32 0.0, %v3444
      %v3446 = vpop.f32.mrb[0].mxu0
      %3447 = vmatprep.mubr.bf16.mxu0 0
      %3448 = vmatmul.mubr.bf16.gmra.mrb[0].mxu0 %v3340
      %v3449 = vpop.f32.mrb[0].mxu0
      %v3450 = vadd.f32 0.0, %v3449
      %v3451 = vpop.f32.mrb[0].mxu0
      %v3452 = vpop.f32.mrb[0].mxu0
      %v3453 = vadd.f32 0.0, %v3452
      %v3454 = vpop.f32.mrb[0].mxu0
      %3455 = vmatprep.mubr.bf16.mxu0 0
      %3456 = vmatmul.mubr.bf16.gmra.mrb[0].mxu0 %v3343
      %v3457 = vpop.f32.mrb[0].mxu0
      %v3458 = vadd.f32 0.0, %v3457
      %v3459 = vpop.f32.mrb[0].mxu0
      %v3460 = vpop.f32.mrb[0].mxu0
      %v3461 = vadd.f32 0.0, %v3460
      %v3462 = vpop.f32.mrb[0].mxu0
      %3463 = vmatprep.mubr.bf16.mxu0 0
      %3464 = vmatmul.mubr.bf16.gmra.mrb[0].mxu0 %v3346
      %v3465 = vpop.f32.mrb[0].mxu0
      %v3466 = vadd.f32 0.0, %v3465
      %v3467 = vpop.f32.mrb[0].mxu0
      %v3468 = vpop.f32.mrb[0].mxu0
      %v3469 = vadd.f32 0.0, %v3468
      %v3470 = vpop.f32.mrb[0].mxu0
      %3471 = vmatprep.mubr.bf16.mxu0 0
      %3472 = vmatmul.mubr.bf16.gmra.mrb[0].mxu0 %v3349
      %v3473 = vpop.f32.mrb[0].mxu0
      %v3474 = vadd.f32 0.0, %v3473
      %v3475 = vpop.f32.mrb[0].mxu0
      %v3476 = vpop.f32.mrb[0].mxu0
      %v3477 = vadd.f32 0.0, %v3476
      %v3478 = vpop.f32.mrb[0].mxu0
      %3479 = vmatprep.mubr.bf16.mxu0 0
      %3480 = vmatmul.mubr.bf16.gmra.mrb[0].mxu0 %v3352
      %v3481 = vpop.f32.mrb[0].mxu0
      %v3482 = vadd.f32 0.0, %v3481
      %v3483 = vpop.f32.mrb[0].mxu0
      %v3484 = vpop.f32.mrb[0].mxu0
      %v3485 = vadd.f32 0.0, %v3484
      %v3486 = vpop.f32.mrb[0].mxu0
      %3487 = vmatprep.mubr.bf16.mxu0 0
      %3488 = vmatmul.mubr.bf16.gmra.mrb[0].mxu0 %v3355
      %v3489 = vpop.f32.mrb[0].mxu0
      %v3490 = vadd.f32 0.0, %v3489
      %v3491 = vpop.f32.mrb[0].mxu0
      %v3492 = vpop.f32.mrb[0].mxu0
      %v3493 = vadd.f32 0.0, %v3492
      %v3494 = vpop.f32.mrb[0].mxu0
      %3495 = vmatprep.mubr.bf16.mxu0 0
      %3496 = vmatmul.mubr.bf16.gmra.mrb[0].mxu0 %v3358
      %v3497 = vpop.f32.mrb[0].mxu0
      %v3498 = vadd.f32 0.0, %v3497
      %v3499 = vpop.f32.mrb[0].mxu0
      %v3500 = vpop.f32.mrb[0].mxu0
      %v3501 = vadd.f32 0.0, %v3500
      %v3502 = vpop.f32.mrb[0].mxu0
      %3503 = vmatprep.mubr.bf16.mxu0 0
      %3504 = vmatmul.mubr.bf16.gmra.mrb[0].mxu0 %v3361
      %v3505 = vpop.f32.mrb[0].mxu0
      %v3506 = vadd.f32 0.0, %v3505
      %v3507 = vpop.f32.mrb[0].mxu0
      %v3508 = vpop.f32.mrb[0].mxu0
      %v3509 = vadd.f32 0.0, %v3508
      %v3510 = vpop.f32.mrb[0].mxu0
      %3511 = vmatprep.mubr.bf16.mxu0 0
      %3512 = vmatmul.mubr.bf16.gmra.mrb[0].mxu0 %v3364
      %v3513 = vpop.f32.mrb[0].mxu0
      %v3514 = vadd.f32 0.0, %v3513
      %v3515 = vpop.f32.mrb[0].mxu0
      %v3516 = vpop.f32.mrb[0].mxu0
      %v3517 = vadd.f32 0.0, %v3516
      %v3518 = vpop.f32.mrb[0].mxu0
      %3519 = vmatprep.mubr.bf16.mxu0 0
      %3520 = vmatmul.mubr.bf16.gmra.mrb[0].mxu0 %v3367
      %v3521 = vpop.f32.mrb[0].mxu0
      %v3522 = vadd.f32 0.0, %v3521
      %v3523 = vpop.f32.mrb[0].mxu0
      %v3524 = vpop.f32.mrb[0].mxu0
      %v3525 = vadd.f32 0.0, %v3524
      %v3526 = vpop.f32.mrb[0].mxu0
      %3527 = vmatprep.mubr.bf16.mxu0 0
      %3528 = vmatmul.mubr.bf16.gmra.mrb[0].mxu0 %v3370
      %v3529 = vpop.f32.mrb[0].mxu0
      %v3530 = vadd.f32 0.0, %v3529
      %v3531 = vpop.f32.mrb[0].mxu0
      %v3532 = vpop.f32.mrb[0].mxu0
      %v3533 = vadd.f32 0.0, %v3532
      %v3534 = vpop.f32.mrb[0].mxu0
      %3535 = vdwg.mxu0
      %v3536 = vadd.f32 %v3002, %v3410
      %v3537 = vadd.f32 %v3003, %v3413
      %v3538 = vadd.f32 %v3004, %v3418
      %v3539 = vadd.f32 %v3005, %v3421
      %v3540 = vadd.f32 %v3006, %v3426
      %v3541 = vadd.f32 %v3007, %v3429
      %v3542 = vadd.f32 %v3008, %v3434
      %v3543 = vadd.f32 %v3009, %v3437
      %v3544 = vadd.f32 %v3010, %v3442
      %v3545 = vadd.f32 %v3011, %v3445
      %v3546 = vadd.f32 %v3012, %v3450
      %v3547 = vadd.f32 %v3013, %v3453
      %v3548 = vadd.f32 %v3014, %v3458
      %v3549 = vadd.f32 %v3015, %v3461
      %v3550 = vadd.f32 %v3016, %v3466
      %v3551 = vadd.f32 %v3017, %v3469
      %v3552 = vadd.f32 %v3018, %v3474
      %v3553 = vadd.f32 %v3019, %v3477
      %v3554 = vadd.f32 %v3020, %v3482
      %v3555 = vadd.f32 %v3021, %v3485
      %v3556 = vadd.f32 %v3022, %v3490
      %v3557 = vadd.f32 %v3023, %v3493
      %v3558 = vadd.f32 %v3024, %v3498
      %v3559 = vadd.f32 %v3025, %v3501
      %v3560 = vadd.f32 %v3026, %v3506
      %v3561 = vadd.f32 %v3027, %v3509
      %v3562 = vadd.f32 %v3028, %v3514
      %v3563 = vadd.f32 %v3029, %v3517
      %v3564 = vadd.f32 %v3030, %v3522
      %v3565 = vadd.f32 %v3031, %v3525
      %v3566 = vadd.f32 %v3032, %v3530
      %v3567 = vadd.f32 %v3033, %v3533
      %s3568 = scalar_lea.vmem [#allocation2], 32
      %v3569 = vld [vmem:[%s3568] sm:$0xf8]
      %v3570 = vld [vmem:[%s3568 + $0x8] sm:$0xf]
      %v3571 = vld [vmem:[%s3568 + $0x10] sm:$0xf8]
      %v3572 = vld [vmem:[%s3568 + $0x18] sm:$0xf]
      %v3573 = vld [vmem:[%s3568 + $0x20] sm:$0xf8]
      %v3574 = vld [vmem:[%s3568 + $0x28] sm:$0xf]
      %v3575 = vld [vmem:[%s3568 + $0x30] sm:$0xf8]
      %v3576 = vld [vmem:[%s3568 + $0x38] sm:$0xf]
      %v3577 = vld [vmem:[%s3568 + $0x40] sm:$0xf8]
      %v3578 = vld [vmem:[%s3568 + $0x48] sm:$0xf]
      %v3579 = vld [vmem:[%s3568 + $0x50] sm:$0xf8]
      %v3580 = vld [vmem:[%s3568 + $0x58] sm:$0xf]
      %v3581 = vld [vmem:[%s3568 + $0x60] sm:$0xf8]
      %v3582 = vld [vmem:[%s3568 + $0x68] sm:$0xf]
      %v3583 = vld [vmem:[%s3568 + $0x70] sm:$0xf8]
      %v3584 = vld [vmem:[%s3568 + $0x78] sm:$0xf]
      %v3585 = vld [vmem:[%s3568 + $0x80] sm:$0xf8]
      %v3586 = vld [vmem:[%s3568 + $0x88] sm:$0xf]
      %v3587 = vld [vmem:[%s3568 + $0x90] sm:$0xf8]
      %v3588 = vld [vmem:[%s3568 + $0x98] sm:$0xf]
      %v3589 = vld [vmem:[%s3568 + $0xa0] sm:$0xf8]
      %v3590 = vld [vmem:[%s3568 + $0xa8] sm:$0xf]
      %v3591 = vld [vmem:[%s3568 + $0xb0] sm:$0xf8]
      %v3592 = vld [vmem:[%s3568 + $0xb8] sm:$0xf]
      %v3593 = vld [vmem:[%s3568 + $0xc0] sm:$0xf8]
      %v3594 = vld [vmem:[%s3568 + $0xc8] sm:$0xf]
      %v3595 = vld [vmem:[%s3568 + $0xd0] sm:$0xf8]
      %v3596 = vld [vmem:[%s3568 + $0xd8] sm:$0xf]
      %v3597 = vld [vmem:[%s3568 + $0xe0] sm:$0xf8]
      %v3598 = vld [vmem:[%s3568 + $0xe8] sm:$0xf]
      %v3599 = vld [vmem:[%s3568 + $0xf0] sm:$0xf8]
      %v3600 = vld [vmem:[%s3568 + $0xf8] sm:$0xf]
      %v3602 = vshrl.u32 %v3569, 16
      %v3604 = vrot.slane %v3602, 3
      %v3605 = vshll.u32 %v3569, 16
      %v3607 = vrot.slane %v3605, 4
      %v3608 = vor.u32 %v3604, %v3607
      %v3610 = vshrl.u32 %v3570, 16
      %v3612 = vrot.slane %v3610, 3
      %v3613 = vshll.u32 %v3570, 16
      %v3615 = vrot.slane %v3613, 4
      %v3616 = vor.u32 %v3612, %v3615
      %v3617 = vsel %vm808, %v3608, %v3616
      %v3619 = vshrl.u32 %v3571, 16
      %v3621 = vrot.slane %v3619, 3
      %v3622 = vshll.u32 %v3571, 16
      %v3624 = vrot.slane %v3622, 4
      %v3625 = vor.u32 %v3621, %v3624
      %v3627 = vshrl.u32 %v3572, 16
      %v3629 = vrot.slane %v3627, 3
      %v3630 = vshll.u32 %v3572, 16
      %v3632 = vrot.slane %v3630, 4
      %v3633 = vor.u32 %v3629, %v3632
      %v3634 = vsel %vm808, %v3625, %v3633
      %v3636 = vshrl.u32 %v3573, 16
      %v3638 = vrot.slane %v3636, 3
      %v3639 = vshll.u32 %v3573, 16
      %v3641 = vrot.slane %v3639, 4
      %v3642 = vor.u32 %v3638, %v3641
      %v3644 = vshrl.u32 %v3574, 16
      %v3646 = vrot.slane %v3644, 3
      %v3647 = vshll.u32 %v3574, 16
      %v3649 = vrot.slane %v3647, 4
      %v3650 = vor.u32 %v3646, %v3649
      %v3651 = vsel %vm808, %v3642, %v3650
      %v3653 = vshrl.u32 %v3575, 16
      %v3655 = vrot.slane %v3653, 3
      %v3656 = vshll.u32 %v3575, 16
      %v3658 = vrot.slane %v3656, 4
      %v3659 = vor.u32 %v3655, %v3658
      %v3661 = vshrl.u32 %v3576, 16
      %v3663 = vrot.slane %v3661, 3
      %v3664 = vshll.u32 %v3576, 16
      %v3666 = vrot.slane %v3664, 4
      %v3667 = vor.u32 %v3663, %v3666
      %v3668 = vsel %vm808, %v3659, %v3667
      %v3670 = vshrl.u32 %v3577, 16
      %v3672 = vrot.slane %v3670, 3
      %v3673 = vshll.u32 %v3577, 16
      %v3675 = vrot.slane %v3673, 4
      %v3676 = vor.u32 %v3672, %v3675
      %v3678 = vshrl.u32 %v3578, 16
      %v3680 = vrot.slane %v3678, 3
      %v3681 = vshll.u32 %v3578, 16
      %v3683 = vrot.slane %v3681, 4
      %v3684 = vor.u32 %v3680, %v3683
      %v3685 = vsel %vm808, %v3676, %v3684
      %v3687 = vshrl.u32 %v3579, 16
      %v3689 = vrot.slane %v3687, 3
      %v3690 = vshll.u32 %v3579, 16
      %v3692 = vrot.slane %v3690, 4
      %v3693 = vor.u32 %v3689, %v3692
      %v3695 = vshrl.u32 %v3580, 16
      %v3697 = vrot.slane %v3695, 3
      %v3698 = vshll.u32 %v3580, 16
      %v3700 = vrot.slane %v3698, 4
      %v3701 = vor.u32 %v3697, %v3700
      %v3702 = vsel %vm808, %v3693, %v3701
      %v3704 = vshrl.u32 %v3581, 16
      %v3706 = vrot.slane %v3704, 3
      %v3707 = vshll.u32 %v3581, 16
      %v3709 = vrot.slane %v3707, 4
      %v3710 = vor.u32 %v3706, %v3709
      %v3712 = vshrl.u32 %v3582, 16
      %v3714 = vrot.slane %v3712, 3
      %v3715 = vshll.u32 %v3582, 16
      %v3717 = vrot.slane %v3715, 4
      %v3718 = vor.u32 %v3714, %v3717
      %v3719 = vsel %vm808, %v3710, %v3718
      %v3721 = vshrl.u32 %v3583, 16
      %v3723 = vrot.slane %v3721, 3
      %v3724 = vshll.u32 %v3583, 16
      %v3726 = vrot.slane %v3724, 4
      %v3727 = vor.u32 %v3723, %v3726
      %v3729 = vshrl.u32 %v3584, 16
      %v3731 = vrot.slane %v3729, 3
      %v3732 = vshll.u32 %v3584, 16
      %v3734 = vrot.slane %v3732, 4
      %v3735 = vor.u32 %v3731, %v3734
      %v3736 = vsel %vm808, %v3727, %v3735
      %v3738 = vshrl.u32 %v3585, 16
      %v3740 = vrot.slane %v3738, 3
      %v3741 = vshll.u32 %v3585, 16
      %v3743 = vrot.slane %v3741, 4
      %v3744 = vor.u32 %v3740, %v3743
      %v3746 = vshrl.u32 %v3586, 16
      %v3748 = vrot.slane %v3746, 3
      %v3749 = vshll.u32 %v3586, 16
      %v3751 = vrot.slane %v3749, 4
      %v3752 = vor.u32 %v3748, %v3751
      %v3753 = vsel %vm808, %v3744, %v3752
      %v3755 = vshrl.u32 %v3587, 16
      %v3757 = vrot.slane %v3755, 3
      %v3758 = vshll.u32 %v3587, 16
      %v3760 = vrot.slane %v3758, 4
      %v3761 = vor.u32 %v3757, %v3760
      %v3763 = vshrl.u32 %v3588, 16
      %v3765 = vrot.slane %v3763, 3
      %v3766 = vshll.u32 %v3588, 16
      %v3768 = vrot.slane %v3766, 4
      %v3769 = vor.u32 %v3765, %v3768
      %v3770 = vsel %vm808, %v3761, %v3769
      %v3772 = vshrl.u32 %v3589, 16
      %v3774 = vrot.slane %v3772, 3
      %v3775 = vshll.u32 %v3589, 16
      %v3777 = vrot.slane %v3775, 4
      %v3778 = vor.u32 %v3774, %v3777
      %v3780 = vshrl.u32 %v3590, 16
      %v3782 = vrot.slane %v3780, 3
      %v3783 = vshll.u32 %v3590, 16
      %v3785 = vrot.slane %v3783, 4
      %v3786 = vor.u32 %v3782, %v3785
      %v3787 = vsel %vm808, %v3778, %v3786
      %v3789 = vshrl.u32 %v3591, 16
      %v3791 = vrot.slane %v3789, 3
      %v3792 = vshll.u32 %v3591, 16
      %v3794 = vrot.slane %v3792, 4
      %v3795 = vor.u32 %v3791, %v3794
      %v3797 = vshrl.u32 %v3592, 16
      %v3799 = vrot.slane %v3797, 3
      %v3800 = vshll.u32 %v3592, 16
      %v3802 = vrot.slane %v3800, 4
      %v3803 = vor.u32 %v3799, %v3802
      %v3804 = vsel %vm808, %v3795, %v3803
      %v3806 = vshrl.u32 %v3593, 16
      %v3808 = vrot.slane %v3806, 3
      %v3809 = vshll.u32 %v3593, 16
      %v3811 = vrot.slane %v3809, 4
      %v3812 = vor.u32 %v3808, %v3811
      %v3814 = vshrl.u32 %v3594, 16
      %v3816 = vrot.slane %v3814, 3
      %v3817 = vshll.u32 %v3594, 16
      %v3819 = vrot.slane %v3817, 4
      %v3820 = vor.u32 %v3816, %v3819
      %v3821 = vsel %vm808, %v3812, %v3820
      %v3823 = vshrl.u32 %v3595, 16
      %v3825 = vrot.slane %v3823, 3
      %v3826 = vshll.u32 %v3595, 16
      %v3828 = vrot.slane %v3826, 4
      %v3829 = vor.u32 %v3825, %v3828
      %v3831 = vshrl.u32 %v3596, 16
      %v3833 = vrot.slane %v3831, 3
      %v3834 = vshll.u32 %v3596, 16
      %v3836 = vrot.slane %v3834, 4
      %v3837 = vor.u32 %v3833, %v3836
      %v3838 = vsel %vm808, %v3829, %v3837
      %v3840 = vshrl.u32 %v3597, 16
      %v3842 = vrot.slane %v3840, 3
      %v3843 = vshll.u32 %v3597, 16
      %v3845 = vrot.slane %v3843, 4
      %v3846 = vor.u32 %v3842, %v3845
      %v3848 = vshrl.u32 %v3598, 16
      %v3850 = vrot.slane %v3848, 3
      %v3851 = vshll.u32 %v3598, 16
      %v3853 = vrot.slane %v3851, 4
      %v3854 = vor.u32 %v3850, %v3853
      %v3855 = vsel %vm808, %v3846, %v3854
      %v3857 = vshrl.u32 %v3599, 16
      %v3859 = vrot.slane %v3857, 3
      %v3860 = vshll.u32 %v3599, 16
      %v3862 = vrot.slane %v3860, 4
      %v3863 = vor.u32 %v3859, %v3862
      %v3865 = vshrl.u32 %v3600, 16
      %v3867 = vrot.slane %v3865, 3
      %v3868 = vshll.u32 %v3600, 16
      %v3870 = vrot.slane %v3868, 4
      %v3871 = vor.u32 %v3867, %v3870
      %v3872 = vsel %vm808, %v3863, %v3871
      %s3873 = scalar_lea.vmem %s3, 12
      %v3874 = vld [vmem:[%s3873] sm:$0x3]
      %v3876 = vsel %vm1181, %v3617, 0
      %v3879 = vsel %vm1181, %v3634, 0
      %v3882 = vsel %vm1181, %v3651, 0
      %v3885 = vsel %vm1181, %v3668, 0
      %v3888 = vsel %vm1181, %v3685, 0
      %v3891 = vsel %vm1181, %v3702, 0
      %v3894 = vsel %vm1181, %v3719, 0
      %v3897 = vsel %vm1181, %v3736, 0
      %v3900 = vsel %vm1181, %v3753, 0
      %v3903 = vsel %vm1181, %v3770, 0
      %v3906 = vsel %vm1181, %v3787, 0
      %v3909 = vsel %vm1181, %v3804, 0
      %v3912 = vsel %vm1181, %v3821, 0
      %v3915 = vsel %vm1181, %v3838, 0
      %v3918 = vsel %vm1181, %v3855, 0
      %v3921 = vsel %vm1181, %v3872, 0
      %v3924 = vsel %vm1230, %v3874, 0
      %3926 = vmatprep.subr.bf16.mxu0 0
      %3927 = vmatpush1.bf16.msra.mxu0 %v3924
      %3928 = vmatprep.subr.bf16.mxu0 0
      %3929 = vmatpush1.bf16.msra.mxu0 0
      %3930 = vmatprep.subr.bf16.mxu0 0
      %3931 = vmatpush1.bf16.msra.mxu0 0
      %3932 = vmatprep.subr.bf16.mxu0 0
      %3933 = vmatpush1.bf16.msra.mxu0 0
      %3934 = vmatprep.subr.bf16.mxu0 0
      %3935 = vmatpush1.bf16.msra.mxu0 0
      %3936 = vmatprep.subr.bf16.mxu0 0
      %3937 = vmatpush1.bf16.msra.mxu0 0
      %3938 = vmatprep.subr.bf16.mxu0 0
      %3939 = vmatpush1.bf16.msra.mxu0 0
      %3940 = vmatprep.subr.bf16.mxu0 0
      %3941 = vmatpush1.bf16.msra.mxu0 0
      %3942 = vmatprep.subr.bf16.mxu0 0
      %3943 = vmatpush1.bf16.msra.mxu0 0
      %3944 = vmatprep.subr.bf16.mxu0 0
      %3945 = vmatpush1.bf16.msra.mxu0 0
      %3946 = vmatprep.subr.bf16.mxu0 0
      %3947 = vmatpush1.bf16.msra.mxu0 0
      %3948 = vmatprep.subr.bf16.mxu0 0
      %3949 = vmatpush1.bf16.msra.mxu0 0
      %3950 = vmatprep.subr.bf16.mxu0 0
      %3951 = vmatpush1.bf16.msra.mxu0 0
      %3952 = vmatprep.subr.bf16.mxu0 0
      %3953 = vmatpush1.bf16.msra.mxu0 0
      %3954 = vmatprep.subr.bf16.mxu0 0
      %3955 = vmatpush1.bf16.msra.mxu0 0
      %3956 = vmatprep.subr.bf16.mxu0 0
      %3957 = vmatpush1.bf16.msra.mxu0 0
      %3958 = vmatprep.mubr.bf16.mxu0 0
      %3959 = vmatmul.mubr.bf16.gmra.mrb[0].mxu0 %v3876
      %v3960 = vpop.f32.mrb[0].mxu0
      %v3961 = vadd.f32 0.0, %v3960
      %v3962 = vpop.f32.mrb[0].mxu0
      %v3963 = vpop.f32.mrb[0].mxu0
      %v3964 = vadd.f32 0.0, %v3963
      %v3965 = vpop.f32.mrb[0].mxu0
      %3966 = vmatprep.mubr.bf16.mxu0 0
      %3967 = vmatmul.mubr.bf16.gmra.mrb[0].mxu0 %v3879
      %v3968 = vpop.f32.mrb[0].mxu0
      %v3969 = vadd.f32 0.0, %v3968
      %v3970 = vpop.f32.mrb[0].mxu0
      %v3971 = vpop.f32.mrb[0].mxu0
      %v3972 = vadd.f32 0.0, %v3971
      %v3973 = vpop.f32.mrb[0].mxu0
      %3974 = vmatprep.mubr.bf16.mxu0 0
      %3975 = vmatmul.mubr.bf16.gmra.mrb[0].mxu0 %v3882
      %v3976 = vpop.f32.mrb[0].mxu0
      %v3977 = vadd.f32 0.0, %v3976
      %v3978 = vpop.f32.mrb[0].mxu0
      %v3979 = vpop.f32.mrb[0].mxu0
      %v3980 = vadd.f32 0.0, %v3979
      %v3981 = vpop.f32.mrb[0].mxu0
      %3982 = vmatprep.mubr.bf16.mxu0 0
      %3983 = vmatmul.mubr.bf16.gmra.mrb[0].mxu0 %v3885
      %v3984 = vpop.f32.mrb[0].mxu0
      %v3985 = vadd.f32 0.0, %v3984
      %v3986 = vpop.f32.mrb[0].mxu0
      %v3987 = vpop.f32.mrb[0].mxu0
      %v3988 = vadd.f32 0.0, %v3987
      %v3989 = vpop.f32.mrb[0].mxu0
      %3990 = vmatprep.mubr.bf16.mxu0 0
      %3991 = vmatmul.mubr.bf16.gmra.mrb[0].mxu0 %v3888
      %v3992 = vpop.f32.mrb[0].mxu0
      %v3993 = vadd.f32 0.0, %v3992
      %v3994 = vpop.f32.mrb[0].mxu0
      %v3995 = vpop.f32.mrb[0].mxu0
      %v3996 = vadd.f32 0.0, %v3995
      %v3997 = vpop.f32.mrb[0].mxu0
      %3998 = vmatprep.mubr.bf16.mxu0 0
      %3999 = vmatmul.mubr.bf16.gmra.mrb[0].mxu0 %v3891
      %v4000 = vpop.f32.mrb[0].mxu0
      %v4001 = vadd.f32 0.0, %v4000
      %v4002 = vpop.f32.mrb[0].mxu0
      %v4003 = vpop.f32.mrb[0].mxu0
      %v4004 = vadd.f32 0.0, %v4003
      %v4005 = vpop.f32.mrb[0].mxu0
      %4006 = vmatprep.mubr.bf16.mxu0 0
      %4007 = vmatmul.mubr.bf16.gmra.mrb[0].mxu0 %v3894
      %v4008 = vpop.f32.mrb[0].mxu0
      %v4009 = vadd.f32 0.0, %v4008
      %v4010 = vpop.f32.mrb[0].mxu0
      %v4011 = vpop.f32.mrb[0].mxu0
      %v4012 = vadd.f32 0.0, %v4011
      %v4013 = vpop.f32.mrb[0].mxu0
      %4014 = vmatprep.mubr.bf16.mxu0 0
      %4015 = vmatmul.mubr.bf16.gmra.mrb[0].mxu0 %v3897
      %v4016 = vpop.f32.mrb[0].mxu0
      %v4017 = vadd.f32 0.0, %v4016
      %v4018 = vpop.f32.mrb[0].mxu0
      %v4019 = vpop.f32.mrb[0].mxu0
      %v4020 = vadd.f32 0.0, %v4019
      %v4021 = vpop.f32.mrb[0].mxu0
      %4022 = vmatprep.mubr.bf16.mxu0 0
      %4023 = vmatmul.mubr.bf16.gmra.mrb[0].mxu0 %v3900
      %v4024 = vpop.f32.mrb[0].mxu0
      %v4025 = vadd.f32 0.0, %v4024
      %v4026 = vpop.f32.mrb[0].mxu0
      %v4027 = vpop.f32.mrb[0].mxu0
      %v4028 = vadd.f32 0.0, %v4027
      %v4029 = vpop.f32.mrb[0].mxu0
      %4030 = vmatprep.mubr.bf16.mxu0 0
      %4031 = vmatmul.mubr.bf16.gmra.mrb[0].mxu0 %v3903
      %v4032 = vpop.f32.mrb[0].mxu0
      %v4033 = vadd.f32 0.0, %v4032
      %v4034 = vpop.f32.mrb[0].mxu0
      %v4035 = vpop.f32.mrb[0].mxu0
      %v4036 = vadd.f32 0.0, %v4035
      %v4037 = vpop.f32.mrb[0].mxu0
      %4038 = vmatprep.mubr.bf16.mxu0 0
      %4039 = vmatmul.mubr.bf16.gmra.mrb[0].mxu0 %v3906
      %v4040 = vpop.f32.mrb[0].mxu0
      %v4041 = vadd.f32 0.0, %v4040
      %v4042 = vpop.f32.mrb[0].mxu0
      %v4043 = vpop.f32.mrb[0].mxu0
      %v4044 = vadd.f32 0.0, %v4043
      %v4045 = vpop.f32.mrb[0].mxu0
      %4046 = vmatprep.mubr.bf16.mxu0 0
      %4047 = vmatmul.mubr.bf16.gmra.mrb[0].mxu0 %v3909
      %v4048 = vpop.f32.mrb[0].mxu0
      %v4049 = vadd.f32 0.0, %v4048
      %v4050 = vpop.f32.mrb[0].mxu0
      %v4051 = vpop.f32.mrb[0].mxu0
      %v4052 = vadd.f32 0.0, %v4051
      %v4053 = vpop.f32.mrb[0].mxu0
      %4054 = vmatprep.mubr.bf16.mxu0 0
      %4055 = vmatmul.mubr.bf16.gmra.mrb[0].mxu0 %v3912
      %v4056 = vpop.f32.mrb[0].mxu0
      %v4057 = vadd.f32 0.0, %v4056
      %v4058 = vpop.f32.mrb[0].mxu0
      %v4059 = vpop.f32.mrb[0].mxu0
      %v4060 = vadd.f32 0.0, %v4059
      %v4061 = vpop.f32.mrb[0].mxu0
      %4062 = vmatprep.mubr.bf16.mxu0 0
      %4063 = vmatmul.mubr.bf16.gmra.mrb[0].mxu0 %v3915
      %v4064 = vpop.f32.mrb[0].mxu0
      %v4065 = vadd.f32 0.0, %v4064
      %v4066 = vpop.f32.mrb[0].mxu0
      %v4067 = vpop.f32.mrb[0].mxu0
      %v4068 = vadd.f32 0.0, %v4067
      %v4069 = vpop.f32.mrb[0].mxu0
      %4070 = vmatprep.mubr.bf16.mxu0 0
      %4071 = vmatmul.mubr.bf16.gmra.mrb[0].mxu0 %v3918
      %v4072 = vpop.f32.mrb[0].mxu0
      %v4073 = vadd.f32 0.0, %v4072
      %v4074 = vpop.f32.mrb[0].mxu0
      %v4075 = vpop.f32.mrb[0].mxu0
      %v4076 = vadd.f32 0.0, %v4075
      %v4077 = vpop.f32.mrb[0].mxu0
      %4078 = vmatprep.mubr.bf16.mxu0 0
      %4079 = vmatmul.mubr.bf16.gmra.mrb[0].mxu0 %v3921
      %v4080 = vpop.f32.mrb[0].mxu0
      %v4081 = vadd.f32 0.0, %v4080
      %v4082 = vpop.f32.mrb[0].mxu0
      %v4083 = vpop.f32.mrb[0].mxu0
      %v4084 = vadd.f32 0.0, %v4083
      %v4085 = vpop.f32.mrb[0].mxu0
      %4086 = vdwg.mxu0
      %v4087 = vadd.f32 %v3536, %v3961
      %v4088 = vadd.f32 %v3537, %v3964
      %v4089 = vadd.f32 %v3538, %v3969
      %v4090 = vadd.f32 %v3539, %v3972
      %v4091 = vadd.f32 %v3540, %v3977
      %v4092 = vadd.f32 %v3541, %v3980
      %v4093 = vadd.f32 %v3542, %v3985
      %v4094 = vadd.f32 %v3543, %v3988
      %v4095 = vadd.f32 %v3544, %v3993
      %v4096 = vadd.f32 %v3545, %v3996
      %v4097 = vadd.f32 %v3546, %v4001
      %v4098 = vadd.f32 %v3547, %v4004
      %v4099 = vadd.f32 %v3548, %v4009
      %v4100 = vadd.f32 %v3549, %v4012
      %v4101 = vadd.f32 %v3550, %v4017
      %v4102 = vadd.f32 %v3551, %v4020
      %v4103 = vadd.f32 %v3552, %v4025
      %v4104 = vadd.f32 %v3553, %v4028
      %v4105 = vadd.f32 %v3554, %v4033
      %v4106 = vadd.f32 %v3555, %v4036
      %v4107 = vadd.f32 %v3556, %v4041
      %v4108 = vadd.f32 %v3557, %v4044
      %v4109 = vadd.f32 %v3558, %v4049
      %v4110 = vadd.f32 %v3559, %v4052
      %v4111 = vadd.f32 %v3560, %v4057
      %v4112 = vadd.f32 %v3561, %v4060
      %v4113 = vadd.f32 %v3562, %v4065
      %v4114 = vadd.f32 %v3563, %v4068
      %v4115 = vadd.f32 %v3564, %v4073
      %v4116 = vadd.f32 %v3565, %v4076
      %v4117 = vadd.f32 %v3566, %v4081
      %v4118 = vadd.f32 %v3567, %v4084
      %v4119 = vld [vmem:[%s3568] sm:$0xf0]
      %v4120 = vld [vmem:[%s3568 + $0x10] sm:$0xf0]
      %v4121 = vld [vmem:[%s3568 + $0x20] sm:$0xf0]
      %v4122 = vld [vmem:[%s3568 + $0x30] sm:$0xf0]
      %v4123 = vld [vmem:[%s3568 + $0x40] sm:$0xf0]
      %v4124 = vld [vmem:[%s3568 + $0x50] sm:$0xf0]
      %v4125 = vld [vmem:[%s3568 + $0x60] sm:$0xf0]
      %v4126 = vld [vmem:[%s3568 + $0x70] sm:$0xf0]
      %v4127 = vld [vmem:[%s3568 + $0x80] sm:$0xf0]
      %v4128 = vld [vmem:[%s3568 + $0x90] sm:$0xf0]
      %v4129 = vld [vmem:[%s3568 + $0xa0] sm:$0xf0]
      %v4130 = vld [vmem:[%s3568 + $0xb0] sm:$0xf0]
      %v4131 = vld [vmem:[%s3568 + $0xc0] sm:$0xf0]
      %v4132 = vld [vmem:[%s3568 + $0xd0] sm:$0xf0]
      %v4133 = vld [vmem:[%s3568 + $0xe0] sm:$0xf0]
      %v4134 = vld [vmem:[%s3568 + $0xf0] sm:$0xf0]
      %v4167 = vrot.slane %v4119, 4
      %v4168 = vrot.slane %v3570, 4
      %v4169 = vsel %vm1130, %v4167, %v4168
      %v4170 = vrot.slane %v4120, 4
      %v4171 = vrot.slane %v3572, 4
      %v4172 = vsel %vm1130, %v4170, %v4171
      %v4173 = vrot.slane %v4121, 4
      %v4174 = vrot.slane %v3574, 4
      %v4175 = vsel %vm1130, %v4173, %v4174
      %v4176 = vrot.slane %v4122, 4
      %v4177 = vrot.slane %v3576, 4
      %v4178 = vsel %vm1130, %v4176, %v4177
      %v4179 = vrot.slane %v4123, 4
      %v4180 = vrot.slane %v3578, 4
      %v4181 = vsel %vm1130, %v4179, %v4180
      %v4182 = vrot.slane %v4124, 4
      %v4183 = vrot.slane %v3580, 4
      %v4184 = vsel %vm1130, %v4182, %v4183
      %v4185 = vrot.slane %v4125, 4
      %v4186 = vrot.slane %v3582, 4
      %v4187 = vsel %vm1130, %v4185, %v4186
      %v4188 = vrot.slane %v4126, 4
      %v4189 = vrot.slane %v3584, 4
      %v4190 = vsel %vm1130, %v4188, %v4189
      %v4191 = vrot.slane %v4127, 4
      %v4192 = vrot.slane %v3586, 4
      %v4193 = vsel %vm1130, %v4191, %v4192
      %v4194 = vrot.slane %v4128, 4
      %v4195 = vrot.slane %v3588, 4
      %v4196 = vsel %vm1130, %v4194, %v4195
      %v4197 = vrot.slane %v4129, 4
      %v4198 = vrot.slane %v3590, 4
      %v4199 = vsel %vm1130, %v4197, %v4198
      %v4200 = vrot.slane %v4130, 4
      %v4201 = vrot.slane %v3592, 4
      %v4202 = vsel %vm1130, %v4200, %v4201
      %v4203 = vrot.slane %v4131, 4
      %v4204 = vrot.slane %v3594, 4
      %v4205 = vsel %vm1130, %v4203, %v4204
      %v4206 = vrot.slane %v4132, 4
      %v4207 = vrot.slane %v3596, 4
      %v4208 = vsel %vm1130, %v4206, %v4207
      %v4209 = vrot.slane %v4133, 4
      %v4210 = vrot.slane %v3598, 4
      %v4211 = vsel %vm1130, %v4209, %v4210
      %v4212 = vrot.slane %v4134, 4
      %v4213 = vrot.slane %v3600, 4
      %v4214 = vsel %vm1130, %v4212, %v4213
      %s4215 = scalar_lea.vmem %s3, 14
      %v4216 = vld [vmem:[%s4215] sm:$0x3]
      %v4218 = vsel %vm1181, %v4169, 0
      %v4221 = vsel %vm1181, %v4172, 0
      %v4224 = vsel %vm1181, %v4175, 0
      %v4227 = vsel %vm1181, %v4178, 0
      %v4230 = vsel %vm1181, %v4181, 0
      %v4233 = vsel %vm1181, %v4184, 0
      %v4236 = vsel %vm1181, %v4187, 0
      %v4239 = vsel %vm1181, %v4190, 0
      %v4242 = vsel %vm1181, %v4193, 0
      %v4245 = vsel %vm1181, %v4196, 0
      %v4248 = vsel %vm1181, %v4199, 0
      %v4251 = vsel %vm1181, %v4202, 0
      %v4254 = vsel %vm1181, %v4205, 0
      %v4257 = vsel %vm1181, %v4208, 0
      %v4260 = vsel %vm1181, %v4211, 0
      %v4263 = vsel %vm1181, %v4214, 0
      %v4266 = vsel %vm1230, %v4216, 0
      %4268 = vmatprep.subr.bf16.mxu0 0
      %4269 = vmatpush1.bf16.msra.mxu0 %v4266
      %4270 = vmatprep.subr.bf16.mxu0 0
      %4271 = vmatpush1.bf16.msra.mxu0 0
      %4272 = vmatprep.subr.bf16.mxu0 0
      %4273 = vmatpush1.bf16.msra.mxu0 0
      %4274 = vmatprep.subr.bf16.mxu0 0
      %4275 = vmatpush1.bf16.msra.mxu0 0
      %4276 = vmatprep.subr.bf16.mxu0 0
      %4277 = vmatpush1.bf16.msra.mxu0 0
      %4278 = vmatprep.subr.bf16.mxu0 0
      %4279 = vmatpush1.bf16.msra.mxu0 0
      %4280 = vmatprep.subr.bf16.mxu0 0
      %4281 = vmatpush1.bf16.msra.mxu0 0
      %4282 = vmatprep.subr.bf16.mxu0 0
      %4283 = vmatpush1.bf16.msra.mxu0 0
      %4284 = vmatprep.subr.bf16.mxu0 0
      %4285 = vmatpush1.bf16.msra.mxu0 0
      %4286 = vmatprep.subr.bf16.mxu0 0
      %4287 = vmatpush1.bf16.msra.mxu0 0
      %4288 = vmatprep.subr.bf16.mxu0 0
      %4289 = vmatpush1.bf16.msra.mxu0 0
      %4290 = vmatprep.subr.bf16.mxu0 0
      %4291 = vmatpush1.bf16.msra.mxu0 0
      %4292 = vmatprep.subr.bf16.mxu0 0
      %4293 = vmatpush1.bf16.msra.mxu0 0
      %4294 = vmatprep.subr.bf16.mxu0 0
      %4295 = vmatpush1.bf16.msra.mxu0 0
      %4296 = vmatprep.subr.bf16.mxu0 0
      %4297 = vmatpush1.bf16.msra.mxu0 0
      %4298 = vmatprep.subr.bf16.mxu0 0
      %4299 = vmatpush1.bf16.msra.mxu0 0
      %4300 = vmatprep.mubr.bf16.mxu0 0
      %4301 = vmatmul.mubr.bf16.gmra.mrb[0].mxu0 %v4218
      %v4302 = vpop.f32.mrb[0].mxu0
      %v4303 = vadd.f32 0.0, %v4302
      %v4304 = vpop.f32.mrb[0].mxu0
      %v4305 = vpop.f32.mrb[0].mxu0
      %v4306 = vadd.f32 0.0, %v4305
      %v4307 = vpop.f32.mrb[0].mxu0
      %4308 = vmatprep.mubr.bf16.mxu0 0
      %4309 = vmatmul.mubr.bf16.gmra.mrb[0].mxu0 %v4221
      %v4310 = vpop.f32.mrb[0].mxu0
      %v4311 = vadd.f32 0.0, %v4310
      %v4312 = vpop.f32.mrb[0].mxu0
      %v4313 = vpop.f32.mrb[0].mxu0
      %v4314 = vadd.f32 0.0, %v4313
      %v4315 = vpop.f32.mrb[0].mxu0
      %4316 = vmatprep.mubr.bf16.mxu0 0
      %4317 = vmatmul.mubr.bf16.gmra.mrb[0].mxu0 %v4224
      %v4318 = vpop.f32.mrb[0].mxu0
      %v4319 = vadd.f32 0.0, %v4318
      %v4320 = vpop.f32.mrb[0].mxu0
      %v4321 = vpop.f32.mrb[0].mxu0
      %v4322 = vadd.f32 0.0, %v4321
      %v4323 = vpop.f32.mrb[0].mxu0
      %4324 = vmatprep.mubr.bf16.mxu0 0
      %4325 = vmatmul.mubr.bf16.gmra.mrb[0].mxu0 %v4227
      %v4326 = vpop.f32.mrb[0].mxu0
      %v4327 = vadd.f32 0.0, %v4326
      %v4328 = vpop.f32.mrb[0].mxu0
      %v4329 = vpop.f32.mrb[0].mxu0
      %v4330 = vadd.f32 0.0, %v4329
      %v4331 = vpop.f32.mrb[0].mxu0
      %4332 = vmatprep.mubr.bf16.mxu0 0
      %4333 = vmatmul.mubr.bf16.gmra.mrb[0].mxu0 %v4230
      %v4334 = vpop.f32.mrb[0].mxu0
      %v4335 = vadd.f32 0.0, %v4334
      %v4336 = vpop.f32.mrb[0].mxu0
      %v4337 = vpop.f32.mrb[0].mxu0
      %v4338 = vadd.f32 0.0, %v4337
      %v4339 = vpop.f32.mrb[0].mxu0
      %4340 = vmatprep.mubr.bf16.mxu0 0
      %4341 = vmatmul.mubr.bf16.gmra.mrb[0].mxu0 %v4233
      %v4342 = vpop.f32.mrb[0].mxu0
      %v4343 = vadd.f32 0.0, %v4342
      %v4344 = vpop.f32.mrb[0].mxu0
      %v4345 = vpop.f32.mrb[0].mxu0
      %v4346 = vadd.f32 0.0, %v4345
      %v4347 = vpop.f32.mrb[0].mxu0
      %4348 = vmatprep.mubr.bf16.mxu0 0
      %4349 = vmatmul.mubr.bf16.gmra.mrb[0].mxu0 %v4236
      %v4350 = vpop.f32.mrb[0].mxu0
      %v4351 = vadd.f32 0.0, %v4350
      %v4352 = vpop.f32.mrb[0].mxu0
      %v4353 = vpop.f32.mrb[0].mxu0
      %v4354 = vadd.f32 0.0, %v4353
      %v4355 = vpop.f32.mrb[0].mxu0
      %4356 = vmatprep.mubr.bf16.mxu0 0
      %4357 = vmatmul.mubr.bf16.gmra.mrb[0].mxu0 %v4239
      %v4358 = vpop.f32.mrb[0].mxu0
      %v4359 = vadd.f32 0.0, %v4358
      %v4360 = vpop.f32.mrb[0].mxu0
      %v4361 = vpop.f32.mrb[0].mxu0
      %v4362 = vadd.f32 0.0, %v4361
      %v4363 = vpop.f32.mrb[0].mxu0
      %4364 = vmatprep.mubr.bf16.mxu0 0
      %4365 = vmatmul.mubr.bf16.gmra.mrb[0].mxu0 %v4242
      %v4366 = vpop.f32.mrb[0].mxu0
      %v4367 = vadd.f32 0.0, %v4366
      %v4368 = vpop.f32.mrb[0].mxu0
      %v4369 = vpop.f32.mrb[0].mxu0
      %v4370 = vadd.f32 0.0, %v4369
      %v4371 = vpop.f32.mrb[0].mxu0
      %4372 = vmatprep.mubr.bf16.mxu0 0
      %4373 = vmatmul.mubr.bf16.gmra.mrb[0].mxu0 %v4245
      %v4374 = vpop.f32.mrb[0].mxu0
      %v4375 = vadd.f32 0.0, %v4374
      %v4376 = vpop.f32.mrb[0].mxu0
      %v4377 = vpop.f32.mrb[0].mxu0
      %v4378 = vadd.f32 0.0, %v4377
      %v4379 = vpop.f32.mrb[0].mxu0
      %4380 = vmatprep.mubr.bf16.mxu0 0
      %4381 = vmatmul.mubr.bf16.gmra.mrb[0].mxu0 %v4248
      %v4382 = vpop.f32.mrb[0].mxu0
      %v4383 = vadd.f32 0.0, %v4382
      %v4384 = vpop.f32.mrb[0].mxu0
      %v4385 = vpop.f32.mrb[0].mxu0
      %v4386 = vadd.f32 0.0, %v4385
      %v4387 = vpop.f32.mrb[0].mxu0
      %4388 = vmatprep.mubr.bf16.mxu0 0
      %4389 = vmatmul.mubr.bf16.gmra.mrb[0].mxu0 %v4251
      %v4390 = vpop.f32.mrb[0].mxu0
      %v4391 = vadd.f32 0.0, %v4390
      %v4392 = vpop.f32.mrb[0].mxu0
      %v4393 = vpop.f32.mrb[0].mxu0
      %v4394 = vadd.f32 0.0, %v4393
      %v4395 = vpop.f32.mrb[0].mxu0
      %4396 = vmatprep.mubr.bf16.mxu0 0
      %4397 = vmatmul.mubr.bf16.gmra.mrb[0].mxu0 %v4254
      %v4398 = vpop.f32.mrb[0].mxu0
      %v4399 = vadd.f32 0.0, %v4398
      %v4400 = vpop.f32.mrb[0].mxu0
      %v4401 = vpop.f32.mrb[0].mxu0
      %v4402 = vadd.f32 0.0, %v4401
      %v4403 = vpop.f32.mrb[0].mxu0
      %4404 = vmatprep.mubr.bf16.mxu0 0
      %4405 = vmatmul.mubr.bf16.gmra.mrb[0].mxu0 %v4257
      %v4406 = vpop.f32.mrb[0].mxu0
      %v4407 = vadd.f32 0.0, %v4406
      %v4408 = vpop.f32.mrb[0].mxu0
      %v4409 = vpop.f32.mrb[0].mxu0
      %v4410 = vadd.f32 0.0, %v4409
      %v4411 = vpop.f32.mrb[0].mxu0
      %4412 = vmatprep.mubr.bf16.mxu0 0
      %4413 = vmatmul.mubr.bf16.gmra.mrb[0].mxu0 %v4260
      %v4414 = vpop.f32.mrb[0].mxu0
      %v4415 = vadd.f32 0.0, %v4414
      %v4416 = vpop.f32.mrb[0].mxu0
      %v4417 = vpop.f32.mrb[0].mxu0
      %v4418 = vadd.f32 0.0, %v4417
      %v4419 = vpop.f32.mrb[0].mxu0
      %4420 = vmatprep.mubr.bf16.mxu0 0
      %4421 = vmatmul.mubr.bf16.gmra.mrb[0].mxu0 %v4263
      %v4422 = vpop.f32.mrb[0].mxu0
      %v4423 = vadd.f32 0.0, %v4422
      %v4424 = vpop.f32.mrb[0].mxu0
      %v4425 = vpop.f32.mrb[0].mxu0
      %v4426 = vadd.f32 0.0, %v4425
      %v4427 = vpop.f32.mrb[0].mxu0
      %4428 = vdwg.mxu0
      %v4429 = vadd.f32 %v4087, %v4303
      %v4430 = vadd.f32 %v4088, %v4306
      %v4431 = vadd.f32 %v4089, %v4311
      %v4432 = vadd.f32 %v4090, %v4314
      %v4433 = vadd.f32 %v4091, %v4319
      %v4434 = vadd.f32 %v4092, %v4322
      %v4435 = vadd.f32 %v4093, %v4327
      %v4436 = vadd.f32 %v4094, %v4330
      %v4437 = vadd.f32 %v4095, %v4335
      %v4438 = vadd.f32 %v4096, %v4338
      %v4439 = vadd.f32 %v4097, %v4343
      %v4440 = vadd.f32 %v4098, %v4346
      %v4441 = vadd.f32 %v4099, %v4351
      %v4442 = vadd.f32 %v4100, %v4354
      %v4443 = vadd.f32 %v4101, %v4359
      %v4444 = vadd.f32 %v4102, %v4362
      %v4445 = vadd.f32 %v4103, %v4367
      %v4446 = vadd.f32 %v4104, %v4370
      %v4447 = vadd.f32 %v4105, %v4375
      %v4448 = vadd.f32 %v4106, %v4378
      %v4449 = vadd.f32 %v4107, %v4383
      %v4450 = vadd.f32 %v4108, %v4386
      %v4451 = vadd.f32 %v4109, %v4391
      %v4452 = vadd.f32 %v4110, %v4394
      %v4453 = vadd.f32 %v4111, %v4399
      %v4454 = vadd.f32 %v4112, %v4402
      %v4455 = vadd.f32 %v4113, %v4407
      %v4456 = vadd.f32 %v4114, %v4410
      %v4457 = vadd.f32 %v4115, %v4415
      %v4458 = vadd.f32 %v4116, %v4418
      %v4459 = vadd.f32 %v4117, %v4423
      %v4460 = vadd.f32 %v4118, %v4426
      %v4461 = vld [vmem:[%s3568 + $0x8] sm:$0x1f]
      %v4462 = vld [vmem:[%s3568 + $0x18] sm:$0x1f]
      %v4463 = vld [vmem:[%s3568 + $0x28] sm:$0x1f]
      %v4464 = vld [vmem:[%s3568 + $0x38] sm:$0x1f]
      %v4465 = vld [vmem:[%s3568 + $0x48] sm:$0x1f]
      %v4466 = vld [vmem:[%s3568 + $0x58] sm:$0x1f]
      %v4467 = vld [vmem:[%s3568 + $0x68] sm:$0x1f]
      %v4468 = vld [vmem:[%s3568 + $0x78] sm:$0x1f]
      %v4469 = vld [vmem:[%s3568 + $0x88] sm:$0x1f]
      %v4470 = vld [vmem:[%s3568 + $0x98] sm:$0x1f]
      %v4471 = vld [vmem:[%s3568 + $0xa8] sm:$0x1f]
      %v4472 = vld [vmem:[%s3568 + $0xb8] sm:$0x1f]
      %v4473 = vld [vmem:[%s3568 + $0xc8] sm:$0x1f]
      %v4474 = vld [vmem:[%s3568 + $0xd8] sm:$0x1f]
      %v4475 = vld [vmem:[%s3568 + $0xe8] sm:$0x1f]
      %v4476 = vld [vmem:[%s3568 + $0xf8] sm:$0x1f]
      %v4478 = vshrl.u32 %v4119, 16
      %v4480 = vrot.slane %v4478, 4
      %v4481 = vshll.u32 %v4119, 16
      %v4483 = vrot.slane %v4481, 5
      %v4484 = vor.u32 %v4480, %v4483
      %v4486 = vshrl.u32 %v4461, 16
      %v4488 = vrot.slane %v4486, 4
      %v4489 = vshll.u32 %v4461, 16
      %v4491 = vrot.slane %v4489, 5
      %v4492 = vor.u32 %v4488, %v4491
      %v4493 = vsel %vm1623, %v4484, %v4492
      %v4495 = vshrl.u32 %v4120, 16
      %v4497 = vrot.slane %v4495, 4
      %v4498 = vshll.u32 %v4120, 16
      %v4500 = vrot.slane %v4498, 5
      %v4501 = vor.u32 %v4497, %v4500
      %v4503 = vshrl.u32 %v4462, 16
      %v4505 = vrot.slane %v4503, 4
      %v4506 = vshll.u32 %v4462, 16
      %v4508 = vrot.slane %v4506, 5
      %v4509 = vor.u32 %v4505, %v4508
      %v4510 = vsel %vm1623, %v4501, %v4509
      %v4512 = vshrl.u32 %v4121, 16
      %v4514 = vrot.slane %v4512, 4
      %v4515 = vshll.u32 %v4121, 16
      %v4517 = vrot.slane %v4515, 5
      %v4518 = vor.u32 %v4514, %v4517
      %v4520 = vshrl.u32 %v4463, 16
      %v4522 = vrot.slane %v4520, 4
      %v4523 = vshll.u32 %v4463, 16
      %v4525 = vrot.slane %v4523, 5
      %v4526 = vor.u32 %v4522, %v4525
      %v4527 = vsel %vm1623, %v4518, %v4526
      %v4529 = vshrl.u32 %v4122, 16
      %v4531 = vrot.slane %v4529, 4
      %v4532 = vshll.u32 %v4122, 16
      %v4534 = vrot.slane %v4532, 5
      %v4535 = vor.u32 %v4531, %v4534
      %v4537 = vshrl.u32 %v4464, 16
      %v4539 = vrot.slane %v4537, 4
      %v4540 = vshll.u32 %v4464, 16
      %v4542 = vrot.slane %v4540, 5
      %v4543 = vor.u32 %v4539, %v4542
      %v4544 = vsel %vm1623, %v4535, %v4543
      %v4546 = vshrl.u32 %v4123, 16
      %v4548 = vrot.slane %v4546, 4
      %v4549 = vshll.u32 %v4123, 16
      %v4551 = vrot.slane %v4549, 5
      %v4552 = vor.u32 %v4548, %v4551
      %v4554 = vshrl.u32 %v4465, 16
      %v4556 = vrot.slane %v4554, 4
      %v4557 = vshll.u32 %v4465, 16
      %v4559 = vrot.slane %v4557, 5
      %v4560 = vor.u32 %v4556, %v4559
      %v4561 = vsel %vm1623, %v4552, %v4560
      %v4563 = vshrl.u32 %v4124, 16
      %v4565 = vrot.slane %v4563, 4
      %v4566 = vshll.u32 %v4124, 16
      %v4568 = vrot.slane %v4566, 5
      %v4569 = vor.u32 %v4565, %v4568
      %v4571 = vshrl.u32 %v4466, 16
      %v4573 = vrot.slane %v4571, 4
      %v4574 = vshll.u32 %v4466, 16
      %v4576 = vrot.slane %v4574, 5
      %v4577 = vor.u32 %v4573, %v4576
      %v4578 = vsel %vm1623, %v4569, %v4577
      %v4580 = vshrl.u32 %v4125, 16
      %v4582 = vrot.slane %v4580, 4
      %v4583 = vshll.u32 %v4125, 16
      %v4585 = vrot.slane %v4583, 5
      %v4586 = vor.u32 %v4582, %v4585
      %v4588 = vshrl.u32 %v4467, 16
      %v4590 = vrot.slane %v4588, 4
      %v4591 = vshll.u32 %v4467, 16
      %v4593 = vrot.slane %v4591, 5
      %v4594 = vor.u32 %v4590, %v4593
      %v4595 = vsel %vm1623, %v4586, %v4594
      %v4597 = vshrl.u32 %v4126, 16
      %v4599 = vrot.slane %v4597, 4
      %v4600 = vshll.u32 %v4126, 16
      %v4602 = vrot.slane %v4600, 5
      %v4603 = vor.u32 %v4599, %v4602
      %v4605 = vshrl.u32 %v4468, 16
      %v4607 = vrot.slane %v4605, 4
      %v4608 = vshll.u32 %v4468, 16
      %v4610 = vrot.slane %v4608, 5
      %v4611 = vor.u32 %v4607, %v4610
      %v4612 = vsel %vm1623, %v4603, %v4611
      %v4614 = vshrl.u32 %v4127, 16
      %v4616 = vrot.slane %v4614, 4
      %v4617 = vshll.u32 %v4127, 16
      %v4619 = vrot.slane %v4617, 5
      %v4620 = vor.u32 %v4616, %v4619
      %v4622 = vshrl.u32 %v4469, 16
      %v4624 = vrot.slane %v4622, 4
      %v4625 = vshll.u32 %v4469, 16
      %v4627 = vrot.slane %v4625, 5
      %v4628 = vor.u32 %v4624, %v4627
      %v4629 = vsel %vm1623, %v4620, %v4628
      %v4631 = vshrl.u32 %v4128, 16
      %v4633 = vrot.slane %v4631, 4
      %v4634 = vshll.u32 %v4128, 16
      %v4636 = vrot.slane %v4634, 5
      %v4637 = vor.u32 %v4633, %v4636
      %v4639 = vshrl.u32 %v4470, 16
      %v4641 = vrot.slane %v4639, 4
      %v4642 = vshll.u32 %v4470, 16
      %v4644 = vrot.slane %v4642, 5
      %v4645 = vor.u32 %v4641, %v4644
      %v4646 = vsel %vm1623, %v4637, %v4645
      %v4648 = vshrl.u32 %v4129, 16
      %v4650 = vrot.slane %v4648, 4
      %v4651 = vshll.u32 %v4129, 16
      %v4653 = vrot.slane %v4651, 5
      %v4654 = vor.u32 %v4650, %v4653
      %v4656 = vshrl.u32 %v4471, 16
      %v4658 = vrot.slane %v4656, 4
      %v4659 = vshll.u32 %v4471, 16
      %v4661 = vrot.slane %v4659, 5
      %v4662 = vor.u32 %v4658, %v4661
      %v4663 = vsel %vm1623, %v4654, %v4662
      %v4665 = vshrl.u32 %v4130, 16
      %v4667 = vrot.slane %v4665, 4
      %v4668 = vshll.u32 %v4130, 16
      %v4670 = vrot.slane %v4668, 5
      %v4671 = vor.u32 %v4667, %v4670
      %v4673 = vshrl.u32 %v4472, 16
      %v4675 = vrot.slane %v4673, 4
      %v4676 = vshll.u32 %v4472, 16
      %v4678 = vrot.slane %v4676, 5
      %v4679 = vor.u32 %v4675, %v4678
      %v4680 = vsel %vm1623, %v4671, %v4679
      %v4682 = vshrl.u32 %v4131, 16
      %v4684 = vrot.slane %v4682, 4
      %v4685 = vshll.u32 %v4131, 16
      %v4687 = vrot.slane %v4685, 5
      %v4688 = vor.u32 %v4684, %v4687
      %v4690 = vshrl.u32 %v4473, 16
      %v4692 = vrot.slane %v4690, 4
      %v4693 = vshll.u32 %v4473, 16
      %v4695 = vrot.slane %v4693, 5
      %v4696 = vor.u32 %v4692, %v4695
      %v4697 = vsel %vm1623, %v4688, %v4696
      %v4699 = vshrl.u32 %v4132, 16
      %v4701 = vrot.slane %v4699, 4
      %v4702 = vshll.u32 %v4132, 16
      %v4704 = vrot.slane %v4702, 5
      %v4705 = vor.u32 %v4701, %v4704
      %v4707 = vshrl.u32 %v4474, 16
      %v4709 = vrot.slane %v4707, 4
      %v4710 = vshll.u32 %v4474, 16
      %v4712 = vrot.slane %v4710, 5
      %v4713 = vor.u32 %v4709, %v4712
      %v4714 = vsel %vm1623, %v4705, %v4713
      %v4716 = vshrl.u32 %v4133, 16
      %v4718 = vrot.slane %v4716, 4
      %v4719 = vshll.u32 %v4133, 16
      %v4721 = vrot.slane %v4719, 5
      %v4722 = vor.u32 %v4718, %v4721
      %v4724 = vshrl.u32 %v4475, 16
      %v4726 = vrot.slane %v4724, 4
      %v4727 = vshll.u32 %v4475, 16
      %v4729 = vrot.slane %v4727, 5
      %v4730 = vor.u32 %v4726, %v4729
      %v4731 = vsel %vm1623, %v4722, %v4730
      %v4733 = vshrl.u32 %v4134, 16
      %v4735 = vrot.slane %v4733, 4
      %v4736 = vshll.u32 %v4134, 16
      %v4738 = vrot.slane %v4736, 5
      %v4739 = vor.u32 %v4735, %v4738
      %v4741 = vshrl.u32 %v4476, 16
      %v4743 = vrot.slane %v4741, 4
      %v4744 = vshll.u32 %v4476, 16
      %v4746 = vrot.slane %v4744, 5
      %v4747 = vor.u32 %v4743, %v4746
      %v4748 = vsel %vm1623, %v4739, %v4747
      %s4749 = scalar_lea.vmem %s3, 16
      %v4750 = vld [vmem:[%s4749] sm:$0x3]
      %v4752 = vsel %vm1181, %v4493, 0
      %v4755 = vsel %vm1181, %v4510, 0
      %v4758 = vsel %vm1181, %v4527, 0
      %v4761 = vsel %vm1181, %v4544, 0
      %v4764 = vsel %vm1181, %v4561, 0
      %v4767 = vsel %vm1181, %v4578, 0
      %v4770 = vsel %vm1181, %v4595, 0
      %v4773 = vsel %vm1181, %v4612, 0
      %v4776 = vsel %vm1181, %v4629, 0
      %v4779 = vsel %vm1181, %v4646, 0
      %v4782 = vsel %vm1181, %v4663, 0
      %v4785 = vsel %vm1181, %v4680, 0
      %v4788 = vsel %vm1181, %v4697, 0
      %v4791 = vsel %vm1181, %v4714, 0
      %v4794 = vsel %vm1181, %v4731, 0
      %v4797 = vsel %vm1181, %v4748, 0
      %v4800 = vsel %vm1230, %v4750, 0
      %4802 = vmatprep.subr.bf16.mxu0 0
      %4803 = vmatpush1.bf16.msra.mxu0 %v4800
      %4804 = vmatprep.subr.bf16.mxu0 0
      %4805 = vmatpush1.bf16.msra.mxu0 0
      %4806 = vmatprep.subr.bf16.mxu0 0
      %4807 = vmatpush1.bf16.msra.mxu0 0
      %4808 = vmatprep.subr.bf16.mxu0 0
      %4809 = vmatpush1.bf16.msra.mxu0 0
      %4810 = vmatprep.subr.bf16.mxu0 0
      %4811 = vmatpush1.bf16.msra.mxu0 0
      %4812 = vmatprep.subr.bf16.mxu0 0
      %4813 = vmatpush1.bf16.msra.mxu0 0
      %4814 = vmatprep.subr.bf16.mxu0 0
      %4815 = vmatpush1.bf16.msra.mxu0 0
      %4816 = vmatprep.subr.bf16.mxu0 0
      %4817 = vmatpush1.bf16.msra.mxu0 0
      %4818 = vmatprep.subr.bf16.mxu0 0
      %4819 = vmatpush1.bf16.msra.mxu0 0
      %4820 = vmatprep.subr.bf16.mxu0 0
      %4821 = vmatpush1.bf16.msra.mxu0 0
      %4822 = vmatprep.subr.bf16.mxu0 0
      %4823 = vmatpush1.bf16.msra.mxu0 0
      %4824 = vmatprep.subr.bf16.mxu0 0
      %4825 = vmatpush1.bf16.msra.mxu0 0
      %4826 = vmatprep.subr.bf16.mxu0 0
      %4827 = vmatpush1.bf16.msra.mxu0 0
      %4828 = vmatprep.subr.bf16.mxu0 0
      %4829 = vmatpush1.bf16.msra.mxu0 0
      %4830 = vmatprep.subr.bf16.mxu0 0
      %4831 = vmatpush1.bf16.msra.mxu0 0
      %4832 = vmatprep.subr.bf16.mxu0 0
      %4833 = vmatpush1.bf16.msra.mxu0 0
      %4834 = vmatprep.mubr.bf16.mxu0 0
      %4835 = vmatmul.mubr.bf16.gmra.mrb[0].mxu0 %v4752
      %v4836 = vpop.f32.mrb[0].mxu0
      %v4837 = vadd.f32 0.0, %v4836
      %v4838 = vpop.f32.mrb[0].mxu0
      %v4839 = vpop.f32.mrb[0].mxu0
      %v4840 = vadd.f32 0.0, %v4839
      %v4841 = vpop.f32.mrb[0].mxu0
      %4842 = vmatprep.mubr.bf16.mxu0 0
      %4843 = vmatmul.mubr.bf16.gmra.mrb[0].mxu0 %v4755
      %v4844 = vpop.f32.mrb[0].mxu0
      %v4845 = vadd.f32 0.0, %v4844
      %v4846 = vpop.f32.mrb[0].mxu0
      %v4847 = vpop.f32.mrb[0].mxu0
      %v4848 = vadd.f32 0.0, %v4847
      %v4849 = vpop.f32.mrb[0].mxu0
      %4850 = vmatprep.mubr.bf16.mxu0 0
      %4851 = vmatmul.mubr.bf16.gmra.mrb[0].mxu0 %v4758
      %v4852 = vpop.f32.mrb[0].mxu0
      %v4853 = vadd.f32 0.0, %v4852
      %v4854 = vpop.f32.mrb[0].mxu0
      %v4855 = vpop.f32.mrb[0].mxu0
      %v4856 = vadd.f32 0.0, %v4855
      %v4857 = vpop.f32.mrb[0].mxu0
      %4858 = vmatprep.mubr.bf16.mxu0 0
      %4859 = vmatmul.mubr.bf16.gmra.mrb[0].mxu0 %v4761
      %v4860 = vpop.f32.mrb[0].mxu0
      %v4861 = vadd.f32 0.0, %v4860
      %v4862 = vpop.f32.mrb[0].mxu0
      %v4863 = vpop.f32.mrb[0].mxu0
      %v4864 = vadd.f32 0.0, %v4863
      %v4865 = vpop.f32.mrb[0].mxu0
      %4866 = vmatprep.mubr.bf16.mxu0 0
      %4867 = vmatmul.mubr.bf16.gmra.mrb[0].mxu0 %v4764
      %v4868 = vpop.f32.mrb[0].mxu0
      %v4869 = vadd.f32 0.0, %v4868
      %v4870 = vpop.f32.mrb[0].mxu0
      %v4871 = vpop.f32.mrb[0].mxu0
      %v4872 = vadd.f32 0.0, %v4871
      %v4873 = vpop.f32.mrb[0].mxu0
      %4874 = vmatprep.mubr.bf16.mxu0 0
      %4875 = vmatmul.mubr.bf16.gmra.mrb[0].mxu0 %v4767
      %v4876 = vpop.f32.mrb[0].mxu0
      %v4877 = vadd.f32 0.0, %v4876
      %v4878 = vpop.f32.mrb[0].mxu0
      %v4879 = vpop.f32.mrb[0].mxu0
      %v4880 = vadd.f32 0.0, %v4879
      %v4881 = vpop.f32.mrb[0].mxu0
      %4882 = vmatprep.mubr.bf16.mxu0 0
      %4883 = vmatmul.mubr.bf16.gmra.mrb[0].mxu0 %v4770
      %v4884 = vpop.f32.mrb[0].mxu0
      %v4885 = vadd.f32 0.0, %v4884
      %v4886 = vpop.f32.mrb[0].mxu0
      %v4887 = vpop.f32.mrb[0].mxu0
      %v4888 = vadd.f32 0.0, %v4887
      %v4889 = vpop.f32.mrb[0].mxu0
      %4890 = vmatprep.mubr.bf16.mxu0 0
      %4891 = vmatmul.mubr.bf16.gmra.mrb[0].mxu0 %v4773
      %v4892 = vpop.f32.mrb[0].mxu0
      %v4893 = vadd.f32 0.0, %v4892
      %v4894 = vpop.f32.mrb[0].mxu0
      %v4895 = vpop.f32.mrb[0].mxu0
      %v4896 = vadd.f32 0.0, %v4895
      %v4897 = vpop.f32.mrb[0].mxu0
      %4898 = vmatprep.mubr.bf16.mxu0 0
      %4899 = vmatmul.mubr.bf16.gmra.mrb[0].mxu0 %v4776
      %v4900 = vpop.f32.mrb[0].mxu0
      %v4901 = vadd.f32 0.0, %v4900
      %v4902 = vpop.f32.mrb[0].mxu0
      %v4903 = vpop.f32.mrb[0].mxu0
      %v4904 = vadd.f32 0.0, %v4903
      %v4905 = vpop.f32.mrb[0].mxu0
      %4906 = vmatprep.mubr.bf16.mxu0 0
      %4907 = vmatmul.mubr.bf16.gmra.mrb[0].mxu0 %v4779
      %v4908 = vpop.f32.mrb[0].mxu0
      %v4909 = vadd.f32 0.0, %v4908
      %v4910 = vpop.f32.mrb[0].mxu0
      %v4911 = vpop.f32.mrb[0].mxu0
      %v4912 = vadd.f32 0.0, %v4911
      %v4913 = vpop.f32.mrb[0].mxu0
      %4914 = vmatprep.mubr.bf16.mxu0 0
      %4915 = vmatmul.mubr.bf16.gmra.mrb[0].mxu0 %v4782
      %v4916 = vpop.f32.mrb[0].mxu0
      %v4917 = vadd.f32 0.0, %v4916
      %v4918 = vpop.f32.mrb[0].mxu0
      %v4919 = vpop.f32.mrb[0].mxu0
      %v4920 = vadd.f32 0.0, %v4919
      %v4921 = vpop.f32.mrb[0].mxu0
      %4922 = vmatprep.mubr.bf16.mxu0 0
      %4923 = vmatmul.mubr.bf16.gmra.mrb[0].mxu0 %v4785
      %v4924 = vpop.f32.mrb[0].mxu0
      %v4925 = vadd.f32 0.0, %v4924
      %v4926 = vpop.f32.mrb[0].mxu0
      %v4927 = vpop.f32.mrb[0].mxu0
      %v4928 = vadd.f32 0.0, %v4927
      %v4929 = vpop.f32.mrb[0].mxu0
      %4930 = vmatprep.mubr.bf16.mxu0 0
      %4931 = vmatmul.mubr.bf16.gmra.mrb[0].mxu0 %v4788
      %v4932 = vpop.f32.mrb[0].mxu0
      %v4933 = vadd.f32 0.0, %v4932
      %v4934 = vpop.f32.mrb[0].mxu0
      %v4935 = vpop.f32.mrb[0].mxu0
      %v4936 = vadd.f32 0.0, %v4935
      %v4937 = vpop.f32.mrb[0].mxu0
      %4938 = vmatprep.mubr.bf16.mxu0 0
      %4939 = vmatmul.mubr.bf16.gmra.mrb[0].mxu0 %v4791
      %v4940 = vpop.f32.mrb[0].mxu0
      %v4941 = vadd.f32 0.0, %v4940
      %v4942 = vpop.f32.mrb[0].mxu0
      %v4943 = vpop.f32.mrb[0].mxu0
      %v4944 = vadd.f32 0.0, %v4943
      %v4945 = vpop.f32.mrb[0].mxu0
      %4946 = vmatprep.mubr.bf16.mxu0 0
      %4947 = vmatmul.mubr.bf16.gmra.mrb[0].mxu0 %v4794
      %v4948 = vpop.f32.mrb[0].mxu0
      %v4949 = vadd.f32 0.0, %v4948
      %v4950 = vpop.f32.mrb[0].mxu0
      %v4951 = vpop.f32.mrb[0].mxu0
      %v4952 = vadd.f32 0.0, %v4951
      %v4953 = vpop.f32.mrb[0].mxu0
      %4954 = vmatprep.mubr.bf16.mxu0 0
      %4955 = vmatmul.mubr.bf16.gmra.mrb[0].mxu0 %v4797
      %v4956 = vpop.f32.mrb[0].mxu0
      %v4957 = vadd.f32 0.0, %v4956
      %v4958 = vpop.f32.mrb[0].mxu0
      %v4959 = vpop.f32.mrb[0].mxu0
      %v4960 = vadd.f32 0.0, %v4959
      %v4961 = vpop.f32.mrb[0].mxu0
      %4962 = vdwg.mxu0
      %v4963 = vadd.f32 %v4429, %v4837
      %v4964 = vadd.f32 %v4430, %v4840
      %v4965 = vadd.f32 %v4431, %v4845
      %v4966 = vadd.f32 %v4432, %v4848
      %v4967 = vadd.f32 %v4433, %v4853
      %v4968 = vadd.f32 %v4434, %v4856
      %v4969 = vadd.f32 %v4435, %v4861
      %v4970 = vadd.f32 %v4436, %v4864
      %v4971 = vadd.f32 %v4437, %v4869
      %v4972 = vadd.f32 %v4438, %v4872
      %v4973 = vadd.f32 %v4439, %v4877
      %v4974 = vadd.f32 %v4440, %v4880
      %v4975 = vadd.f32 %v4441, %v4885
      %v4976 = vadd.f32 %v4442, %v4888
      %v4977 = vadd.f32 %v4443, %v4893
      %v4978 = vadd.f32 %v4444, %v4896
      %v4979 = vadd.f32 %v4445, %v4901
      %v4980 = vadd.f32 %v4446, %v4904
      %v4981 = vadd.f32 %v4447, %v4909
      %v4982 = vadd.f32 %v4448, %v4912
      %v4983 = vadd.f32 %v4449, %v4917
      %v4984 = vadd.f32 %v4450, %v4920
      %v4985 = vadd.f32 %v4451, %v4925
      %v4986 = vadd.f32 %v4452, %v4928
      %v4987 = vadd.f32 %v4453, %v4933
      %v4988 = vadd.f32 %v4454, %v4936
      %v4989 = vadd.f32 %v4455, %v4941
      %v4990 = vadd.f32 %v4456, %v4944
      %v4991 = vadd.f32 %v4457, %v4949
      %v4992 = vadd.f32 %v4458, %v4952
      %v4993 = vadd.f32 %v4459, %v4957
      %v4994 = vadd.f32 %v4460, %v4960
      %vm4995 = vcmask 64512
      %v4996 = vsel %vm4995, %v4963, 0.0
      %v4997 = vsel %vm4995, %v4964, 0.0
      %v4998 = vadd.f32 %v4996, %v4997
      %v4999 = vsel %vm4995, %v4965, 0.0
      %v5000 = vadd.f32 %v4998, %v4999
      %v5001 = vsel %vm4995, %v4966, 0.0
      %v5002 = vadd.f32 %v5000, %v5001
      %v5003 = vsel %vm4995, %v4967, 0.0
      %v5004 = vadd.f32 %v5002, %v5003
      %v5005 = vsel %vm4995, %v4968, 0.0
      %v5006 = vadd.f32 %v5004, %v5005
      %v5007 = vsel %vm4995, %v4969, 0.0
      %v5008 = vadd.f32 %v5006, %v5007
      %v5009 = vsel %vm4995, %v4970, 0.0
      %v5010 = vadd.f32 %v5008, %v5009
      %v5011 = vsel %vm4995, %v4971, 0.0
      %v5012 = vadd.f32 %v5010, %v5011
      %v5013 = vsel %vm4995, %v4972, 0.0
      %v5014 = vadd.f32 %v5012, %v5013
      %v5015 = vsel %vm4995, %v4973, 0.0
      %v5016 = vadd.f32 %v5014, %v5015
      %v5017 = vsel %vm4995, %v4974, 0.0
      %v5018 = vadd.f32 %v5016, %v5017
      %v5019 = vsel %vm4995, %v4975, 0.0
      %v5020 = vadd.f32 %v5018, %v5019
      %v5021 = vsel %vm4995, %v4976, 0.0
      %v5022 = vadd.f32 %v5020, %v5021
      %v5023 = vsel %vm4995, %v4977, 0.0
      %v5024 = vadd.f32 %v5022, %v5023
      %v5025 = vsel %vm4995, %v4978, 0.0
      %v5026 = vadd.f32 %v5024, %v5025
      %v5027 = vsel %vm4995, %v4979, 0.0
      %v5028 = vadd.f32 %v5026, %v5027
      %v5029 = vsel %vm4995, %v4980, 0.0
      %v5030 = vadd.f32 %v5028, %v5029
      %v5031 = vsel %vm4995, %v4981, 0.0
      %v5032 = vadd.f32 %v5030, %v5031
      %v5033 = vsel %vm4995, %v4982, 0.0
      %v5034 = vadd.f32 %v5032, %v5033
      %v5035 = vsel %vm4995, %v4983, 0.0
      %v5036 = vadd.f32 %v5034, %v5035
      %v5037 = vsel %vm4995, %v4984, 0.0
      %v5038 = vadd.f32 %v5036, %v5037
      %v5039 = vsel %vm4995, %v4985, 0.0
      %v5040 = vadd.f32 %v5038, %v5039
      %v5041 = vsel %vm4995, %v4986, 0.0
      %v5042 = vadd.f32 %v5040, %v5041
      %v5043 = vsel %vm4995, %v4987, 0.0
      %v5044 = vadd.f32 %v5042, %v5043
      %v5045 = vsel %vm4995, %v4988, 0.0
      %v5046 = vadd.f32 %v5044, %v5045
      %v5047 = vsel %vm4995, %v4989, 0.0
      %v5048 = vadd.f32 %v5046, %v5047
      %v5049 = vsel %vm4995, %v4990, 0.0
      %v5050 = vadd.f32 %v5048, %v5049
      %v5051 = vsel %vm4995, %v4991, 0.0
      %v5052 = vadd.f32 %v5050, %v5051
      %v5053 = vsel %vm4995, %v4992, 0.0
      %v5054 = vadd.f32 %v5052, %v5053
      %v5055 = vsel %vm4995, %v4993, 0.0
      %v5056 = vadd.f32 %v5054, %v5055
      %v5057 = vsel %vm4995, %v4994, 0.0
      %v5058 = vadd.f32 %v5056, %v5057
      %v5059 = vrot.slane %v5058, 4
      %v5060 = vadd.f32 %v5058, %v5059
      %v5061 = vrot.slane %v5060, 2
      %v5062 = vadd.f32 %v5060, %v5061
      %v5063 = vrot.slane %v5062, 1
      %v5064 = vadd.f32 %v5062, %v5063
      %v5065 = vmul.f32 %v5064, 0.00390625
      %v5066 = vsub.f32 %v4963, %v5065
      %v5067 = vsub.f32 %v4964, %v5065
      %v5068 = vsub.f32 %v4965, %v5065
      %v5069 = vsub.f32 %v4966, %v5065
      %v5070 = vsub.f32 %v4967, %v5065
      %v5071 = vsub.f32 %v4968, %v5065
      %v5072 = vsub.f32 %v4969, %v5065
      %v5073 = vsub.f32 %v4970, %v5065
      %v5074 = vsub.f32 %v4971, %v5065
      %v5075 = vsub.f32 %v4972, %v5065
      %v5076 = vsub.f32 %v4973, %v5065
      %v5077 = vsub.f32 %v4974, %v5065
      %v5078 = vsub.f32 %v4975, %v5065
      %v5079 = vsub.f32 %v4976, %v5065
      %v5080 = vsub.f32 %v4977, %v5065
      %v5081 = vsub.f32 %v4978, %v5065
      %v5082 = vsub.f32 %v4979, %v5065
      %v5083 = vsub.f32 %v4980, %v5065
      %v5084 = vsub.f32 %v4981, %v5065
      %v5085 = vsub.f32 %v4982, %v5065
      %v5086 = vsub.f32 %v4983, %v5065
      %v5087 = vsub.f32 %v4984, %v5065
      %v5088 = vsub.f32 %v4985, %v5065
      %v5089 = vsub.f32 %v4986, %v5065
      %v5090 = vsub.f32 %v4987, %v5065
      %v5091 = vsub.f32 %v4988, %v5065
      %v5092 = vsub.f32 %v4989, %v5065
      %v5093 = vsub.f32 %v4990, %v5065
      %v5094 = vsub.f32 %v4991, %v5065
      %v5095 = vsub.f32 %v4992, %v5065
      %v5096 = vsub.f32 %v4993, %v5065
      %v5097 = vsub.f32 %v4994, %v5065
      %vm5098 = vcmask 57344
      %5099 = vst.msk [vmem:[%s500] sm:$0x1] %vm5098, %v5064
      %v5100 = vmul.f32 %v5066, %v5066
      %v5101 = vmul.f32 %v5067, %v5067
      %v5102 = vmul.f32 %v5068, %v5068
      %v5103 = vmul.f32 %v5069, %v5069
      %v5104 = vmul.f32 %v5070, %v5070
      %v5105 = vmul.f32 %v5071, %v5071
      %v5106 = vmul.f32 %v5072, %v5072
      %v5107 = vmul.f32 %v5073, %v5073
      %v5108 = vmul.f32 %v5074, %v5074
      %v5109 = vmul.f32 %v5075, %v5075
      %v5110 = vmul.f32 %v5076, %v5076
      %v5111 = vmul.f32 %v5077, %v5077
      %v5112 = vmul.f32 %v5078, %v5078
      %v5113 = vmul.f32 %v5079, %v5079
      %v5114 = vmul.f32 %v5080, %v5080
      %v5115 = vmul.f32 %v5081, %v5081
      %v5116 = vmul.f32 %v5082, %v5082
      %v5117 = vmul.f32 %v5083, %v5083
      %v5118 = vmul.f32 %v5084, %v5084
      %v5119 = vmul.f32 %v5085, %v5085
      %v5120 = vmul.f32 %v5086, %v5086
      %v5121 = vmul.f32 %v5087, %v5087
      %v5122 = vmul.f32 %v5088, %v5088
      %v5123 = vmul.f32 %v5089, %v5089
      %v5124 = vmul.f32 %v5090, %v5090
      %v5125 = vmul.f32 %v5091, %v5091
      %v5126 = vmul.f32 %v5092, %v5092
      %v5127 = vmul.f32 %v5093, %v5093
      %v5128 = vmul.f32 %v5094, %v5094
      %v5129 = vmul.f32 %v5095, %v5095
      %v5130 = vmul.f32 %v5096, %v5096
      %v5131 = vmul.f32 %v5097, %v5097
      %v5132 = vsel %vm4995, %v5100, 0.0
      %v5133 = vsel %vm4995, %v5101, 0.0
      %v5134 = vadd.f32 %v5132, %v5133
      %v5135 = vsel %vm4995, %v5102, 0.0
      %v5136 = vadd.f32 %v5134, %v5135
      %v5137 = vsel %vm4995, %v5103, 0.0
      %v5138 = vadd.f32 %v5136, %v5137
      %v5139 = vsel %vm4995, %v5104, 0.0
      %v5140 = vadd.f32 %v5138, %v5139
      %v5141 = vsel %vm4995, %v5105, 0.0
      %v5142 = vadd.f32 %v5140, %v5141
      %v5143 = vsel %vm4995, %v5106, 0.0
      %v5144 = vadd.f32 %v5142, %v5143
      %v5145 = vsel %vm4995, %v5107, 0.0
      %v5146 = vadd.f32 %v5144, %v5145
      %v5147 = vsel %vm4995, %v5108, 0.0
      %v5148 = vadd.f32 %v5146, %v5147
      %v5149 = vsel %vm4995, %v5109, 0.0
      %v5150 = vadd.f32 %v5148, %v5149
      %v5151 = vsel %vm4995, %v5110, 0.0
      %v5152 = vadd.f32 %v5150, %v5151
      %v5153 = vsel %vm4995, %v5111, 0.0
      %v5154 = vadd.f32 %v5152, %v5153
      %v5155 = vsel %vm4995, %v5112, 0.0
      %v5156 = vadd.f32 %v5154, %v5155
      %v5157 = vsel %vm4995, %v5113, 0.0
      %v5158 = vadd.f32 %v5156, %v5157
      %v5159 = vsel %vm4995, %v5114, 0.0
      %v5160 = vadd.f32 %v5158, %v5159
      %v5161 = vsel %vm4995, %v5115, 0.0
      %v5162 = vadd.f32 %v5160, %v5161
      %v5163 = vsel %vm4995, %v5116, 0.0
      %v5164 = vadd.f32 %v5162, %v5163
      %v5165 = vsel %vm4995, %v5117, 0.0
      %v5166 = vadd.f32 %v5164, %v5165
      %v5167 = vsel %vm4995, %v5118, 0.0
      %v5168 = vadd.f32 %v5166, %v5167
      %v5169 = vsel %vm4995, %v5119, 0.0
      %v5170 = vadd.f32 %v5168, %v5169
      %v5171 = vsel %vm4995, %v5120, 0.0
      %v5172 = vadd.f32 %v5170, %v5171
      %v5173 = vsel %vm4995, %v5121, 0.0
      %v5174 = vadd.f32 %v5172, %v5173
      %v5175 = vsel %vm4995, %v5122, 0.0
      %v5176 = vadd.f32 %v5174, %v5175
      %v5177 = vsel %vm4995, %v5123, 0.0
      %v5178 = vadd.f32 %v5176, %v5177
      %v5179 = vsel %vm4995, %v5124, 0.0
      %v5180 = vadd.f32 %v5178, %v5179
      %v5181 = vsel %vm4995, %v5125, 0.0
      %v5182 = vadd.f32 %v5180, %v5181
      %v5183 = vsel %vm4995, %v5126, 0.0
      %v5184 = vadd.f32 %v5182, %v5183
      %v5185 = vsel %vm4995, %v5127, 0.0
      %v5186 = vadd.f32 %v5184, %v5185
      %v5187 = vsel %vm4995, %v5128, 0.0
      %v5188 = vadd.f32 %v5186, %v5187
      %v5189 = vsel %vm4995, %v5129, 0.0
      %v5190 = vadd.f32 %v5188, %v5189
      %v5191 = vsel %vm4995, %v5130, 0.0
      %v5192 = vadd.f32 %v5190, %v5191
      %v5193 = vsel %vm4995, %v5131, 0.0
      %v5194 = vadd.f32 %v5192, %v5193
      %v5195 = vrot.slane %v5194, 4
      %v5196 = vadd.f32 %v5194, %v5195
      %v5197 = vrot.slane %v5196, 2
      %v5198 = vadd.f32 %v5196, %v5197
      %v5199 = vrot.slane %v5198, 1
      %v5200 = vadd.f32 %v5198, %v5199
      %5201 = vst.msk [vmem:[%s506] sm:$0x1] %vm5098, %v5200
      %v5202 = vpack.c.bf16 %v4964, %v4963
      %v5203 = vpack.c.bf16 %v4966, %v4965
      %v5204 = vpack.c.bf16 %v4968, %v4967
      %v5205 = vpack.c.bf16 %v4970, %v4969
      %v5206 = vpack.c.bf16 %v4972, %v4971
      %v5207 = vpack.c.bf16 %v4974, %v4973
      %v5208 = vpack.c.bf16 %v4976, %v4975
      %v5209 = vpack.c.bf16 %v4978, %v4977
      %v5210 = vpack.c.bf16 %v4980, %v4979
      %v5211 = vpack.c.bf16 %v4982, %v4981
      %v5212 = vpack.c.bf16 %v4984, %v4983
      %v5213 = vpack.c.bf16 %v4986, %v4985
      %v5214 = vpack.c.bf16 %v4988, %v4987
      %v5215 = vpack.c.bf16 %v4990, %v4989
      %v5216 = vpack.c.bf16 %v4992, %v4991
      %v5217 = vpack.c.bf16 %v4994, %v4993
      %v5234 = vunpack.c.l.b16 %v5202
      %v5235 = vunpack.c.h.b16 %v5202
      %v5236 = vunpack.c.l.b16 %v5203
      %v5237 = vunpack.c.h.b16 %v5203
      %v5238 = vunpack.c.l.b16 %v5204
      %v5239 = vunpack.c.h.b16 %v5204
      %v5240 = vunpack.c.l.b16 %v5205
      %v5241 = vunpack.c.h.b16 %v5205
      %v5242 = vunpack.c.l.b16 %v5206
      %v5243 = vunpack.c.h.b16 %v5206
      %v5244 = vunpack.c.l.b16 %v5207
      %v5245 = vunpack.c.h.b16 %v5207
      %v5246 = vunpack.c.l.b16 %v5208
      %v5247 = vunpack.c.h.b16 %v5208
      %v5248 = vunpack.c.l.b16 %v5209
      %v5249 = vunpack.c.h.b16 %v5209
      %v5250 = vunpack.c.l.b16 %v5210
      %v5251 = vunpack.c.h.b16 %v5210
      %v5252 = vunpack.c.l.b16 %v5211
      %v5253 = vunpack.c.h.b16 %v5211
      %v5254 = vunpack.c.l.b16 %v5212
      %v5255 = vunpack.c.h.b16 %v5212
      %v5256 = vunpack.c.l.b16 %v5213
      %v5257 = vunpack.c.h.b16 %v5213
      %v5258 = vunpack.c.l.b16 %v5214
      %v5259 = vunpack.c.h.b16 %v5214
      %v5260 = vunpack.c.l.b16 %v5215
      %v5261 = vunpack.c.h.b16 %v5215
      %v5262 = vunpack.c.l.b16 %v5216
      %v5263 = vunpack.c.h.b16 %v5216
      %v5264 = vunpack.c.l.b16 %v5217
      %v5265 = vunpack.c.h.b16 %v5217
      %v5266 = vpack.c.b16 %v5234, %v5234
      %v5267 = vpack.c.b16 %v5235, %v5235
      %v5268 = vpack.c.b16 %v5236, %v5236
      %v5269 = vpack.c.b16 %v5237, %v5237
      %v5270 = vpack.c.b16 %v5238, %v5238
      %v5271 = vpack.c.b16 %v5239, %v5239
      %v5272 = vpack.c.b16 %v5240, %v5240
      %v5273 = vpack.c.b16 %v5241, %v5241
      %v5274 = vpack.c.b16 %v5242, %v5242
      %v5275 = vpack.c.b16 %v5243, %v5243
      %v5276 = vpack.c.b16 %v5244, %v5244
      %v5277 = vpack.c.b16 %v5245, %v5245
      %v5278 = vpack.c.b16 %v5246, %v5246
      %v5279 = vpack.c.b16 %v5247, %v5247
      %v5280 = vpack.c.b16 %v5248, %v5248
      %v5281 = vpack.c.b16 %v5249, %v5249
      %v5282 = vpack.c.b16 %v5250, %v5250
      %v5283 = vpack.c.b16 %v5251, %v5251
      %v5284 = vpack.c.b16 %v5252, %v5252
      %v5285 = vpack.c.b16 %v5253, %v5253
      %v5286 = vpack.c.b16 %v5254, %v5254
      %v5287 = vpack.c.b16 %v5255, %v5255
      %v5288 = vpack.c.b16 %v5256, %v5256
      %v5289 = vpack.c.b16 %v5257, %v5257
      %v5290 = vpack.c.b16 %v5258, %v5258
      %v5291 = vpack.c.b16 %v5259, %v5259
      %v5292 = vpack.c.b16 %v5260, %v5260
      %v5293 = vpack.c.b16 %v5261, %v5261
      %v5294 = vpack.c.b16 %v5262, %v5262
      %v5295 = vpack.c.b16 %v5263, %v5263
      %v5296 = vpack.c.b16 %v5264, %v5264
      %v5297 = vpack.c.b16 %v5265, %v5265
      %vm5330 = vcmask 60416
      %5331 = vst.msk [vmem:[%s493] sm:$0xf] %vm5330, %v5266
      %5332 = vst.msk [vmem:[%s493 + $0x4] sm:$0xf] %vm5330, %v5267
      %5333 = vst.msk [vmem:[%s493 + $0x8] sm:$0xf] %vm5330, %v5268
      %5334 = vst.msk [vmem:[%s493 + $0xc] sm:$0xf] %vm5330, %v5269
      %5335 = vst.msk [vmem:[%s493 + $0x10] sm:$0xf] %vm5330, %v5270
      %5336 = vst.msk [vmem:[%s493 + $0x14] sm:$0xf] %vm5330, %v5271
      %5337 = vst.msk [vmem:[%s493 + $0x18] sm:$0xf] %vm5330, %v5272
      %5338 = vst.msk [vmem:[%s493 + $0x1c] sm:$0xf] %vm5330, %v5273
      %5339 = vst.msk [vmem:[%s493 + $0x20] sm:$0xf] %vm5330, %v5274
      %5340 = vst.msk [vmem:[%s493 + $0x24] sm:$0xf] %vm5330, %v5275
      %5341 = vst.msk [vmem:[%s493 + $0x28] sm:$0xf] %vm5330, %v5276
      %5342 = vst.msk [vmem:[%s493 + $0x2c] sm:$0xf] %vm5330, %v5277
      %5343 = vst.msk [vmem:[%s493 + $0x30] sm:$0xf] %vm5330, %v5278
      %5344 = vst.msk [vmem:[%s493 + $0x34] sm:$0xf] %vm5330, %v5279
      %5345 = vst.msk [vmem:[%s493 + $0x38] sm:$0xf] %vm5330, %v5280
      %5346 = vst.msk [vmem:[%s493 + $0x3c] sm:$0xf] %vm5330, %v5281
      %5347 = vst.msk [vmem:[%s493 + $0x40] sm:$0xf] %vm5330, %v5282
      %5348 = vst.msk [vmem:[%s493 + $0x44] sm:$0xf] %vm5330, %v5283
      %5349 = vst.msk [vmem:[%s493 + $0x48] sm:$0xf] %vm5330, %v5284
      %5350 = vst.msk [vmem:[%s493 + $0x4c] sm:$0xf] %vm5330, %v5285
      %5351 = vst.msk [vmem:[%s493 + $0x50] sm:$0xf] %vm5330, %v5286
      %5352 = vst.msk [vmem:[%s493 + $0x54] sm:$0xf] %vm5330, %v5287
      %5353 = vst.msk [vmem:[%s493 + $0x58] sm:$0xf] %vm5330, %v5288
      %5354 = vst.msk [vmem:[%s493 + $0x5c] sm:$0xf] %vm5330, %v5289
      %5355 = vst.msk [vmem:[%s493 + $0x60] sm:$0xf] %vm5330, %v5290
      %5356 = vst.msk [vmem:[%s493 + $0x64] sm:$0xf] %vm5330, %v5291
      %5357 = vst.msk [vmem:[%s493 + $0x68] sm:$0xf] %vm5330, %v5292
      %5358 = vst.msk [vmem:[%s493 + $0x6c] sm:$0xf] %vm5330, %v5293
      %5359 = vst.msk [vmem:[%s493 + $0x70] sm:$0xf] %vm5330, %v5294
      %5360 = vst.msk [vmem:[%s493 + $0x74] sm:$0xf] %vm5330, %v5295
      %5361 = vst.msk [vmem:[%s493 + $0x78] sm:$0xf] %vm5330, %v5296
      %5362 = vst.msk [vmem:[%s493 + $0x7c] sm:$0xf] %vm5330, %v5297
      %s5363 = smul.u32 16, %s25
      %p5364 = scmp.lt.s32.totalorder %s24, 1
      %s5365 = scalar_select %p5364, %s24, 1
      %p5366 = scmp.lt.s32.totalorder %s5363, 15
      %s5367 = scalar_select %p5366, %s5363, 15
      %s5368 = smul.addr %s5367, 2
      %s5369 = smul.addr %s5365, 32
      %s5370 = sadd.s32 %s5368, %s5369
      %s5371 = smul.addr %s5370, 4
      %s5372 = scalar_lea.vmem %s6, %s5371
      %p5373 = scmp.lt.s32.totalorder %s24, 1
      %s5374 = scalar_select %p5373, %s24, 1
      %p5375 = scmp.lt.s32.totalorder %s25, 0
      %s5376 = scalar_select %p5375, %s25, 0
      %s5377 = sadd.s32 %s5376, %s5374
      %s5378 = scalar_lea.vmem %s7, %s5377
      %p5379 = scmp.lt.s32.totalorder %s24, 1
      %s5380 = scalar_select %p5379, %s24, 1
      %p5381 = scmp.lt.s32.totalorder %s25, 0
      %s5382 = scalar_select %p5381, %s25, 0
      %s5383 = sadd.s32 %s5382, %s5380
      %s5384 = scalar_lea.vmem %s8, %s5383
      // Predicated region
      $region45: #{double_conv_forward.3} parent=43 // pred_check
        %p5385 = pneg %p215
      $region46: #{double_conv_forward.3} parent=43 // pred_check_branch
        %5387 = sbr.rel (%p5385) target = $region48
      $region47: #{double_conv_forward.3} parent=43 // pred_region
        %s5388 = smul.u32 16, %s25
      $region48: #{double_conv_forward.3} parent=43 // pred_fallthru
        _
      // Predicated region
      $region49: #{double_conv_forward.3} parent=43 // pred_check
        %p5389 = pneg %p243
      $region50: #{double_conv_forward.3} parent=43 // pred_check_branch
        %5391 = sbr.rel (%p5389) target = $region52
      $region51: #{double_conv_forward.3} parent=43 // pred_region
        _
      $region52: #{double_conv_forward.3} parent=43 // pred_fallthru
        _
      // Predicated region
      $region53: #{double_conv_forward.3} parent=43 // pred_check
        %p5392 = pneg %p271
      $region54: #{double_conv_forward.3} parent=43 // pred_check_branch
        %5394 = sbr.rel (%p5392) target = $region56
      $region55: #{double_conv_forward.3} parent=43 // pred_region
        _
      $region56: #{double_conv_forward.3} parent=43 // pred_fallthru
        _
    $region44: #{double_conv_forward.3} parent=5 // pred_fallthru
      _
    %p5395 = scmp.le.s32.totalorder 2, %s15
    // Predicated region
    $region57: #{double_conv_forward.3} parent=5 // pred_check
      %p5396 = pneg %p5395
    $region58: #{double_conv_forward.3} parent=5 // pred_check_branch
      %5398 = sbr.rel (%p5396) target = $region60
    $region59: #{double_conv_forward.3} parent=5 // pred_region
      %s5399 = ssub.s32 %s15, 2
      // Predicated region
      $region61: #{double_conv_forward.3} parent=59 // pred_check
        %p5400 = pneg %p221
      $region62: #{double_conv_forward.3} parent=59 // pred_check_branch
        %5402 = sbr.rel (%p5400) target = $region64
      $region63: #{double_conv_forward.3} parent=59 // pred_region
        %s5403 = smul.u32 16, %s27
        %p5404 = scmp.lt.s32.totalorder %s26, 1
        %s5405 = scalar_select %p5404, %s26, 1
        %p5406 = scmp.lt.s32.totalorder %s5403, 15
        %s5407 = scalar_select %p5406, %s5403, 15
        %s5408 = smul.addr %s5407, 2
        %s5409 = smul.addr %s5405, 32
        %s5410 = sadd.s32 %s5408, %s5409
        %s5411 = smul.addr %s5410, 4
        %s5412 = scalar_lea.vmem %s6, %s5411
      $region64: #{double_conv_forward.3} parent=59 // pred_fallthru
        _
      // Predicated region
      $region65: #{double_conv_forward.3} parent=59 // pred_check
        %p5413 = pneg %p249
      $region66: #{double_conv_forward.3} parent=59 // pred_check_branch
        %5415 = sbr.rel (%p5413) target = $region68
      $region67: #{double_conv_forward.3} parent=59 // pred_region
        %p5416 = scmp.lt.s32.totalorder %s26, 1
        %s5417 = scalar_select %p5416, %s26, 1
        %p5418 = scmp.lt.s32.totalorder %s27, 0
        %s5419 = scalar_select %p5418, %s27, 0
        %s5420 = sadd.s32 %s5419, %s5417
        %s5421 = scalar_lea.vmem %s7, %s5420
      $region68: #{double_conv_forward.3} parent=59 // pred_fallthru
        _
      // Predicated region
      $region69: #{double_conv_forward.3} parent=59 // pred_check
        %p5422 = pneg %p277
      $region70: #{double_conv_forward.3} parent=59 // pred_check_branch
        %5424 = sbr.rel (%p5422) target = $region72
      $region71: #{double_conv_forward.3} parent=59 // pred_region
        %p5425 = scmp.lt.s32.totalorder %s26, 1
        %s5426 = scalar_select %p5425, %s26, 1
        %p5427 = scmp.lt.s32.totalorder %s27, 0
        %s5428 = scalar_select %p5427, %s27, 0
        %s5429 = sadd.s32 %s5428, %s5426
        %s5430 = scalar_lea.vmem %s8, %s5429
      $region72: #{double_conv_forward.3} parent=59 // pred_fallthru
        _
    $region60: #{double_conv_forward.3} parent=5 // pred_fallthru
      _
  $region6: #{double_conv_forward.3} parent=0 // loop_footer
    %s19 = sadd.s32 1, %s15
  $region7: #{double_conv_forward.3} parent=0 // loop_footer_branch
    %14 = sbr.rel target = $region3
  $region8: #{double_conv_forward.3} parent=0 // loop_exit
    _

// kernel: double_conv_forward.4
$region0: #{double_conv_forward.4}
  #allocation0 [shape = 'u32[]', space=smem, size = 0x4, offset = 0x4, fixed_abs, tag = 'smem constant byte address 0x4 - core index']
  #allocation1 [shape = 'u32[144,128]{1,0:T(1,128)}', space=vmem, size = 0x12000, scoped, tag = 'internal scratch']
  #allocation2 [shape = 'bf16[18,32,8]{2,1,0:T(16,128)(2,1)}', space=vmem, size = 0x24000, scoped, tag = 'scratch operand']
  %s0 = inlined_call_operand.vmem [shape: bf16[2,16,16,8], index: 0, kind: input, shape index: {}, may-alias: {0,1,2}]
  %s1 = inlined_call_operand.vmem [shape: bf16[2,16,16,8], index: 1, kind: input, shape index: {}, may-alias: {0,1,2}]
  %s2 = inlined_call_operand.vmem [shape: bf16[2,16,16,8], index: 2, kind: input, shape index: {}, may-alias: {0,1,2}]
  %s3 = inlined_call_operand.vmem [shape: bf16[9,8,8], index: 3, kind: input, shape index: {}]
  %s4 = inlined_call_operand.vmem [shape: f32[1,8], index: 4, kind: input, shape index: {}]
  %s5 = inlined_call_operand.vmem [shape: f32[1,8], index: 5, kind: input, shape index: {}]
  %s6 = inlined_call_operand.vmem [shape: bf16[2,16,16,8], index: 6, kind: output, shape index: {0}]
  %s7 = inlined_call_operand.vmem [shape: f32[2,1,1,8], index: 7, kind: output, shape index: {1}]
  %s8 = inlined_call_operand.vmem [shape: f32[2,1,1,8], index: 8, kind: output, shape index: {2}]
  %9 = xla_tuple %s6, %s7, %s8
  %s10 = sld [smem:[#allocation0]]
  $region73: #{double_conv_forward.4} parent=0
    _
  %s12 = ssub.s32 1, %s10
  %s13 = scalar_select 0, %s12, %s10
  loop: start=0, step=1, limit=4
  $region2: #{double_conv_forward.4} parent=0 // loop_pre_header
    _
  $region3: #{double_conv_forward.4} parent=0 // loop_header
    %s15 = sphi 0, %s19
    %p16 = scmp.ge.s32.totalorder %s15, 4
    %s22 = sphi 0, %s34
    %s23 = sphi 0, %s30
    %s24 = sphi 0, %s22
    %s25 = sphi 0, %s23
    %s26 = sphi 0, %s24
    %s27 = sphi 0, %s25
    %s39 = sphi 0, %s41
    %s42 = sphi 0, %s39
    %s43 = sphi 0, %s42
    %s59 = sphi 0, %s43
    %s75 = sphi 0, %s77
    %s78 = sphi 0, %s75
    %s79 = sphi 0, %s78
    %s95 = sphi 0, %s79
    %s111 = sphi 0, %s113
    %s114 = sphi 0, %s111
    %s115 = sphi 0, %s114
    %s131 = sphi 0, %s115
    %s135 = sphi 0, %s135
    %s137 = sphi 0, %s135
    %s138 = sphi 0, %s137
    %s152 = sphi 0, %s138
    %s156 = sphi 0, %s156
    %s158 = sphi 0, %s156
    %s159 = sphi 0, %s158
    %s173 = sphi 0, %s159
    %s177 = sphi 0, %s177
    %s179 = sphi 0, %s177
    %s180 = sphi 0, %s179
    %s194 = sphi 0, %s180
    %s202 = sphi 0, %s204
    %s205 = sphi 0, %s202
    %s206 = sphi 0, %s205
    %s222 = sphi 0, %s206
    %s230 = sphi 0, %s232
    %s233 = sphi 0, %s230
    %s234 = sphi 0, %s233
    %s250 = sphi 0, %s234
    %s258 = sphi 0, %s260
    %s261 = sphi 0, %s258
    %s262 = sphi 0, %s261
    %s278 = sphi 0, %s262
  $region4: #{double_conv_forward.4} parent=0 // loop_header_branch
    %18 = sbr.rel (%p16) target = $region8
  $region5: #{double_conv_forward.4} parent=0 // loop_body
    %s20 = ssub.s32 %s15, 1
    %s21 = ssub.s32 %s15, 2
    %s28 = sadd.s32 1, %s23
    %p29 = scmp.ge.s32.totalorder %s28, 1
    %s30 = scalar_select %p29, 0, %s28
    %s31 = sadd.s32 1, %s22
    %s32 = scalar_select %p29, %s31, %s22
    %p33 = scmp.ge.s32.totalorder %s32, 2
    %s34 = scalar_select %p33, 0, %s32
    %s35 = ssub.s32 %s22, %s34
    %s36 = ssub.s32 %s23, %s30
    %s37 = sor.u32 %s35, %s36
    %p38 = scmp.eq.s32.totalorder %s37, 0
    %s40 = sadd.s32 %s39, 1
    %s41 = scalar_select %p38, %s39, %s40
    %p44 = pneg %p38
    %p45 = scmp.eq.s32.totalorder %s15, 1
    %p46 = por %p44, %p45
    %p47 = scmp.ne.s32.totalorder %s39, %s42
    %p48 = scmp.eq.s32.totalorder %s15, 0
    %p49 = por %p47, %p48
    %p50 = scmp.ne.s32.totalorder %s39, %s42
    %p51 = scmp.eq.s32.totalorder %s20, 1
    %p52 = por %p50, %p51
    %p53 = scmp.ne.s32.totalorder %s42, %s43
    %p54 = scmp.eq.s32.totalorder %s20, 0
    %p55 = por %p53, %p54
    %p56 = scmp.ne.s32.totalorder %s42, %s43
    %p57 = scmp.eq.s32.totalorder %s21, 1
    %p58 = por %p56, %p57
    %p60 = scmp.ne.s32.totalorder %s43, %s59
    %p61 = scmp.eq.s32.totalorder %s21, 0
    %p62 = por %p60, %p61
    %s63 = smul.u32 %s23, 16
    %s64 = ssub.s32 %s63, 1
    %p65 = scmp.gt.s32.totalorder %s64, 0
    %s66 = scalar_select %p65, %s64, 0
    %s67 = smul.u32 %s30, 16
    %s68 = ssub.s32 %s67, 1
    %p69 = scmp.gt.s32.totalorder %s68, 0
    %s70 = scalar_select %p69, %s68, 0
    %s71 = ssub.s32 %s22, %s34
    %s72 = ssub.s32 %s66, %s70
    %s73 = sor.u32 %s71, %s72
    %p74 = scmp.eq.s32.totalorder %s73, 0
    %s76 = sadd.s32 %s75, 1
    %s77 = scalar_select %p74, %s75, %s76
    %p80 = pneg %p74
    %p81 = scmp.eq.s32.totalorder %s15, 1
    %p82 = por %p80, %p81
    %p83 = scmp.ne.s32.totalorder %s75, %s78
    %p84 = scmp.eq.s32.totalorder %s15, 0
    %p85 = por %p83, %p84
    %p86 = scmp.ne.s32.totalorder %s75, %s78
    %p87 = scmp.eq.s32.totalorder %s20, 1
    %p88 = por %p86, %p87
    %p89 = scmp.ne.s32.totalorder %s78, %s79
    %p90 = scmp.eq.s32.totalorder %s20, 0
    %p91 = por %p89, %p90
    %p92 = scmp.ne.s32.totalorder %s78, %s79
    %p93 = scmp.eq.s32.totalorder %s21, 1
    %p94 = por %p92, %p93
    %p96 = scmp.ne.s32.totalorder %s79, %s95
    %p97 = scmp.eq.s32.totalorder %s21, 0
    %p98 = por %p96, %p97
    %s99 = sadd.s32 %s23, 1
    %s100 = smul.u32 %s99, 16
    %p101 = scmp.lt.s32.totalorder %s100, 15
    %s102 = scalar_select %p101, %s100, 15
    %s103 = sadd.s32 %s30, 1
    %s104 = smul.u32 %s103, 16
    %p105 = scmp.lt.s32.totalorder %s104, 15
    %s106 = scalar_select %p105, %s104, 15
    %s107 = ssub.s32 %s22, %s34
    %s108 = ssub.s32 %s102, %s106
    %s109 = sor.u32 %s107, %s108
    %p110 = scmp.eq.s32.totalorder %s109, 0
    %s112 = sadd.s32 %s111, 1
    %s113 = scalar_select %p110, %s111, %s112
    %p116 = pneg %p110
    %p117 = scmp.eq.s32.totalorder %s15, 1
    %p118 = por %p116, %p117
    %p119 = scmp.ne.s32.totalorder %s111, %s114
    %p120 = scmp.eq.s32.totalorder %s15, 0
    %p121 = por %p119, %p120
    %p122 = scmp.ne.s32.totalorder %s111, %s114
    %p123 = scmp.eq.s32.totalorder %s20, 1
    %p124 = por %p122, %p123
    %p125 = scmp.ne.s32.totalorder %s114, %s115
    %p126 = scmp.eq.s32.totalorder %s20, 0
    %p127 = por %p125, %p126
    %p128 = scmp.ne.s32.totalorder %s114, %s115
    %p129 = scmp.eq.s32.totalorder %s21, 1
    %p130 = por %p128, %p129
    %p132 = scmp.ne.s32.totalorder %s115, %s131
    %p133 = scmp.eq.s32.totalorder %s21, 0
    %p134 = por %p132, %p133
    %s136 = sadd.s32 %s135, 1
    %p139 = scmp.eq.s32.totalorder %s15, 1
    %p140 = scmp.ne.s32.totalorder %s135, %s137
    %p141 = scmp.eq.s32.totalorder %s15, 0
    %p142 = por %p140, %p141
    %p143 = scmp.ne.s32.totalorder %s135, %s137
    %p144 = scmp.eq.s32.totalorder %s20, 1
    %p145 = por %p143, %p144
    %p146 = scmp.ne.s32.totalorder %s137, %s138
    %p147 = scmp.eq.s32.totalorder %s20, 0
    %p148 = por %p146, %p147
    %p149 = scmp.ne.s32.totalorder %s137, %s138
    %p150 = scmp.eq.s32.totalorder %s21, 1
    %p151 = por %p149, %p150
    %p153 = scmp.ne.s32.totalorder %s138, %s152
    %p154 = scmp.eq.s32.totalorder %s21, 0
    %p155 = por %p153, %p154
    %s157 = sadd.s32 %s156, 1
    %p160 = scmp.eq.s32.totalorder %s15, 1
    %p161 = scmp.ne.s32.totalorder %s156, %s158
    %p162 = scmp.eq.s32.totalorder %s15, 0
    %p163 = por %p161, %p162
    %p164 = scmp.ne.s32.totalorder %s156, %s158
    %p165 = scmp.eq.s32.totalorder %s20, 1
    %p166 = por %p164, %p165
    %p167 = scmp.ne.s32.totalorder %s158, %s159
    %p168 = scmp.eq.s32.totalorder %s20, 0
    %p169 = por %p167, %p168
    %p170 = scmp.ne.s32.totalorder %s158, %s159
    %p171 = scmp.eq.s32.totalorder %s21, 1
    %p172 = por %p170, %p171
    %p174 = scmp.ne.s32.totalorder %s159, %s173
    %p175 = scmp.eq.s32.totalorder %s21, 0
    %p176 = por %p174, %p175
    %s178 = sadd.s32 %s177, 1
    %p181 = scmp.eq.s32.totalorder %s15, 1
    %p182 = scmp.ne.s32.totalorder %s177, %s179
    %p183 = scmp.eq.s32.totalorder %s15, 0
    %p184 = por %p182, %p183
    %p185 = scmp.ne.s32.totalorder %s177, %s179
    %p186 = scmp.eq.s32.totalorder %s20, 1
    %p187 = por %p185, %p186
    %p188 = scmp.ne.s32.totalorder %s179, %s180
    %p189 = scmp.eq.s32.totalorder %s20, 0
    %p190 = por %p188, %p189
    %p191 = scmp.ne.s32.totalorder %s179, %s180
    %p192 = scmp.eq.s32.totalorder %s21, 1
    %p193 = por %p191, %p192
    %p195 = scmp.ne.s32.totalorder %s180, %s194
    %p196 = scmp.eq.s32.totalorder %s21, 0
    %p197 = por %p195, %p196
    %s198 = ssub.s32 %s22, %s34
    %s199 = ssub.s32 %s23, %s30
    %s200 = sor.u32 %s198, %s199
    %p201 = scmp.eq.s32.totalorder %s200, 0
    %s203 = sadd.s32 %s202, 1
    %s204 = scalar_select %p201, %s202, %s203
    %p207 = pneg %p201
    %p208 = scmp.eq.s32.totalorder %s15, 1
    %p209 = por %p207, %p208
    %p210 = scmp.ne.s32.totalorder %s202, %s205
    %p211 = scmp.eq.s32.totalorder %s15, 0
    %p212 = por %p210, %p211
    %p213 = scmp.ne.s32.totalorder %s202, %s205
    %p214 = scmp.eq.s32.totalorder %s20, 1
    %p215 = por %p213, %p214
    %p216 = scmp.ne.s32.totalorder %s205, %s206
    %p217 = scmp.eq.s32.totalorder %s20, 0
    %p218 = por %p216, %p217
    %p219 = scmp.ne.s32.totalorder %s205, %s206
    %p220 = scmp.eq.s32.totalorder %s21, 1
    %p221 = por %p219, %p220
    %p223 = scmp.ne.s32.totalorder %s206, %s222
    %p224 = scmp.eq.s32.totalorder %s21, 0
    %p225 = por %p223, %p224
    %s226 = ssub.s32 %s22, %s34
    %s227 = ssub.s32 %s23, %s30
    %s228 = sor.u32 %s226, %s227
    %p229 = scmp.eq.s32.totalorder %s228, 0
    %s231 = sadd.s32 %s230, 1
    %s232 = scalar_select %p229, %s230, %s231
    %p235 = pneg %p229
    %p236 = scmp.eq.s32.totalorder %s15, 1
    %p237 = por %p235, %p236
    %p238 = scmp.ne.s32.totalorder %s230, %s233
    %p239 = scmp.eq.s32.totalorder %s15, 0
    %p240 = por %p238, %p239
    %p241 = scmp.ne.s32.totalorder %s230, %s233
    %p242 = scmp.eq.s32.totalorder %s20, 1
    %p243 = por %p241, %p242
    %p244 = scmp.ne.s32.totalorder %s233, %s234
    %p245 = scmp.eq.s32.totalorder %s20, 0
    %p246 = por %p244, %p245
    %p247 = scmp.ne.s32.totalorder %s233, %s234
    %p248 = scmp.eq.s32.totalorder %s21, 1
    %p249 = por %p247, %p248
    %p251 = scmp.ne.s32.totalorder %s234, %s250
    %p252 = scmp.eq.s32.totalorder %s21, 0
    %p253 = por %p251, %p252
    %s254 = ssub.s32 %s22, %s34
    %s255 = ssub.s32 %s23, %s30
    %s256 = sor.u32 %s254, %s255
    %p257 = scmp.eq.s32.totalorder %s256, 0
    %s259 = sadd.s32 %s258, 1
    %s260 = scalar_select %p257, %s258, %s259
    %p263 = pneg %p257
    %p264 = scmp.eq.s32.totalorder %s15, 1
    %p265 = por %p263, %p264
    %p266 = scmp.ne.s32.totalorder %s258, %s261
    %p267 = scmp.eq.s32.totalorder %s15, 0
    %p268 = por %p266, %p267
    %p269 = scmp.ne.s32.totalorder %s258, %s261
    %p270 = scmp.eq.s32.totalorder %s20, 1
    %p271 = por %p269, %p270
    %p272 = scmp.ne.s32.totalorder %s261, %s262
    %p273 = scmp.eq.s32.totalorder %s20, 0
    %p274 = por %p272, %p273
    %p275 = scmp.ne.s32.totalorder %s261, %s262
    %p276 = scmp.eq.s32.totalorder %s21, 1
    %p277 = por %p275, %p276
    %p279 = scmp.ne.s32.totalorder %s262, %s278
    %p280 = scmp.eq.s32.totalorder %s21, 0
    %p281 = por %p279, %p280
    %p282 = scmp.le.s32.totalorder 1, %s15
    %p283 = scmp.lt.s32.totalorder %s15, 3
    %p284 = pnand %p282, %p283
    %p285 = pneg %p284
    // Predicated region
    $region9: #{double_conv_forward.4} parent=5 // pred_check
      _
    $region10: #{double_conv_forward.4} parent=5 // pred_check_branch
      %287 = sbr.rel (%p284) target = $region12
    $region11: #{double_conv_forward.4} parent=5 // pred_region
      %s288 = ssub.s32 %s15, 1
      // Predicated region
      $region13: #{double_conv_forward.4} parent=11 // pred_check
        %p289 = pneg %p148
      $region14: #{double_conv_forward.4} parent=11 // pred_check_branch
        %291 = sbr.rel (%p289) target = $region16
      $region15: #{double_conv_forward.4} parent=11 // pred_region
        _
      $region16: #{double_conv_forward.4} parent=11 // pred_fallthru
        _
      // Predicated region
      $region17: #{double_conv_forward.4} parent=11 // pred_check
        %p292 = pneg %p169
      $region18: #{double_conv_forward.4} parent=11 // pred_check_branch
        %294 = sbr.rel (%p292) target = $region20
      $region19: #{double_conv_forward.4} parent=11 // pred_region
        _
      $region20: #{double_conv_forward.4} parent=11 // pred_fallthru
        _
      // Predicated region
      $region21: #{double_conv_forward.4} parent=11 // pred_check
        %p295 = pneg %p190
      $region22: #{double_conv_forward.4} parent=11 // pred_check_branch
        %297 = sbr.rel (%p295) target = $region24
      $region23: #{double_conv_forward.4} parent=11 // pred_region
        _
      $region24: #{double_conv_forward.4} parent=11 // pred_fallthru
        _
    $region12: #{double_conv_forward.4} parent=5 // pred_fallthru
      _
    %p298 = scmp.lt.s32.totalorder %s15, 2
    // Predicated region
    $region25: #{double_conv_forward.4} parent=5 // pred_check
      %p299 = pneg %p298
    $region26: #{double_conv_forward.4} parent=5 // pred_check_branch
      %301 = sbr.rel (%p299) target = $region28
    $region27: #{double_conv_forward.4} parent=5 // pred_region
      // Predicated region
      $region29: #{double_conv_forward.4} parent=27 // pred_check
        %p302 = pneg %p49
      $region30: #{double_conv_forward.4} parent=27 // pred_check_branch
        %304 = sbr.rel (%p302) target = $region32
      $region31: #{double_conv_forward.4} parent=27 // pred_region
        %s305 = smul.u32 16, %s23
        %p306 = scmp.lt.s32.totalorder %s22, 1
        %s307 = scalar_select %p306, %s22, 1
        %p308 = scmp.lt.s32.totalorder %s305, 15
        %s309 = scalar_select %p308, %s305, 15
        %s310 = smul.addr %s309, 2
        %s311 = smul.addr %s307, 32
        %s312 = sadd.s32 %s310, %s311
        %s313 = smul.addr %s312, 4
        %s314 = scalar_lea.vmem %s0, %s313
        %s315 = smul.u32 16, %s23
      $region32: #{double_conv_forward.4} parent=27 // pred_fallthru
        _
      // Predicated region
      $region33: #{double_conv_forward.4} parent=27 // pred_check
        %p316 = pneg %p85
      $region34: #{double_conv_forward.4} parent=27 // pred_check_branch
        %318 = sbr.rel (%p316) target = $region36
      $region35: #{double_conv_forward.4} parent=27 // pred_region
        %s319 = smul.u32 %s23, 16
        %s320 = ssub.s32 %s319, 1
        %p321 = scmp.gt.s32.totalorder %s320, 0
        %s322 = scalar_select %p321, %s320, 0
        %p323 = scmp.lt.s32.totalorder %s22, 1
        %s324 = scalar_select %p323, %s22, 1
        %p325 = scmp.lt.s32.totalorder %s322, 15
        %s326 = scalar_select %p325, %s322, 15
        %s327 = smul.addr %s326, 2
        %s328 = smul.addr %s324, 32
        %s329 = sadd.s32 %s327, %s328
        %s330 = smul.addr %s329, 4
        %s331 = scalar_lea.vmem %s1, %s330
        %s332 = smul.u32 %s23, 16
        %s333 = ssub.s32 %s332, 1
        %p334 = scmp.gt.s32.totalorder %s333, 0
        %s335 = scalar_select %p334, %s333, 0
      $region36: #{double_conv_forward.4} parent=27 // pred_fallthru
        _
      // Predicated region
      $region37: #{double_conv_forward.4} parent=27 // pred_check
        %p336 = pneg %p121
      $region38: #{double_conv_forward.4} parent=27 // pred_check_branch
        %338 = sbr.rel (%p336) target = $region40
      $region39: #{double_conv_forward.4} parent=27 // pred_region
        %s339 = sadd.s32 %s23, 1
        %s340 = smul.u32 %s339, 16
        %p341 = scmp.lt.s32.totalorder %s340, 15
        %s342 = scalar_select %p341, %s340, 15
        %p343 = scmp.lt.s32.totalorder %s22, 1
        %s344 = scalar_select %p343, %s22, 1
        %p345 = scmp.lt.s32.totalorder %s342, 15
        %s346 = scalar_select %p345, %s342, 15
        %s347 = smul.addr %s346, 2
        %s348 = smul.addr %s344, 32
        %s349 = sadd.s32 %s347, %s348
        %s350 = smul.addr %s349, 4
        %s351 = scalar_lea.vmem %s2, %s350
        %s352 = sadd.s32 %s23, 1
        %s353 = smul.u32 %s352, 16
        %p354 = scmp.lt.s32.totalorder %s353, 15
        %s355 = scalar_select %p354, %s353, 15
      $region40: #{double_conv_forward.4} parent=27 // pred_fallthru
        _
    $region28: #{double_conv_forward.4} parent=5 // pred_fallthru
      _
    %p356 = scmp.le.s32.totalorder 1, %s15
    %p357 = scmp.lt.s32.totalorder %s15, 3
    %p358 = pnand %p356, %p357
    %p359 = pneg %p358
    // Predicated region
    $region41: #{double_conv_forward.4} parent=5 // pred_check
      _
    $region42: #{double_conv_forward.4} parent=5 // pred_check_branch
      %361 = sbr.rel (%p358) target = $region44
    $region43: #{double_conv_forward.4} parent=5 // pred_region
      %s362 = ssub.s32 %s15, 1
      %s363 = smul.u32 16, %s25
      %p364 = scmp.lt.s32.totalorder %s24, 1
      %s365 = scalar_select %p364, %s24, 1
      %p366 = scmp.lt.s32.totalorder %s363, 15
      %s367 = scalar_select %p366, %s363, 15
      %s368 = smul.addr %s367, 2
      %s369 = smul.addr %s365, 32
      %s370 = sadd.s32 %s368, %s369
      %s371 = smul.addr %s370, 4
      %s372 = scalar_lea.vmem %s0, %s371
      %p373 = pneg %p55
      %p374 = pneg %p52
      %s375 = smul.u32 %s25, 16
      %s376 = ssub.s32 %s375, 1
      %p377 = scmp.gt.s32.totalorder %s376, 0
      %s378 = scalar_select %p377, %s376, 0
      %p379 = scmp.lt.s32.totalorder %s24, 1
      %s380 = scalar_select %p379, %s24, 1
      %p381 = scmp.lt.s32.totalorder %s378, 15
      %s382 = scalar_select %p381, %s378, 15
      %s383 = smul.addr %s382, 2
      %s384 = smul.addr %s380, 32
      %s385 = sadd.s32 %s383, %s384
      %s386 = smul.addr %s385, 4
      %s387 = scalar_lea.vmem %s1, %s386
      %p388 = pneg %p91
      %p389 = pneg %p88
      %s390 = sadd.s32 %s25, 1
      %s391 = smul.u32 %s390, 16
      %p392 = scmp.lt.s32.totalorder %s391, 15
      %s393 = scalar_select %p392, %s391, 15
      %p394 = scmp.lt.s32.totalorder %s24, 1
      %s395 = scalar_select %p394, %s24, 1
      %p396 = scmp.lt.s32.totalorder %s393, 15
      %s397 = scalar_select %p396, %s393, 15
      %s398 = smul.addr %s397, 2
      %s399 = smul.addr %s395, 32
      %s400 = sadd.s32 %s398, %s399
      %s401 = smul.addr %s400, 4
      %s402 = scalar_lea.vmem %s2, %s401
      %p403 = pneg %p127
      %p404 = pneg %p124
      %p405 = pneg %p148
      %p406 = pneg %p145
      %p407 = pneg %p169
      %p408 = pneg %p166
      %p409 = pneg %p190
      %p410 = pneg %p187
      %p411 = pneg %p218
      %p412 = pneg %p215
      %s413 = smul.u32 16, %s25
      %p414 = scmp.lt.s32.totalorder %s24, 1
      %s415 = scalar_select %p414, %s24, 1
      %p416 = scmp.lt.s32.totalorder %s413, 15
      %s417 = scalar_select %p416, %s413, 15
      %s418 = smul.addr %s417, 2
      %s419 = smul.addr %s415, 32
      %s420 = sadd.s32 %s418, %s419
      %s421 = smul.addr %s420, 4
      %s422 = scalar_lea.vmem %s6, %s421
      %p423 = pneg %p246
      %p424 = pneg %p243
      %p425 = scmp.lt.s32.totalorder %s24, 1
      %s426 = scalar_select %p425, %s24, 1
      %p427 = scmp.lt.s32.totalorder %s25, 0
      %s428 = scalar_select %p427, %s25, 0
      %s429 = sadd.s32 %s428, %s426
      %s430 = scalar_lea.vmem %s7, %s429
      %p431 = pneg %p274
      %p432 = pneg %p271
      %p433 = scmp.lt.s32.totalorder %s24, 1
      %s434 = scalar_select %p433, %s24, 1
      %p435 = scmp.lt.s32.totalorder %s25, 0
      %s436 = scalar_select %p435, %s25, 0
      %s437 = sadd.s32 %s436, %s434
      %s438 = scalar_lea.vmem %s8, %s437
      %s439 = smul.u32 16, %s25
      %p440 = scmp.lt.s32.totalorder %s24, 1
      %s441 = scalar_select %p440, %s24, 1
      %p442 = scmp.lt.s32.totalorder %s439, 15
      %s443 = scalar_select %p442, %s439, 15
      %s444 = smul.addr %s443, 2
      %s445 = smul.addr %s441, 32
      %s446 = sadd.s32 %s444, %s445
      %s447 = smul.addr %s446, 4
      %s448 = scalar_lea.vmem %s0, %s447
      %s449 = smul.u32 16, %s25
      %s450 = smul.u32 %s25, 16
      %s451 = ssub.s32 %s450, 1
      %p452 = scmp.gt.s32.totalorder %s451, 0
      %s453 = scalar_select %p452, %s451, 0
      %p454 = scmp.lt.s32.totalorder %s24, 1
      %s455 = scalar_select %p454, %s24, 1
      %p456 = scmp.lt.s32.totalorder %s453, 15
      %s457 = scalar_select %p456, %s453, 15
      %s458 = smul.addr %s457, 2
      %s459 = smul.addr %s455, 32
      %s460 = sadd.s32 %s458, %s459
      %s461 = smul.addr %s460, 4
      %s462 = scalar_lea.vmem %s1, %s461
      %s463 = smul.u32 %s25, 16
      %s464 = ssub.s32 %s463, 1
      %p465 = scmp.gt.s32.totalorder %s464, 0
      %s466 = scalar_select %p465, %s464, 0
      %s467 = sadd.s32 %s25, 1
      %s468 = smul.u32 %s467, 16
      %p469 = scmp.lt.s32.totalorder %s468, 15
      %s470 = scalar_select %p469, %s468, 15
      %p471 = scmp.lt.s32.totalorder %s24, 1
      %s472 = scalar_select %p471, %s24, 1
      %p473 = scmp.lt.s32.totalorder %s470, 15
      %s474 = scalar_select %p473, %s470, 15
      %s475 = smul.addr %s474, 2
      %s476 = smul.addr %s472, 32
      %s477 = sadd.s32 %s475, %s476
      %s478 = smul.addr %s477, 4
      %s479 = scalar_lea.vmem %s2, %s478
      %s480 = sadd.s32 %s25, 1
      %s481 = smul.u32 %s480, 16
      %p482 = scmp.lt.s32.totalorder %s481, 15
      %s483 = scalar_select %p482, %s481, 15
      %s484 = smul.u32 16, %s25
      %p485 = scmp.lt.s32.totalorder %s24, 1
      %s486 = scalar_select %p485, %s24, 1
      %p487 = scmp.lt.s32.totalorder %s484, 15
      %s488 = scalar_select %p487, %s484, 15
      %s489 = smul.addr %s488, 2
      %s490 = smul.addr %s486, 32
      %s491 = sadd.s32 %s489, %s490
      %s492 = smul.addr %s491, 4
      %s493 = scalar_lea.vmem %s6, %s492
      %s494 = smul.u32 16, %s25
      %p495 = scmp.lt.s32.totalorder %s24, 1
      %s496 = scalar_select %p495, %s24, 1
      %p497 = scmp.lt.s32.totalorder %s25, 0
      %s498 = scalar_select %p497, %s25, 0
      %s499 = sadd.s32 %s498, %s496
      %s500 = scalar_lea.vmem %s7, %s499
      %p501 = scmp.lt.s32.totalorder %s24, 1
      %s502 = scalar_select %p501, %s24, 1
      %p503 = scmp.lt.s32.totalorder %s25, 0
      %s504 = scalar_select %p503, %s25, 0
      %s505 = sadd.s32 %s504, %s502
      %s506 = scalar_lea.vmem %s8, %s505
      %vm508 = vcmask 60416
      %509 = vst.msk [vmem:[#allocation2] sm:$0xf] %vm508, 0
      %510 = vst.msk [vmem:[#allocation2 + $0x10] sm:$0xf] %vm508, 0
      %511 = vst.msk [vmem:[#allocation2 + $0x20] sm:$0xf] %vm508, 0
      %512 = vst.msk [vmem:[#allocation2 + $0x30] sm:$0xf] %vm508, 0
      %513 = vst.msk [vmem:[#allocation2 + $0x40] sm:$0xf] %vm508, 0
      %514 = vst.msk [vmem:[#allocation2 + $0x50] sm:$0xf] %vm508, 0
      %515 = vst.msk [vmem:[#allocation2 + $0x60] sm:$0xf] %vm508, 0
      %516 = vst.msk [vmem:[#allocation2 + $0x70] sm:$0xf] %vm508, 0
      %517 = vst.msk [vmem:[#allocation2 + $0x80] sm:$0xf] %vm508, 0
      %518 = vst.msk [vmem:[#allocation2 + $0x90] sm:$0xf] %vm508, 0
      %519 = vst.msk [vmem:[#allocation2 + $0xa0] sm:$0xf] %vm508, 0
      %520 = vst.msk [vmem:[#allocation2 + $0xb0] sm:$0xf] %vm508, 0
      %521 = vst.msk [vmem:[#allocation2 + $0xc0] sm:$0xf] %vm508, 0
      %522 = vst.msk [vmem:[#allocation2 + $0xd0] sm:$0xf] %vm508, 0
      %523 = vst.msk [vmem:[#allocation2 + $0xe0] sm:$0xf] %vm508, 0
      %524 = vst.msk [vmem:[#allocation2 + $0xf0] sm:$0xf] %vm508, 0
      %525 = vst.msk [vmem:[#allocation2 + $0x100] sm:$0xf] %vm508, 0
      %526 = vst.msk [vmem:[#allocation2 + $0x110] sm:$0xf] %vm508, 0
      %vm527 = vcmask 64516
      %528 = vst.msk [vmem:[#allocation2 + $0x8] sm:$0xf0] %vm527, 0
      %529 = vst.msk [vmem:[#allocation2 + $0x18] sm:$0xf0] %vm527, 0
      %530 = vst.msk [vmem:[#allocation2 + $0x28] sm:$0xf0] %vm527, 0
      %531 = vst.msk [vmem:[#allocation2 + $0x38] sm:$0xf0] %vm527, 0
      %532 = vst.msk [vmem:[#allocation2 + $0x48] sm:$0xf0] %vm527, 0
      %533 = vst.msk [vmem:[#allocation2 + $0x58] sm:$0xf0] %vm527, 0
      %534 = vst.msk [vmem:[#allocation2 + $0x68] sm:$0xf0] %vm527, 0
      %535 = vst.msk [vmem:[#allocation2 + $0x78] sm:$0xf0] %vm527, 0
      %536 = vst.msk [vmem:[#allocation2 + $0x88] sm:$0xf0] %vm527, 0
      %537 = vst.msk [vmem:[#allocation2 + $0x98] sm:$0xf0] %vm527, 0
      %538 = vst.msk [vmem:[#allocation2 + $0xa8] sm:$0xf0] %vm527, 0
      %539 = vst.msk [vmem:[#allocation2 + $0xb8] sm:$0xf0] %vm527, 0
      %540 = vst.msk [vmem:[#allocation2 + $0xc8] sm:$0xf0] %vm527, 0
      %541 = vst.msk [vmem:[#allocation2 + $0xd8] sm:$0xf0] %vm527, 0
      %542 = vst.msk [vmem:[#allocation2 + $0xe8] sm:$0xf0] %vm527, 0
      %543 = vst.msk [vmem:[#allocation2 + $0xf8] sm:$0xf0] %vm527, 0
      %544 = vst.msk [vmem:[#allocation2 + $0x108] sm:$0xf0] %vm527, 0
      %545 = vst.msk [vmem:[#allocation2 + $0x118] sm:$0xf0] %vm527, 0
      %v546 = vld [vmem:[%s448] sm:$0xf]
      %v547 = vld [vmem:[%s448 + $0x4] sm:$0xf]
      %v548 = vld [vmem:[%s448 + $0x8] sm:$0xf]
      %v549 = vld [vmem:[%s448 + $0xc] sm:$0xf]
      %v550 = vld [vmem:[%s448 + $0x10] sm:$0xf]
      %v551 = vld [vmem:[%s448 + $0x14] sm:$0xf]
      %v552 = vld [vmem:[%s448 + $0x18] sm:$0xf]
      %v553 = vld [vmem:[%s448 + $0x1c] sm:$0xf]
      %v554 = vld [vmem:[%s448 + $0x20] sm:$0xf]
      %v555 = vld [vmem:[%s448 + $0x24] sm:$0xf]
      %v556 = vld [vmem:[%s448 + $0x28] sm:$0xf]
      %v557 = vld [vmem:[%s448 + $0x2c] sm:$0xf]
      %v558 = vld [vmem:[%s448 + $0x30] sm:$0xf]
      %v559 = vld [vmem:[%s448 + $0x34] sm:$0xf]
      %v560 = vld [vmem:[%s448 + $0x38] sm:$0xf]
      %v561 = vld [vmem:[%s448 + $0x3c] sm:$0xf]
      %v562 = vld [vmem:[%s448 + $0x40] sm:$0xf]
      %v563 = vld [vmem:[%s448 + $0x44] sm:$0xf]
      %v564 = vld [vmem:[%s448 + $0x48] sm:$0xf]
      %v565 = vld [vmem:[%s448 + $0x4c] sm:$0xf]
      %v566 = vld [vmem:[%s448 + $0x50] sm:$0xf]
      %v567 = vld [vmem:[%s448 + $0x54] sm:$0xf]
      %v568 = vld [vmem:[%s448 + $0x58] sm:$0xf]
      %v569 = vld [vmem:[%s448 + $0x5c] sm:$0xf]
      %v570 = vld [vmem:[%s448 + $0x60] sm:$0xf]
      %v571 = vld [vmem:[%s448 + $0x64] sm:$0xf]
      %v572 = vld [vmem:[%s448 + $0x68] sm:$0xf]
      %v573 = vld [vmem:[%s448 + $0x6c] sm:$0xf]
      %v574 = vld [vmem:[%s448 + $0x70] sm:$0xf]
      %v575 = vld [vmem:[%s448 + $0x74] sm:$0xf]
      %v576 = vld [vmem:[%s448 + $0x78] sm:$0xf]
      %v577 = vld [vmem:[%s448 + $0x7c] sm:$0xf]
      %v578 = vunpack.c.l.bf16 %v546
      %v579 = vunpack.c.l.bf16 %v547
      %v580 = vunpack.c.l.bf16 %v548
      %v581 = vunpack.c.l.bf16 %v549
      %v582 = vunpack.c.l.bf16 %v550
      %v583 = vunpack.c.l.bf16 %v551
      %v584 = vunpack.c.l.bf16 %v552
      %v585 = vunpack.c.l.bf16 %v553
      %v586 = vunpack.c.l.bf16 %v554
      %v587 = vunpack.c.l.bf16 %v555
      %v588 = vunpack.c.l.bf16 %v556
      %v589 = vunpack.c.l.bf16 %v557
      %v590 = vunpack.c.l.bf16 %v558
      %v591 = vunpack.c.l.bf16 %v559
      %v592 = vunpack.c.l.bf16 %v560
      %v593 = vunpack.c.l.bf16 %v561
      %v594 = vunpack.c.l.bf16 %v562
      %v595 = vunpack.c.l.bf16 %v563
      %v596 = vunpack.c.l.bf16 %v564
      %v597 = vunpack.c.l.bf16 %v565
      %v598 = vunpack.c.l.bf16 %v566
      %v599 = vunpack.c.l.bf16 %v567
      %v600 = vunpack.c.l.bf16 %v568
      %v601 = vunpack.c.l.bf16 %v569
      %v602 = vunpack.c.l.bf16 %v570
      %v603 = vunpack.c.l.bf16 %v571
      %v604 = vunpack.c.l.bf16 %v572
      %v605 = vunpack.c.l.bf16 %v573
      %v606 = vunpack.c.l.bf16 %v574
      %v607 = vunpack.c.l.bf16 %v575
      %v608 = vunpack.c.l.bf16 %v576
      %v609 = vunpack.c.l.bf16 %v577
      %v610 = vld [vmem:[%s4] sm:$0x1]
      %v612 = vlaneseq
      %v613 = vshrl.u32 %v612, 7
      %v614 = vsub.s32 0, %v613
      %v615 = vrot.slane %v610, %v614
      %v617 = vmul.f32 %v578, %v615
      %v618 = vmul.f32 %v579, %v615
      %v619 = vmul.f32 %v580, %v615
      %v620 = vmul.f32 %v581, %v615
      %v621 = vmul.f32 %v582, %v615
      %v622 = vmul.f32 %v583, %v615
      %v623 = vmul.f32 %v584, %v615
      %v624 = vmul.f32 %v585, %v615
      %v625 = vmul.f32 %v586, %v615
      %v626 = vmul.f32 %v587, %v615
      %v627 = vmul.f32 %v588, %v615
      %v628 = vmul.f32 %v589, %v615
      %v629 = vmul.f32 %v590, %v615
      %v630 = vmul.f32 %v591, %v615
      %v631 = vmul.f32 %v592, %v615
      %v632 = vmul.f32 %v593, %v615
      %v633 = vmul.f32 %v594, %v615
      %v634 = vmul.f32 %v595, %v615
      %v635 = vmul.f32 %v596, %v615
      %v636 = vmul.f32 %v597, %v615
      %v637 = vmul.f32 %v598, %v615
      %v638 = vmul.f32 %v599, %v615
      %v639 = vmul.f32 %v600, %v615
      %v640 = vmul.f32 %v601, %v615
      %v641 = vmul.f32 %v602, %v615
      %v642 = vmul.f32 %v603, %v615
      %v643 = vmul.f32 %v604, %v615
      %v644 = vmul.f32 %v605, %v615
      %v645 = vmul.f32 %v606, %v615
      %v646 = vmul.f32 %v607, %v615
      %v647 = vmul.f32 %v608, %v615
      %v648 = vmul.f32 %v609, %v615
      %v649 = vld [vmem:[%s5] sm:$0x1]
      %v651 = vlaneseq
      %v652 = vshrl.u32 %v651, 7
      %v653 = vsub.s32 0, %v652
      %v654 = vrot.slane %v649, %v653
      %v656 = vadd.f32 %v617, %v654
      %v657 = vadd.f32 %v618, %v654
      %v658 = vadd.f32 %v619, %v654
      %v659 = vadd.f32 %v620, %v654
      %v660 = vadd.f32 %v621, %v654
      %v661 = vadd.f32 %v622, %v654
      %v662 = vadd.f32 %v623, %v654
      %v663 = vadd.f32 %v624, %v654
      %v664 = vadd.f32 %v625, %v654
      %v665 = vadd.f32 %v626, %v654
      %v666 = vadd.f32 %v627, %v654
      %v667 = vadd.f32 %v628, %v654
      %v668 = vadd.f32 %v629, %v654
      %v669 = vadd.f32 %v630, %v654
      %v670 = vadd.f32 %v631, %v654
      %v671 = vadd.f32 %v632, %v654
      %v672 = vadd.f32 %v633, %v654
      %v673 = vadd.f32 %v634, %v654
      %v674 = vadd.f32 %v635, %v654
      %v675 = vadd.f32 %v636, %v654
      %v676 = vadd.f32 %v637, %v654
      %v677 = vadd.f32 %v638, %v654
      %v678 = vadd.f32 %v639, %v654
      %v679 = vadd.f32 %v640, %v654
      %v680 = vadd.f32 %v641, %v654
      %v681 = vadd.f32 %v642, %v654
      %v682 = vadd.f32 %v643, %v654
      %v683 = vadd.f32 %v644, %v654
      %v684 = vadd.f32 %v645, %v654
      %v685 = vadd.f32 %v646, %v654
      %v686 = vadd.f32 %v647, %v654
      %v687 = vadd.f32 %v648, %v654
      %v688 = vmax.f32 %v656, 0.0
      %v689 = vmax.f32 %v657, 0.0
      %v690 = vmax.f32 %v658, 0.0
      %v691 = vmax.f32 %v659, 0.0
      %v692 = vmax.f32 %v660, 0.0
      %v693 = vmax.f32 %v661, 0.0
      %v694 = vmax.f32 %v662, 0.0
      %v695 = vmax.f32 %v663, 0.0
      %v696 = vmax.f32 %v664, 0.0
      %v697 = vmax.f32 %v665, 0.0
      %v698 = vmax.f32 %v666, 0.0
      %v699 = vmax.f32 %v667, 0.0
      %v700 = vmax.f32 %v668, 0.0
      %v701 = vmax.f32 %v669, 0.0
      %v702 = vmax.f32 %v670, 0.0
      %v703 = vmax.f32 %v671, 0.0
      %v704 = vmax.f32 %v672, 0.0
      %v705 = vmax.f32 %v673, 0.0
      %v706 = vmax.f32 %v674, 0.0
      %v707 = vmax.f32 %v675, 0.0
      %v708 = vmax.f32 %v676, 0.0
      %v709 = vmax.f32 %v677, 0.0
      %v710 = vmax.f32 %v678, 0.0
      %v711 = vmax.f32 %v679, 0.0
      %v712 = vmax.f32 %v680, 0.0
      %v713 = vmax.f32 %v681, 0.0
      %v714 = vmax.f32 %v682, 0.0
      %v715 = vmax.f32 %v683, 0.0
      %v716 = vmax.f32 %v684, 0.0
      %v717 = vmax.f32 %v685, 0.0
      %v718 = vmax.f32 %v686, 0.0
      %v719 = vmax.f32 %v687, 0.0
      %v720 = vpack.c.bf16 %v689, %v688
      %v721 = vpack.c.bf16 %v691, %v690
      %v722 = vpack.c.bf16 %v693, %v692
      %v723 = vpack.c.bf16 %v695, %v694
      %v724 = vpack.c.bf16 %v697, %v696
      %v725 = vpack.c.bf16 %v699, %v698
      %v726 = vpack.c.bf16 %v701, %v700
      %v727 = vpack.c.bf16 %v703, %v702
      %v728 = vpack.c.bf16 %v705, %v704
      %v729 = vpack.c.bf16 %v707, %v706
      %v730 = vpack.c.bf16 %v709, %v708
      %v731 = vpack.c.bf16 %v711, %v710
      %v732 = vpack.c.bf16 %v713, %v712
      %v733 = vpack.c.bf16 %v715, %v714
      %v734 = vpack.c.bf16 %v717, %v716
      %v735 = vpack.c.bf16 %v719, %v718
      %v752 = vrot.slane %v720, 4
      %v753 = vrot.slane %v721, 4
      %v754 = vrot.slane %v722, 4
      %v755 = vrot.slane %v723, 4
      %v756 = vrot.slane %v724, 4
      %v757 = vrot.slane %v725, 4
      %v758 = vrot.slane %v726, 4
      %v759 = vrot.slane %v727, 4
      %v760 = vrot.slane %v728, 4
      %v761 = vrot.slane %v729, 4
      %v762 = vrot.slane %v730, 4
      %v763 = vrot.slane %v731, 4
      %v764 = vrot.slane %v732, 4
      %v765 = vrot.slane %v733, 4
      %v766 = vrot.slane %v734, 4
      %v767 = vrot.slane %v735, 4
      %s784 = scalar_lea.vmem [#allocation2], 16
      %785 = vst.msk [vmem:[%s784] sm:$0xf0] %vm527, %v752
      %786 = vst.msk [vmem:[%s784 + $0x8] sm:$0xf] %vm508, %v752
      %787 = vst.msk [vmem:[%s784 + $0x10] sm:$0xf0] %vm527, %v753
      %788 = vst.msk [vmem:[%s784 + $0x18] sm:$0xf] %vm508, %v753
      %789 = vst.msk [vmem:[%s784 + $0x20] sm:$0xf0] %vm527, %v754
      %790 = vst.msk [vmem:[%s784 + $0x28] sm:$0xf] %vm508, %v754
      %791 = vst.msk [vmem:[%s784 + $0x30] sm:$0xf0] %vm527, %v755
      %792 = vst.msk [vmem:[%s784 + $0x38] sm:$0xf] %vm508, %v755
      %793 = vst.msk [vmem:[%s784 + $0x40] sm:$0xf0] %vm527, %v756
      %794 = vst.msk [vmem:[%s784 + $0x48] sm:$0xf] %vm508, %v756
      %795 = vst.msk [vmem:[%s784 + $0x50] sm:$0xf0] %vm527, %v757
      %796 = vst.msk [vmem:[%s784 + $0x58] sm:$0xf] %vm508, %v757
      %797 = vst.msk [vmem:[%s784 + $0x60] sm:$0xf0] %vm527, %v758
      %798 = vst.msk [vmem:[%s784 + $0x68] sm:$0xf] %vm508, %v758
      %799 = vst.msk [vmem:[%s784 + $0x70] sm:$0xf0] %vm527, %v759
      %800 = vst.msk [vmem:[%s784 + $0x78] sm:$0xf] %vm508, %v759
      %801 = vst.msk [vmem:[%s784 + $0x80] sm:$0xf0] %vm527, %v760
      %802 = vst.msk [vmem:[%s784 + $0x88] sm:$0xf] %vm508, %v760
      %803 = vst.msk [vmem:[%s784 + $0x90] sm:$0xf0] %vm527, %v761
      %804 = vst.msk [vmem:[%s784 + $0x98] sm:$0xf] %vm508, %v761
      %805 = vst.msk [vmem:[%s784 + $0xa0] sm:$0xf0] %vm527, %v762
      %806 = vst.msk [vmem:[%s784 + $0xa8] sm:$0xf] %vm508, %v762
      %807 = vst.msk [vmem:[%s784 + $0xb0] sm:$0xf0] %vm527, %v763
      %808 = vst.msk [vmem:[%s784 + $0xb8] sm:$0xf] %vm508, %v763
      %809 = vst.msk [vmem:[%s784 + $0xc0] sm:$0xf0] %vm527, %v764
      %810 = vst.msk [vmem:[%s784 + $0xc8] sm:$0xf] %vm508, %v764
      %811 = vst.msk [vmem:[%s784 + $0xd0] sm:$0xf0] %vm527, %v765
      %812 = vst.msk [vmem:[%s784 + $0xd8] sm:$0xf] %vm508, %v765
      %813 = vst.msk [vmem:[%s784 + $0xe0] sm:$0xf0] %vm527, %v766
      %814 = vst.msk [vmem:[%s784 + $0xe8] sm:$0xf] %vm508, %v766
      %815 = vst.msk [vmem:[%s784 + $0xf0] sm:$0xf0] %vm527, %v767
      %816 = vst.msk [vmem:[%s784 + $0xf8] sm:$0xf] %vm508, %v767
      %v817 = vld [vmem:[%s462] sm:$0xf]
      %v818 = vld [vmem:[%s462 + $0x4] sm:$0xf]
      %v819 = vunpack.c.l.bf16 %v817
      %v820 = vunpack.c.l.bf16 %v818
      %v821 = vld [vmem:[%s4] sm:$0x1]
      %v823 = vlaneseq
      %v824 = vshrl.u32 %v823, 7
      %v825 = vsub.s32 0, %v824
      %v826 = vrot.slane %v821, %v825
      %v828 = vmul.f32 %v819, %v826
      %v829 = vmul.f32 %v820, %v826
      %v830 = vld [vmem:[%s5] sm:$0x1]
      %v832 = vlaneseq
      %v833 = vshrl.u32 %v832, 7
      %v834 = vsub.s32 0, %v833
      %v835 = vrot.slane %v830, %v834
      %v837 = vadd.f32 %v828, %v835
      %v838 = vadd.f32 %v829, %v835
      %v839 = vmax.f32 %v837, 0.0
      %v840 = vmax.f32 %v838, 0.0
      %v841 = vpack.c.bf16 %v840, %v839
      %p842 = scmp.gt.s32.totalorder %s25, 0
      %s843 = scalar_select %p842, 1, 0
      %v844 = vstv %s843
      %vm845 = vcmp.eq.s32.totalorder %v844, 1
      %v846 = vsel %vm845, %v841, 0
      %v848 = vrot.slane %v846, 4
      %850 = vst.msk [vmem:[#allocation2] sm:$0xf0] %vm527, %v848
      %851 = vst.msk [vmem:[#allocation2 + $0x8] sm:$0xf] %vm508, %v848
      %v852 = vld [vmem:[%s479] sm:$0xf]
      %v853 = vld [vmem:[%s479 + $0x4] sm:$0xf]
      %v854 = vunpack.c.l.bf16 %v852
      %v855 = vunpack.c.l.bf16 %v853
      %v856 = vld [vmem:[%s4] sm:$0x1]
      %v858 = vlaneseq
      %v859 = vshrl.u32 %v858, 7
      %v860 = vsub.s32 0, %v859
      %v861 = vrot.slane %v856, %v860
      %v863 = vmul.f32 %v854, %v861
      %v864 = vmul.f32 %v855, %v861
      %v865 = vld [vmem:[%s5] sm:$0x1]
      %v867 = vlaneseq
      %v868 = vshrl.u32 %v867, 7
      %v869 = vsub.s32 0, %v868
      %v870 = vrot.slane %v865, %v869
      %v872 = vadd.f32 %v863, %v870
      %v873 = vadd.f32 %v864, %v870
      %v874 = vmax.f32 %v872, 0.0
      %v875 = vmax.f32 %v873, 0.0
      %v876 = vpack.c.bf16 %v875, %v874
      %p877 = scmp.lt.s32.totalorder %s25, 0
      %s878 = scalar_select %p877, 1, 0
      %v879 = vstv %s878
      %vm880 = vcmp.eq.s32.totalorder %v879, 1
      %v881 = vsel %vm880, %v876, 0
      %v883 = vrot.slane %v881, 4
      %s885 = scalar_lea.vmem [#allocation2], 272
      %886 = vst.msk [vmem:[%s885] sm:$0xf0] %vm527, %v883
      %887 = vst.msk [vmem:[%s885 + $0x8] sm:$0xf] %vm508, %v883
      %v888 = vld [vmem:[#allocation2] sm:$0xf8]
      %v889 = vld [vmem:[#allocation2 + $0x8] sm:$0xf]
      %v890 = vld [vmem:[#allocation2 + $0x10] sm:$0xf8]
      %v891 = vld [vmem:[#allocation2 + $0x18] sm:$0xf]
      %v892 = vld [vmem:[#allocation2 + $0x20] sm:$0xf8]
      %v893 = vld [vmem:[#allocation2 + $0x28] sm:$0xf]
      %v894 = vld [vmem:[#allocation2 + $0x30] sm:$0xf8]
      %v895 = vld [vmem:[#allocation2 + $0x38] sm:$0xf]
      %v896 = vld [vmem:[#allocation2 + $0x40] sm:$0xf8]
      %v897 = vld [vmem:[#allocation2 + $0x48] sm:$0xf]
      %v898 = vld [vmem:[#allocation2 + $0x50] sm:$0xf8]
      %v899 = vld [vmem:[#allocation2 + $0x58] sm:$0xf]
      %v900 = vld [vmem:[#allocation2 + $0x60] sm:$0xf8]
      %v901 = vld [vmem:[#allocation2 + $0x68] sm:$0xf]
      %v902 = vld [vmem:[#allocation2 + $0x70] sm:$0xf8]
      %v903 = vld [vmem:[#allocation2 + $0x78] sm:$0xf]
      %v904 = vld [vmem:[#allocation2 + $0x80] sm:$0xf8]
      %v905 = vld [vmem:[#allocation2 + $0x88] sm:$0xf]
      %v906 = vld [vmem:[#allocation2 + $0x90] sm:$0xf8]
      %v907 = vld [vmem:[#allocation2 + $0x98] sm:$0xf]
      %v908 = vld [vmem:[#allocation2 + $0xa0] sm:$0xf8]
      %v909 = vld [vmem:[#allocation2 + $0xa8] sm:$0xf]
      %v910 = vld [vmem:[#allocation2 + $0xb0] sm:$0xf8]
      %v911 = vld [vmem:[#allocation2 + $0xb8] sm:$0xf]
      %v912 = vld [vmem:[#allocation2 + $0xc0] sm:$0xf8]
      %v913 = vld [vmem:[#allocation2 + $0xc8] sm:$0xf]
      %v914 = vld [vmem:[#allocation2 + $0xd0] sm:$0xf8]
      %v915 = vld [vmem:[#allocation2 + $0xd8] sm:$0xf]
      %v916 = vld [vmem:[#allocation2 + $0xe0] sm:$0xf8]
      %v917 = vld [vmem:[#allocation2 + $0xe8] sm:$0xf]
      %v918 = vld [vmem:[#allocation2 + $0xf0] sm:$0xf8]
      %v919 = vld [vmem:[#allocation2 + $0xf8] sm:$0xf]
      %vm920 = vsmask.f32 4352
      %v922 = vshrl.u32 %v888, 16
      %v924 = vrot.slane %v922, 3
      %v925 = vshll.u32 %v888, 16
      %v927 = vrot.slane %v925, 4
      %v928 = vor.u32 %v924, %v927
      %v930 = vshrl.u32 %v889, 16
      %v932 = vrot.slane %v930, 3
      %v933 = vshll.u32 %v889, 16
      %v935 = vrot.slane %v933, 4
      %v936 = vor.u32 %v932, %v935
      %v937 = vsel %vm920, %v928, %v936
      %v939 = vshrl.u32 %v890, 16
      %v941 = vrot.slane %v939, 3
      %v942 = vshll.u32 %v890, 16
      %v944 = vrot.slane %v942, 4
      %v945 = vor.u32 %v941, %v944
      %v947 = vshrl.u32 %v891, 16
      %v949 = vrot.slane %v947, 3
      %v950 = vshll.u32 %v891, 16
      %v952 = vrot.slane %v950, 4
      %v953 = vor.u32 %v949, %v952
      %v954 = vsel %vm920, %v945, %v953
      %v956 = vshrl.u32 %v892, 16
      %v958 = vrot.slane %v956, 3
      %v959 = vshll.u32 %v892, 16
      %v961 = vrot.slane %v959, 4
      %v962 = vor.u32 %v958, %v961
      %v964 = vshrl.u32 %v893, 16
      %v966 = vrot.slane %v964, 3
      %v967 = vshll.u32 %v893, 16
      %v969 = vrot.slane %v967, 4
      %v970 = vor.u32 %v966, %v969
      %v971 = vsel %vm920, %v962, %v970
      %v973 = vshrl.u32 %v894, 16
      %v975 = vrot.slane %v973, 3
      %v976 = vshll.u32 %v894, 16
      %v978 = vrot.slane %v976, 4
      %v979 = vor.u32 %v975, %v978
      %v981 = vshrl.u32 %v895, 16
      %v983 = vrot.slane %v981, 3
      %v984 = vshll.u32 %v895, 16
      %v986 = vrot.slane %v984, 4
      %v987 = vor.u32 %v983, %v986
      %v988 = vsel %vm920, %v979, %v987
      %v990 = vshrl.u32 %v896, 16
      %v992 = vrot.slane %v990, 3
      %v993 = vshll.u32 %v896, 16
      %v995 = vrot.slane %v993, 4
      %v996 = vor.u32 %v992, %v995
      %v998 = vshrl.u32 %v897, 16
      %v1000 = vrot.slane %v998, 3
      %v1001 = vshll.u32 %v897, 16
      %v1003 = vrot.slane %v1001, 4
      %v1004 = vor.u32 %v1000, %v1003
      %v1005 = vsel %vm920, %v996, %v1004
      %v1007 = vshrl.u32 %v898, 16
      %v1009 = vrot.slane %v1007, 3
      %v1010 = vshll.u32 %v898, 16
      %v1012 = vrot.slane %v1010, 4
      %v1013 = vor.u32 %v1009, %v1012
      %v1015 = vshrl.u32 %v899, 16
      %v1017 = vrot.slane %v1015, 3
      %v1018 = vshll.u32 %v899, 16
      %v1020 = vrot.slane %v1018, 4
      %v1021 = vor.u32 %v1017, %v1020
      %v1022 = vsel %vm920, %v1013, %v1021
      %v1024 = vshrl.u32 %v900, 16
      %v1026 = vrot.slane %v1024, 3
      %v1027 = vshll.u32 %v900, 16
      %v1029 = vrot.slane %v1027, 4
      %v1030 = vor.u32 %v1026, %v1029
      %v1032 = vshrl.u32 %v901, 16
      %v1034 = vrot.slane %v1032, 3
      %v1035 = vshll.u32 %v901, 16
      %v1037 = vrot.slane %v1035, 4
      %v1038 = vor.u32 %v1034, %v1037
      %v1039 = vsel %vm920, %v1030, %v1038
      %v1041 = vshrl.u32 %v902, 16
      %v1043 = vrot.slane %v1041, 3
      %v1044 = vshll.u32 %v902, 16
      %v1046 = vrot.slane %v1044, 4
      %v1047 = vor.u32 %v1043, %v1046
      %v1049 = vshrl.u32 %v903, 16
      %v1051 = vrot.slane %v1049, 3
      %v1052 = vshll.u32 %v903, 16
      %v1054 = vrot.slane %v1052, 4
      %v1055 = vor.u32 %v1051, %v1054
      %v1056 = vsel %vm920, %v1047, %v1055
      %v1058 = vshrl.u32 %v904, 16
      %v1060 = vrot.slane %v1058, 3
      %v1061 = vshll.u32 %v904, 16
      %v1063 = vrot.slane %v1061, 4
      %v1064 = vor.u32 %v1060, %v1063
      %v1066 = vshrl.u32 %v905, 16
      %v1068 = vrot.slane %v1066, 3
      %v1069 = vshll.u32 %v905, 16
      %v1071 = vrot.slane %v1069, 4
      %v1072 = vor.u32 %v1068, %v1071
      %v1073 = vsel %vm920, %v1064, %v1072
      %v1075 = vshrl.u32 %v906, 16
      %v1077 = vrot.slane %v1075, 3
      %v1078 = vshll.u32 %v906, 16
      %v1080 = vrot.slane %v1078, 4
      %v1081 = vor.u32 %v1077, %v1080
      %v1083 = vshrl.u32 %v907, 16
      %v1085 = vrot.slane %v1083, 3
      %v1086 = vshll.u32 %v907, 16
      %v1088 = vrot.slane %v1086, 4
      %v1089 = vor.u32 %v1085, %v1088
      %v1090 = vsel %vm920, %v1081, %v1089
      %v1092 = vshrl.u32 %v908, 16
      %v1094 = vrot.slane %v1092, 3
      %v1095 = vshll.u32 %v908, 16
      %v1097 = vrot.slane %v1095, 4
      %v1098 = vor.u32 %v1094, %v1097
      %v1100 = vshrl.u32 %v909, 16
      %v1102 = vrot.slane %v1100, 3
      %v1103 = vshll.u32 %v909, 16
      %v1105 = vrot.slane %v1103, 4
      %v1106 = vor.u32 %v1102, %v1105
      %v1107 = vsel %vm920, %v1098, %v1106
      %v1109 = vshrl.u32 %v910, 16
      %v1111 = vrot.slane %v1109, 3
      %v1112 = vshll.u32 %v910, 16
      %v1114 = vrot.slane %v1112, 4
      %v1115 = vor.u32 %v1111, %v1114
      %v1117 = vshrl.u32 %v911, 16
      %v1119 = vrot.slane %v1117, 3
      %v1120 = vshll.u32 %v911, 16
      %v1122 = vrot.slane %v1120, 4
      %v1123 = vor.u32 %v1119, %v1122
      %v1124 = vsel %vm920, %v1115, %v1123
      %v1126 = vshrl.u32 %v912, 16
      %v1128 = vrot.slane %v1126, 3
      %v1129 = vshll.u32 %v912, 16
      %v1131 = vrot.slane %v1129, 4
      %v1132 = vor.u32 %v1128, %v1131
      %v1134 = vshrl.u32 %v913, 16
      %v1136 = vrot.slane %v1134, 3
      %v1137 = vshll.u32 %v913, 16
      %v1139 = vrot.slane %v1137, 4
      %v1140 = vor.u32 %v1136, %v1139
      %v1141 = vsel %vm920, %v1132, %v1140
      %v1143 = vshrl.u32 %v914, 16
      %v1145 = vrot.slane %v1143, 3
      %v1146 = vshll.u32 %v914, 16
      %v1148 = vrot.slane %v1146, 4
      %v1149 = vor.u32 %v1145, %v1148
      %v1151 = vshrl.u32 %v915, 16
      %v1153 = vrot.slane %v1151, 3
      %v1154 = vshll.u32 %v915, 16
      %v1156 = vrot.slane %v1154, 4
      %v1157 = vor.u32 %v1153, %v1156
      %v1158 = vsel %vm920, %v1149, %v1157
      %v1160 = vshrl.u32 %v916, 16
      %v1162 = vrot.slane %v1160, 3
      %v1163 = vshll.u32 %v916, 16
      %v1165 = vrot.slane %v1163, 4
      %v1166 = vor.u32 %v1162, %v1165
      %v1168 = vshrl.u32 %v917, 16
      %v1170 = vrot.slane %v1168, 3
      %v1171 = vshll.u32 %v917, 16
      %v1173 = vrot.slane %v1171, 4
      %v1174 = vor.u32 %v1170, %v1173
      %v1175 = vsel %vm920, %v1166, %v1174
      %v1177 = vshrl.u32 %v918, 16
      %v1179 = vrot.slane %v1177, 3
      %v1180 = vshll.u32 %v918, 16
      %v1182 = vrot.slane %v1180, 4
      %v1183 = vor.u32 %v1179, %v1182
      %v1185 = vshrl.u32 %v919, 16
      %v1187 = vrot.slane %v1185, 3
      %v1188 = vshll.u32 %v919, 16
      %v1190 = vrot.slane %v1188, 4
      %v1191 = vor.u32 %v1187, %v1190
      %v1192 = vsel %vm920, %v1183, %v1191
      %v1193 = vld [vmem:[%s3] sm:$0xf]
      %v1194 = vld [vmem:[#allocation2] sm:$0xf0]
      %v1195 = vld [vmem:[#allocation2 + $0x10] sm:$0xf0]
      %v1196 = vld [vmem:[#allocation2 + $0x20] sm:$0xf0]
      %v1197 = vld [vmem:[#allocation2 + $0x30] sm:$0xf0]
      %v1198 = vld [vmem:[#allocation2 + $0x40] sm:$0xf0]
      %v1199 = vld [vmem:[#allocation2 + $0x50] sm:$0xf0]
      %v1200 = vld [vmem:[#allocation2 + $0x60] sm:$0xf0]
      %v1201 = vld [vmem:[#allocation2 + $0x70] sm:$0xf0]
      %v1202 = vld [vmem:[#allocation2 + $0x80] sm:$0xf0]
      %v1203 = vld [vmem:[#allocation2 + $0x90] sm:$0xf0]
      %v1204 = vld [vmem:[#allocation2 + $0xa0] sm:$0xf0]
      %v1205 = vld [vmem:[#allocation2 + $0xb0] sm:$0xf0]
      %v1206 = vld [vmem:[#allocation2 + $0xc0] sm:$0xf0]
      %v1207 = vld [vmem:[#allocation2 + $0xd0] sm:$0xf0]
      %v1208 = vld [vmem:[#allocation2 + $0xe0] sm:$0xf0]
      %v1209 = vld [vmem:[#allocation2 + $0xf0] sm:$0xf0]
      %vm1242 = vcmask 1043456
      %v1243 = vrot.slane %v1194, 4
      %v1244 = vrot.slane %v889, 4
      %v1245 = vsel %vm1242, %v1243, %v1244
      %v1246 = vrot.slane %v1195, 4
      %v1247 = vrot.slane %v891, 4
      %v1248 = vsel %vm1242, %v1246, %v1247
      %v1249 = vrot.slane %v1196, 4
      %v1250 = vrot.slane %v893, 4
      %v1251 = vsel %vm1242, %v1249, %v1250
      %v1252 = vrot.slane %v1197, 4
      %v1253 = vrot.slane %v895, 4
      %v1254 = vsel %vm1242, %v1252, %v1253
      %v1255 = vrot.slane %v1198, 4
      %v1256 = vrot.slane %v897, 4
      %v1257 = vsel %vm1242, %v1255, %v1256
      %v1258 = vrot.slane %v1199, 4
      %v1259 = vrot.slane %v899, 4
      %v1260 = vsel %vm1242, %v1258, %v1259
      %v1261 = vrot.slane %v1200, 4
      %v1262 = vrot.slane %v901, 4
      %v1263 = vsel %vm1242, %v1261, %v1262
      %v1264 = vrot.slane %v1201, 4
      %v1265 = vrot.slane %v903, 4
      %v1266 = vsel %vm1242, %v1264, %v1265
      %v1267 = vrot.slane %v1202, 4
      %v1268 = vrot.slane %v905, 4
      %v1269 = vsel %vm1242, %v1267, %v1268
      %v1270 = vrot.slane %v1203, 4
      %v1271 = vrot.slane %v907, 4
      %v1272 = vsel %vm1242, %v1270, %v1271
      %v1273 = vrot.slane %v1204, 4
      %v1274 = vrot.slane %v909, 4
      %v1275 = vsel %vm1242, %v1273, %v1274
      %v1276 = vrot.slane %v1205, 4
      %v1277 = vrot.slane %v911, 4
      %v1278 = vsel %vm1242, %v1276, %v1277
      %v1279 = vrot.slane %v1206, 4
      %v1280 = vrot.slane %v913, 4
      %v1281 = vsel %vm1242, %v1279, %v1280
      %v1282 = vrot.slane %v1207, 4
      %v1283 = vrot.slane %v915, 4
      %v1284 = vsel %vm1242, %v1282, %v1283
      %v1285 = vrot.slane %v1208, 4
      %v1286 = vrot.slane %v917, 4
      %v1287 = vsel %vm1242, %v1285, %v1286
      %v1288 = vrot.slane %v1209, 4
      %v1289 = vrot.slane %v919, 4
      %v1290 = vsel %vm1242, %v1288, %v1289
      %s1291 = scalar_lea.vmem %s3, 4
      %v1292 = vld [vmem:[%s1291] sm:$0xf]
      %vm1293 = vcmask 64512
      %v1295 = vsel %vm1293, %v1245, 0
      %v1298 = vsel %vm1293, %v1248, 0
      %v1301 = vsel %vm1293, %v1251, 0
      %v1304 = vsel %vm1293, %v1254, 0
      %v1307 = vsel %vm1293, %v1257, 0
      %v1310 = vsel %vm1293, %v1260, 0
      %v1313 = vsel %vm1293, %v1263, 0
      %v1316 = vsel %vm1293, %v1266, 0
      %v1319 = vsel %vm1293, %v1269, 0
      %v1322 = vsel %vm1293, %v1272, 0
      %v1325 = vsel %vm1293, %v1275, 0
      %v1328 = vsel %vm1293, %v1278, 0
      %v1331 = vsel %vm1293, %v1281, 0
      %v1334 = vsel %vm1293, %v1284, 0
      %v1337 = vsel %vm1293, %v1287, 0
      %v1340 = vsel %vm1293, %v1290, 0
      %vm1342 = vcmask 1043456
      %v1344 = vsel %vm1342, %v1292, 0
      %1346 = vmatprep.subr.bf16.mxu0 0
      %1347 = vmatpush1.bf16.msra.mxu0 %v1344
      %1348 = vmatprep.subr.bf16.mxu0 0
      %1349 = vmatpush1.bf16.msra.mxu0 0
      %1350 = vmatprep.subr.bf16.mxu0 0
      %1351 = vmatpush1.bf16.msra.mxu0 0
      %1352 = vmatprep.subr.bf16.mxu0 0
      %1353 = vmatpush1.bf16.msra.mxu0 0
      %1354 = vmatprep.subr.bf16.mxu0 0
      %1355 = vmatpush1.bf16.msra.mxu0 0
      %1356 = vmatprep.subr.bf16.mxu0 0
      %1357 = vmatpush1.bf16.msra.mxu0 0
      %1358 = vmatprep.subr.bf16.mxu0 0
      %1359 = vmatpush1.bf16.msra.mxu0 0
      %1360 = vmatprep.subr.bf16.mxu0 0
      %1361 = vmatpush1.bf16.msra.mxu0 0
      %1362 = vmatprep.subr.bf16.mxu0 0
      %1363 = vmatpush1.bf16.msra.mxu0 0
      %1364 = vmatprep.subr.bf16.mxu0 0
      %1365 = vmatpush1.bf16.msra.mxu0 0
      %1366 = vmatprep.subr.bf16.mxu0 0
      %1367 = vmatpush1.bf16.msra.mxu0 0
      %1368 = vmatprep.subr.bf16.mxu0 0
      %1369 = vmatpush1.bf16.msra.mxu0 0
      %1370 = vmatprep.subr.bf16.mxu0 0
      %1371 = vmatpush1.bf16.msra.mxu0 0
      %1372 = vmatprep.subr.bf16.mxu0 0
      %1373 = vmatpush1.bf16.msra.mxu0 0
      %1374 = vmatprep.subr.bf16.mxu0 0
      %1375 = vmatpush1.bf16.msra.mxu0 0
      %1376 = vmatprep.subr.bf16.mxu0 0
      %1377 = vmatpush1.bf16.msra.mxu0 0
      %1378 = vmatprep.mubr.bf16.mxu0 0
      %1379 = vmatmul.mubr.bf16.gmra.mrb[0].mxu0 %v1295
      %v1380 = vpop.f32.mrb[0].mxu0
      %v1381 = vadd.f32 0.0, %v1380
      %v1382 = vpop.f32.mrb[0].mxu0
      %v1383 = vpop.f32.mrb[0].mxu0
      %v1384 = vadd.f32 0.0, %v1383
      %v1385 = vpop.f32.mrb[0].mxu0
      %1386 = vmatprep.mubr.bf16.mxu0 0
      %1387 = vmatmul.mubr.bf16.gmra.mrb[0].mxu0 %v1298
      %v1388 = vpop.f32.mrb[0].mxu0
      %v1389 = vadd.f32 0.0, %v1388
      %v1390 = vpop.f32.mrb[0].mxu0
      %v1391 = vpop.f32.mrb[0].mxu0
      %v1392 = vadd.f32 0.0, %v1391
      %v1393 = vpop.f32.mrb[0].mxu0
      %1394 = vmatprep.mubr.bf16.mxu0 0
      %1395 = vmatmul.mubr.bf16.gmra.mrb[0].mxu0 %v1301
      %v1396 = vpop.f32.mrb[0].mxu0
      %v1397 = vadd.f32 0.0, %v1396
      %v1398 = vpop.f32.mrb[0].mxu0
      %v1399 = vpop.f32.mrb[0].mxu0
      %v1400 = vadd.f32 0.0, %v1399
      %v1401 = vpop.f32.mrb[0].mxu0
      %1402 = vmatprep.mubr.bf16.mxu0 0
      %1403 = vmatmul.mubr.bf16.gmra.mrb[0].mxu0 %v1304
      %v1404 = vpop.f32.mrb[0].mxu0
      %v1405 = vadd.f32 0.0, %v1404
      %v1406 = vpop.f32.mrb[0].mxu0
      %v1407 = vpop.f32.mrb[0].mxu0
      %v1408 = vadd.f32 0.0, %v1407
      %v1409 = vpop.f32.mrb[0].mxu0
      %1410 = vmatprep.mubr.bf16.mxu0 0
      %1411 = vmatmul.mubr.bf16.gmra.mrb[0].mxu0 %v1307
      %v1412 = vpop.f32.mrb[0].mxu0
      %v1413 = vadd.f32 0.0, %v1412
      %v1414 = vpop.f32.mrb[0].mxu0
      %v1415 = vpop.f32.mrb[0].mxu0
      %v1416 = vadd.f32 0.0, %v1415
      %v1417 = vpop.f32.mrb[0].mxu0
      %1418 = vmatprep.mubr.bf16.mxu0 0
      %1419 = vmatmul.mubr.bf16.gmra.mrb[0].mxu0 %v1310
      %v1420 = vpop.f32.mrb[0].mxu0
      %v1421 = vadd.f32 0.0, %v1420
      %v1422 = vpop.f32.mrb[0].mxu0
      %v1423 = vpop.f32.mrb[0].mxu0
      %v1424 = vadd.f32 0.0, %v1423
      %v1425 = vpop.f32.mrb[0].mxu0
      %1426 = vmatprep.mubr.bf16.mxu0 0
      %1427 = vmatmul.mubr.bf16.gmra.mrb[0].mxu0 %v1313
      %v1428 = vpop.f32.mrb[0].mxu0
      %v1429 = vadd.f32 0.0, %v1428
      %v1430 = vpop.f32.mrb[0].mxu0
      %v1431 = vpop.f32.mrb[0].mxu0
      %v1432 = vadd.f32 0.0, %v1431
      %v1433 = vpop.f32.mrb[0].mxu0
      %1434 = vmatprep.mubr.bf16.mxu0 0
      %1435 = vmatmul.mubr.bf16.gmra.mrb[0].mxu0 %v1316
      %v1436 = vpop.f32.mrb[0].mxu0
      %v1437 = vadd.f32 0.0, %v1436
      %v1438 = vpop.f32.mrb[0].mxu0
      %v1439 = vpop.f32.mrb[0].mxu0
      %v1440 = vadd.f32 0.0, %v1439
      %v1441 = vpop.f32.mrb[0].mxu0
      %1442 = vmatprep.mubr.bf16.mxu0 0
      %1443 = vmatmul.mubr.bf16.gmra.mrb[0].mxu0 %v1319
      %v1444 = vpop.f32.mrb[0].mxu0
      %v1445 = vadd.f32 0.0, %v1444
      %v1446 = vpop.f32.mrb[0].mxu0
      %v1447 = vpop.f32.mrb[0].mxu0
      %v1448 = vadd.f32 0.0, %v1447
      %v1449 = vpop.f32.mrb[0].mxu0
      %1450 = vmatprep.mubr.bf16.mxu0 0
      %1451 = vmatmul.mubr.bf16.gmra.mrb[0].mxu0 %v1322
      %v1452 = vpop.f32.mrb[0].mxu0
      %v1453 = vadd.f32 0.0, %v1452
      %v1454 = vpop.f32.mrb[0].mxu0
      %v1455 = vpop.f32.mrb[0].mxu0
      %v1456 = vadd.f32 0.0, %v1455
      %v1457 = vpop.f32.mrb[0].mxu0
      %1458 = vmatprep.mubr.bf16.mxu0 0
      %1459 = vmatmul.mubr.bf16.gmra.mrb[0].mxu0 %v1325
      %v1460 = vpop.f32.mrb[0].mxu0
      %v1461 = vadd.f32 0.0, %v1460
      %v1462 = vpop.f32.mrb[0].mxu0
      %v1463 = vpop.f32.mrb[0].mxu0
      %v1464 = vadd.f32 0.0, %v1463
      %v1465 = vpop.f32.mrb[0].mxu0
      %1466 = vmatprep.mubr.bf16.mxu0 0
      %1467 = vmatmul.mubr.bf16.gmra.mrb[0].mxu0 %v1328
      %v1468 = vpop.f32.mrb[0].mxu0
      %v1469 = vadd.f32 0.0, %v1468
      %v1470 = vpop.f32.mrb[0].mxu0
      %v1471 = vpop.f32.mrb[0].mxu0
      %v1472 = vadd.f32 0.0, %v1471
      %v1473 = vpop.f32.mrb[0].mxu0
      %1474 = vmatprep.mubr.bf16.mxu0 0
      %1475 = vmatmul.mubr.bf16.gmra.mrb[0].mxu0 %v1331
      %v1476 = vpop.f32.mrb[0].mxu0
      %v1477 = vadd.f32 0.0, %v1476
      %v1478 = vpop.f32.mrb[0].mxu0
      %v1479 = vpop.f32.mrb[0].mxu0
      %v1480 = vadd.f32 0.0, %v1479
      %v1481 = vpop.f32.mrb[0].mxu0
      %1482 = vmatprep.mubr.bf16.mxu0 0
      %1483 = vmatmul.mubr.bf16.gmra.mrb[0].mxu0 %v1334
      %v1484 = vpop.f32.mrb[0].mxu0
      %v1485 = vadd.f32 0.0, %v1484
      %v1486 = vpop.f32.mrb[0].mxu0
      %v1487 = vpop.f32.mrb[0].mxu0
      %v1488 = vadd.f32 0.0, %v1487
      %v1489 = vpop.f32.mrb[0].mxu0
      %1490 = vmatprep.mubr.bf16.mxu0 0
      %1491 = vmatmul.mubr.bf16.gmra.mrb[0].mxu0 %v1337
      %v1492 = vpop.f32.mrb[0].mxu0
      %v1493 = vadd.f32 0.0, %v1492
      %v1494 = vpop.f32.mrb[0].mxu0
      %v1495 = vpop.f32.mrb[0].mxu0
      %v1496 = vadd.f32 0.0, %v1495
      %v1497 = vpop.f32.mrb[0].mxu0
      %1498 = vmatprep.mubr.bf16.mxu0 0
      %1499 = vmatmul.mubr.bf16.gmra.mrb[0].mxu0 %v1340
      %v1500 = vpop.f32.mrb[0].mxu0
      %v1501 = vadd.f32 0.0, %v1500
      %v1502 = vpop.f32.mrb[0].mxu0
      %v1503 = vpop.f32.mrb[0].mxu0
      %v1504 = vadd.f32 0.0, %v1503
      %v1505 = vpop.f32.mrb[0].mxu0
      %1506 = vdwg.mxu0
      %v1508 = vsel %vm1293, %v937, 0
      %v1511 = vsel %vm1293, %v954, 0
      %v1514 = vsel %vm1293, %v971, 0
      %v1517 = vsel %vm1293, %v988, 0
      %v1520 = vsel %vm1293, %v1005, 0
      %v1523 = vsel %vm1293, %v1022, 0
      %v1526 = vsel %vm1293, %v1039, 0
      %v1529 = vsel %vm1293, %v1056, 0
      %v1532 = vsel %vm1293, %v1073, 0
      %v1535 = vsel %vm1293, %v1090, 0
      %v1538 = vsel %vm1293, %v1107, 0
      %v1541 = vsel %vm1293, %v1124, 0
      %v1544 = vsel %vm1293, %v1141, 0
      %v1547 = vsel %vm1293, %v1158, 0
      %v1550 = vsel %vm1293, %v1175, 0
      %v1553 = vsel %vm1293, %v1192, 0
      %v1556 = vsel %vm1342, %v1193, 0
      %1558 = vmatprep.subr.bf16.mxu0 0
      %1559 = vmatpush1.bf16.msra.mxu0 %v1556
      %1560 = vmatprep.subr.bf16.mxu0 0
      %1561 = vmatpush1.bf16.msra.mxu0 0
      %1562 = vmatprep.subr.bf16.mxu0 0
      %1563 = vmatpush1.bf16.msra.mxu0 0
      %1564 = vmatprep.subr.bf16.mxu0 0
      %1565 = vmatpush1.bf16.msra.mxu0 0
      %1566 = vmatprep.subr.bf16.mxu0 0
      %1567 = vmatpush1.bf16.msra.mxu0 0
      %1568 = vmatprep.subr.bf16.mxu0 0
      %1569 = vmatpush1.bf16.msra.mxu0 0
      %1570 = vmatprep.subr.bf16.mxu0 0
      %1571 = vmatpush1.bf16.msra.mxu0 0
      %1572 = vmatprep.subr.bf16.mxu0 0
      %1573 = vmatpush1.bf16.msra.mxu0 0
      %1574 = vmatprep.subr.bf16.mxu0 0
      %1575 = vmatpush1.bf16.msra.mxu0 0
      %1576 = vmatprep.subr.bf16.mxu0 0
      %1577 = vmatpush1.bf16.msra.mxu0 0
      %1578 = vmatprep.subr.bf16.mxu0 0
      %1579 = vmatpush1.bf16.msra.mxu0 0
      %1580 = vmatprep.subr.bf16.mxu0 0
      %1581 = vmatpush1.bf16.msra.mxu0 0
      %1582 = vmatprep.subr.bf16.mxu0 0
      %1583 = vmatpush1.bf16.msra.mxu0 0
      %1584 = vmatprep.subr.bf16.mxu0 0
      %1585 = vmatpush1.bf16.msra.mxu0 0
      %1586 = vmatprep.subr.bf16.mxu0 0
      %1587 = vmatpush1.bf16.msra.mxu0 0
      %1588 = vmatprep.subr.bf16.mxu0 0
      %1589 = vmatpush1.bf16.msra.mxu0 0
      %1590 = vmatprep.mubr.bf16.mxu0 0
      %1591 = vmatmul.mubr.bf16.gmra.mrb[0].mxu0 %v1508
      %v1592 = vpop.f32.mrb[0].mxu0
      %v1593 = vadd.f32 %v1381, %v1592
      %v1594 = vpop.f32.mrb[0].mxu0
      %v1595 = vpop.f32.mrb[0].mxu0
      %v1596 = vadd.f32 %v1384, %v1595
      %v1597 = vpop.f32.mrb[0].mxu0
      %1598 = vmatprep.mubr.bf16.mxu0 0
      %1599 = vmatmul.mubr.bf16.gmra.mrb[0].mxu0 %v1511
      %v1600 = vpop.f32.mrb[0].mxu0
      %v1601 = vadd.f32 %v1389, %v1600
      %v1602 = vpop.f32.mrb[0].mxu0
      %v1603 = vpop.f32.mrb[0].mxu0
      %v1604 = vadd.f32 %v1392, %v1603
      %v1605 = vpop.f32.mrb[0].mxu0
      %1606 = vmatprep.mubr.bf16.mxu0 0
      %1607 = vmatmul.mubr.bf16.gmra.mrb[0].mxu0 %v1514
      %v1608 = vpop.f32.mrb[0].mxu0
      %v1609 = vadd.f32 %v1397, %v1608
      %v1610 = vpop.f32.mrb[0].mxu0
      %v1611 = vpop.f32.mrb[0].mxu0
      %v1612 = vadd.f32 %v1400, %v1611
      %v1613 = vpop.f32.mrb[0].mxu0
      %1614 = vmatprep.mubr.bf16.mxu0 0
      %1615 = vmatmul.mubr.bf16.gmra.mrb[0].mxu0 %v1517
      %v1616 = vpop.f32.mrb[0].mxu0
      %v1617 = vadd.f32 %v1405, %v1616
      %v1618 = vpop.f32.mrb[0].mxu0
      %v1619 = vpop.f32.mrb[0].mxu0
      %v1620 = vadd.f32 %v1408, %v1619
      %v1621 = vpop.f32.mrb[0].mxu0
      %1622 = vmatprep.mubr.bf16.mxu0 0
      %1623 = vmatmul.mubr.bf16.gmra.mrb[0].mxu0 %v1520
      %v1624 = vpop.f32.mrb[0].mxu0
      %v1625 = vadd.f32 %v1413, %v1624
      %v1626 = vpop.f32.mrb[0].mxu0
      %v1627 = vpop.f32.mrb[0].mxu0
      %v1628 = vadd.f32 %v1416, %v1627
      %v1629 = vpop.f32.mrb[0].mxu0
      %1630 = vmatprep.mubr.bf16.mxu0 0
      %1631 = vmatmul.mubr.bf16.gmra.mrb[0].mxu0 %v1523
      %v1632 = vpop.f32.mrb[0].mxu0
      %v1633 = vadd.f32 %v1421, %v1632
      %v1634 = vpop.f32.mrb[0].mxu0
      %v1635 = vpop.f32.mrb[0].mxu0
      %v1636 = vadd.f32 %v1424, %v1635
      %v1637 = vpop.f32.mrb[0].mxu0
      %1638 = vmatprep.mubr.bf16.mxu0 0
      %1639 = vmatmul.mubr.bf16.gmra.mrb[0].mxu0 %v1526
      %v1640 = vpop.f32.mrb[0].mxu0
      %v1641 = vadd.f32 %v1429, %v1640
      %v1642 = vpop.f32.mrb[0].mxu0
      %v1643 = vpop.f32.mrb[0].mxu0
      %v1644 = vadd.f32 %v1432, %v1643
      %v1645 = vpop.f32.mrb[0].mxu0
      %1646 = vmatprep.mubr.bf16.mxu0 0
      %1647 = vmatmul.mubr.bf16.gmra.mrb[0].mxu0 %v1529
      %v1648 = vpop.f32.mrb[0].mxu0
      %v1649 = vadd.f32 %v1437, %v1648
      %v1650 = vpop.f32.mrb[0].mxu0
      %v1651 = vpop.f32.mrb[0].mxu0
      %v1652 = vadd.f32 %v1440, %v1651
      %v1653 = vpop.f32.mrb[0].mxu0
      %1654 = vmatprep.mubr.bf16.mxu0 0
      %1655 = vmatmul.mubr.bf16.gmra.mrb[0].mxu0 %v1532
      %v1656 = vpop.f32.mrb[0].mxu0
      %v1657 = vadd.f32 %v1445, %v1656
      %v1658 = vpop.f32.mrb[0].mxu0
      %v1659 = vpop.f32.mrb[0].mxu0
      %v1660 = vadd.f32 %v1448, %v1659
      %v1661 = vpop.f32.mrb[0].mxu0
      %1662 = vmatprep.mubr.bf16.mxu0 0
      %1663 = vmatmul.mubr.bf16.gmra.mrb[0].mxu0 %v1535
      %v1664 = vpop.f32.mrb[0].mxu0
      %v1665 = vadd.f32 %v1453, %v1664
      %v1666 = vpop.f32.mrb[0].mxu0
      %v1667 = vpop.f32.mrb[0].mxu0
      %v1668 = vadd.f32 %v1456, %v1667
      %v1669 = vpop.f32.mrb[0].mxu0
      %1670 = vmatprep.mubr.bf16.mxu0 0
      %1671 = vmatmul.mubr.bf16.gmra.mrb[0].mxu0 %v1538
      %v1672 = vpop.f32.mrb[0].mxu0
      %v1673 = vadd.f32 %v1461, %v1672
      %v1674 = vpop.f32.mrb[0].mxu0
      %v1675 = vpop.f32.mrb[0].mxu0
      %v1676 = vadd.f32 %v1464, %v1675
      %v1677 = vpop.f32.mrb[0].mxu0
      %1678 = vmatprep.mubr.bf16.mxu0 0
      %1679 = vmatmul.mubr.bf16.gmra.mrb[0].mxu0 %v1541
      %v1680 = vpop.f32.mrb[0].mxu0
      %v1681 = vadd.f32 %v1469, %v1680
      %v1682 = vpop.f32.mrb[0].mxu0
      %v1683 = vpop.f32.mrb[0].mxu0
      %v1684 = vadd.f32 %v1472, %v1683
      %v1685 = vpop.f32.mrb[0].mxu0
      %1686 = vmatprep.mubr.bf16.mxu0 0
      %1687 = vmatmul.mubr.bf16.gmra.mrb[0].mxu0 %v1544
      %v1688 = vpop.f32.mrb[0].mxu0
      %v1689 = vadd.f32 %v1477, %v1688
      %v1690 = vpop.f32.mrb[0].mxu0
      %v1691 = vpop.f32.mrb[0].mxu0
      %v1692 = vadd.f32 %v1480, %v1691
      %v1693 = vpop.f32.mrb[0].mxu0
      %1694 = vmatprep.mubr.bf16.mxu0 0
      %1695 = vmatmul.mubr.bf16.gmra.mrb[0].mxu0 %v1547
      %v1696 = vpop.f32.mrb[0].mxu0
      %v1697 = vadd.f32 %v1485, %v1696
      %v1698 = vpop.f32.mrb[0].mxu0
      %v1699 = vpop.f32.mrb[0].mxu0
      %v1700 = vadd.f32 %v1488, %v1699
      %v1701 = vpop.f32.mrb[0].mxu0
      %1702 = vmatprep.mubr.bf16.mxu0 0
      %1703 = vmatmul.mubr.bf16.gmra.mrb[0].mxu0 %v1550
      %v1704 = vpop.f32.mrb[0].mxu0
      %v1705 = vadd.f32 %v1493, %v1704
      %v1706 = vpop.f32.mrb[0].mxu0
      %v1707 = vpop.f32.mrb[0].mxu0
      %v1708 = vadd.f32 %v1496, %v1707
      %v1709 = vpop.f32.mrb[0].mxu0
      %1710 = vmatprep.mubr.bf16.mxu0 0
      %1711 = vmatmul.mubr.bf16.gmra.mrb[0].mxu0 %v1553
      %v1712 = vpop.f32.mrb[0].mxu0
      %v1713 = vadd.f32 %v1501, %v1712
      %v1714 = vpop.f32.mrb[0].mxu0
      %v1715 = vpop.f32.mrb[0].mxu0
      %v1716 = vadd.f32 %v1504, %v1715
      %v1717 = vpop.f32.mrb[0].mxu0
      %1718 = vdwg.mxu0
      %v1719 = vld [vmem:[#allocation2 + $0x8] sm:$0x1f]
      %v1720 = vld [vmem:[#allocation2 + $0x18] sm:$0x1f]
      %v1721 = vld [vmem:[#allocation2 + $0x28] sm:$0x1f]
      %v1722 = vld [vmem:[#allocation2 + $0x38] sm:$0x1f]
      %v1723 = vld [vmem:[#allocation2 + $0x48] sm:$0x1f]
      %v1724 = vld [vmem:[#allocation2 + $0x58] sm:$0x1f]
      %v1725 = vld [vmem:[#allocation2 + $0x68] sm:$0x1f]
      %v1726 = vld [vmem:[#allocation2 + $0x78] sm:$0x1f]
      %v1727 = vld [vmem:[#allocation2 + $0x88] sm:$0x1f]
      %v1728 = vld [vmem:[#allocation2 + $0x98] sm:$0x1f]
      %v1729 = vld [vmem:[#allocation2 + $0xa8] sm:$0x1f]
      %v1730 = vld [vmem:[#allocation2 + $0xb8] sm:$0x1f]
      %v1731 = vld [vmem:[#allocation2 + $0xc8] sm:$0x1f]
      %v1732 = vld [vmem:[#allocation2 + $0xd8] sm:$0x1f]
      %v1733 = vld [vmem:[#allocation2 + $0xe8] sm:$0x1f]
      %v1734 = vld [vmem:[#allocation2 + $0xf8] sm:$0x1f]
      %vm1735 = vsmask.f32 3328
      %v1737 = vshrl.u32 %v1194, 16
      %v1739 = vrot.slane %v1737, 4
      %v1740 = vshll.u32 %v1194, 16
      %v1742 = vrot.slane %v1740, 5
      %v1743 = vor.u32 %v1739, %v1742
      %v1745 = vshrl.u32 %v1719, 16
      %v1747 = vrot.slane %v1745, 4
      %v1748 = vshll.u32 %v1719, 16
      %v1750 = vrot.slane %v1748, 5
      %v1751 = vor.u32 %v1747, %v1750
      %v1752 = vsel %vm1735, %v1743, %v1751
      %v1754 = vshrl.u32 %v1195, 16
      %v1756 = vrot.slane %v1754, 4
      %v1757 = vshll.u32 %v1195, 16
      %v1759 = vrot.slane %v1757, 5
      %v1760 = vor.u32 %v1756, %v1759
      %v1762 = vshrl.u32 %v1720, 16
      %v1764 = vrot.slane %v1762, 4
      %v1765 = vshll.u32 %v1720, 16
      %v1767 = vrot.slane %v1765, 5
      %v1768 = vor.u32 %v1764, %v1767
      %v1769 = vsel %vm1735, %v1760, %v1768
      %v1771 = vshrl.u32 %v1196, 16
      %v1773 = vrot.slane %v1771, 4
      %v1774 = vshll.u32 %v1196, 16
      %v1776 = vrot.slane %v1774, 5
      %v1777 = vor.u32 %v1773, %v1776
      %v1779 = vshrl.u32 %v1721, 16
      %v1781 = vrot.slane %v1779, 4
      %v1782 = vshll.u32 %v1721, 16
      %v1784 = vrot.slane %v1782, 5
      %v1785 = vor.u32 %v1781, %v1784
      %v1786 = vsel %vm1735, %v1777, %v1785
      %v1788 = vshrl.u32 %v1197, 16
      %v1790 = vrot.slane %v1788, 4
      %v1791 = vshll.u32 %v1197, 16
      %v1793 = vrot.slane %v1791, 5
      %v1794 = vor.u32 %v1790, %v1793
      %v1796 = vshrl.u32 %v1722, 16
      %v1798 = vrot.slane %v1796, 4
      %v1799 = vshll.u32 %v1722, 16
      %v1801 = vrot.slane %v1799, 5
      %v1802 = vor.u32 %v1798, %v1801
      %v1803 = vsel %vm1735, %v1794, %v1802
      %v1805 = vshrl.u32 %v1198, 16
      %v1807 = vrot.slane %v1805, 4
      %v1808 = vshll.u32 %v1198, 16
      %v1810 = vrot.slane %v1808, 5
      %v1811 = vor.u32 %v1807, %v1810
      %v1813 = vshrl.u32 %v1723, 16
      %v1815 = vrot.slane %v1813, 4
      %v1816 = vshll.u32 %v1723, 16
      %v1818 = vrot.slane %v1816, 5
      %v1819 = vor.u32 %v1815, %v1818
      %v1820 = vsel %vm1735, %v1811, %v1819
      %v1822 = vshrl.u32 %v1199, 16
      %v1824 = vrot.slane %v1822, 4
      %v1825 = vshll.u32 %v1199, 16
      %v1827 = vrot.slane %v1825, 5
      %v1828 = vor.u32 %v1824, %v1827
      %v1830 = vshrl.u32 %v1724, 16
      %v1832 = vrot.slane %v1830, 4
      %v1833 = vshll.u32 %v1724, 16
      %v1835 = vrot.slane %v1833, 5
      %v1836 = vor.u32 %v1832, %v1835
      %v1837 = vsel %vm1735, %v1828, %v1836
      %v1839 = vshrl.u32 %v1200, 16
      %v1841 = vrot.slane %v1839, 4
      %v1842 = vshll.u32 %v1200, 16
      %v1844 = vrot.slane %v1842, 5
      %v1845 = vor.u32 %v1841, %v1844
      %v1847 = vshrl.u32 %v1725, 16
      %v1849 = vrot.slane %v1847, 4
      %v1850 = vshll.u32 %v1725, 16
      %v1852 = vrot.slane %v1850, 5
      %v1853 = vor.u32 %v1849, %v1852
      %v1854 = vsel %vm1735, %v1845, %v1853
      %v1856 = vshrl.u32 %v1201, 16
      %v1858 = vrot.slane %v1856, 4
      %v1859 = vshll.u32 %v1201, 16
      %v1861 = vrot.slane %v1859, 5
      %v1862 = vor.u32 %v1858, %v1861
      %v1864 = vshrl.u32 %v1726, 16
      %v1866 = vrot.slane %v1864, 4
      %v1867 = vshll.u32 %v1726, 16
      %v1869 = vrot.slane %v1867, 5
      %v1870 = vor.u32 %v1866, %v1869
      %v1871 = vsel %vm1735, %v1862, %v1870
      %v1873 = vshrl.u32 %v1202, 16
      %v1875 = vrot.slane %v1873, 4
      %v1876 = vshll.u32 %v1202, 16
      %v1878 = vrot.slane %v1876, 5
      %v1879 = vor.u32 %v1875, %v1878
      %v1881 = vshrl.u32 %v1727, 16
      %v1883 = vrot.slane %v1881, 4
      %v1884 = vshll.u32 %v1727, 16
      %v1886 = vrot.slane %v1884, 5
      %v1887 = vor.u32 %v1883, %v1886
      %v1888 = vsel %vm1735, %v1879, %v1887
      %v1890 = vshrl.u32 %v1203, 16
      %v1892 = vrot.slane %v1890, 4
      %v1893 = vshll.u32 %v1203, 16
      %v1895 = vrot.slane %v1893, 5
      %v1896 = vor.u32 %v1892, %v1895
      %v1898 = vshrl.u32 %v1728, 16
      %v1900 = vrot.slane %v1898, 4
      %v1901 = vshll.u32 %v1728, 16
      %v1903 = vrot.slane %v1901, 5
      %v1904 = vor.u32 %v1900, %v1903
      %v1905 = vsel %vm1735, %v1896, %v1904
      %v1907 = vshrl.u32 %v1204, 16
      %v1909 = vrot.slane %v1907, 4
      %v1910 = vshll.u32 %v1204, 16
      %v1912 = vrot.slane %v1910, 5
      %v1913 = vor.u32 %v1909, %v1912
      %v1915 = vshrl.u32 %v1729, 16
      %v1917 = vrot.slane %v1915, 4
      %v1918 = vshll.u32 %v1729, 16
      %v1920 = vrot.slane %v1918, 5
      %v1921 = vor.u32 %v1917, %v1920
      %v1922 = vsel %vm1735, %v1913, %v1921
      %v1924 = vshrl.u32 %v1205, 16
      %v1926 = vrot.slane %v1924, 4
      %v1927 = vshll.u32 %v1205, 16
      %v1929 = vrot.slane %v1927, 5
      %v1930 = vor.u32 %v1926, %v1929
      %v1932 = vshrl.u32 %v1730, 16
      %v1934 = vrot.slane %v1932, 4
      %v1935 = vshll.u32 %v1730, 16
      %v1937 = vrot.slane %v1935, 5
      %v1938 = vor.u32 %v1934, %v1937
      %v1939 = vsel %vm1735, %v1930, %v1938
      %v1941 = vshrl.u32 %v1206, 16
      %v1943 = vrot.slane %v1941, 4
      %v1944 = vshll.u32 %v1206, 16
      %v1946 = vrot.slane %v1944, 5
      %v1947 = vor.u32 %v1943, %v1946
      %v1949 = vshrl.u32 %v1731, 16
      %v1951 = vrot.slane %v1949, 4
      %v1952 = vshll.u32 %v1731, 16
      %v1954 = vrot.slane %v1952, 5
      %v1955 = vor.u32 %v1951, %v1954
      %v1956 = vsel %vm1735, %v1947, %v1955
      %v1958 = vshrl.u32 %v1207, 16
      %v1960 = vrot.slane %v1958, 4
      %v1961 = vshll.u32 %v1207, 16
      %v1963 = vrot.slane %v1961, 5
      %v1964 = vor.u32 %v1960, %v1963
      %v1966 = vshrl.u32 %v1732, 16
      %v1968 = vrot.slane %v1966, 4
      %v1969 = vshll.u32 %v1732, 16
      %v1971 = vrot.slane %v1969, 5
      %v1972 = vor.u32 %v1968, %v1971
      %v1973 = vsel %vm1735, %v1964, %v1972
      %v1975 = vshrl.u32 %v1208, 16
      %v1977 = vrot.slane %v1975, 4
      %v1978 = vshll.u32 %v1208, 16
      %v1980 = vrot.slane %v1978, 5
      %v1981 = vor.u32 %v1977, %v1980
      %v1983 = vshrl.u32 %v1733, 16
      %v1985 = vrot.slane %v1983, 4
      %v1986 = vshll.u32 %v1733, 16
      %v1988 = vrot.slane %v1986, 5
      %v1989 = vor.u32 %v1985, %v1988
      %v1990 = vsel %vm1735, %v1981, %v1989
      %v1992 = vshrl.u32 %v1209, 16
      %v1994 = vrot.slane %v1992, 4
      %v1995 = vshll.u32 %v1209, 16
      %v1997 = vrot.slane %v1995, 5
      %v1998 = vor.u32 %v1994, %v1997
      %v2000 = vshrl.u32 %v1734, 16
      %v2002 = vrot.slane %v2000, 4
      %v2003 = vshll.u32 %v1734, 16
      %v2005 = vrot.slane %v2003, 5
      %v2006 = vor.u32 %v2002, %v2005
      %v2007 = vsel %vm1735, %v1998, %v2006
      %s2008 = scalar_lea.vmem %s3, 8
      %v2009 = vld [vmem:[%s2008] sm:$0xf]
      %v2011 = vsel %vm1293, %v1752, 0
      %v2014 = vsel %vm1293, %v1769, 0
      %v2017 = vsel %vm1293, %v1786, 0
      %v2020 = vsel %vm1293, %v1803, 0
      %v2023 = vsel %vm1293, %v1820, 0
      %v2026 = vsel %vm1293, %v1837, 0
      %v2029 = vsel %vm1293, %v1854, 0
      %v2032 = vsel %vm1293, %v1871, 0
      %v2035 = vsel %vm1293, %v1888, 0
      %v2038 = vsel %vm1293, %v1905, 0
      %v2041 = vsel %vm1293, %v1922, 0
      %v2044 = vsel %vm1293, %v1939, 0
      %v2047 = vsel %vm1293, %v1956, 0
      %v2050 = vsel %vm1293, %v1973, 0
      %v2053 = vsel %vm1293, %v1990, 0
      %v2056 = vsel %vm1293, %v2007, 0
      %v2059 = vsel %vm1342, %v2009, 0
      %2061 = vmatprep.subr.bf16.mxu0 0
      %2062 = vmatpush1.bf16.msra.mxu0 %v2059
      %2063 = vmatprep.subr.bf16.mxu0 0
      %2064 = vmatpush1.bf16.msra.mxu0 0
      %2065 = vmatprep.subr.bf16.mxu0 0
      %2066 = vmatpush1.bf16.msra.mxu0 0
      %2067 = vmatprep.subr.bf16.mxu0 0
      %2068 = vmatpush1.bf16.msra.mxu0 0
      %2069 = vmatprep.subr.bf16.mxu0 0
      %2070 = vmatpush1.bf16.msra.mxu0 0
      %2071 = vmatprep.subr.bf16.mxu0 0
      %2072 = vmatpush1.bf16.msra.mxu0 0
      %2073 = vmatprep.subr.bf16.mxu0 0
      %2074 = vmatpush1.bf16.msra.mxu0 0
      %2075 = vmatprep.subr.bf16.mxu0 0
      %2076 = vmatpush1.bf16.msra.mxu0 0
      %2077 = vmatprep.subr.bf16.mxu0 0
      %2078 = vmatpush1.bf16.msra.mxu0 0
      %2079 = vmatprep.subr.bf16.mxu0 0
      %2080 = vmatpush1.bf16.msra.mxu0 0
      %2081 = vmatprep.subr.bf16.mxu0 0
      %2082 = vmatpush1.bf16.msra.mxu0 0
      %2083 = vmatprep.subr.bf16.mxu0 0
      %2084 = vmatpush1.bf16.msra.mxu0 0
      %2085 = vmatprep.subr.bf16.mxu0 0
      %2086 = vmatpush1.bf16.msra.mxu0 0
      %2087 = vmatprep.subr.bf16.mxu0 0
      %2088 = vmatpush1.bf16.msra.mxu0 0
      %2089 = vmatprep.subr.bf16.mxu0 0
      %2090 = vmatpush1.bf16.msra.mxu0 0
      %2091 = vmatprep.subr.bf16.mxu0 0
      %2092 = vmatpush1.bf16.msra.mxu0 0
      %2093 = vmatprep.mubr.bf16.mxu0 0
      %2094 = vmatmul.mubr.bf16.gmra.mrb[0].mxu0 %v2011
      %v2095 = vpop.f32.mrb[0].mxu0
      %v2096 = vadd.f32 0.0, %v2095
      %v2097 = vpop.f32.mrb[0].mxu0
      %v2098 = vpop.f32.mrb[0].mxu0
      %v2099 = vadd.f32 0.0, %v2098
      %v2100 = vpop.f32.mrb[0].mxu0
      %2101 = vmatprep.mubr.bf16.mxu0 0
      %2102 = vmatmul.mubr.bf16.gmra.mrb[0].mxu0 %v2014
      %v2103 = vpop.f32.mrb[0].mxu0
      %v2104 = vadd.f32 0.0, %v2103
      %v2105 = vpop.f32.mrb[0].mxu0
      %v2106 = vpop.f32.mrb[0].mxu0
      %v2107 = vadd.f32 0.0, %v2106
      %v2108 = vpop.f32.mrb[0].mxu0
      %2109 = vmatprep.mubr.bf16.mxu0 0
      %2110 = vmatmul.mubr.bf16.gmra.mrb[0].mxu0 %v2017
      %v2111 = vpop.f32.mrb[0].mxu0
      %v2112 = vadd.f32 0.0, %v2111
      %v2113 = vpop.f32.mrb[0].mxu0
      %v2114 = vpop.f32.mrb[0].mxu0
      %v2115 = vadd.f32 0.0, %v2114
      %v2116 = vpop.f32.mrb[0].mxu0
      %2117 = vmatprep.mubr.bf16.mxu0 0
      %2118 = vmatmul.mubr.bf16.gmra.mrb[0].mxu0 %v2020
      %v2119 = vpop.f32.mrb[0].mxu0
      %v2120 = vadd.f32 0.0, %v2119
      %v2121 = vpop.f32.mrb[0].mxu0
      %v2122 = vpop.f32.mrb[0].mxu0
      %v2123 = vadd.f32 0.0, %v2122
      %v2124 = vpop.f32.mrb[0].mxu0
      %2125 = vmatprep.mubr.bf16.mxu0 0
      %2126 = vmatmul.mubr.bf16.gmra.mrb[0].mxu0 %v2023
      %v2127 = vpop.f32.mrb[0].mxu0
      %v2128 = vadd.f32 0.0, %v2127
      %v2129 = vpop.f32.mrb[0].mxu0
      %v2130 = vpop.f32.mrb[0].mxu0
      %v2131 = vadd.f32 0.0, %v2130
      %v2132 = vpop.f32.mrb[0].mxu0
      %2133 = vmatprep.mubr.bf16.mxu0 0
      %2134 = vmatmul.mubr.bf16.gmra.mrb[0].mxu0 %v2026
      %v2135 = vpop.f32.mrb[0].mxu0
      %v2136 = vadd.f32 0.0, %v2135
      %v2137 = vpop.f32.mrb[0].mxu0
      %v2138 = vpop.f32.mrb[0].mxu0
      %v2139 = vadd.f32 0.0, %v2138
      %v2140 = vpop.f32.mrb[0].mxu0
      %2141 = vmatprep.mubr.bf16.mxu0 0
      %2142 = vmatmul.mubr.bf16.gmra.mrb[0].mxu0 %v2029
      %v2143 = vpop.f32.mrb[0].mxu0
      %v2144 = vadd.f32 0.0, %v2143
      %v2145 = vpop.f32.mrb[0].mxu0
      %v2146 = vpop.f32.mrb[0].mxu0
      %v2147 = vadd.f32 0.0, %v2146
      %v2148 = vpop.f32.mrb[0].mxu0
      %2149 = vmatprep.mubr.bf16.mxu0 0
      %2150 = vmatmul.mubr.bf16.gmra.mrb[0].mxu0 %v2032
      %v2151 = vpop.f32.mrb[0].mxu0
      %v2152 = vadd.f32 0.0, %v2151
      %v2153 = vpop.f32.mrb[0].mxu0
      %v2154 = vpop.f32.mrb[0].mxu0
      %v2155 = vadd.f32 0.0, %v2154
      %v2156 = vpop.f32.mrb[0].mxu0
      %2157 = vmatprep.mubr.bf16.mxu0 0
      %2158 = vmatmul.mubr.bf16.gmra.mrb[0].mxu0 %v2035
      %v2159 = vpop.f32.mrb[0].mxu0
      %v2160 = vadd.f32 0.0, %v2159
      %v2161 = vpop.f32.mrb[0].mxu0
      %v2162 = vpop.f32.mrb[0].mxu0
      %v2163 = vadd.f32 0.0, %v2162
      %v2164 = vpop.f32.mrb[0].mxu0
      %2165 = vmatprep.mubr.bf16.mxu0 0
      %2166 = vmatmul.mubr.bf16.gmra.mrb[0].mxu0 %v2038
      %v2167 = vpop.f32.mrb[0].mxu0
      %v2168 = vadd.f32 0.0, %v2167
      %v2169 = vpop.f32.mrb[0].mxu0
      %v2170 = vpop.f32.mrb[0].mxu0
      %v2171 = vadd.f32 0.0, %v2170
      %v2172 = vpop.f32.mrb[0].mxu0
      %2173 = vmatprep.mubr.bf16.mxu0 0
      %2174 = vmatmul.mubr.bf16.gmra.mrb[0].mxu0 %v2041
      %v2175 = vpop.f32.mrb[0].mxu0
      %v2176 = vadd.f32 0.0, %v2175
      %v2177 = vpop.f32.mrb[0].mxu0
      %v2178 = vpop.f32.mrb[0].mxu0
      %v2179 = vadd.f32 0.0, %v2178
      %v2180 = vpop.f32.mrb[0].mxu0
      %2181 = vmatprep.mubr.bf16.mxu0 0
      %2182 = vmatmul.mubr.bf16.gmra.mrb[0].mxu0 %v2044
      %v2183 = vpop.f32.mrb[0].mxu0
      %v2184 = vadd.f32 0.0, %v2183
      %v2185 = vpop.f32.mrb[0].mxu0
      %v2186 = vpop.f32.mrb[0].mxu0
      %v2187 = vadd.f32 0.0, %v2186
      %v2188 = vpop.f32.mrb[0].mxu0
      %2189 = vmatprep.mubr.bf16.mxu0 0
      %2190 = vmatmul.mubr.bf16.gmra.mrb[0].mxu0 %v2047
      %v2191 = vpop.f32.mrb[0].mxu0
      %v2192 = vadd.f32 0.0, %v2191
      %v2193 = vpop.f32.mrb[0].mxu0
      %v2194 = vpop.f32.mrb[0].mxu0
      %v2195 = vadd.f32 0.0, %v2194
      %v2196 = vpop.f32.mrb[0].mxu0
      %2197 = vmatprep.mubr.bf16.mxu0 0
      %2198 = vmatmul.mubr.bf16.gmra.mrb[0].mxu0 %v2050
      %v2199 = vpop.f32.mrb[0].mxu0
      %v2200 = vadd.f32 0.0, %v2199
      %v2201 = vpop.f32.mrb[0].mxu0
      %v2202 = vpop.f32.mrb[0].mxu0
      %v2203 = vadd.f32 0.0, %v2202
      %v2204 = vpop.f32.mrb[0].mxu0
      %2205 = vmatprep.mubr.bf16.mxu0 0
      %2206 = vmatmul.mubr.bf16.gmra.mrb[0].mxu0 %v2053
      %v2207 = vpop.f32.mrb[0].mxu0
      %v2208 = vadd.f32 0.0, %v2207
      %v2209 = vpop.f32.mrb[0].mxu0
      %v2210 = vpop.f32.mrb[0].mxu0
      %v2211 = vadd.f32 0.0, %v2210
      %v2212 = vpop.f32.mrb[0].mxu0
      %2213 = vmatprep.mubr.bf16.mxu0 0
      %2214 = vmatmul.mubr.bf16.gmra.mrb[0].mxu0 %v2056
      %v2215 = vpop.f32.mrb[0].mxu0
      %v2216 = vadd.f32 0.0, %v2215
      %v2217 = vpop.f32.mrb[0].mxu0
      %v2218 = vpop.f32.mrb[0].mxu0
      %v2219 = vadd.f32 0.0, %v2218
      %v2220 = vpop.f32.mrb[0].mxu0
      %2221 = vdwg.mxu0
      %v2222 = vadd.f32 %v1593, %v2096
      %v2223 = vadd.f32 %v1596, %v2099
      %v2224 = vadd.f32 %v1601, %v2104
      %v2225 = vadd.f32 %v1604, %v2107
      %v2226 = vadd.f32 %v1609, %v2112
      %v2227 = vadd.f32 %v1612, %v2115
      %v2228 = vadd.f32 %v1617, %v2120
      %v2229 = vadd.f32 %v1620, %v2123
      %v2230 = vadd.f32 %v1625, %v2128
      %v2231 = vadd.f32 %v1628, %v2131
      %v2232 = vadd.f32 %v1633, %v2136
      %v2233 = vadd.f32 %v1636, %v2139
      %v2234 = vadd.f32 %v1641, %v2144
      %v2235 = vadd.f32 %v1644, %v2147
      %v2236 = vadd.f32 %v1649, %v2152
      %v2237 = vadd.f32 %v1652, %v2155
      %v2238 = vadd.f32 %v1657, %v2160
      %v2239 = vadd.f32 %v1660, %v2163
      %v2240 = vadd.f32 %v1665, %v2168
      %v2241 = vadd.f32 %v1668, %v2171
      %v2242 = vadd.f32 %v1673, %v2176
      %v2243 = vadd.f32 %v1676, %v2179
      %v2244 = vadd.f32 %v1681, %v2184
      %v2245 = vadd.f32 %v1684, %v2187
      %v2246 = vadd.f32 %v1689, %v2192
      %v2247 = vadd.f32 %v1692, %v2195
      %v2248 = vadd.f32 %v1697, %v2200
      %v2249 = vadd.f32 %v1700, %v2203
      %v2250 = vadd.f32 %v1705, %v2208
      %v2251 = vadd.f32 %v1708, %v2211
      %v2252 = vadd.f32 %v1713, %v2216
      %v2253 = vadd.f32 %v1716, %v2219
      %v2254 = vld [vmem:[%s784] sm:$0xf8]
      %v2255 = vld [vmem:[%s784 + $0x8] sm:$0xf]
      %v2256 = vld [vmem:[%s784 + $0x10] sm:$0xf8]
      %v2257 = vld [vmem:[%s784 + $0x18] sm:$0xf]
      %v2258 = vld [vmem:[%s784 + $0x20] sm:$0xf8]
      %v2259 = vld [vmem:[%s784 + $0x28] sm:$0xf]
      %v2260 = vld [vmem:[%s784 + $0x30] sm:$0xf8]
      %v2261 = vld [vmem:[%s784 + $0x38] sm:$0xf]
      %v2262 = vld [vmem:[%s784 + $0x40] sm:$0xf8]
      %v2263 = vld [vmem:[%s784 + $0x48] sm:$0xf]
      %v2264 = vld [vmem:[%s784 + $0x50] sm:$0xf8]
      %v2265 = vld [vmem:[%s784 + $0x58] sm:$0xf]
      %v2266 = vld [vmem:[%s784 + $0x60] sm:$0xf8]
      %v2267 = vld [vmem:[%s784 + $0x68] sm:$0xf]
      %v2268 = vld [vmem:[%s784 + $0x70] sm:$0xf8]
      %v2269 = vld [vmem:[%s784 + $0x78] sm:$0xf]
      %v2270 = vld [vmem:[%s784 + $0x80] sm:$0xf8]
      %v2271 = vld [vmem:[%s784 + $0x88] sm:$0xf]
      %v2272 = vld [vmem:[%s784 + $0x90] sm:$0xf8]
      %v2273 = vld [vmem:[%s784 + $0x98] sm:$0xf]
      %v2274 = vld [vmem:[%s784 + $0xa0] sm:$0xf8]
      %v2275 = vld [vmem:[%s784 + $0xa8] sm:$0xf]
      %v2276 = vld [vmem:[%s784 + $0xb0] sm:$0xf8]
      %v2277 = vld [vmem:[%s784 + $0xb8] sm:$0xf]
      %v2278 = vld [vmem:[%s784 + $0xc0] sm:$0xf8]
      %v2279 = vld [vmem:[%s784 + $0xc8] sm:$0xf]
      %v2280 = vld [vmem:[%s784 + $0xd0] sm:$0xf8]
      %v2281 = vld [vmem:[%s784 + $0xd8] sm:$0xf]
      %v2282 = vld [vmem:[%s784 + $0xe0] sm:$0xf8]
      %v2283 = vld [vmem:[%s784 + $0xe8] sm:$0xf]
      %v2284 = vld [vmem:[%s784 + $0xf0] sm:$0xf8]
      %v2285 = vld [vmem:[%s784 + $0xf8] sm:$0xf]
      %v2287 = vshrl.u32 %v2254, 16
      %v2289 = vrot.slane %v2287, 3
      %v2290 = vshll.u32 %v2254, 16
      %v2292 = vrot.slane %v2290, 4
      %v2293 = vor.u32 %v2289, %v2292
      %v2295 = vshrl.u32 %v2255, 16
      %v2297 = vrot.slane %v2295, 3
      %v2298 = vshll.u32 %v2255, 16
      %v2300 = vrot.slane %v2298, 4
      %v2301 = vor.u32 %v2297, %v2300
      %v2302 = vsel %vm920, %v2293, %v2301
      %v2304 = vshrl.u32 %v2256, 16
      %v2306 = vrot.slane %v2304, 3
      %v2307 = vshll.u32 %v2256, 16
      %v2309 = vrot.slane %v2307, 4
      %v2310 = vor.u32 %v2306, %v2309
      %v2312 = vshrl.u32 %v2257, 16
      %v2314 = vrot.slane %v2312, 3
      %v2315 = vshll.u32 %v2257, 16
      %v2317 = vrot.slane %v2315, 4
      %v2318 = vor.u32 %v2314, %v2317
      %v2319 = vsel %vm920, %v2310, %v2318
      %v2321 = vshrl.u32 %v2258, 16
      %v2323 = vrot.slane %v2321, 3
      %v2324 = vshll.u32 %v2258, 16
      %v2326 = vrot.slane %v2324, 4
      %v2327 = vor.u32 %v2323, %v2326
      %v2329 = vshrl.u32 %v2259, 16
      %v2331 = vrot.slane %v2329, 3
      %v2332 = vshll.u32 %v2259, 16
      %v2334 = vrot.slane %v2332, 4
      %v2335 = vor.u32 %v2331, %v2334
      %v2336 = vsel %vm920, %v2327, %v2335
      %v2338 = vshrl.u32 %v2260, 16
      %v2340 = vrot.slane %v2338, 3
      %v2341 = vshll.u32 %v2260, 16
      %v2343 = vrot.slane %v2341, 4
      %v2344 = vor.u32 %v2340, %v2343
      %v2346 = vshrl.u32 %v2261, 16
      %v2348 = vrot.slane %v2346, 3
      %v2349 = vshll.u32 %v2261, 16
      %v2351 = vrot.slane %v2349, 4
      %v2352 = vor.u32 %v2348, %v2351
      %v2353 = vsel %vm920, %v2344, %v2352
      %v2355 = vshrl.u32 %v2262, 16
      %v2357 = vrot.slane %v2355, 3
      %v2358 = vshll.u32 %v2262, 16
      %v2360 = vrot.slane %v2358, 4
      %v2361 = vor.u32 %v2357, %v2360
      %v2363 = vshrl.u32 %v2263, 16
      %v2365 = vrot.slane %v2363, 3
      %v2366 = vshll.u32 %v2263, 16
      %v2368 = vrot.slane %v2366, 4
      %v2369 = vor.u32 %v2365, %v2368
      %v2370 = vsel %vm920, %v2361, %v2369
      %v2372 = vshrl.u32 %v2264, 16
      %v2374 = vrot.slane %v2372, 3
      %v2375 = vshll.u32 %v2264, 16
      %v2377 = vrot.slane %v2375, 4
      %v2378 = vor.u32 %v2374, %v2377
      %v2380 = vshrl.u32 %v2265, 16
      %v2382 = vrot.slane %v2380, 3
      %v2383 = vshll.u32 %v2265, 16
      %v2385 = vrot.slane %v2383, 4
      %v2386 = vor.u32 %v2382, %v2385
      %v2387 = vsel %vm920, %v2378, %v2386
      %v2389 = vshrl.u32 %v2266, 16
      %v2391 = vrot.slane %v2389, 3
      %v2392 = vshll.u32 %v2266, 16
      %v2394 = vrot.slane %v2392, 4
      %v2395 = vor.u32 %v2391, %v2394
      %v2397 = vshrl.u32 %v2267, 16
      %v2399 = vrot.slane %v2397, 3
      %v2400 = vshll.u32 %v2267, 16
      %v2402 = vrot.slane %v2400, 4
      %v2403 = vor.u32 %v2399, %v2402
      %v2404 = vsel %vm920, %v2395, %v2403
      %v2406 = vshrl.u32 %v2268, 16
      %v2408 = vrot.slane %v2406, 3
      %v2409 = vshll.u32 %v2268, 16
      %v2411 = vrot.slane %v2409, 4
      %v2412 = vor.u32 %v2408, %v2411
      %v2414 = vshrl.u32 %v2269, 16
      %v2416 = vrot.slane %v2414, 3
      %v2417 = vshll.u32 %v2269, 16
      %v2419 = vrot.slane %v2417, 4
      %v2420 = vor.u32 %v2416, %v2419
      %v2421 = vsel %vm920, %v2412, %v2420
      %v2423 = vshrl.u32 %v2270, 16
      %v2425 = vrot.slane %v2423, 3
      %v2426 = vshll.u32 %v2270, 16
      %v2428 = vrot.slane %v2426, 4
      %v2429 = vor.u32 %v2425, %v2428
      %v2431 = vshrl.u32 %v2271, 16
      %v2433 = vrot.slane %v2431, 3
      %v2434 = vshll.u32 %v2271, 16
      %v2436 = vrot.slane %v2434, 4
      %v2437 = vor.u32 %v2433, %v2436
      %v2438 = vsel %vm920, %v2429, %v2437
      %v2440 = vshrl.u32 %v2272, 16
      %v2442 = vrot.slane %v2440, 3
      %v2443 = vshll.u32 %v2272, 16
      %v2445 = vrot.slane %v2443, 4
      %v2446 = vor.u32 %v2442, %v2445
      %v2448 = vshrl.u32 %v2273, 16
      %v2450 = vrot.slane %v2448, 3
      %v2451 = vshll.u32 %v2273, 16
      %v2453 = vrot.slane %v2451, 4
      %v2454 = vor.u32 %v2450, %v2453
      %v2455 = vsel %vm920, %v2446, %v2454
      %v2457 = vshrl.u32 %v2274, 16
      %v2459 = vrot.slane %v2457, 3
      %v2460 = vshll.u32 %v2274, 16
      %v2462 = vrot.slane %v2460, 4
      %v2463 = vor.u32 %v2459, %v2462
      %v2465 = vshrl.u32 %v2275, 16
      %v2467 = vrot.slane %v2465, 3
      %v2468 = vshll.u32 %v2275, 16
      %v2470 = vrot.slane %v2468, 4
      %v2471 = vor.u32 %v2467, %v2470
      %v2472 = vsel %vm920, %v2463, %v2471
      %v2474 = vshrl.u32 %v2276, 16
      %v2476 = vrot.slane %v2474, 3
      %v2477 = vshll.u32 %v2276, 16
      %v2479 = vrot.slane %v2477, 4
      %v2480 = vor.u32 %v2476, %v2479
      %v2482 = vshrl.u32 %v2277, 16
      %v2484 = vrot.slane %v2482, 3
      %v2485 = vshll.u32 %v2277, 16
      %v2487 = vrot.slane %v2485, 4
      %v2488 = vor.u32 %v2484, %v2487
      %v2489 = vsel %vm920, %v2480, %v2488
      %v2491 = vshrl.u32 %v2278, 16
      %v2493 = vrot.slane %v2491, 3
      %v2494 = vshll.u32 %v2278, 16
      %v2496 = vrot.slane %v2494, 4
      %v2497 = vor.u32 %v2493, %v2496
      %v2499 = vshrl.u32 %v2279, 16
      %v2501 = vrot.slane %v2499, 3
      %v2502 = vshll.u32 %v2279, 16
      %v2504 = vrot.slane %v2502, 4
      %v2505 = vor.u32 %v2501, %v2504
      %v2506 = vsel %vm920, %v2497, %v2505
      %v2508 = vshrl.u32 %v2280, 16
      %v2510 = vrot.slane %v2508, 3
      %v2511 = vshll.u32 %v2280, 16
      %v2513 = vrot.slane %v2511, 4
      %v2514 = vor.u32 %v2510, %v2513
      %v2516 = vshrl.u32 %v2281, 16
      %v2518 = vrot.slane %v2516, 3
      %v2519 = vshll.u32 %v2281, 16
      %v2521 = vrot.slane %v2519, 4
      %v2522 = vor.u32 %v2518, %v2521
      %v2523 = vsel %vm920, %v2514, %v2522
      %v2525 = vshrl.u32 %v2282, 16
      %v2527 = vrot.slane %v2525, 3
      %v2528 = vshll.u32 %v2282, 16
      %v2530 = vrot.slane %v2528, 4
      %v2531 = vor.u32 %v2527, %v2530
      %v2533 = vshrl.u32 %v2283, 16
      %v2535 = vrot.slane %v2533, 3
      %v2536 = vshll.u32 %v2283, 16
      %v2538 = vrot.slane %v2536, 4
      %v2539 = vor.u32 %v2535, %v2538
      %v2540 = vsel %vm920, %v2531, %v2539
      %v2542 = vshrl.u32 %v2284, 16
      %v2544 = vrot.slane %v2542, 3
      %v2545 = vshll.u32 %v2284, 16
      %v2547 = vrot.slane %v2545, 4
      %v2548 = vor.u32 %v2544, %v2547
      %v2550 = vshrl.u32 %v2285, 16
      %v2552 = vrot.slane %v2550, 3
      %v2553 = vshll.u32 %v2285, 16
      %v2555 = vrot.slane %v2553, 4
      %v2556 = vor.u32 %v2552, %v2555
      %v2557 = vsel %vm920, %v2548, %v2556
      %s2558 = scalar_lea.vmem %s3, 12
      %v2559 = vld [vmem:[%s2558] sm:$0xf]
      %v2561 = vsel %vm1293, %v2302, 0
      %v2564 = vsel %vm1293, %v2319, 0
      %v2567 = vsel %vm1293, %v2336, 0
      %v2570 = vsel %vm1293, %v2353, 0
      %v2573 = vsel %vm1293, %v2370, 0
      %v2576 = vsel %vm1293, %v2387, 0
      %v2579 = vsel %vm1293, %v2404, 0
      %v2582 = vsel %vm1293, %v2421, 0
      %v2585 = vsel %vm1293, %v2438, 0
      %v2588 = vsel %vm1293, %v2455, 0
      %v2591 = vsel %vm1293, %v2472, 0
      %v2594 = vsel %vm1293, %v2489, 0
      %v2597 = vsel %vm1293, %v2506, 0
      %v2600 = vsel %vm1293, %v2523, 0
      %v2603 = vsel %vm1293, %v2540, 0
      %v2606 = vsel %vm1293, %v2557, 0
      %v2609 = vsel %vm1342, %v2559, 0
      %2611 = vmatprep.subr.bf16.mxu0 0
      %2612 = vmatpush1.bf16.msra.mxu0 %v2609
      %2613 = vmatprep.subr.bf16.mxu0 0
      %2614 = vmatpush1.bf16.msra.mxu0 0
      %2615 = vmatprep.subr.bf16.mxu0 0
      %2616 = vmatpush1.bf16.msra.mxu0 0
      %2617 = vmatprep.subr.bf16.mxu0 0
      %2618 = vmatpush1.bf16.msra.mxu0 0
      %2619 = vmatprep.subr.bf16.mxu0 0
      %2620 = vmatpush1.bf16.msra.mxu0 0
      %2621 = vmatprep.subr.bf16.mxu0 0
      %2622 = vmatpush1.bf16.msra.mxu0 0
      %2623 = vmatprep.subr.bf16.mxu0 0
      %2624 = vmatpush1.bf16.msra.mxu0 0
      %2625 = vmatprep.subr.bf16.mxu0 0
      %2626 = vmatpush1.bf16.msra.mxu0 0
      %2627 = vmatprep.subr.bf16.mxu0 0
      %2628 = vmatpush1.bf16.msra.mxu0 0
      %2629 = vmatprep.subr.bf16.mxu0 0
      %2630 = vmatpush1.bf16.msra.mxu0 0
      %2631 = vmatprep.subr.bf16.mxu0 0
      %2632 = vmatpush1.bf16.msra.mxu0 0
      %2633 = vmatprep.subr.bf16.mxu0 0
      %2634 = vmatpush1.bf16.msra.mxu0 0
      %2635 = vmatprep.subr.bf16.mxu0 0
      %2636 = vmatpush1.bf16.msra.mxu0 0
      %2637 = vmatprep.subr.bf16.mxu0 0
      %2638 = vmatpush1.bf16.msra.mxu0 0
      %2639 = vmatprep.subr.bf16.mxu0 0
      %2640 = vmatpush1.bf16.msra.mxu0 0
      %2641 = vmatprep.subr.bf16.mxu0 0
      %2642 = vmatpush1.bf16.msra.mxu0 0
      %2643 = vmatprep.mubr.bf16.mxu0 0
      %2644 = vmatmul.mubr.bf16.gmra.mrb[0].mxu0 %v2561
      %v2645 = vpop.f32.mrb[0].mxu0
      %v2646 = vadd.f32 0.0, %v2645
      %v2647 = vpop.f32.mrb[0].mxu0
      %v2648 = vpop.f32.mrb[0].mxu0
      %v2649 = vadd.f32 0.0, %v2648
      %v2650 = vpop.f32.mrb[0].mxu0
      %2651 = vmatprep.mubr.bf16.mxu0 0
      %2652 = vmatmul.mubr.bf16.gmra.mrb[0].mxu0 %v2564
      %v2653 = vpop.f32.mrb[0].mxu0
      %v2654 = vadd.f32 0.0, %v2653
      %v2655 = vpop.f32.mrb[0].mxu0
      %v2656 = vpop.f32.mrb[0].mxu0
      %v2657 = vadd.f32 0.0, %v2656
      %v2658 = vpop.f32.mrb[0].mxu0
      %2659 = vmatprep.mubr.bf16.mxu0 0
      %2660 = vmatmul.mubr.bf16.gmra.mrb[0].mxu0 %v2567
      %v2661 = vpop.f32.mrb[0].mxu0
      %v2662 = vadd.f32 0.0, %v2661
      %v2663 = vpop.f32.mrb[0].mxu0
      %v2664 = vpop.f32.mrb[0].mxu0
      %v2665 = vadd.f32 0.0, %v2664
      %v2666 = vpop.f32.mrb[0].mxu0
      %2667 = vmatprep.mubr.bf16.mxu0 0
      %2668 = vmatmul.mubr.bf16.gmra.mrb[0].mxu0 %v2570
      %v2669 = vpop.f32.mrb[0].mxu0
      %v2670 = vadd.f32 0.0, %v2669
      %v2671 = vpop.f32.mrb[0].mxu0
      %v2672 = vpop.f32.mrb[0].mxu0
      %v2673 = vadd.f32 0.0, %v2672
      %v2674 = vpop.f32.mrb[0].mxu0
      %2675 = vmatprep.mubr.bf16.mxu0 0
      %2676 = vmatmul.mubr.bf16.gmra.mrb[0].mxu0 %v2573
      %v2677 = vpop.f32.mrb[0].mxu0
      %v2678 = vadd.f32 0.0, %v2677
      %v2679 = vpop.f32.mrb[0].mxu0
      %v2680 = vpop.f32.mrb[0].mxu0
      %v2681 = vadd.f32 0.0, %v2680
      %v2682 = vpop.f32.mrb[0].mxu0
      %2683 = vmatprep.mubr.bf16.mxu0 0
      %2684 = vmatmul.mubr.bf16.gmra.mrb[0].mxu0 %v2576
      %v2685 = vpop.f32.mrb[0].mxu0
      %v2686 = vadd.f32 0.0, %v2685
      %v2687 = vpop.f32.mrb[0].mxu0
      %v2688 = vpop.f32.mrb[0].mxu0
      %v2689 = vadd.f32 0.0, %v2688
      %v2690 = vpop.f32.mrb[0].mxu0
      %2691 = vmatprep.mubr.bf16.mxu0 0
      %2692 = vmatmul.mubr.bf16.gmra.mrb[0].mxu0 %v2579
      %v2693 = vpop.f32.mrb[0].mxu0
      %v2694 = vadd.f32 0.0, %v2693
      %v2695 = vpop.f32.mrb[0].mxu0
      %v2696 = vpop.f32.mrb[0].mxu0
      %v2697 = vadd.f32 0.0, %v2696
      %v2698 = vpop.f32.mrb[0].mxu0
      %2699 = vmatprep.mubr.bf16.mxu0 0
      %2700 = vmatmul.mubr.bf16.gmra.mrb[0].mxu0 %v2582
      %v2701 = vpop.f32.mrb[0].mxu0
      %v2702 = vadd.f32 0.0, %v2701
      %v2703 = vpop.f32.mrb[0].mxu0
      %v2704 = vpop.f32.mrb[0].mxu0
      %v2705 = vadd.f32 0.0, %v2704
      %v2706 = vpop.f32.mrb[0].mxu0
      %2707 = vmatprep.mubr.bf16.mxu0 0
      %2708 = vmatmul.mubr.bf16.gmra.mrb[0].mxu0 %v2585
      %v2709 = vpop.f32.mrb[0].mxu0
      %v2710 = vadd.f32 0.0, %v2709
      %v2711 = vpop.f32.mrb[0].mxu0
      %v2712 = vpop.f32.mrb[0].mxu0
      %v2713 = vadd.f32 0.0, %v2712
      %v2714 = vpop.f32.mrb[0].mxu0
      %2715 = vmatprep.mubr.bf16.mxu0 0
      %2716 = vmatmul.mubr.bf16.gmra.mrb[0].mxu0 %v2588
      %v2717 = vpop.f32.mrb[0].mxu0
      %v2718 = vadd.f32 0.0, %v2717
      %v2719 = vpop.f32.mrb[0].mxu0
      %v2720 = vpop.f32.mrb[0].mxu0
      %v2721 = vadd.f32 0.0, %v2720
      %v2722 = vpop.f32.mrb[0].mxu0
      %2723 = vmatprep.mubr.bf16.mxu0 0
      %2724 = vmatmul.mubr.bf16.gmra.mrb[0].mxu0 %v2591
      %v2725 = vpop.f32.mrb[0].mxu0
      %v2726 = vadd.f32 0.0, %v2725
      %v2727 = vpop.f32.mrb[0].mxu0
      %v2728 = vpop.f32.mrb[0].mxu0
      %v2729 = vadd.f32 0.0, %v2728
      %v2730 = vpop.f32.mrb[0].mxu0
      %2731 = vmatprep.mubr.bf16.mxu0 0
      %2732 = vmatmul.mubr.bf16.gmra.mrb[0].mxu0 %v2594
      %v2733 = vpop.f32.mrb[0].mxu0
      %v2734 = vadd.f32 0.0, %v2733
      %v2735 = vpop.f32.mrb[0].mxu0
      %v2736 = vpop.f32.mrb[0].mxu0
      %v2737 = vadd.f32 0.0, %v2736
      %v2738 = vpop.f32.mrb[0].mxu0
      %2739 = vmatprep.mubr.bf16.mxu0 0
      %2740 = vmatmul.mubr.bf16.gmra.mrb[0].mxu0 %v2597
      %v2741 = vpop.f32.mrb[0].mxu0
      %v2742 = vadd.f32 0.0, %v2741
      %v2743 = vpop.f32.mrb[0].mxu0
      %v2744 = vpop.f32.mrb[0].mxu0
      %v2745 = vadd.f32 0.0, %v2744
      %v2746 = vpop.f32.mrb[0].mxu0
      %2747 = vmatprep.mubr.bf16.mxu0 0
      %2748 = vmatmul.mubr.bf16.gmra.mrb[0].mxu0 %v2600
      %v2749 = vpop.f32.mrb[0].mxu0
      %v2750 = vadd.f32 0.0, %v2749
      %v2751 = vpop.f32.mrb[0].mxu0
      %v2752 = vpop.f32.mrb[0].mxu0
      %v2753 = vadd.f32 0.0, %v2752
      %v2754 = vpop.f32.mrb[0].mxu0
      %2755 = vmatprep.mubr.bf16.mxu0 0
      %2756 = vmatmul.mubr.bf16.gmra.mrb[0].mxu0 %v2603
      %v2757 = vpop.f32.mrb[0].mxu0
      %v2758 = vadd.f32 0.0, %v2757
      %v2759 = vpop.f32.mrb[0].mxu0
      %v2760 = vpop.f32.mrb[0].mxu0
      %v2761 = vadd.f32 0.0, %v2760
      %v2762 = vpop.f32.mrb[0].mxu0
      %2763 = vmatprep.mubr.bf16.mxu0 0
      %2764 = vmatmul.mubr.bf16.gmra.mrb[0].mxu0 %v2606
      %v2765 = vpop.f32.mrb[0].mxu0
      %v2766 = vadd.f32 0.0, %v2765
      %v2767 = vpop.f32.mrb[0].mxu0
      %v2768 = vpop.f32.mrb[0].mxu0
      %v2769 = vadd.f32 0.0, %v2768
      %v2770 = vpop.f32.mrb[0].mxu0
      %2771 = vdwg.mxu0
      %v2772 = vadd.f32 %v2222, %v2646
      %v2773 = vadd.f32 %v2223, %v2649
      %v2774 = vadd.f32 %v2224, %v2654
      %v2775 = vadd.f32 %v2225, %v2657
      %v2776 = vadd.f32 %v2226, %v2662
      %v2777 = vadd.f32 %v2227, %v2665
      %v2778 = vadd.f32 %v2228, %v2670
      %v2779 = vadd.f32 %v2229, %v2673
      %v2780 = vadd.f32 %v2230, %v2678
      %v2781 = vadd.f32 %v2231, %v2681
      %v2782 = vadd.f32 %v2232, %v2686
      %v2783 = vadd.f32 %v2233, %v2689
      %v2784 = vadd.f32 %v2234, %v2694
      %v2785 = vadd.f32 %v2235, %v2697
      %v2786 = vadd.f32 %v2236, %v2702
      %v2787 = vadd.f32 %v2237, %v2705
      %v2788 = vadd.f32 %v2238, %v2710
      %v2789 = vadd.f32 %v2239, %v2713
      %v2790 = vadd.f32 %v2240, %v2718
      %v2791 = vadd.f32 %v2241, %v2721
      %v2792 = vadd.f32 %v2242, %v2726
      %v2793 = vadd.f32 %v2243, %v2729
      %v2794 = vadd.f32 %v2244, %v2734
      %v2795 = vadd.f32 %v2245, %v2737
      %v2796 = vadd.f32 %v2246, %v2742
      %v2797 = vadd.f32 %v2247, %v2745
      %v2798 = vadd.f32 %v2248, %v2750
      %v2799 = vadd.f32 %v2249, %v2753
      %v2800 = vadd.f32 %v2250, %v2758
      %v2801 = vadd.f32 %v2251, %v2761
      %v2802 = vadd.f32 %v2252, %v2766
      %v2803 = vadd.f32 %v2253, %v2769
      %v2804 = vld [vmem:[%s784] sm:$0xf0]
      %v2805 = vld [vmem:[%s784 + $0x10] sm:$0xf0]
      %v2806 = vld [vmem:[%s784 + $0x20] sm:$0xf0]
      %v2807 = vld [vmem:[%s784 + $0x30] sm:$0xf0]
      %v2808 = vld [vmem:[%s784 + $0x40] sm:$0xf0]
      %v2809 = vld [vmem:[%s784 + $0x50] sm:$0xf0]
      %v2810 = vld [vmem:[%s784 + $0x60] sm:$0xf0]
      %v2811 = vld [vmem:[%s784 + $0x70] sm:$0xf0]
      %v2812 = vld [vmem:[%s784 + $0x80] sm:$0xf0]
      %v2813 = vld [vmem:[%s784 + $0x90] sm:$0xf0]
      %v2814 = vld [vmem:[%s784 + $0xa0] sm:$0xf0]
      %v2815 = vld [vmem:[%s784 + $0xb0] sm:$0xf0]
      %v2816 = vld [vmem:[%s784 + $0xc0] sm:$0xf0]
      %v2817 = vld [vmem:[%s784 + $0xd0] sm:$0xf0]
      %v2818 = vld [vmem:[%s784 + $0xe0] sm:$0xf0]
      %v2819 = vld [vmem:[%s784 + $0xf0] sm:$0xf0]
      %v2852 = vrot.slane %v2804, 4
      %v2853 = vrot.slane %v2255, 4
      %v2854 = vsel %vm1242, %v2852, %v2853
      %v2855 = vrot.slane %v2805, 4
      %v2856 = vrot.slane %v2257, 4
      %v2857 = vsel %vm1242, %v2855, %v2856
      %v2858 = vrot.slane %v2806, 4
      %v2859 = vrot.slane %v2259, 4
      %v2860 = vsel %vm1242, %v2858, %v2859
      %v2861 = vrot.slane %v2807, 4
      %v2862 = vrot.slane %v2261, 4
      %v2863 = vsel %vm1242, %v2861, %v2862
      %v2864 = vrot.slane %v2808, 4
      %v2865 = vrot.slane %v2263, 4
      %v2866 = vsel %vm1242, %v2864, %v2865
      %v2867 = vrot.slane %v2809, 4
      %v2868 = vrot.slane %v2265, 4
      %v2869 = vsel %vm1242, %v2867, %v2868
      %v2870 = vrot.slane %v2810, 4
      %v2871 = vrot.slane %v2267, 4
      %v2872 = vsel %vm1242, %v2870, %v2871
      %v2873 = vrot.slane %v2811, 4
      %v2874 = vrot.slane %v2269, 4
      %v2875 = vsel %vm1242, %v2873, %v2874
      %v2876 = vrot.slane %v2812, 4
      %v2877 = vrot.slane %v2271, 4
      %v2878 = vsel %vm1242, %v2876, %v2877
      %v2879 = vrot.slane %v2813, 4
      %v2880 = vrot.slane %v2273, 4
      %v2881 = vsel %vm1242, %v2879, %v2880
      %v2882 = vrot.slane %v2814, 4
      %v2883 = vrot.slane %v2275, 4
      %v2884 = vsel %vm1242, %v2882, %v2883
      %v2885 = vrot.slane %v2815, 4
      %v2886 = vrot.slane %v2277, 4
      %v2887 = vsel %vm1242, %v2885, %v2886
      %v2888 = vrot.slane %v2816, 4
      %v2889 = vrot.slane %v2279, 4
      %v2890 = vsel %vm1242, %v2888, %v2889
      %v2891 = vrot.slane %v2817, 4
      %v2892 = vrot.slane %v2281, 4
      %v2893 = vsel %vm1242, %v2891, %v2892
      %v2894 = vrot.slane %v2818, 4
      %v2895 = vrot.slane %v2283, 4
      %v2896 = vsel %vm1242, %v2894, %v2895
      %v2897 = vrot.slane %v2819, 4
      %v2898 = vrot.slane %v2285, 4
      %v2899 = vsel %vm1242, %v2897, %v2898
      %s2900 = scalar_lea.vmem %s3, 16
      %v2901 = vld [vmem:[%s2900] sm:$0xf]
      %v2903 = vsel %vm1293, %v2854, 0
      %v2906 = vsel %vm1293, %v2857, 0
      %v2909 = vsel %vm1293, %v2860, 0
      %v2912 = vsel %vm1293, %v2863, 0
      %v2915 = vsel %vm1293, %v2866, 0
      %v2918 = vsel %vm1293, %v2869, 0
      %v2921 = vsel %vm1293, %v2872, 0
      %v2924 = vsel %vm1293, %v2875, 0
      %v2927 = vsel %vm1293, %v2878, 0
      %v2930 = vsel %vm1293, %v2881, 0
      %v2933 = vsel %vm1293, %v2884, 0
      %v2936 = vsel %vm1293, %v2887, 0
      %v2939 = vsel %vm1293, %v2890, 0
      %v2942 = vsel %vm1293, %v2893, 0
      %v2945 = vsel %vm1293, %v2896, 0
      %v2948 = vsel %vm1293, %v2899, 0
      %v2951 = vsel %vm1342, %v2901, 0
      %2953 = vmatprep.subr.bf16.mxu0 0
      %2954 = vmatpush1.bf16.msra.mxu0 %v2951
      %2955 = vmatprep.subr.bf16.mxu0 0
      %2956 = vmatpush1.bf16.msra.mxu0 0
      %2957 = vmatprep.subr.bf16.mxu0 0
      %2958 = vmatpush1.bf16.msra.mxu0 0
      %2959 = vmatprep.subr.bf16.mxu0 0
      %2960 = vmatpush1.bf16.msra.mxu0 0
      %2961 = vmatprep.subr.bf16.mxu0 0
      %2962 = vmatpush1.bf16.msra.mxu0 0
      %2963 = vmatprep.subr.bf16.mxu0 0
      %2964 = vmatpush1.bf16.msra.mxu0 0
      %2965 = vmatprep.subr.bf16.mxu0 0
      %2966 = vmatpush1.bf16.msra.mxu0 0
      %2967 = vmatprep.subr.bf16.mxu0 0
      %2968 = vmatpush1.bf16.msra.mxu0 0
      %2969 = vmatprep.subr.bf16.mxu0 0
      %2970 = vmatpush1.bf16.msra.mxu0 0
      %2971 = vmatprep.subr.bf16.mxu0 0
      %2972 = vmatpush1.bf16.msra.mxu0 0
      %2973 = vmatprep.subr.bf16.mxu0 0
      %2974 = vmatpush1.bf16.msra.mxu0 0
      %2975 = vmatprep.subr.bf16.mxu0 0
      %2976 = vmatpush1.bf16.msra.mxu0 0
      %2977 = vmatprep.subr.bf16.mxu0 0
      %2978 = vmatpush1.bf16.msra.mxu0 0
      %2979 = vmatprep.subr.bf16.mxu0 0
      %2980 = vmatpush1.bf16.msra.mxu0 0
      %2981 = vmatprep.subr.bf16.mxu0 0
      %2982 = vmatpush1.bf16.msra.mxu0 0
      %2983 = vmatprep.subr.bf16.mxu0 0
      %2984 = vmatpush1.bf16.msra.mxu0 0
      %2985 = vmatprep.mubr.bf16.mxu0 0
      %2986 = vmatmul.mubr.bf16.gmra.mrb[0].mxu0 %v2903
      %v2987 = vpop.f32.mrb[0].mxu0
      %v2988 = vadd.f32 0.0, %v2987
      %v2989 = vpop.f32.mrb[0].mxu0
      %v2990 = vpop.f32.mrb[0].mxu0
      %v2991 = vadd.f32 0.0, %v2990
      %v2992 = vpop.f32.mrb[0].mxu0
      %2993 = vmatprep.mubr.bf16.mxu0 0
      %2994 = vmatmul.mubr.bf16.gmra.mrb[0].mxu0 %v2906
      %v2995 = vpop.f32.mrb[0].mxu0
      %v2996 = vadd.f32 0.0, %v2995
      %v2997 = vpop.f32.mrb[0].mxu0
      %v2998 = vpop.f32.mrb[0].mxu0
      %v2999 = vadd.f32 0.0, %v2998
      %v3000 = vpop.f32.mrb[0].mxu0
      %3001 = vmatprep.mubr.bf16.mxu0 0
      %3002 = vmatmul.mubr.bf16.gmra.mrb[0].mxu0 %v2909
      %v3003 = vpop.f32.mrb[0].mxu0
      %v3004 = vadd.f32 0.0, %v3003
      %v3005 = vpop.f32.mrb[0].mxu0
      %v3006 = vpop.f32.mrb[0].mxu0
      %v3007 = vadd.f32 0.0, %v3006
      %v3008 = vpop.f32.mrb[0].mxu0
      %3009 = vmatprep.mubr.bf16.mxu0 0
      %3010 = vmatmul.mubr.bf16.gmra.mrb[0].mxu0 %v2912
      %v3011 = vpop.f32.mrb[0].mxu0
      %v3012 = vadd.f32 0.0, %v3011
      %v3013 = vpop.f32.mrb[0].mxu0
      %v3014 = vpop.f32.mrb[0].mxu0
      %v3015 = vadd.f32 0.0, %v3014
      %v3016 = vpop.f32.mrb[0].mxu0
      %3017 = vmatprep.mubr.bf16.mxu0 0
      %3018 = vmatmul.mubr.bf16.gmra.mrb[0].mxu0 %v2915
      %v3019 = vpop.f32.mrb[0].mxu0
      %v3020 = vadd.f32 0.0, %v3019
      %v3021 = vpop.f32.mrb[0].mxu0
      %v3022 = vpop.f32.mrb[0].mxu0
      %v3023 = vadd.f32 0.0, %v3022
      %v3024 = vpop.f32.mrb[0].mxu0
      %3025 = vmatprep.mubr.bf16.mxu0 0
      %3026 = vmatmul.mubr.bf16.gmra.mrb[0].mxu0 %v2918
      %v3027 = vpop.f32.mrb[0].mxu0
      %v3028 = vadd.f32 0.0, %v3027
      %v3029 = vpop.f32.mrb[0].mxu0
      %v3030 = vpop.f32.mrb[0].mxu0
      %v3031 = vadd.f32 0.0, %v3030
      %v3032 = vpop.f32.mrb[0].mxu0
      %3033 = vmatprep.mubr.bf16.mxu0 0
      %3034 = vmatmul.mubr.bf16.gmra.mrb[0].mxu0 %v2921
      %v3035 = vpop.f32.mrb[0].mxu0
      %v3036 = vadd.f32 0.0, %v3035
      %v3037 = vpop.f32.mrb[0].mxu0
      %v3038 = vpop.f32.mrb[0].mxu0
      %v3039 = vadd.f32 0.0, %v3038
      %v3040 = vpop.f32.mrb[0].mxu0
      %3041 = vmatprep.mubr.bf16.mxu0 0
      %3042 = vmatmul.mubr.bf16.gmra.mrb[0].mxu0 %v2924
      %v3043 = vpop.f32.mrb[0].mxu0
      %v3044 = vadd.f32 0.0, %v3043
      %v3045 = vpop.f32.mrb[0].mxu0
      %v3046 = vpop.f32.mrb[0].mxu0
      %v3047 = vadd.f32 0.0, %v3046
      %v3048 = vpop.f32.mrb[0].mxu0
      %3049 = vmatprep.mubr.bf16.mxu0 0
      %3050 = vmatmul.mubr.bf16.gmra.mrb[0].mxu0 %v2927
      %v3051 = vpop.f32.mrb[0].mxu0
      %v3052 = vadd.f32 0.0, %v3051
      %v3053 = vpop.f32.mrb[0].mxu0
      %v3054 = vpop.f32.mrb[0].mxu0
      %v3055 = vadd.f32 0.0, %v3054
      %v3056 = vpop.f32.mrb[0].mxu0
      %3057 = vmatprep.mubr.bf16.mxu0 0
      %3058 = vmatmul.mubr.bf16.gmra.mrb[0].mxu0 %v2930
      %v3059 = vpop.f32.mrb[0].mxu0
      %v3060 = vadd.f32 0.0, %v3059
      %v3061 = vpop.f32.mrb[0].mxu0
      %v3062 = vpop.f32.mrb[0].mxu0
      %v3063 = vadd.f32 0.0, %v3062
      %v3064 = vpop.f32.mrb[0].mxu0
      %3065 = vmatprep.mubr.bf16.mxu0 0
      %3066 = vmatmul.mubr.bf16.gmra.mrb[0].mxu0 %v2933
      %v3067 = vpop.f32.mrb[0].mxu0
      %v3068 = vadd.f32 0.0, %v3067
      %v3069 = vpop.f32.mrb[0].mxu0
      %v3070 = vpop.f32.mrb[0].mxu0
      %v3071 = vadd.f32 0.0, %v3070
      %v3072 = vpop.f32.mrb[0].mxu0
      %3073 = vmatprep.mubr.bf16.mxu0 0
      %3074 = vmatmul.mubr.bf16.gmra.mrb[0].mxu0 %v2936
      %v3075 = vpop.f32.mrb[0].mxu0
      %v3076 = vadd.f32 0.0, %v3075
      %v3077 = vpop.f32.mrb[0].mxu0
      %v3078 = vpop.f32.mrb[0].mxu0
      %v3079 = vadd.f32 0.0, %v3078
      %v3080 = vpop.f32.mrb[0].mxu0
      %3081 = vmatprep.mubr.bf16.mxu0 0
      %3082 = vmatmul.mubr.bf16.gmra.mrb[0].mxu0 %v2939
      %v3083 = vpop.f32.mrb[0].mxu0
      %v3084 = vadd.f32 0.0, %v3083
      %v3085 = vpop.f32.mrb[0].mxu0
      %v3086 = vpop.f32.mrb[0].mxu0
      %v3087 = vadd.f32 0.0, %v3086
      %v3088 = vpop.f32.mrb[0].mxu0
      %3089 = vmatprep.mubr.bf16.mxu0 0
      %3090 = vmatmul.mubr.bf16.gmra.mrb[0].mxu0 %v2942
      %v3091 = vpop.f32.mrb[0].mxu0
      %v3092 = vadd.f32 0.0, %v3091
      %v3093 = vpop.f32.mrb[0].mxu0
      %v3094 = vpop.f32.mrb[0].mxu0
      %v3095 = vadd.f32 0.0, %v3094
      %v3096 = vpop.f32.mrb[0].mxu0
      %3097 = vmatprep.mubr.bf16.mxu0 0
      %3098 = vmatmul.mubr.bf16.gmra.mrb[0].mxu0 %v2945
      %v3099 = vpop.f32.mrb[0].mxu0
      %v3100 = vadd.f32 0.0, %v3099
      %v3101 = vpop.f32.mrb[0].mxu0
      %v3102 = vpop.f32.mrb[0].mxu0
      %v3103 = vadd.f32 0.0, %v3102
      %v3104 = vpop.f32.mrb[0].mxu0
      %3105 = vmatprep.mubr.bf16.mxu0 0
      %3106 = vmatmul.mubr.bf16.gmra.mrb[0].mxu0 %v2948
      %v3107 = vpop.f32.mrb[0].mxu0
      %v3108 = vadd.f32 0.0, %v3107
      %v3109 = vpop.f32.mrb[0].mxu0
      %v3110 = vpop.f32.mrb[0].mxu0
      %v3111 = vadd.f32 0.0, %v3110
      %v3112 = vpop.f32.mrb[0].mxu0
      %3113 = vdwg.mxu0
      %v3114 = vadd.f32 %v2772, %v2988
      %v3115 = vadd.f32 %v2773, %v2991
      %v3116 = vadd.f32 %v2774, %v2996
      %v3117 = vadd.f32 %v2775, %v2999
      %v3118 = vadd.f32 %v2776, %v3004
      %v3119 = vadd.f32 %v2777, %v3007
      %v3120 = vadd.f32 %v2778, %v3012
      %v3121 = vadd.f32 %v2779, %v3015
      %v3122 = vadd.f32 %v2780, %v3020
      %v3123 = vadd.f32 %v2781, %v3023
      %v3124 = vadd.f32 %v2782, %v3028
      %v3125 = vadd.f32 %v2783, %v3031
      %v3126 = vadd.f32 %v2784, %v3036
      %v3127 = vadd.f32 %v2785, %v3039
      %v3128 = vadd.f32 %v2786, %v3044
      %v3129 = vadd.f32 %v2787, %v3047
      %v3130 = vadd.f32 %v2788, %v3052
      %v3131 = vadd.f32 %v2789, %v3055
      %v3132 = vadd.f32 %v2790, %v3060
      %v3133 = vadd.f32 %v2791, %v3063
      %v3134 = vadd.f32 %v2792, %v3068
      %v3135 = vadd.f32 %v2793, %v3071
      %v3136 = vadd.f32 %v2794, %v3076
      %v3137 = vadd.f32 %v2795, %v3079
      %v3138 = vadd.f32 %v2796, %v3084
      %v3139 = vadd.f32 %v2797, %v3087
      %v3140 = vadd.f32 %v2798, %v3092
      %v3141 = vadd.f32 %v2799, %v3095
      %v3142 = vadd.f32 %v2800, %v3100
      %v3143 = vadd.f32 %v2801, %v3103
      %v3144 = vadd.f32 %v2802, %v3108
      %v3145 = vadd.f32 %v2803, %v3111
      %v3146 = vld [vmem:[%s784 + $0x8] sm:$0x1f]
      %v3147 = vld [vmem:[%s784 + $0x18] sm:$0x1f]
      %v3148 = vld [vmem:[%s784 + $0x28] sm:$0x1f]
      %v3149 = vld [vmem:[%s784 + $0x38] sm:$0x1f]
      %v3150 = vld [vmem:[%s784 + $0x48] sm:$0x1f]
      %v3151 = vld [vmem:[%s784 + $0x58] sm:$0x1f]
      %v3152 = vld [vmem:[%s784 + $0x68] sm:$0x1f]
      %v3153 = vld [vmem:[%s784 + $0x78] sm:$0x1f]
      %v3154 = vld [vmem:[%s784 + $0x88] sm:$0x1f]
      %v3155 = vld [vmem:[%s784 + $0x98] sm:$0x1f]
      %v3156 = vld [vmem:[%s784 + $0xa8] sm:$0x1f]
      %v3157 = vld [vmem:[%s784 + $0xb8] sm:$0x1f]
      %v3158 = vld [vmem:[%s784 + $0xc8] sm:$0x1f]
      %v3159 = vld [vmem:[%s784 + $0xd8] sm:$0x1f]
      %v3160 = vld [vmem:[%s784 + $0xe8] sm:$0x1f]
      %v3161 = vld [vmem:[%s784 + $0xf8] sm:$0x1f]
      %v3163 = vshrl.u32 %v2804, 16
      %v3165 = vrot.slane %v3163, 4
      %v3166 = vshll.u32 %v2804, 16
      %v3168 = vrot.slane %v3166, 5
      %v3169 = vor.u32 %v3165, %v3168
      %v3171 = vshrl.u32 %v3146, 16
      %v3173 = vrot.slane %v3171, 4
      %v3174 = vshll.u32 %v3146, 16
      %v3176 = vrot.slane %v3174, 5
      %v3177 = vor.u32 %v3173, %v3176
      %v3178 = vsel %vm1735, %v3169, %v3177
      %v3180 = vshrl.u32 %v2805, 16
      %v3182 = vrot.slane %v3180, 4
      %v3183 = vshll.u32 %v2805, 16
      %v3185 = vrot.slane %v3183, 5
      %v3186 = vor.u32 %v3182, %v3185
      %v3188 = vshrl.u32 %v3147, 16
      %v3190 = vrot.slane %v3188, 4
      %v3191 = vshll.u32 %v3147, 16
      %v3193 = vrot.slane %v3191, 5
      %v3194 = vor.u32 %v3190, %v3193
      %v3195 = vsel %vm1735, %v3186, %v3194
      %v3197 = vshrl.u32 %v2806, 16
      %v3199 = vrot.slane %v3197, 4
      %v3200 = vshll.u32 %v2806, 16
      %v3202 = vrot.slane %v3200, 5
      %v3203 = vor.u32 %v3199, %v3202
      %v3205 = vshrl.u32 %v3148, 16
      %v3207 = vrot.slane %v3205, 4
      %v3208 = vshll.u32 %v3148, 16
      %v3210 = vrot.slane %v3208, 5
      %v3211 = vor.u32 %v3207, %v3210
      %v3212 = vsel %vm1735, %v3203, %v3211
      %v3214 = vshrl.u32 %v2807, 16
      %v3216 = vrot.slane %v3214, 4
      %v3217 = vshll.u32 %v2807, 16
      %v3219 = vrot.slane %v3217, 5
      %v3220 = vor.u32 %v3216, %v3219
      %v3222 = vshrl.u32 %v3149, 16
      %v3224 = vrot.slane %v3222, 4
      %v3225 = vshll.u32 %v3149, 16
      %v3227 = vrot.slane %v3225, 5
      %v3228 = vor.u32 %v3224, %v3227
      %v3229 = vsel %vm1735, %v3220, %v3228
      %v3231 = vshrl.u32 %v2808, 16
      %v3233 = vrot.slane %v3231, 4
      %v3234 = vshll.u32 %v2808, 16
      %v3236 = vrot.slane %v3234, 5
      %v3237 = vor.u32 %v3233, %v3236
      %v3239 = vshrl.u32 %v3150, 16
      %v3241 = vrot.slane %v3239, 4
      %v3242 = vshll.u32 %v3150, 16
      %v3244 = vrot.slane %v3242, 5
      %v3245 = vor.u32 %v3241, %v3244
      %v3246 = vsel %vm1735, %v3237, %v3245
      %v3248 = vshrl.u32 %v2809, 16
      %v3250 = vrot.slane %v3248, 4
      %v3251 = vshll.u32 %v2809, 16
      %v3253 = vrot.slane %v3251, 5
      %v3254 = vor.u32 %v3250, %v3253
      %v3256 = vshrl.u32 %v3151, 16
      %v3258 = vrot.slane %v3256, 4
      %v3259 = vshll.u32 %v3151, 16
      %v3261 = vrot.slane %v3259, 5
      %v3262 = vor.u32 %v3258, %v3261
      %v3263 = vsel %vm1735, %v3254, %v3262
      %v3265 = vshrl.u32 %v2810, 16
      %v3267 = vrot.slane %v3265, 4
      %v3268 = vshll.u32 %v2810, 16
      %v3270 = vrot.slane %v3268, 5
      %v3271 = vor.u32 %v3267, %v3270
      %v3273 = vshrl.u32 %v3152, 16
      %v3275 = vrot.slane %v3273, 4
      %v3276 = vshll.u32 %v3152, 16
      %v3278 = vrot.slane %v3276, 5
      %v3279 = vor.u32 %v3275, %v3278
      %v3280 = vsel %vm1735, %v3271, %v3279
      %v3282 = vshrl.u32 %v2811, 16
      %v3284 = vrot.slane %v3282, 4
      %v3285 = vshll.u32 %v2811, 16
      %v3287 = vrot.slane %v3285, 5
      %v3288 = vor.u32 %v3284, %v3287
      %v3290 = vshrl.u32 %v3153, 16
      %v3292 = vrot.slane %v3290, 4
      %v3293 = vshll.u32 %v3153, 16
      %v3295 = vrot.slane %v3293, 5
      %v3296 = vor.u32 %v3292, %v3295
      %v3297 = vsel %vm1735, %v3288, %v3296
      %v3299 = vshrl.u32 %v2812, 16
      %v3301 = vrot.slane %v3299, 4
      %v3302 = vshll.u32 %v2812, 16
      %v3304 = vrot.slane %v3302, 5
      %v3305 = vor.u32 %v3301, %v3304
      %v3307 = vshrl.u32 %v3154, 16
      %v3309 = vrot.slane %v3307, 4
      %v3310 = vshll.u32 %v3154, 16
      %v3312 = vrot.slane %v3310, 5
      %v3313 = vor.u32 %v3309, %v3312
      %v3314 = vsel %vm1735, %v3305, %v3313
      %v3316 = vshrl.u32 %v2813, 16
      %v3318 = vrot.slane %v3316, 4
      %v3319 = vshll.u32 %v2813, 16
      %v3321 = vrot.slane %v3319, 5
      %v3322 = vor.u32 %v3318, %v3321
      %v3324 = vshrl.u32 %v3155, 16
      %v3326 = vrot.slane %v3324, 4
      %v3327 = vshll.u32 %v3155, 16
      %v3329 = vrot.slane %v3327, 5
      %v3330 = vor.u32 %v3326, %v3329
      %v3331 = vsel %vm1735, %v3322, %v3330
      %v3333 = vshrl.u32 %v2814, 16
      %v3335 = vrot.slane %v3333, 4
      %v3336 = vshll.u32 %v2814, 16
      %v3338 = vrot.slane %v3336, 5
      %v3339 = vor.u32 %v3335, %v3338
      %v3341 = vshrl.u32 %v3156, 16
      %v3343 = vrot.slane %v3341, 4
      %v3344 = vshll.u32 %v3156, 16
      %v3346 = vrot.slane %v3344, 5
      %v3347 = vor.u32 %v3343, %v3346
      %v3348 = vsel %vm1735, %v3339, %v3347
      %v3350 = vshrl.u32 %v2815, 16
      %v3352 = vrot.slane %v3350, 4
      %v3353 = vshll.u32 %v2815, 16
      %v3355 = vrot.slane %v3353, 5
      %v3356 = vor.u32 %v3352, %v3355
      %v3358 = vshrl.u32 %v3157, 16
      %v3360 = vrot.slane %v3358, 4
      %v3361 = vshll.u32 %v3157, 16
      %v3363 = vrot.slane %v3361, 5
      %v3364 = vor.u32 %v3360, %v3363
      %v3365 = vsel %vm1735, %v3356, %v3364
      %v3367 = vshrl.u32 %v2816, 16
      %v3369 = vrot.slane %v3367, 4
      %v3370 = vshll.u32 %v2816, 16
      %v3372 = vrot.slane %v3370, 5
      %v3373 = vor.u32 %v3369, %v3372
      %v3375 = vshrl.u32 %v3158, 16
      %v3377 = vrot.slane %v3375, 4
      %v3378 = vshll.u32 %v3158, 16
      %v3380 = vrot.slane %v3378, 5
      %v3381 = vor.u32 %v3377, %v3380
      %v3382 = vsel %vm1735, %v3373, %v3381
      %v3384 = vshrl.u32 %v2817, 16
      %v3386 = vrot.slane %v3384, 4
      %v3387 = vshll.u32 %v2817, 16
      %v3389 = vrot.slane %v3387, 5
      %v3390 = vor.u32 %v3386, %v3389
      %v3392 = vshrl.u32 %v3159, 16
      %v3394 = vrot.slane %v3392, 4
      %v3395 = vshll.u32 %v3159, 16
      %v3397 = vrot.slane %v3395, 5
      %v3398 = vor.u32 %v3394, %v3397
      %v3399 = vsel %vm1735, %v3390, %v3398
      %v3401 = vshrl.u32 %v2818, 16
      %v3403 = vrot.slane %v3401, 4
      %v3404 = vshll.u32 %v2818, 16
      %v3406 = vrot.slane %v3404, 5
      %v3407 = vor.u32 %v3403, %v3406
      %v3409 = vshrl.u32 %v3160, 16
      %v3411 = vrot.slane %v3409, 4
      %v3412 = vshll.u32 %v3160, 16
      %v3414 = vrot.slane %v3412, 5
      %v3415 = vor.u32 %v3411, %v3414
      %v3416 = vsel %vm1735, %v3407, %v3415
      %v3418 = vshrl.u32 %v2819, 16
      %v3420 = vrot.slane %v3418, 4
      %v3421 = vshll.u32 %v2819, 16
      %v3423 = vrot.slane %v3421, 5
      %v3424 = vor.u32 %v3420, %v3423
      %v3426 = vshrl.u32 %v3161, 16
      %v3428 = vrot.slane %v3426, 4
      %v3429 = vshll.u32 %v3161, 16
      %v3431 = vrot.slane %v3429, 5
      %v3432 = vor.u32 %v3428, %v3431
      %v3433 = vsel %vm1735, %v3424, %v3432
      %s3434 = scalar_lea.vmem %s3, 20
      %v3435 = vld [vmem:[%s3434] sm:$0xf]
      %v3437 = vsel %vm1293, %v3178, 0
      %v3440 = vsel %vm1293, %v3195, 0
      %v3443 = vsel %vm1293, %v3212, 0
      %v3446 = vsel %vm1293, %v3229, 0
      %v3449 = vsel %vm1293, %v3246, 0
      %v3452 = vsel %vm1293, %v3263, 0
      %v3455 = vsel %vm1293, %v3280, 0
      %v3458 = vsel %vm1293, %v3297, 0
      %v3461 = vsel %vm1293, %v3314, 0
      %v3464 = vsel %vm1293, %v3331, 0
      %v3467 = vsel %vm1293, %v3348, 0
      %v3470 = vsel %vm1293, %v3365, 0
      %v3473 = vsel %vm1293, %v3382, 0
      %v3476 = vsel %vm1293, %v3399, 0
      %v3479 = vsel %vm1293, %v3416, 0
      %v3482 = vsel %vm1293, %v3433, 0
      %v3485 = vsel %vm1342, %v3435, 0
      %3487 = vmatprep.subr.bf16.mxu0 0
      %3488 = vmatpush1.bf16.msra.mxu0 %v3485
      %3489 = vmatprep.subr.bf16.mxu0 0
      %3490 = vmatpush1.bf16.msra.mxu0 0
      %3491 = vmatprep.subr.bf16.mxu0 0
      %3492 = vmatpush1.bf16.msra.mxu0 0
      %3493 = vmatprep.subr.bf16.mxu0 0
      %3494 = vmatpush1.bf16.msra.mxu0 0
      %3495 = vmatprep.subr.bf16.mxu0 0
      %3496 = vmatpush1.bf16.msra.mxu0 0
      %3497 = vmatprep.subr.bf16.mxu0 0
      %3498 = vmatpush1.bf16.msra.mxu0 0
      %3499 = vmatprep.subr.bf16.mxu0 0
      %3500 = vmatpush1.bf16.msra.mxu0 0
      %3501 = vmatprep.subr.bf16.mxu0 0
      %3502 = vmatpush1.bf16.msra.mxu0 0
      %3503 = vmatprep.subr.bf16.mxu0 0
      %3504 = vmatpush1.bf16.msra.mxu0 0
      %3505 = vmatprep.subr.bf16.mxu0 0
      %3506 = vmatpush1.bf16.msra.mxu0 0
      %3507 = vmatprep.subr.bf16.mxu0 0
      %3508 = vmatpush1.bf16.msra.mxu0 0
      %3509 = vmatprep.subr.bf16.mxu0 0
      %3510 = vmatpush1.bf16.msra.mxu0 0
      %3511 = vmatprep.subr.bf16.mxu0 0
      %3512 = vmatpush1.bf16.msra.mxu0 0
      %3513 = vmatprep.subr.bf16.mxu0 0
      %3514 = vmatpush1.bf16.msra.mxu0 0
      %3515 = vmatprep.subr.bf16.mxu0 0
      %3516 = vmatpush1.bf16.msra.mxu0 0
      %3517 = vmatprep.subr.bf16.mxu0 0
      %3518 = vmatpush1.bf16.msra.mxu0 0
      %3519 = vmatprep.mubr.bf16.mxu0 0
      %3520 = vmatmul.mubr.bf16.gmra.mrb[0].mxu0 %v3437
      %v3521 = vpop.f32.mrb[0].mxu0
      %v3522 = vadd.f32 0.0, %v3521
      %v3523 = vpop.f32.mrb[0].mxu0
      %v3524 = vpop.f32.mrb[0].mxu0
      %v3525 = vadd.f32 0.0, %v3524
      %v3526 = vpop.f32.mrb[0].mxu0
      %3527 = vmatprep.mubr.bf16.mxu0 0
      %3528 = vmatmul.mubr.bf16.gmra.mrb[0].mxu0 %v3440
      %v3529 = vpop.f32.mrb[0].mxu0
      %v3530 = vadd.f32 0.0, %v3529
      %v3531 = vpop.f32.mrb[0].mxu0
      %v3532 = vpop.f32.mrb[0].mxu0
      %v3533 = vadd.f32 0.0, %v3532
      %v3534 = vpop.f32.mrb[0].mxu0
      %3535 = vmatprep.mubr.bf16.mxu0 0
      %3536 = vmatmul.mubr.bf16.gmra.mrb[0].mxu0 %v3443
      %v3537 = vpop.f32.mrb[0].mxu0
      %v3538 = vadd.f32 0.0, %v3537
      %v3539 = vpop.f32.mrb[0].mxu0
      %v3540 = vpop.f32.mrb[0].mxu0
      %v3541 = vadd.f32 0.0, %v3540
      %v3542 = vpop.f32.mrb[0].mxu0
      %3543 = vmatprep.mubr.bf16.mxu0 0
      %3544 = vmatmul.mubr.bf16.gmra.mrb[0].mxu0 %v3446
      %v3545 = vpop.f32.mrb[0].mxu0
      %v3546 = vadd.f32 0.0, %v3545
      %v3547 = vpop.f32.mrb[0].mxu0
      %v3548 = vpop.f32.mrb[0].mxu0
      %v3549 = vadd.f32 0.0, %v3548
      %v3550 = vpop.f32.mrb[0].mxu0
      %3551 = vmatprep.mubr.bf16.mxu0 0
      %3552 = vmatmul.mubr.bf16.gmra.mrb[0].mxu0 %v3449
      %v3553 = vpop.f32.mrb[0].mxu0
      %v3554 = vadd.f32 0.0, %v3553
      %v3555 = vpop.f32.mrb[0].mxu0
      %v3556 = vpop.f32.mrb[0].mxu0
      %v3557 = vadd.f32 0.0, %v3556
      %v3558 = vpop.f32.mrb[0].mxu0
      %3559 = vmatprep.mubr.bf16.mxu0 0
      %3560 = vmatmul.mubr.bf16.gmra.mrb[0].mxu0 %v3452
      %v3561 = vpop.f32.mrb[0].mxu0
      %v3562 = vadd.f32 0.0, %v3561
      %v3563 = vpop.f32.mrb[0].mxu0
      %v3564 = vpop.f32.mrb[0].mxu0
      %v3565 = vadd.f32 0.0, %v3564
      %v3566 = vpop.f32.mrb[0].mxu0
      %3567 = vmatprep.mubr.bf16.mxu0 0
      %3568 = vmatmul.mubr.bf16.gmra.mrb[0].mxu0 %v3455
      %v3569 = vpop.f32.mrb[0].mxu0
      %v3570 = vadd.f32 0.0, %v3569
      %v3571 = vpop.f32.mrb[0].mxu0
      %v3572 = vpop.f32.mrb[0].mxu0
      %v3573 = vadd.f32 0.0, %v3572
      %v3574 = vpop.f32.mrb[0].mxu0
      %3575 = vmatprep.mubr.bf16.mxu0 0
      %3576 = vmatmul.mubr.bf16.gmra.mrb[0].mxu0 %v3458
      %v3577 = vpop.f32.mrb[0].mxu0
      %v3578 = vadd.f32 0.0, %v3577
      %v3579 = vpop.f32.mrb[0].mxu0
      %v3580 = vpop.f32.mrb[0].mxu0
      %v3581 = vadd.f32 0.0, %v3580
      %v3582 = vpop.f32.mrb[0].mxu0
      %3583 = vmatprep.mubr.bf16.mxu0 0
      %3584 = vmatmul.mubr.bf16.gmra.mrb[0].mxu0 %v3461
      %v3585 = vpop.f32.mrb[0].mxu0
      %v3586 = vadd.f32 0.0, %v3585
      %v3587 = vpop.f32.mrb[0].mxu0
      %v3588 = vpop.f32.mrb[0].mxu0
      %v3589 = vadd.f32 0.0, %v3588
      %v3590 = vpop.f32.mrb[0].mxu0
      %3591 = vmatprep.mubr.bf16.mxu0 0
      %3592 = vmatmul.mubr.bf16.gmra.mrb[0].mxu0 %v3464
      %v3593 = vpop.f32.mrb[0].mxu0
      %v3594 = vadd.f32 0.0, %v3593
      %v3595 = vpop.f32.mrb[0].mxu0
      %v3596 = vpop.f32.mrb[0].mxu0
      %v3597 = vadd.f32 0.0, %v3596
      %v3598 = vpop.f32.mrb[0].mxu0
      %3599 = vmatprep.mubr.bf16.mxu0 0
      %3600 = vmatmul.mubr.bf16.gmra.mrb[0].mxu0 %v3467
      %v3601 = vpop.f32.mrb[0].mxu0
      %v3602 = vadd.f32 0.0, %v3601
      %v3603 = vpop.f32.mrb[0].mxu0
      %v3604 = vpop.f32.mrb[0].mxu0
      %v3605 = vadd.f32 0.0, %v3604
      %v3606 = vpop.f32.mrb[0].mxu0
      %3607 = vmatprep.mubr.bf16.mxu0 0
      %3608 = vmatmul.mubr.bf16.gmra.mrb[0].mxu0 %v3470
      %v3609 = vpop.f32.mrb[0].mxu0
      %v3610 = vadd.f32 0.0, %v3609
      %v3611 = vpop.f32.mrb[0].mxu0
      %v3612 = vpop.f32.mrb[0].mxu0
      %v3613 = vadd.f32 0.0, %v3612
      %v3614 = vpop.f32.mrb[0].mxu0
      %3615 = vmatprep.mubr.bf16.mxu0 0
      %3616 = vmatmul.mubr.bf16.gmra.mrb[0].mxu0 %v3473
      %v3617 = vpop.f32.mrb[0].mxu0
      %v3618 = vadd.f32 0.0, %v3617
      %v3619 = vpop.f32.mrb[0].mxu0
      %v3620 = vpop.f32.mrb[0].mxu0
      %v3621 = vadd.f32 0.0, %v3620
      %v3622 = vpop.f32.mrb[0].mxu0
      %3623 = vmatprep.mubr.bf16.mxu0 0
      %3624 = vmatmul.mubr.bf16.gmra.mrb[0].mxu0 %v3476
      %v3625 = vpop.f32.mrb[0].mxu0
      %v3626 = vadd.f32 0.0, %v3625
      %v3627 = vpop.f32.mrb[0].mxu0
      %v3628 = vpop.f32.mrb[0].mxu0
      %v3629 = vadd.f32 0.0, %v3628
      %v3630 = vpop.f32.mrb[0].mxu0
      %3631 = vmatprep.mubr.bf16.mxu0 0
      %3632 = vmatmul.mubr.bf16.gmra.mrb[0].mxu0 %v3479
      %v3633 = vpop.f32.mrb[0].mxu0
      %v3634 = vadd.f32 0.0, %v3633
      %v3635 = vpop.f32.mrb[0].mxu0
      %v3636 = vpop.f32.mrb[0].mxu0
      %v3637 = vadd.f32 0.0, %v3636
      %v3638 = vpop.f32.mrb[0].mxu0
      %3639 = vmatprep.mubr.bf16.mxu0 0
      %3640 = vmatmul.mubr.bf16.gmra.mrb[0].mxu0 %v3482
      %v3641 = vpop.f32.mrb[0].mxu0
      %v3642 = vadd.f32 0.0, %v3641
      %v3643 = vpop.f32.mrb[0].mxu0
      %v3644 = vpop.f32.mrb[0].mxu0
      %v3645 = vadd.f32 0.0, %v3644
      %v3646 = vpop.f32.mrb[0].mxu0
      %3647 = vdwg.mxu0
      %v3648 = vadd.f32 %v3114, %v3522
      %v3649 = vadd.f32 %v3115, %v3525
      %v3650 = vadd.f32 %v3116, %v3530
      %v3651 = vadd.f32 %v3117, %v3533
      %v3652 = vadd.f32 %v3118, %v3538
      %v3653 = vadd.f32 %v3119, %v3541
      %v3654 = vadd.f32 %v3120, %v3546
      %v3655 = vadd.f32 %v3121, %v3549
      %v3656 = vadd.f32 %v3122, %v3554
      %v3657 = vadd.f32 %v3123, %v3557
      %v3658 = vadd.f32 %v3124, %v3562
      %v3659 = vadd.f32 %v3125, %v3565
      %v3660 = vadd.f32 %v3126, %v3570
      %v3661 = vadd.f32 %v3127, %v3573
      %v3662 = vadd.f32 %v3128, %v3578
      %v3663 = vadd.f32 %v3129, %v3581
      %v3664 = vadd.f32 %v3130, %v3586
      %v3665 = vadd.f32 %v3131, %v3589
      %v3666 = vadd.f32 %v3132, %v3594
      %v3667 = vadd.f32 %v3133, %v3597
      %v3668 = vadd.f32 %v3134, %v3602
      %v3669 = vadd.f32 %v3135, %v3605
      %v3670 = vadd.f32 %v3136, %v3610
      %v3671 = vadd.f32 %v3137, %v3613
      %v3672 = vadd.f32 %v3138, %v3618
      %v3673 = vadd.f32 %v3139, %v3621
      %v3674 = vadd.f32 %v3140, %v3626
      %v3675 = vadd.f32 %v3141, %v3629
      %v3676 = vadd.f32 %v3142, %v3634
      %v3677 = vadd.f32 %v3143, %v3637
      %v3678 = vadd.f32 %v3144, %v3642
      %v3679 = vadd.f32 %v3145, %v3645
      %s3680 = scalar_lea.vmem [#allocation2], 32
      %v3681 = vld [vmem:[%s3680] sm:$0xf8]
      %v3682 = vld [vmem:[%s3680 + $0x8] sm:$0xf]
      %v3683 = vld [vmem:[%s3680 + $0x10] sm:$0xf8]
      %v3684 = vld [vmem:[%s3680 + $0x18] sm:$0xf]
      %v3685 = vld [vmem:[%s3680 + $0x20] sm:$0xf8]
      %v3686 = vld [vmem:[%s3680 + $0x28] sm:$0xf]
      %v3687 = vld [vmem:[%s3680 + $0x30] sm:$0xf8]
      %v3688 = vld [vmem:[%s3680 + $0x38] sm:$0xf]
      %v3689 = vld [vmem:[%s3680 + $0x40] sm:$0xf8]
      %v3690 = vld [vmem:[%s3680 + $0x48] sm:$0xf]
      %v3691 = vld [vmem:[%s3680 + $0x50] sm:$0xf8]
      %v3692 = vld [vmem:[%s3680 + $0x58] sm:$0xf]
      %v3693 = vld [vmem:[%s3680 + $0x60] sm:$0xf8]
      %v3694 = vld [vmem:[%s3680 + $0x68] sm:$0xf]
      %v3695 = vld [vmem:[%s3680 + $0x70] sm:$0xf8]
      %v3696 = vld [vmem:[%s3680 + $0x78] sm:$0xf]
      %v3697 = vld [vmem:[%s3680 + $0x80] sm:$0xf8]
      %v3698 = vld [vmem:[%s3680 + $0x88] sm:$0xf]
      %v3699 = vld [vmem:[%s3680 + $0x90] sm:$0xf8]
      %v3700 = vld [vmem:[%s3680 + $0x98] sm:$0xf]
      %v3701 = vld [vmem:[%s3680 + $0xa0] sm:$0xf8]
      %v3702 = vld [vmem:[%s3680 + $0xa8] sm:$0xf]
      %v3703 = vld [vmem:[%s3680 + $0xb0] sm:$0xf8]
      %v3704 = vld [vmem:[%s3680 + $0xb8] sm:$0xf]
      %v3705 = vld [vmem:[%s3680 + $0xc0] sm:$0xf8]
      %v3706 = vld [vmem:[%s3680 + $0xc8] sm:$0xf]
      %v3707 = vld [vmem:[%s3680 + $0xd0] sm:$0xf8]
      %v3708 = vld [vmem:[%s3680 + $0xd8] sm:$0xf]
      %v3709 = vld [vmem:[%s3680 + $0xe0] sm:$0xf8]
      %v3710 = vld [vmem:[%s3680 + $0xe8] sm:$0xf]
      %v3711 = vld [vmem:[%s3680 + $0xf0] sm:$0xf8]
      %v3712 = vld [vmem:[%s3680 + $0xf8] sm:$0xf]
      %v3714 = vshrl.u32 %v3681, 16
      %v3716 = vrot.slane %v3714, 3
      %v3717 = vshll.u32 %v3681, 16
      %v3719 = vrot.slane %v3717, 4
      %v3720 = vor.u32 %v3716, %v3719
      %v3722 = vshrl.u32 %v3682, 16
      %v3724 = vrot.slane %v3722, 3
      %v3725 = vshll.u32 %v3682, 16
      %v3727 = vrot.slane %v3725, 4
      %v3728 = vor.u32 %v3724, %v3727
      %v3729 = vsel %vm920, %v3720, %v3728
      %v3731 = vshrl.u32 %v3683, 16
      %v3733 = vrot.slane %v3731, 3
      %v3734 = vshll.u32 %v3683, 16
      %v3736 = vrot.slane %v3734, 4
      %v3737 = vor.u32 %v3733, %v3736
      %v3739 = vshrl.u32 %v3684, 16
      %v3741 = vrot.slane %v3739, 3
      %v3742 = vshll.u32 %v3684, 16
      %v3744 = vrot.slane %v3742, 4
      %v3745 = vor.u32 %v3741, %v3744
      %v3746 = vsel %vm920, %v3737, %v3745
      %v3748 = vshrl.u32 %v3685, 16
      %v3750 = vrot.slane %v3748, 3
      %v3751 = vshll.u32 %v3685, 16
      %v3753 = vrot.slane %v3751, 4
      %v3754 = vor.u32 %v3750, %v3753
      %v3756 = vshrl.u32 %v3686, 16
      %v3758 = vrot.slane %v3756, 3
      %v3759 = vshll.u32 %v3686, 16
      %v3761 = vrot.slane %v3759, 4
      %v3762 = vor.u32 %v3758, %v3761
      %v3763 = vsel %vm920, %v3754, %v3762
      %v3765 = vshrl.u32 %v3687, 16
      %v3767 = vrot.slane %v3765, 3
      %v3768 = vshll.u32 %v3687, 16
      %v3770 = vrot.slane %v3768, 4
      %v3771 = vor.u32 %v3767, %v3770
      %v3773 = vshrl.u32 %v3688, 16
      %v3775 = vrot.slane %v3773, 3
      %v3776 = vshll.u32 %v3688, 16
      %v3778 = vrot.slane %v3776, 4
      %v3779 = vor.u32 %v3775, %v3778
      %v3780 = vsel %vm920, %v3771, %v3779
      %v3782 = vshrl.u32 %v3689, 16
      %v3784 = vrot.slane %v3782, 3
      %v3785 = vshll.u32 %v3689, 16
      %v3787 = vrot.slane %v3785, 4
      %v3788 = vor.u32 %v3784, %v3787
      %v3790 = vshrl.u32 %v3690, 16
      %v3792 = vrot.slane %v3790, 3
      %v3793 = vshll.u32 %v3690, 16
      %v3795 = vrot.slane %v3793, 4
      %v3796 = vor.u32 %v3792, %v3795
      %v3797 = vsel %vm920, %v3788, %v3796
      %v3799 = vshrl.u32 %v3691, 16
      %v3801 = vrot.slane %v3799, 3
      %v3802 = vshll.u32 %v3691, 16
      %v3804 = vrot.slane %v3802, 4
      %v3805 = vor.u32 %v3801, %v3804
      %v3807 = vshrl.u32 %v3692, 16
      %v3809 = vrot.slane %v3807, 3
      %v3810 = vshll.u32 %v3692, 16
      %v3812 = vrot.slane %v3810, 4
      %v3813 = vor.u32 %v3809, %v3812
      %v3814 = vsel %vm920, %v3805, %v3813
      %v3816 = vshrl.u32 %v3693, 16
      %v3818 = vrot.slane %v3816, 3
      %v3819 = vshll.u32 %v3693, 16
      %v3821 = vrot.slane %v3819, 4
      %v3822 = vor.u32 %v3818, %v3821
      %v3824 = vshrl.u32 %v3694, 16
      %v3826 = vrot.slane %v3824, 3
      %v3827 = vshll.u32 %v3694, 16
      %v3829 = vrot.slane %v3827, 4
      %v3830 = vor.u32 %v3826, %v3829
      %v3831 = vsel %vm920, %v3822, %v3830
      %v3833 = vshrl.u32 %v3695, 16
      %v3835 = vrot.slane %v3833, 3
      %v3836 = vshll.u32 %v3695, 16
      %v3838 = vrot.slane %v3836, 4
      %v3839 = vor.u32 %v3835, %v3838
      %v3841 = vshrl.u32 %v3696, 16
      %v3843 = vrot.slane %v3841, 3
      %v3844 = vshll.u32 %v3696, 16
      %v3846 = vrot.slane %v3844, 4
      %v3847 = vor.u32 %v3843, %v3846
      %v3848 = vsel %vm920, %v3839, %v3847
      %v3850 = vshrl.u32 %v3697, 16
      %v3852 = vrot.slane %v3850, 3
      %v3853 = vshll.u32 %v3697, 16
      %v3855 = vrot.slane %v3853, 4
      %v3856 = vor.u32 %v3852, %v3855
      %v3858 = vshrl.u32 %v3698, 16
      %v3860 = vrot.slane %v3858, 3
      %v3861 = vshll.u32 %v3698, 16
      %v3863 = vrot.slane %v3861, 4
      %v3864 = vor.u32 %v3860, %v3863
      %v3865 = vsel %vm920, %v3856, %v3864
      %v3867 = vshrl.u32 %v3699, 16
      %v3869 = vrot.slane %v3867, 3
      %v3870 = vshll.u32 %v3699, 16
      %v3872 = vrot.slane %v3870, 4
      %v3873 = vor.u32 %v3869, %v3872
      %v3875 = vshrl.u32 %v3700, 16
      %v3877 = vrot.slane %v3875, 3
      %v3878 = vshll.u32 %v3700, 16
      %v3880 = vrot.slane %v3878, 4
      %v3881 = vor.u32 %v3877, %v3880
      %v3882 = vsel %vm920, %v3873, %v3881
      %v3884 = vshrl.u32 %v3701, 16
      %v3886 = vrot.slane %v3884, 3
      %v3887 = vshll.u32 %v3701, 16
      %v3889 = vrot.slane %v3887, 4
      %v3890 = vor.u32 %v3886, %v3889
      %v3892 = vshrl.u32 %v3702, 16
      %v3894 = vrot.slane %v3892, 3
      %v3895 = vshll.u32 %v3702, 16
      %v3897 = vrot.slane %v3895, 4
      %v3898 = vor.u32 %v3894, %v3897
      %v3899 = vsel %vm920, %v3890, %v3898
      %v3901 = vshrl.u32 %v3703, 16
      %v3903 = vrot.slane %v3901, 3
      %v3904 = vshll.u32 %v3703, 16
      %v3906 = vrot.slane %v3904, 4
      %v3907 = vor.u32 %v3903, %v3906
      %v3909 = vshrl.u32 %v3704, 16
      %v3911 = vrot.slane %v3909, 3
      %v3912 = vshll.u32 %v3704, 16
      %v3914 = vrot.slane %v3912, 4
      %v3915 = vor.u32 %v3911, %v3914
      %v3916 = vsel %vm920, %v3907, %v3915
      %v3918 = vshrl.u32 %v3705, 16
      %v3920 = vrot.slane %v3918, 3
      %v3921 = vshll.u32 %v3705, 16
      %v3923 = vrot.slane %v3921, 4
      %v3924 = vor.u32 %v3920, %v3923
      %v3926 = vshrl.u32 %v3706, 16
      %v3928 = vrot.slane %v3926, 3
      %v3929 = vshll.u32 %v3706, 16
      %v3931 = vrot.slane %v3929, 4
      %v3932 = vor.u32 %v3928, %v3931
      %v3933 = vsel %vm920, %v3924, %v3932
      %v3935 = vshrl.u32 %v3707, 16
      %v3937 = vrot.slane %v3935, 3
      %v3938 = vshll.u32 %v3707, 16
      %v3940 = vrot.slane %v3938, 4
      %v3941 = vor.u32 %v3937, %v3940
      %v3943 = vshrl.u32 %v3708, 16
      %v3945 = vrot.slane %v3943, 3
      %v3946 = vshll.u32 %v3708, 16
      %v3948 = vrot.slane %v3946, 4
      %v3949 = vor.u32 %v3945, %v3948
      %v3950 = vsel %vm920, %v3941, %v3949
      %v3952 = vshrl.u32 %v3709, 16
      %v3954 = vrot.slane %v3952, 3
      %v3955 = vshll.u32 %v3709, 16
      %v3957 = vrot.slane %v3955, 4
      %v3958 = vor.u32 %v3954, %v3957
      %v3960 = vshrl.u32 %v3710, 16
      %v3962 = vrot.slane %v3960, 3
      %v3963 = vshll.u32 %v3710, 16
      %v3965 = vrot.slane %v3963, 4
      %v3966 = vor.u32 %v3962, %v3965
      %v3967 = vsel %vm920, %v3958, %v3966
      %v3969 = vshrl.u32 %v3711, 16
      %v3971 = vrot.slane %v3969, 3
      %v3972 = vshll.u32 %v3711, 16
      %v3974 = vrot.slane %v3972, 4
      %v3975 = vor.u32 %v3971, %v3974
      %v3977 = vshrl.u32 %v3712, 16
      %v3979 = vrot.slane %v3977, 3
      %v3980 = vshll.u32 %v3712, 16
      %v3982 = vrot.slane %v3980, 4
      %v3983 = vor.u32 %v3979, %v3982
      %v3984 = vsel %vm920, %v3975, %v3983
      %s3985 = scalar_lea.vmem %s3, 24
      %v3986 = vld [vmem:[%s3985] sm:$0xf]
      %v3988 = vsel %vm1293, %v3729, 0
      %v3991 = vsel %vm1293, %v3746, 0
      %v3994 = vsel %vm1293, %v3763, 0
      %v3997 = vsel %vm1293, %v3780, 0
      %v4000 = vsel %vm1293, %v3797, 0
      %v4003 = vsel %vm1293, %v3814, 0
      %v4006 = vsel %vm1293, %v3831, 0
      %v4009 = vsel %vm1293, %v3848, 0
      %v4012 = vsel %vm1293, %v3865, 0
      %v4015 = vsel %vm1293, %v3882, 0
      %v4018 = vsel %vm1293, %v3899, 0
      %v4021 = vsel %vm1293, %v3916, 0
      %v4024 = vsel %vm1293, %v3933, 0
      %v4027 = vsel %vm1293, %v3950, 0
      %v4030 = vsel %vm1293, %v3967, 0
      %v4033 = vsel %vm1293, %v3984, 0
      %v4036 = vsel %vm1342, %v3986, 0
      %4038 = vmatprep.subr.bf16.mxu0 0
      %4039 = vmatpush1.bf16.msra.mxu0 %v4036
      %4040 = vmatprep.subr.bf16.mxu0 0
      %4041 = vmatpush1.bf16.msra.mxu0 0
      %4042 = vmatprep.subr.bf16.mxu0 0
      %4043 = vmatpush1.bf16.msra.mxu0 0
      %4044 = vmatprep.subr.bf16.mxu0 0
      %4045 = vmatpush1.bf16.msra.mxu0 0
      %4046 = vmatprep.subr.bf16.mxu0 0
      %4047 = vmatpush1.bf16.msra.mxu0 0
      %4048 = vmatprep.subr.bf16.mxu0 0
      %4049 = vmatpush1.bf16.msra.mxu0 0
      %4050 = vmatprep.subr.bf16.mxu0 0
      %4051 = vmatpush1.bf16.msra.mxu0 0
      %4052 = vmatprep.subr.bf16.mxu0 0
      %4053 = vmatpush1.bf16.msra.mxu0 0
      %4054 = vmatprep.subr.bf16.mxu0 0
      %4055 = vmatpush1.bf16.msra.mxu0 0
      %4056 = vmatprep.subr.bf16.mxu0 0
      %4057 = vmatpush1.bf16.msra.mxu0 0
      %4058 = vmatprep.subr.bf16.mxu0 0
      %4059 = vmatpush1.bf16.msra.mxu0 0
      %4060 = vmatprep.subr.bf16.mxu0 0
      %4061 = vmatpush1.bf16.msra.mxu0 0
      %4062 = vmatprep.subr.bf16.mxu0 0
      %4063 = vmatpush1.bf16.msra.mxu0 0
      %4064 = vmatprep.subr.bf16.mxu0 0
      %4065 = vmatpush1.bf16.msra.mxu0 0
      %4066 = vmatprep.subr.bf16.mxu0 0
      %4067 = vmatpush1.bf16.msra.mxu0 0
      %4068 = vmatprep.subr.bf16.mxu0 0
      %4069 = vmatpush1.bf16.msra.mxu0 0
      %4070 = vmatprep.mubr.bf16.mxu0 0
      %4071 = vmatmul.mubr.bf16.gmra.mrb[0].mxu0 %v3988
      %v4072 = vpop.f32.mrb[0].mxu0
      %v4073 = vadd.f32 0.0, %v4072
      %v4074 = vpop.f32.mrb[0].mxu0
      %v4075 = vpop.f32.mrb[0].mxu0
      %v4076 = vadd.f32 0.0, %v4075
      %v4077 = vpop.f32.mrb[0].mxu0
      %4078 = vmatprep.mubr.bf16.mxu0 0
      %4079 = vmatmul.mubr.bf16.gmra.mrb[0].mxu0 %v3991
      %v4080 = vpop.f32.mrb[0].mxu0
      %v4081 = vadd.f32 0.0, %v4080
      %v4082 = vpop.f32.mrb[0].mxu0
      %v4083 = vpop.f32.mrb[0].mxu0
      %v4084 = vadd.f32 0.0, %v4083
      %v4085 = vpop.f32.mrb[0].mxu0
      %4086 = vmatprep.mubr.bf16.mxu0 0
      %4087 = vmatmul.mubr.bf16.gmra.mrb[0].mxu0 %v3994
      %v4088 = vpop.f32.mrb[0].mxu0
      %v4089 = vadd.f32 0.0, %v4088
      %v4090 = vpop.f32.mrb[0].mxu0
      %v4091 = vpop.f32.mrb[0].mxu0
      %v4092 = vadd.f32 0.0, %v4091
      %v4093 = vpop.f32.mrb[0].mxu0
      %4094 = vmatprep.mubr.bf16.mxu0 0
      %4095 = vmatmul.mubr.bf16.gmra.mrb[0].mxu0 %v3997
      %v4096 = vpop.f32.mrb[0].mxu0
      %v4097 = vadd.f32 0.0, %v4096
      %v4098 = vpop.f32.mrb[0].mxu0
      %v4099 = vpop.f32.mrb[0].mxu0
      %v4100 = vadd.f32 0.0, %v4099
      %v4101 = vpop.f32.mrb[0].mxu0
      %4102 = vmatprep.mubr.bf16.mxu0 0
      %4103 = vmatmul.mubr.bf16.gmra.mrb[0].mxu0 %v4000
      %v4104 = vpop.f32.mrb[0].mxu0
      %v4105 = vadd.f32 0.0, %v4104
      %v4106 = vpop.f32.mrb[0].mxu0
      %v4107 = vpop.f32.mrb[0].mxu0
      %v4108 = vadd.f32 0.0, %v4107
      %v4109 = vpop.f32.mrb[0].mxu0
      %4110 = vmatprep.mubr.bf16.mxu0 0
      %4111 = vmatmul.mubr.bf16.gmra.mrb[0].mxu0 %v4003
      %v4112 = vpop.f32.mrb[0].mxu0
      %v4113 = vadd.f32 0.0, %v4112
      %v4114 = vpop.f32.mrb[0].mxu0
      %v4115 = vpop.f32.mrb[0].mxu0
      %v4116 = vadd.f32 0.0, %v4115
      %v4117 = vpop.f32.mrb[0].mxu0
      %4118 = vmatprep.mubr.bf16.mxu0 0
      %4119 = vmatmul.mubr.bf16.gmra.mrb[0].mxu0 %v4006
      %v4120 = vpop.f32.mrb[0].mxu0
      %v4121 = vadd.f32 0.0, %v4120
      %v4122 = vpop.f32.mrb[0].mxu0
      %v4123 = vpop.f32.mrb[0].mxu0
      %v4124 = vadd.f32 0.0, %v4123
      %v4125 = vpop.f32.mrb[0].mxu0
      %4126 = vmatprep.mubr.bf16.mxu0 0
      %4127 = vmatmul.mubr.bf16.gmra.mrb[0].mxu0 %v4009
      %v4128 = vpop.f32.mrb[0].mxu0
      %v4129 = vadd.f32 0.0, %v4128
      %v4130 = vpop.f32.mrb[0].mxu0
      %v4131 = vpop.f32.mrb[0].mxu0
      %v4132 = vadd.f32 0.0, %v4131
      %v4133 = vpop.f32.mrb[0].mxu0
      %4134 = vmatprep.mubr.bf16.mxu0 0
      %4135 = vmatmul.mubr.bf16.gmra.mrb[0].mxu0 %v4012
      %v4136 = vpop.f32.mrb[0].mxu0
      %v4137 = vadd.f32 0.0, %v4136
      %v4138 = vpop.f32.mrb[0].mxu0
      %v4139 = vpop.f32.mrb[0].mxu0
      %v4140 = vadd.f32 0.0, %v4139
      %v4141 = vpop.f32.mrb[0].mxu0
      %4142 = vmatprep.mubr.bf16.mxu0 0
      %4143 = vmatmul.mubr.bf16.gmra.mrb[0].mxu0 %v4015
      %v4144 = vpop.f32.mrb[0].mxu0
      %v4145 = vadd.f32 0.0, %v4144
      %v4146 = vpop.f32.mrb[0].mxu0
      %v4147 = vpop.f32.mrb[0].mxu0
      %v4148 = vadd.f32 0.0, %v4147
      %v4149 = vpop.f32.mrb[0].mxu0
      %4150 = vmatprep.mubr.bf16.mxu0 0
      %4151 = vmatmul.mubr.bf16.gmra.mrb[0].mxu0 %v4018
      %v4152 = vpop.f32.mrb[0].mxu0
      %v4153 = vadd.f32 0.0, %v4152
      %v4154 = vpop.f32.mrb[0].mxu0
      %v4155 = vpop.f32.mrb[0].mxu0
      %v4156 = vadd.f32 0.0, %v4155
      %v4157 = vpop.f32.mrb[0].mxu0
      %4158 = vmatprep.mubr.bf16.mxu0 0
      %4159 = vmatmul.mubr.bf16.gmra.mrb[0].mxu0 %v4021
      %v4160 = vpop.f32.mrb[0].mxu0
      %v4161 = vadd.f32 0.0, %v4160
      %v4162 = vpop.f32.mrb[0].mxu0
      %v4163 = vpop.f32.mrb[0].mxu0
      %v4164 = vadd.f32 0.0, %v4163
      %v4165 = vpop.f32.mrb[0].mxu0
      %4166 = vmatprep.mubr.bf16.mxu0 0
      %4167 = vmatmul.mubr.bf16.gmra.mrb[0].mxu0 %v4024
      %v4168 = vpop.f32.mrb[0].mxu0
      %v4169 = vadd.f32 0.0, %v4168
      %v4170 = vpop.f32.mrb[0].mxu0
      %v4171 = vpop.f32.mrb[0].mxu0
      %v4172 = vadd.f32 0.0, %v4171
      %v4173 = vpop.f32.mrb[0].mxu0
      %4174 = vmatprep.mubr.bf16.mxu0 0
      %4175 = vmatmul.mubr.bf16.gmra.mrb[0].mxu0 %v4027
      %v4176 = vpop.f32.mrb[0].mxu0
      %v4177 = vadd.f32 0.0, %v4176
      %v4178 = vpop.f32.mrb[0].mxu0
      %v4179 = vpop.f32.mrb[0].mxu0
      %v4180 = vadd.f32 0.0, %v4179
      %v4181 = vpop.f32.mrb[0].mxu0
      %4182 = vmatprep.mubr.bf16.mxu0 0
      %4183 = vmatmul.mubr.bf16.gmra.mrb[0].mxu0 %v4030
      %v4184 = vpop.f32.mrb[0].mxu0
      %v4185 = vadd.f32 0.0, %v4184
      %v4186 = vpop.f32.mrb[0].mxu0
      %v4187 = vpop.f32.mrb[0].mxu0
      %v4188 = vadd.f32 0.0, %v4187
      %v4189 = vpop.f32.mrb[0].mxu0
      %4190 = vmatprep.mubr.bf16.mxu0 0
      %4191 = vmatmul.mubr.bf16.gmra.mrb[0].mxu0 %v4033
      %v4192 = vpop.f32.mrb[0].mxu0
      %v4193 = vadd.f32 0.0, %v4192
      %v4194 = vpop.f32.mrb[0].mxu0
      %v4195 = vpop.f32.mrb[0].mxu0
      %v4196 = vadd.f32 0.0, %v4195
      %v4197 = vpop.f32.mrb[0].mxu0
      %4198 = vdwg.mxu0
      %v4199 = vadd.f32 %v3648, %v4073
      %v4200 = vadd.f32 %v3649, %v4076
      %v4201 = vadd.f32 %v3650, %v4081
      %v4202 = vadd.f32 %v3651, %v4084
      %v4203 = vadd.f32 %v3652, %v4089
      %v4204 = vadd.f32 %v3653, %v4092
      %v4205 = vadd.f32 %v3654, %v4097
      %v4206 = vadd.f32 %v3655, %v4100
      %v4207 = vadd.f32 %v3656, %v4105
      %v4208 = vadd.f32 %v3657, %v4108
      %v4209 = vadd.f32 %v3658, %v4113
      %v4210 = vadd.f32 %v3659, %v4116
      %v4211 = vadd.f32 %v3660, %v4121
      %v4212 = vadd.f32 %v3661, %v4124
      %v4213 = vadd.f32 %v3662, %v4129
      %v4214 = vadd.f32 %v3663, %v4132
      %v4215 = vadd.f32 %v3664, %v4137
      %v4216 = vadd.f32 %v3665, %v4140
      %v4217 = vadd.f32 %v3666, %v4145
      %v4218 = vadd.f32 %v3667, %v4148
      %v4219 = vadd.f32 %v3668, %v4153
      %v4220 = vadd.f32 %v3669, %v4156
      %v4221 = vadd.f32 %v3670, %v4161
      %v4222 = vadd.f32 %v3671, %v4164
      %v4223 = vadd.f32 %v3672, %v4169
      %v4224 = vadd.f32 %v3673, %v4172
      %v4225 = vadd.f32 %v3674, %v4177
      %v4226 = vadd.f32 %v3675, %v4180
      %v4227 = vadd.f32 %v3676, %v4185
      %v4228 = vadd.f32 %v3677, %v4188
      %v4229 = vadd.f32 %v3678, %v4193
      %v4230 = vadd.f32 %v3679, %v4196
      %v4231 = vld [vmem:[%s3680] sm:$0xf0]
      %v4232 = vld [vmem:[%s3680 + $0x10] sm:$0xf0]
      %v4233 = vld [vmem:[%s3680 + $0x20] sm:$0xf0]
      %v4234 = vld [vmem:[%s3680 + $0x30] sm:$0xf0]
      %v4235 = vld [vmem:[%s3680 + $0x40] sm:$0xf0]
      %v4236 = vld [vmem:[%s3680 + $0x50] sm:$0xf0]
      %v4237 = vld [vmem:[%s3680 + $0x60] sm:$0xf0]
      %v4238 = vld [vmem:[%s3680 + $0x70] sm:$0xf0]
      %v4239 = vld [vmem:[%s3680 + $0x80] sm:$0xf0]
      %v4240 = vld [vmem:[%s3680 + $0x90] sm:$0xf0]
      %v4241 = vld [vmem:[%s3680 + $0xa0] sm:$0xf0]
      %v4242 = vld [vmem:[%s3680 + $0xb0] sm:$0xf0]
      %v4243 = vld [vmem:[%s3680 + $0xc0] sm:$0xf0]
      %v4244 = vld [vmem:[%s3680 + $0xd0] sm:$0xf0]
      %v4245 = vld [vmem:[%s3680 + $0xe0] sm:$0xf0]
      %v4246 = vld [vmem:[%s3680 + $0xf0] sm:$0xf0]
      %v4279 = vrot.slane %v4231, 4
      %v4280 = vrot.slane %v3682, 4
      %v4281 = vsel %vm1242, %v4279, %v4280
      %v4282 = vrot.slane %v4232, 4
      %v4283 = vrot.slane %v3684, 4
      %v4284 = vsel %vm1242, %v4282, %v4283
      %v4285 = vrot.slane %v4233, 4
      %v4286 = vrot.slane %v3686, 4
      %v4287 = vsel %vm1242, %v4285, %v4286
      %v4288 = vrot.slane %v4234, 4
      %v4289 = vrot.slane %v3688, 4
      %v4290 = vsel %vm1242, %v4288, %v4289
      %v4291 = vrot.slane %v4235, 4
      %v4292 = vrot.slane %v3690, 4
      %v4293 = vsel %vm1242, %v4291, %v4292
      %v4294 = vrot.slane %v4236, 4
      %v4295 = vrot.slane %v3692, 4
      %v4296 = vsel %vm1242, %v4294, %v4295
      %v4297 = vrot.slane %v4237, 4
      %v4298 = vrot.slane %v3694, 4
      %v4299 = vsel %vm1242, %v4297, %v4298
      %v4300 = vrot.slane %v4238, 4
      %v4301 = vrot.slane %v3696, 4
      %v4302 = vsel %vm1242, %v4300, %v4301
      %v4303 = vrot.slane %v4239, 4
      %v4304 = vrot.slane %v3698, 4
      %v4305 = vsel %vm1242, %v4303, %v4304
      %v4306 = vrot.slane %v4240, 4
      %v4307 = vrot.slane %v3700, 4
      %v4308 = vsel %vm1242, %v4306, %v4307
      %v4309 = vrot.slane %v4241, 4
      %v4310 = vrot.slane %v3702, 4
      %v4311 = vsel %vm1242, %v4309, %v4310
      %v4312 = vrot.slane %v4242, 4
      %v4313 = vrot.slane %v3704, 4
      %v4314 = vsel %vm1242, %v4312, %v4313
      %v4315 = vrot.slane %v4243, 4
      %v4316 = vrot.slane %v3706, 4
      %v4317 = vsel %vm1242, %v4315, %v4316
      %v4318 = vrot.slane %v4244, 4
      %v4319 = vrot.slane %v3708, 4
      %v4320 = vsel %vm1242, %v4318, %v4319
      %v4321 = vrot.slane %v4245, 4
      %v4322 = vrot.slane %v3710, 4
      %v4323 = vsel %vm1242, %v4321, %v4322
      %v4324 = vrot.slane %v4246, 4
      %v4325 = vrot.slane %v3712, 4
      %v4326 = vsel %vm1242, %v4324, %v4325
      %s4327 = scalar_lea.vmem %s3, 28
      %v4328 = vld [vmem:[%s4327] sm:$0xf]
      %v4330 = vsel %vm1293, %v4281, 0
      %v4333 = vsel %vm1293, %v4284, 0
      %v4336 = vsel %vm1293, %v4287, 0
      %v4339 = vsel %vm1293, %v4290, 0
      %v4342 = vsel %vm1293, %v4293, 0
      %v4345 = vsel %vm1293, %v4296, 0
      %v4348 = vsel %vm1293, %v4299, 0
      %v4351 = vsel %vm1293, %v4302, 0
      %v4354 = vsel %vm1293, %v4305, 0
      %v4357 = vsel %vm1293, %v4308, 0
      %v4360 = vsel %vm1293, %v4311, 0
      %v4363 = vsel %vm1293, %v4314, 0
      %v4366 = vsel %vm1293, %v4317, 0
      %v4369 = vsel %vm1293, %v4320, 0
      %v4372 = vsel %vm1293, %v4323, 0
      %v4375 = vsel %vm1293, %v4326, 0
      %v4378 = vsel %vm1342, %v4328, 0
      %4380 = vmatprep.subr.bf16.mxu0 0
      %4381 = vmatpush1.bf16.msra.mxu0 %v4378
      %4382 = vmatprep.subr.bf16.mxu0 0
      %4383 = vmatpush1.bf16.msra.mxu0 0
      %4384 = vmatprep.subr.bf16.mxu0 0
      %4385 = vmatpush1.bf16.msra.mxu0 0
      %4386 = vmatprep.subr.bf16.mxu0 0
      %4387 = vmatpush1.bf16.msra.mxu0 0
      %4388 = vmatprep.subr.bf16.mxu0 0
      %4389 = vmatpush1.bf16.msra.mxu0 0
      %4390 = vmatprep.subr.bf16.mxu0 0
      %4391 = vmatpush1.bf16.msra.mxu0 0
      %4392 = vmatprep.subr.bf16.mxu0 0
      %4393 = vmatpush1.bf16.msra.mxu0 0
      %4394 = vmatprep.subr.bf16.mxu0 0
      %4395 = vmatpush1.bf16.msra.mxu0 0
      %4396 = vmatprep.subr.bf16.mxu0 0
      %4397 = vmatpush1.bf16.msra.mxu0 0
      %4398 = vmatprep.subr.bf16.mxu0 0
      %4399 = vmatpush1.bf16.msra.mxu0 0
      %4400 = vmatprep.subr.bf16.mxu0 0
      %4401 = vmatpush1.bf16.msra.mxu0 0
      %4402 = vmatprep.subr.bf16.mxu0 0
      %4403 = vmatpush1.bf16.msra.mxu0 0
      %4404 = vmatprep.subr.bf16.mxu0 0
      %4405 = vmatpush1.bf16.msra.mxu0 0
      %4406 = vmatprep.subr.bf16.mxu0 0
      %4407 = vmatpush1.bf16.msra.mxu0 0
      %4408 = vmatprep.subr.bf16.mxu0 0
      %4409 = vmatpush1.bf16.msra.mxu0 0
      %4410 = vmatprep.subr.bf16.mxu0 0
      %4411 = vmatpush1.bf16.msra.mxu0 0
      %4412 = vmatprep.mubr.bf16.mxu0 0
      %4413 = vmatmul.mubr.bf16.gmra.mrb[0].mxu0 %v4330
      %v4414 = vpop.f32.mrb[0].mxu0
      %v4415 = vadd.f32 0.0, %v4414
      %v4416 = vpop.f32.mrb[0].mxu0
      %v4417 = vpop.f32.mrb[0].mxu0
      %v4418 = vadd.f32 0.0, %v4417
      %v4419 = vpop.f32.mrb[0].mxu0
      %4420 = vmatprep.mubr.bf16.mxu0 0
      %4421 = vmatmul.mubr.bf16.gmra.mrb[0].mxu0 %v4333
      %v4422 = vpop.f32.mrb[0].mxu0
      %v4423 = vadd.f32 0.0, %v4422
      %v4424 = vpop.f32.mrb[0].mxu0
      %v4425 = vpop.f32.mrb[0].mxu0
      %v4426 = vadd.f32 0.0, %v4425
      %v4427 = vpop.f32.mrb[0].mxu0
      %4428 = vmatprep.mubr.bf16.mxu0 0
      %4429 = vmatmul.mubr.bf16.gmra.mrb[0].mxu0 %v4336
      %v4430 = vpop.f32.mrb[0].mxu0
      %v4431 = vadd.f32 0.0, %v4430
      %v4432 = vpop.f32.mrb[0].mxu0
      %v4433 = vpop.f32.mrb[0].mxu0
      %v4434 = vadd.f32 0.0, %v4433
      %v4435 = vpop.f32.mrb[0].mxu0
      %4436 = vmatprep.mubr.bf16.mxu0 0
      %4437 = vmatmul.mubr.bf16.gmra.mrb[0].mxu0 %v4339
      %v4438 = vpop.f32.mrb[0].mxu0
      %v4439 = vadd.f32 0.0, %v4438
      %v4440 = vpop.f32.mrb[0].mxu0
      %v4441 = vpop.f32.mrb[0].mxu0
      %v4442 = vadd.f32 0.0, %v4441
      %v4443 = vpop.f32.mrb[0].mxu0
      %4444 = vmatprep.mubr.bf16.mxu0 0
      %4445 = vmatmul.mubr.bf16.gmra.mrb[0].mxu0 %v4342
      %v4446 = vpop.f32.mrb[0].mxu0
      %v4447 = vadd.f32 0.0, %v4446
      %v4448 = vpop.f32.mrb[0].mxu0
      %v4449 = vpop.f32.mrb[0].mxu0
      %v4450 = vadd.f32 0.0, %v4449
      %v4451 = vpop.f32.mrb[0].mxu0
      %4452 = vmatprep.mubr.bf16.mxu0 0
      %4453 = vmatmul.mubr.bf16.gmra.mrb[0].mxu0 %v4345
      %v4454 = vpop.f32.mrb[0].mxu0
      %v4455 = vadd.f32 0.0, %v4454
      %v4456 = vpop.f32.mrb[0].mxu0
      %v4457 = vpop.f32.mrb[0].mxu0
      %v4458 = vadd.f32 0.0, %v4457
      %v4459 = vpop.f32.mrb[0].mxu0
      %4460 = vmatprep.mubr.bf16.mxu0 0
      %4461 = vmatmul.mubr.bf16.gmra.mrb[0].mxu0 %v4348
      %v4462 = vpop.f32.mrb[0].mxu0
      %v4463 = vadd.f32 0.0, %v4462
      %v4464 = vpop.f32.mrb[0].mxu0
      %v4465 = vpop.f32.mrb[0].mxu0
      %v4466 = vadd.f32 0.0, %v4465
      %v4467 = vpop.f32.mrb[0].mxu0
      %4468 = vmatprep.mubr.bf16.mxu0 0
      %4469 = vmatmul.mubr.bf16.gmra.mrb[0].mxu0 %v4351
      %v4470 = vpop.f32.mrb[0].mxu0
      %v4471 = vadd.f32 0.0, %v4470
      %v4472 = vpop.f32.mrb[0].mxu0
      %v4473 = vpop.f32.mrb[0].mxu0
      %v4474 = vadd.f32 0.0, %v4473
      %v4475 = vpop.f32.mrb[0].mxu0
      %4476 = vmatprep.mubr.bf16.mxu0 0
      %4477 = vmatmul.mubr.bf16.gmra.mrb[0].mxu0 %v4354
      %v4478 = vpop.f32.mrb[0].mxu0
      %v4479 = vadd.f32 0.0, %v4478
      %v4480 = vpop.f32.mrb[0].mxu0
      %v4481 = vpop.f32.mrb[0].mxu0
      %v4482 = vadd.f32 0.0, %v4481
      %v4483 = vpop.f32.mrb[0].mxu0
      %4484 = vmatprep.mubr.bf16.mxu0 0
      %4485 = vmatmul.mubr.bf16.gmra.mrb[0].mxu0 %v4357
      %v4486 = vpop.f32.mrb[0].mxu0
      %v4487 = vadd.f32 0.0, %v4486
      %v4488 = vpop.f32.mrb[0].mxu0
      %v4489 = vpop.f32.mrb[0].mxu0
      %v4490 = vadd.f32 0.0, %v4489
      %v4491 = vpop.f32.mrb[0].mxu0
      %4492 = vmatprep.mubr.bf16.mxu0 0
      %4493 = vmatmul.mubr.bf16.gmra.mrb[0].mxu0 %v4360
      %v4494 = vpop.f32.mrb[0].mxu0
      %v4495 = vadd.f32 0.0, %v4494
      %v4496 = vpop.f32.mrb[0].mxu0
      %v4497 = vpop.f32.mrb[0].mxu0
      %v4498 = vadd.f32 0.0, %v4497
      %v4499 = vpop.f32.mrb[0].mxu0
      %4500 = vmatprep.mubr.bf16.mxu0 0
      %4501 = vmatmul.mubr.bf16.gmra.mrb[0].mxu0 %v4363
      %v4502 = vpop.f32.mrb[0].mxu0
      %v4503 = vadd.f32 0.0, %v4502
      %v4504 = vpop.f32.mrb[0].mxu0
      %v4505 = vpop.f32.mrb[0].mxu0
      %v4506 = vadd.f32 0.0, %v4505
      %v4507 = vpop.f32.mrb[0].mxu0
      %4508 = vmatprep.mubr.bf16.mxu0 0
      %4509 = vmatmul.mubr.bf16.gmra.mrb[0].mxu0 %v4366
      %v4510 = vpop.f32.mrb[0].mxu0
      %v4511 = vadd.f32 0.0, %v4510
      %v4512 = vpop.f32.mrb[0].mxu0
      %v4513 = vpop.f32.mrb[0].mxu0
      %v4514 = vadd.f32 0.0, %v4513
      %v4515 = vpop.f32.mrb[0].mxu0
      %4516 = vmatprep.mubr.bf16.mxu0 0
      %4517 = vmatmul.mubr.bf16.gmra.mrb[0].mxu0 %v4369
      %v4518 = vpop.f32.mrb[0].mxu0
      %v4519 = vadd.f32 0.0, %v4518
      %v4520 = vpop.f32.mrb[0].mxu0
      %v4521 = vpop.f32.mrb[0].mxu0
      %v4522 = vadd.f32 0.0, %v4521
      %v4523 = vpop.f32.mrb[0].mxu0
      %4524 = vmatprep.mubr.bf16.mxu0 0
      %4525 = vmatmul.mubr.bf16.gmra.mrb[0].mxu0 %v4372
      %v4526 = vpop.f32.mrb[0].mxu0
      %v4527 = vadd.f32 0.0, %v4526
      %v4528 = vpop.f32.mrb[0].mxu0
      %v4529 = vpop.f32.mrb[0].mxu0
      %v4530 = vadd.f32 0.0, %v4529
      %v4531 = vpop.f32.mrb[0].mxu0
      %4532 = vmatprep.mubr.bf16.mxu0 0
      %4533 = vmatmul.mubr.bf16.gmra.mrb[0].mxu0 %v4375
      %v4534 = vpop.f32.mrb[0].mxu0
      %v4535 = vadd.f32 0.0, %v4534
      %v4536 = vpop.f32.mrb[0].mxu0
      %v4537 = vpop.f32.mrb[0].mxu0
      %v4538 = vadd.f32 0.0, %v4537
      %v4539 = vpop.f32.mrb[0].mxu0
      %4540 = vdwg.mxu0
      %v4541 = vadd.f32 %v4199, %v4415
      %v4542 = vadd.f32 %v4200, %v4418
      %v4543 = vadd.f32 %v4201, %v4423
      %v4544 = vadd.f32 %v4202, %v4426
      %v4545 = vadd.f32 %v4203, %v4431
      %v4546 = vadd.f32 %v4204, %v4434
      %v4547 = vadd.f32 %v4205, %v4439
      %v4548 = vadd.f32 %v4206, %v4442
      %v4549 = vadd.f32 %v4207, %v4447
      %v4550 = vadd.f32 %v4208, %v4450
      %v4551 = vadd.f32 %v4209, %v4455
      %v4552 = vadd.f32 %v4210, %v4458
      %v4553 = vadd.f32 %v4211, %v4463
      %v4554 = vadd.f32 %v4212, %v4466
      %v4555 = vadd.f32 %v4213, %v4471
      %v4556 = vadd.f32 %v4214, %v4474
      %v4557 = vadd.f32 %v4215, %v4479
      %v4558 = vadd.f32 %v4216, %v4482
      %v4559 = vadd.f32 %v4217, %v4487
      %v4560 = vadd.f32 %v4218, %v4490
      %v4561 = vadd.f32 %v4219, %v4495
      %v4562 = vadd.f32 %v4220, %v4498
      %v4563 = vadd.f32 %v4221, %v4503
      %v4564 = vadd.f32 %v4222, %v4506
      %v4565 = vadd.f32 %v4223, %v4511
      %v4566 = vadd.f32 %v4224, %v4514
      %v4567 = vadd.f32 %v4225, %v4519
      %v4568 = vadd.f32 %v4226, %v4522
      %v4569 = vadd.f32 %v4227, %v4527
      %v4570 = vadd.f32 %v4228, %v4530
      %v4571 = vadd.f32 %v4229, %v4535
      %v4572 = vadd.f32 %v4230, %v4538
      %v4573 = vld [vmem:[%s3680 + $0x8] sm:$0x1f]
      %v4574 = vld [vmem:[%s3680 + $0x18] sm:$0x1f]
      %v4575 = vld [vmem:[%s3680 + $0x28] sm:$0x1f]
      %v4576 = vld [vmem:[%s3680 + $0x38] sm:$0x1f]
      %v4577 = vld [vmem:[%s3680 + $0x48] sm:$0x1f]
      %v4578 = vld [vmem:[%s3680 + $0x58] sm:$0x1f]
      %v4579 = vld [vmem:[%s3680 + $0x68] sm:$0x1f]
      %v4580 = vld [vmem:[%s3680 + $0x78] sm:$0x1f]
      %v4581 = vld [vmem:[%s3680 + $0x88] sm:$0x1f]
      %v4582 = vld [vmem:[%s3680 + $0x98] sm:$0x1f]
      %v4583 = vld [vmem:[%s3680 + $0xa8] sm:$0x1f]
      %v4584 = vld [vmem:[%s3680 + $0xb8] sm:$0x1f]
      %v4585 = vld [vmem:[%s3680 + $0xc8] sm:$0x1f]
      %v4586 = vld [vmem:[%s3680 + $0xd8] sm:$0x1f]
      %v4587 = vld [vmem:[%s3680 + $0xe8] sm:$0x1f]
      %v4588 = vld [vmem:[%s3680 + $0xf8] sm:$0x1f]
      %v4590 = vshrl.u32 %v4231, 16
      %v4592 = vrot.slane %v4590, 4
      %v4593 = vshll.u32 %v4231, 16
      %v4595 = vrot.slane %v4593, 5
      %v4596 = vor.u32 %v4592, %v4595
      %v4598 = vshrl.u32 %v4573, 16
      %v4600 = vrot.slane %v4598, 4
      %v4601 = vshll.u32 %v4573, 16
      %v4603 = vrot.slane %v4601, 5
      %v4604 = vor.u32 %v4600, %v4603
      %v4605 = vsel %vm1735, %v4596, %v4604
      %v4607 = vshrl.u32 %v4232, 16
      %v4609 = vrot.slane %v4607, 4
      %v4610 = vshll.u32 %v4232, 16
      %v4612 = vrot.slane %v4610, 5
      %v4613 = vor.u32 %v4609, %v4612
      %v4615 = vshrl.u32 %v4574, 16
      %v4617 = vrot.slane %v4615, 4
      %v4618 = vshll.u32 %v4574, 16
      %v4620 = vrot.slane %v4618, 5
      %v4621 = vor.u32 %v4617, %v4620
      %v4622 = vsel %vm1735, %v4613, %v4621
      %v4624 = vshrl.u32 %v4233, 16
      %v4626 = vrot.slane %v4624, 4
      %v4627 = vshll.u32 %v4233, 16
      %v4629 = vrot.slane %v4627, 5
      %v4630 = vor.u32 %v4626, %v4629
      %v4632 = vshrl.u32 %v4575, 16
      %v4634 = vrot.slane %v4632, 4
      %v4635 = vshll.u32 %v4575, 16
      %v4637 = vrot.slane %v4635, 5
      %v4638 = vor.u32 %v4634, %v4637
      %v4639 = vsel %vm1735, %v4630, %v4638
      %v4641 = vshrl.u32 %v4234, 16
      %v4643 = vrot.slane %v4641, 4
      %v4644 = vshll.u32 %v4234, 16
      %v4646 = vrot.slane %v4644, 5
      %v4647 = vor.u32 %v4643, %v4646
      %v4649 = vshrl.u32 %v4576, 16
      %v4651 = vrot.slane %v4649, 4
      %v4652 = vshll.u32 %v4576, 16
      %v4654 = vrot.slane %v4652, 5
      %v4655 = vor.u32 %v4651, %v4654
      %v4656 = vsel %vm1735, %v4647, %v4655
      %v4658 = vshrl.u32 %v4235, 16
      %v4660 = vrot.slane %v4658, 4
      %v4661 = vshll.u32 %v4235, 16
      %v4663 = vrot.slane %v4661, 5
      %v4664 = vor.u32 %v4660, %v4663
      %v4666 = vshrl.u32 %v4577, 16
      %v4668 = vrot.slane %v4666, 4
      %v4669 = vshll.u32 %v4577, 16
      %v4671 = vrot.slane %v4669, 5
      %v4672 = vor.u32 %v4668, %v4671
      %v4673 = vsel %vm1735, %v4664, %v4672
      %v4675 = vshrl.u32 %v4236, 16
      %v4677 = vrot.slane %v4675, 4
      %v4678 = vshll.u32 %v4236, 16
      %v4680 = vrot.slane %v4678, 5
      %v4681 = vor.u32 %v4677, %v4680
      %v4683 = vshrl.u32 %v4578, 16
      %v4685 = vrot.slane %v4683, 4
      %v4686 = vshll.u32 %v4578, 16
      %v4688 = vrot.slane %v4686, 5
      %v4689 = vor.u32 %v4685, %v4688
      %v4690 = vsel %vm1735, %v4681, %v4689
      %v4692 = vshrl.u32 %v4237, 16
      %v4694 = vrot.slane %v4692, 4
      %v4695 = vshll.u32 %v4237, 16
      %v4697 = vrot.slane %v4695, 5
      %v4698 = vor.u32 %v4694, %v4697
      %v4700 = vshrl.u32 %v4579, 16
      %v4702 = vrot.slane %v4700, 4
      %v4703 = vshll.u32 %v4579, 16
      %v4705 = vrot.slane %v4703, 5
      %v4706 = vor.u32 %v4702, %v4705
      %v4707 = vsel %vm1735, %v4698, %v4706
      %v4709 = vshrl.u32 %v4238, 16
      %v4711 = vrot.slane %v4709, 4
      %v4712 = vshll.u32 %v4238, 16
      %v4714 = vrot.slane %v4712, 5
      %v4715 = vor.u32 %v4711, %v4714
      %v4717 = vshrl.u32 %v4580, 16
      %v4719 = vrot.slane %v4717, 4
      %v4720 = vshll.u32 %v4580, 16
      %v4722 = vrot.slane %v4720, 5
      %v4723 = vor.u32 %v4719, %v4722
      %v4724 = vsel %vm1735, %v4715, %v4723
      %v4726 = vshrl.u32 %v4239, 16
      %v4728 = vrot.slane %v4726, 4
      %v4729 = vshll.u32 %v4239, 16
      %v4731 = vrot.slane %v4729, 5
      %v4732 = vor.u32 %v4728, %v4731
      %v4734 = vshrl.u32 %v4581, 16
      %v4736 = vrot.slane %v4734, 4
      %v4737 = vshll.u32 %v4581, 16
      %v4739 = vrot.slane %v4737, 5
      %v4740 = vor.u32 %v4736, %v4739
      %v4741 = vsel %vm1735, %v4732, %v4740
      %v4743 = vshrl.u32 %v4240, 16
      %v4745 = vrot.slane %v4743, 4
      %v4746 = vshll.u32 %v4240, 16
      %v4748 = vrot.slane %v4746, 5
      %v4749 = vor.u32 %v4745, %v4748
      %v4751 = vshrl.u32 %v4582, 16
      %v4753 = vrot.slane %v4751, 4
      %v4754 = vshll.u32 %v4582, 16
      %v4756 = vrot.slane %v4754, 5
      %v4757 = vor.u32 %v4753, %v4756
      %v4758 = vsel %vm1735, %v4749, %v4757
      %v4760 = vshrl.u32 %v4241, 16
      %v4762 = vrot.slane %v4760, 4
      %v4763 = vshll.u32 %v4241, 16
      %v4765 = vrot.slane %v4763, 5
      %v4766 = vor.u32 %v4762, %v4765
      %v4768 = vshrl.u32 %v4583, 16
      %v4770 = vrot.slane %v4768, 4
      %v4771 = vshll.u32 %v4583, 16
      %v4773 = vrot.slane %v4771, 5
      %v4774 = vor.u32 %v4770, %v4773
      %v4775 = vsel %vm1735, %v4766, %v4774
      %v4777 = vshrl.u32 %v4242, 16
      %v4779 = vrot.slane %v4777, 4
      %v4780 = vshll.u32 %v4242, 16
      %v4782 = vrot.slane %v4780, 5
      %v4783 = vor.u32 %v4779, %v4782
      %v4785 = vshrl.u32 %v4584, 16
      %v4787 = vrot.slane %v4785, 4
      %v4788 = vshll.u32 %v4584, 16
      %v4790 = vrot.slane %v4788, 5
      %v4791 = vor.u32 %v4787, %v4790
      %v4792 = vsel %vm1735, %v4783, %v4791
      %v4794 = vshrl.u32 %v4243, 16
      %v4796 = vrot.slane %v4794, 4
      %v4797 = vshll.u32 %v4243, 16
      %v4799 = vrot.slane %v4797, 5
      %v4800 = vor.u32 %v4796, %v4799
      %v4802 = vshrl.u32 %v4585, 16
      %v4804 = vrot.slane %v4802, 4
      %v4805 = vshll.u32 %v4585, 16
      %v4807 = vrot.slane %v4805, 5
      %v4808 = vor.u32 %v4804, %v4807
      %v4809 = vsel %vm1735, %v4800, %v4808
      %v4811 = vshrl.u32 %v4244, 16
      %v4813 = vrot.slane %v4811, 4
      %v4814 = vshll.u32 %v4244, 16
      %v4816 = vrot.slane %v4814, 5
      %v4817 = vor.u32 %v4813, %v4816
      %v4819 = vshrl.u32 %v4586, 16
      %v4821 = vrot.slane %v4819, 4
      %v4822 = vshll.u32 %v4586, 16
      %v4824 = vrot.slane %v4822, 5
      %v4825 = vor.u32 %v4821, %v4824
      %v4826 = vsel %vm1735, %v4817, %v4825
      %v4828 = vshrl.u32 %v4245, 16
      %v4830 = vrot.slane %v4828, 4
      %v4831 = vshll.u32 %v4245, 16
      %v4833 = vrot.slane %v4831, 5
      %v4834 = vor.u32 %v4830, %v4833
      %v4836 = vshrl.u32 %v4587, 16
      %v4838 = vrot.slane %v4836, 4
      %v4839 = vshll.u32 %v4587, 16
      %v4841 = vrot.slane %v4839, 5
      %v4842 = vor.u32 %v4838, %v4841
      %v4843 = vsel %vm1735, %v4834, %v4842
      %v4845 = vshrl.u32 %v4246, 16
      %v4847 = vrot.slane %v4845, 4
      %v4848 = vshll.u32 %v4246, 16
      %v4850 = vrot.slane %v4848, 5
      %v4851 = vor.u32 %v4847, %v4850
      %v4853 = vshrl.u32 %v4588, 16
      %v4855 = vrot.slane %v4853, 4
      %v4856 = vshll.u32 %v4588, 16
      %v4858 = vrot.slane %v4856, 5
      %v4859 = vor.u32 %v4855, %v4858
      %v4860 = vsel %vm1735, %v4851, %v4859
      %s4861 = scalar_lea.vmem %s3, 32
      %v4862 = vld [vmem:[%s4861] sm:$0xf]
      %v4864 = vsel %vm1293, %v4605, 0
      %v4867 = vsel %vm1293, %v4622, 0
      %v4870 = vsel %vm1293, %v4639, 0
      %v4873 = vsel %vm1293, %v4656, 0
      %v4876 = vsel %vm1293, %v4673, 0
      %v4879 = vsel %vm1293, %v4690, 0
      %v4882 = vsel %vm1293, %v4707, 0
      %v4885 = vsel %vm1293, %v4724, 0
      %v4888 = vsel %vm1293, %v4741, 0
      %v4891 = vsel %vm1293, %v4758, 0
      %v4894 = vsel %vm1293, %v4775, 0
      %v4897 = vsel %vm1293, %v4792, 0
      %v4900 = vsel %vm1293, %v4809, 0
      %v4903 = vsel %vm1293, %v4826, 0
      %v4906 = vsel %vm1293, %v4843, 0
      %v4909 = vsel %vm1293, %v4860, 0
      %v4912 = vsel %vm1342, %v4862, 0
      %4914 = vmatprep.subr.bf16.mxu0 0
      %4915 = vmatpush1.bf16.msra.mxu0 %v4912
      %4916 = vmatprep.subr.bf16.mxu0 0
      %4917 = vmatpush1.bf16.msra.mxu0 0
      %4918 = vmatprep.subr.bf16.mxu0 0
      %4919 = vmatpush1.bf16.msra.mxu0 0
      %4920 = vmatprep.subr.bf16.mxu0 0
      %4921 = vmatpush1.bf16.msra.mxu0 0
      %4922 = vmatprep.subr.bf16.mxu0 0
      %4923 = vmatpush1.bf16.msra.mxu0 0
      %4924 = vmatprep.subr.bf16.mxu0 0
      %4925 = vmatpush1.bf16.msra.mxu0 0
      %4926 = vmatprep.subr.bf16.mxu0 0
      %4927 = vmatpush1.bf16.msra.mxu0 0
      %4928 = vmatprep.subr.bf16.mxu0 0
      %4929 = vmatpush1.bf16.msra.mxu0 0
      %4930 = vmatprep.subr.bf16.mxu0 0
      %4931 = vmatpush1.bf16.msra.mxu0 0
      %4932 = vmatprep.subr.bf16.mxu0 0
      %4933 = vmatpush1.bf16.msra.mxu0 0
      %4934 = vmatprep.subr.bf16.mxu0 0
      %4935 = vmatpush1.bf16.msra.mxu0 0
      %4936 = vmatprep.subr.bf16.mxu0 0
      %4937 = vmatpush1.bf16.msra.mxu0 0
      %4938 = vmatprep.subr.bf16.mxu0 0
      %4939 = vmatpush1.bf16.msra.mxu0 0
      %4940 = vmatprep.subr.bf16.mxu0 0
      %4941 = vmatpush1.bf16.msra.mxu0 0
      %4942 = vmatprep.subr.bf16.mxu0 0
      %4943 = vmatpush1.bf16.msra.mxu0 0
      %4944 = vmatprep.subr.bf16.mxu0 0
      %4945 = vmatpush1.bf16.msra.mxu0 0
      %4946 = vmatprep.mubr.bf16.mxu0 0
      %4947 = vmatmul.mubr.bf16.gmra.mrb[0].mxu0 %v4864
      %v4948 = vpop.f32.mrb[0].mxu0
      %v4949 = vadd.f32 0.0, %v4948
      %v4950 = vpop.f32.mrb[0].mxu0
      %v4951 = vpop.f32.mrb[0].mxu0
      %v4952 = vadd.f32 0.0, %v4951
      %v4953 = vpop.f32.mrb[0].mxu0
      %4954 = vmatprep.mubr.bf16.mxu0 0
      %4955 = vmatmul.mubr.bf16.gmra.mrb[0].mxu0 %v4867
      %v4956 = vpop.f32.mrb[0].mxu0
      %v4957 = vadd.f32 0.0, %v4956
      %v4958 = vpop.f32.mrb[0].mxu0
      %v4959 = vpop.f32.mrb[0].mxu0
      %v4960 = vadd.f32 0.0, %v4959
      %v4961 = vpop.f32.mrb[0].mxu0
      %4962 = vmatprep.mubr.bf16.mxu0 0
      %4963 = vmatmul.mubr.bf16.gmra.mrb[0].mxu0 %v4870
      %v4964 = vpop.f32.mrb[0].mxu0
      %v4965 = vadd.f32 0.0, %v4964
      %v4966 = vpop.f32.mrb[0].mxu0
      %v4967 = vpop.f32.mrb[0].mxu0
      %v4968 = vadd.f32 0.0, %v4967
      %v4969 = vpop.f32.mrb[0].mxu0
      %4970 = vmatprep.mubr.bf16.mxu0 0
      %4971 = vmatmul.mubr.bf16.gmra.mrb[0].mxu0 %v4873
      %v4972 = vpop.f32.mrb[0].mxu0
      %v4973 = vadd.f32 0.0, %v4972
      %v4974 = vpop.f32.mrb[0].mxu0
      %v4975 = vpop.f32.mrb[0].mxu0
      %v4976 = vadd.f32 0.0, %v4975
      %v4977 = vpop.f32.mrb[0].mxu0
      %4978 = vmatprep.mubr.bf16.mxu0 0
      %4979 = vmatmul.mubr.bf16.gmra.mrb[0].mxu0 %v4876
      %v4980 = vpop.f32.mrb[0].mxu0
      %v4981 = vadd.f32 0.0, %v4980
      %v4982 = vpop.f32.mrb[0].mxu0
      %v4983 = vpop.f32.mrb[0].mxu0
      %v4984 = vadd.f32 0.0, %v4983
      %v4985 = vpop.f32.mrb[0].mxu0
      %4986 = vmatprep.mubr.bf16.mxu0 0
      %4987 = vmatmul.mubr.bf16.gmra.mrb[0].mxu0 %v4879
      %v4988 = vpop.f32.mrb[0].mxu0
      %v4989 = vadd.f32 0.0, %v4988
      %v4990 = vpop.f32.mrb[0].mxu0
      %v4991 = vpop.f32.mrb[0].mxu0
      %v4992 = vadd.f32 0.0, %v4991
      %v4993 = vpop.f32.mrb[0].mxu0
      %4994 = vmatprep.mubr.bf16.mxu0 0
      %4995 = vmatmul.mubr.bf16.gmra.mrb[0].mxu0 %v4882
      %v4996 = vpop.f32.mrb[0].mxu0
      %v4997 = vadd.f32 0.0, %v4996
      %v4998 = vpop.f32.mrb[0].mxu0
      %v4999 = vpop.f32.mrb[0].mxu0
      %v5000 = vadd.f32 0.0, %v4999
      %v5001 = vpop.f32.mrb[0].mxu0
      %5002 = vmatprep.mubr.bf16.mxu0 0
      %5003 = vmatmul.mubr.bf16.gmra.mrb[0].mxu0 %v4885
      %v5004 = vpop.f32.mrb[0].mxu0
      %v5005 = vadd.f32 0.0, %v5004
      %v5006 = vpop.f32.mrb[0].mxu0
      %v5007 = vpop.f32.mrb[0].mxu0
      %v5008 = vadd.f32 0.0, %v5007
      %v5009 = vpop.f32.mrb[0].mxu0
      %5010 = vmatprep.mubr.bf16.mxu0 0
      %5011 = vmatmul.mubr.bf16.gmra.mrb[0].mxu0 %v4888
      %v5012 = vpop.f32.mrb[0].mxu0
      %v5013 = vadd.f32 0.0, %v5012
      %v5014 = vpop.f32.mrb[0].mxu0
      %v5015 = vpop.f32.mrb[0].mxu0
      %v5016 = vadd.f32 0.0, %v5015
      %v5017 = vpop.f32.mrb[0].mxu0
      %5018 = vmatprep.mubr.bf16.mxu0 0
      %5019 = vmatmul.mubr.bf16.gmra.mrb[0].mxu0 %v4891
      %v5020 = vpop.f32.mrb[0].mxu0
      %v5021 = vadd.f32 0.0, %v5020
      %v5022 = vpop.f32.mrb[0].mxu0
      %v5023 = vpop.f32.mrb[0].mxu0
      %v5024 = vadd.f32 0.0, %v5023
      %v5025 = vpop.f32.mrb[0].mxu0
      %5026 = vmatprep.mubr.bf16.mxu0 0
      %5027 = vmatmul.mubr.bf16.gmra.mrb[0].mxu0 %v4894
      %v5028 = vpop.f32.mrb[0].mxu0
      %v5029 = vadd.f32 0.0, %v5028
      %v5030 = vpop.f32.mrb[0].mxu0
      %v5031 = vpop.f32.mrb[0].mxu0
      %v5032 = vadd.f32 0.0, %v5031
      %v5033 = vpop.f32.mrb[0].mxu0
      %5034 = vmatprep.mubr.bf16.mxu0 0
      %5035 = vmatmul.mubr.bf16.gmra.mrb[0].mxu0 %v4897
      %v5036 = vpop.f32.mrb[0].mxu0
      %v5037 = vadd.f32 0.0, %v5036
      %v5038 = vpop.f32.mrb[0].mxu0
      %v5039 = vpop.f32.mrb[0].mxu0
      %v5040 = vadd.f32 0.0, %v5039
      %v5041 = vpop.f32.mrb[0].mxu0
      %5042 = vmatprep.mubr.bf16.mxu0 0
      %5043 = vmatmul.mubr.bf16.gmra.mrb[0].mxu0 %v4900
      %v5044 = vpop.f32.mrb[0].mxu0
      %v5045 = vadd.f32 0.0, %v5044
      %v5046 = vpop.f32.mrb[0].mxu0
      %v5047 = vpop.f32.mrb[0].mxu0
      %v5048 = vadd.f32 0.0, %v5047
      %v5049 = vpop.f32.mrb[0].mxu0
      %5050 = vmatprep.mubr.bf16.mxu0 0
      %5051 = vmatmul.mubr.bf16.gmra.mrb[0].mxu0 %v4903
      %v5052 = vpop.f32.mrb[0].mxu0
      %v5053 = vadd.f32 0.0, %v5052
      %v5054 = vpop.f32.mrb[0].mxu0
      %v5055 = vpop.f32.mrb[0].mxu0
      %v5056 = vadd.f32 0.0, %v5055
      %v5057 = vpop.f32.mrb[0].mxu0
      %5058 = vmatprep.mubr.bf16.mxu0 0
      %5059 = vmatmul.mubr.bf16.gmra.mrb[0].mxu0 %v4906
      %v5060 = vpop.f32.mrb[0].mxu0
      %v5061 = vadd.f32 0.0, %v5060
      %v5062 = vpop.f32.mrb[0].mxu0
      %v5063 = vpop.f32.mrb[0].mxu0
      %v5064 = vadd.f32 0.0, %v5063
      %v5065 = vpop.f32.mrb[0].mxu0
      %5066 = vmatprep.mubr.bf16.mxu0 0
      %5067 = vmatmul.mubr.bf16.gmra.mrb[0].mxu0 %v4909
      %v5068 = vpop.f32.mrb[0].mxu0
      %v5069 = vadd.f32 0.0, %v5068
      %v5070 = vpop.f32.mrb[0].mxu0
      %v5071 = vpop.f32.mrb[0].mxu0
      %v5072 = vadd.f32 0.0, %v5071
      %v5073 = vpop.f32.mrb[0].mxu0
      %5074 = vdwg.mxu0
      %v5075 = vadd.f32 %v4541, %v4949
      %v5076 = vadd.f32 %v4542, %v4952
      %v5077 = vadd.f32 %v4543, %v4957
      %v5078 = vadd.f32 %v4544, %v4960
      %v5079 = vadd.f32 %v4545, %v4965
      %v5080 = vadd.f32 %v4546, %v4968
      %v5081 = vadd.f32 %v4547, %v4973
      %v5082 = vadd.f32 %v4548, %v4976
      %v5083 = vadd.f32 %v4549, %v4981
      %v5084 = vadd.f32 %v4550, %v4984
      %v5085 = vadd.f32 %v4551, %v4989
      %v5086 = vadd.f32 %v4552, %v4992
      %v5087 = vadd.f32 %v4553, %v4997
      %v5088 = vadd.f32 %v4554, %v5000
      %v5089 = vadd.f32 %v4555, %v5005
      %v5090 = vadd.f32 %v4556, %v5008
      %v5091 = vadd.f32 %v4557, %v5013
      %v5092 = vadd.f32 %v4558, %v5016
      %v5093 = vadd.f32 %v4559, %v5021
      %v5094 = vadd.f32 %v4560, %v5024
      %v5095 = vadd.f32 %v4561, %v5029
      %v5096 = vadd.f32 %v4562, %v5032
      %v5097 = vadd.f32 %v4563, %v5037
      %v5098 = vadd.f32 %v4564, %v5040
      %v5099 = vadd.f32 %v4565, %v5045
      %v5100 = vadd.f32 %v4566, %v5048
      %v5101 = vadd.f32 %v4567, %v5053
      %v5102 = vadd.f32 %v4568, %v5056
      %v5103 = vadd.f32 %v4569, %v5061
      %v5104 = vadd.f32 %v4570, %v5064
      %v5105 = vadd.f32 %v4571, %v5069
      %v5106 = vadd.f32 %v4572, %v5072
      %v5107 = vsel %vm1293, %v5075, 0.0
      %v5108 = vsel %vm1293, %v5076, 0.0
      %v5109 = vadd.f32 %v5107, %v5108
      %v5110 = vsel %vm1293, %v5077, 0.0
      %v5111 = vadd.f32 %v5109, %v5110
      %v5112 = vsel %vm1293, %v5078, 0.0
      %v5113 = vadd.f32 %v5111, %v5112
      %v5114 = vsel %vm1293, %v5079, 0.0
      %v5115 = vadd.f32 %v5113, %v5114
      %v5116 = vsel %vm1293, %v5080, 0.0
      %v5117 = vadd.f32 %v5115, %v5116
      %v5118 = vsel %vm1293, %v5081, 0.0
      %v5119 = vadd.f32 %v5117, %v5118
      %v5120 = vsel %vm1293, %v5082, 0.0
      %v5121 = vadd.f32 %v5119, %v5120
      %v5122 = vsel %vm1293, %v5083, 0.0
      %v5123 = vadd.f32 %v5121, %v5122
      %v5124 = vsel %vm1293, %v5084, 0.0
      %v5125 = vadd.f32 %v5123, %v5124
      %v5126 = vsel %vm1293, %v5085, 0.0
      %v5127 = vadd.f32 %v5125, %v5126
      %v5128 = vsel %vm1293, %v5086, 0.0
      %v5129 = vadd.f32 %v5127, %v5128
      %v5130 = vsel %vm1293, %v5087, 0.0
      %v5131 = vadd.f32 %v5129, %v5130
      %v5132 = vsel %vm1293, %v5088, 0.0
      %v5133 = vadd.f32 %v5131, %v5132
      %v5134 = vsel %vm1293, %v5089, 0.0
      %v5135 = vadd.f32 %v5133, %v5134
      %v5136 = vsel %vm1293, %v5090, 0.0
      %v5137 = vadd.f32 %v5135, %v5136
      %v5138 = vsel %vm1293, %v5091, 0.0
      %v5139 = vadd.f32 %v5137, %v5138
      %v5140 = vsel %vm1293, %v5092, 0.0
      %v5141 = vadd.f32 %v5139, %v5140
      %v5142 = vsel %vm1293, %v5093, 0.0
      %v5143 = vadd.f32 %v5141, %v5142
      %v5144 = vsel %vm1293, %v5094, 0.0
      %v5145 = vadd.f32 %v5143, %v5144
      %v5146 = vsel %vm1293, %v5095, 0.0
      %v5147 = vadd.f32 %v5145, %v5146
      %v5148 = vsel %vm1293, %v5096, 0.0
      %v5149 = vadd.f32 %v5147, %v5148
      %v5150 = vsel %vm1293, %v5097, 0.0
      %v5151 = vadd.f32 %v5149, %v5150
      %v5152 = vsel %vm1293, %v5098, 0.0
      %v5153 = vadd.f32 %v5151, %v5152
      %v5154 = vsel %vm1293, %v5099, 0.0
      %v5155 = vadd.f32 %v5153, %v5154
      %v5156 = vsel %vm1293, %v5100, 0.0
      %v5157 = vadd.f32 %v5155, %v5156
      %v5158 = vsel %vm1293, %v5101, 0.0
      %v5159 = vadd.f32 %v5157, %v5158
      %v5160 = vsel %vm1293, %v5102, 0.0
      %v5161 = vadd.f32 %v5159, %v5160
      %v5162 = vsel %vm1293, %v5103, 0.0
      %v5163 = vadd.f32 %v5161, %v5162
      %v5164 = vsel %vm1293, %v5104, 0.0
      %v5165 = vadd.f32 %v5163, %v5164
      %v5166 = vsel %vm1293, %v5105, 0.0
      %v5167 = vadd.f32 %v5165, %v5166
      %v5168 = vsel %vm1293, %v5106, 0.0
      %v5169 = vadd.f32 %v5167, %v5168
      %v5170 = vrot.slane %v5169, 4
      %v5171 = vadd.f32 %v5169, %v5170
      %v5172 = vrot.slane %v5171, 2
      %v5173 = vadd.f32 %v5171, %v5172
      %v5174 = vrot.slane %v5173, 1
      %v5175 = vadd.f32 %v5173, %v5174
      %v5176 = vmul.f32 %v5175, 0.00390625
      %v5177 = vsub.f32 %v5075, %v5176
      %v5178 = vsub.f32 %v5076, %v5176
      %v5179 = vsub.f32 %v5077, %v5176
      %v5180 = vsub.f32 %v5078, %v5176
      %v5181 = vsub.f32 %v5079, %v5176
      %v5182 = vsub.f32 %v5080, %v5176
      %v5183 = vsub.f32 %v5081, %v5176
      %v5184 = vsub.f32 %v5082, %v5176
      %v5185 = vsub.f32 %v5083, %v5176
      %v5186 = vsub.f32 %v5084, %v5176
      %v5187 = vsub.f32 %v5085, %v5176
      %v5188 = vsub.f32 %v5086, %v5176
      %v5189 = vsub.f32 %v5087, %v5176
      %v5190 = vsub.f32 %v5088, %v5176
      %v5191 = vsub.f32 %v5089, %v5176
      %v5192 = vsub.f32 %v5090, %v5176
      %v5193 = vsub.f32 %v5091, %v5176
      %v5194 = vsub.f32 %v5092, %v5176
      %v5195 = vsub.f32 %v5093, %v5176
      %v5196 = vsub.f32 %v5094, %v5176
      %v5197 = vsub.f32 %v5095, %v5176
      %v5198 = vsub.f32 %v5096, %v5176
      %v5199 = vsub.f32 %v5097, %v5176
      %v5200 = vsub.f32 %v5098, %v5176
      %v5201 = vsub.f32 %v5099, %v5176
      %v5202 = vsub.f32 %v5100, %v5176
      %v5203 = vsub.f32 %v5101, %v5176
      %v5204 = vsub.f32 %v5102, %v5176
      %v5205 = vsub.f32 %v5103, %v5176
      %v5206 = vsub.f32 %v5104, %v5176
      %v5207 = vsub.f32 %v5105, %v5176
      %v5208 = vsub.f32 %v5106, %v5176
      %vm5209 = vcmask 57344
      %5210 = vst.msk [vmem:[%s500] sm:$0x1] %vm5209, %v5175
      %v5211 = vmul.f32 %v5177, %v5177
      %v5212 = vmul.f32 %v5178, %v5178
      %v5213 = vmul.f32 %v5179, %v5179
      %v5214 = vmul.f32 %v5180, %v5180
      %v5215 = vmul.f32 %v5181, %v5181
      %v5216 = vmul.f32 %v5182, %v5182
      %v5217 = vmul.f32 %v5183, %v5183
      %v5218 = vmul.f32 %v5184, %v5184
      %v5219 = vmul.f32 %v5185, %v5185
      %v5220 = vmul.f32 %v5186, %v5186
      %v5221 = vmul.f32 %v5187, %v5187
      %v5222 = vmul.f32 %v5188, %v5188
      %v5223 = vmul.f32 %v5189, %v5189
      %v5224 = vmul.f32 %v5190, %v5190
      %v5225 = vmul.f32 %v5191, %v5191
      %v5226 = vmul.f32 %v5192, %v5192
      %v5227 = vmul.f32 %v5193, %v5193
      %v5228 = vmul.f32 %v5194, %v5194
      %v5229 = vmul.f32 %v5195, %v5195
      %v5230 = vmul.f32 %v5196, %v5196
      %v5231 = vmul.f32 %v5197, %v5197
      %v5232 = vmul.f32 %v5198, %v5198
      %v5233 = vmul.f32 %v5199, %v5199
      %v5234 = vmul.f32 %v5200, %v5200
      %v5235 = vmul.f32 %v5201, %v5201
      %v5236 = vmul.f32 %v5202, %v5202
      %v5237 = vmul.f32 %v5203, %v5203
      %v5238 = vmul.f32 %v5204, %v5204
      %v5239 = vmul.f32 %v5205, %v5205
      %v5240 = vmul.f32 %v5206, %v5206
      %v5241 = vmul.f32 %v5207, %v5207
      %v5242 = vmul.f32 %v5208, %v5208
      %v5243 = vsel %vm1293, %v5211, 0.0
      %v5244 = vsel %vm1293, %v5212, 0.0
      %v5245 = vadd.f32 %v5243, %v5244
      %v5246 = vsel %vm1293, %v5213, 0.0
      %v5247 = vadd.f32 %v5245, %v5246
      %v5248 = vsel %vm1293, %v5214, 0.0
      %v5249 = vadd.f32 %v5247, %v5248
      %v5250 = vsel %vm1293, %v5215, 0.0
      %v5251 = vadd.f32 %v5249, %v5250
      %v5252 = vsel %vm1293, %v5216, 0.0
      %v5253 = vadd.f32 %v5251, %v5252
      %v5254 = vsel %vm1293, %v5217, 0.0
      %v5255 = vadd.f32 %v5253, %v5254
      %v5256 = vsel %vm1293, %v5218, 0.0
      %v5257 = vadd.f32 %v5255, %v5256
      %v5258 = vsel %vm1293, %v5219, 0.0
      %v5259 = vadd.f32 %v5257, %v5258
      %v5260 = vsel %vm1293, %v5220, 0.0
      %v5261 = vadd.f32 %v5259, %v5260
      %v5262 = vsel %vm1293, %v5221, 0.0
      %v5263 = vadd.f32 %v5261, %v5262
      %v5264 = vsel %vm1293, %v5222, 0.0
      %v5265 = vadd.f32 %v5263, %v5264
      %v5266 = vsel %vm1293, %v5223, 0.0
      %v5267 = vadd.f32 %v5265, %v5266
      %v5268 = vsel %vm1293, %v5224, 0.0
      %v5269 = vadd.f32 %v5267, %v5268
      %v5270 = vsel %vm1293, %v5225, 0.0
      %v5271 = vadd.f32 %v5269, %v5270
      %v5272 = vsel %vm1293, %v5226, 0.0
      %v5273 = vadd.f32 %v5271, %v5272
      %v5274 = vsel %vm1293, %v5227, 0.0
      %v5275 = vadd.f32 %v5273, %v5274
      %v5276 = vsel %vm1293, %v5228, 0.0
      %v5277 = vadd.f32 %v5275, %v5276
      %v5278 = vsel %vm1293, %v5229, 0.0
      %v5279 = vadd.f32 %v5277, %v5278
      %v5280 = vsel %vm1293, %v5230, 0.0
      %v5281 = vadd.f32 %v5279, %v5280
      %v5282 = vsel %vm1293, %v5231, 0.0
      %v5283 = vadd.f32 %v5281, %v5282
      %v5284 = vsel %vm1293, %v5232, 0.0
      %v5285 = vadd.f32 %v5283, %v5284
      %v5286 = vsel %vm1293, %v5233, 0.0
      %v5287 = vadd.f32 %v5285, %v5286
      %v5288 = vsel %vm1293, %v5234, 0.0
      %v5289 = vadd.f32 %v5287, %v5288
      %v5290 = vsel %vm1293, %v5235, 0.0
      %v5291 = vadd.f32 %v5289, %v5290
      %v5292 = vsel %vm1293, %v5236, 0.0
      %v5293 = vadd.f32 %v5291, %v5292
      %v5294 = vsel %vm1293, %v5237, 0.0
      %v5295 = vadd.f32 %v5293, %v5294
      %v5296 = vsel %vm1293, %v5238, 0.0
      %v5297 = vadd.f32 %v5295, %v5296
      %v5298 = vsel %vm1293, %v5239, 0.0
      %v5299 = vadd.f32 %v5297, %v5298
      %v5300 = vsel %vm1293, %v5240, 0.0
      %v5301 = vadd.f32 %v5299, %v5300
      %v5302 = vsel %vm1293, %v5241, 0.0
      %v5303 = vadd.f32 %v5301, %v5302
      %v5304 = vsel %vm1293, %v5242, 0.0
      %v5305 = vadd.f32 %v5303, %v5304
      %v5306 = vrot.slane %v5305, 4
      %v5307 = vadd.f32 %v5305, %v5306
      %v5308 = vrot.slane %v5307, 2
      %v5309 = vadd.f32 %v5307, %v5308
      %v5310 = vrot.slane %v5309, 1
      %v5311 = vadd.f32 %v5309, %v5310
      %5312 = vst.msk [vmem:[%s506] sm:$0x1] %vm5209, %v5311
      %v5313 = vpack.c.bf16 %v5076, %v5075
      %v5314 = vpack.c.bf16 %v5078, %v5077
      %v5315 = vpack.c.bf16 %v5080, %v5079
      %v5316 = vpack.c.bf16 %v5082, %v5081
      %v5317 = vpack.c.bf16 %v5084, %v5083
      %v5318 = vpack.c.bf16 %v5086, %v5085
      %v5319 = vpack.c.bf16 %v5088, %v5087
      %v5320 = vpack.c.bf16 %v5090, %v5089
      %v5321 = vpack.c.bf16 %v5092, %v5091
      %v5322 = vpack.c.bf16 %v5094, %v5093
      %v5323 = vpack.c.bf16 %v5096, %v5095
      %v5324 = vpack.c.bf16 %v5098, %v5097
      %v5325 = vpack.c.bf16 %v5100, %v5099
      %v5326 = vpack.c.bf16 %v5102, %v5101
      %v5327 = vpack.c.bf16 %v5104, %v5103
      %v5328 = vpack.c.bf16 %v5106, %v5105
      %v5345 = vunpack.c.l.b16 %v5313
      %v5346 = vunpack.c.h.b16 %v5313
      %v5347 = vunpack.c.l.b16 %v5314
      %v5348 = vunpack.c.h.b16 %v5314
      %v5349 = vunpack.c.l.b16 %v5315
      %v5350 = vunpack.c.h.b16 %v5315
      %v5351 = vunpack.c.l.b16 %v5316
      %v5352 = vunpack.c.h.b16 %v5316
      %v5353 = vunpack.c.l.b16 %v5317
      %v5354 = vunpack.c.h.b16 %v5317
      %v5355 = vunpack.c.l.b16 %v5318
      %v5356 = vunpack.c.h.b16 %v5318
      %v5357 = vunpack.c.l.b16 %v5319
      %v5358 = vunpack.c.h.b16 %v5319
      %v5359 = vunpack.c.l.b16 %v5320
      %v5360 = vunpack.c.h.b16 %v5320
      %v5361 = vunpack.c.l.b16 %v5321
      %v5362 = vunpack.c.h.b16 %v5321
      %v5363 = vunpack.c.l.b16 %v5322
      %v5364 = vunpack.c.h.b16 %v5322
      %v5365 = vunpack.c.l.b16 %v5323
      %v5366 = vunpack.c.h.b16 %v5323
      %v5367 = vunpack.c.l.b16 %v5324
      %v5368 = vunpack.c.h.b16 %v5324
      %v5369 = vunpack.c.l.b16 %v5325
      %v5370 = vunpack.c.h.b16 %v5325
      %v5371 = vunpack.c.l.b16 %v5326
      %v5372 = vunpack.c.h.b16 %v5326
      %v5373 = vunpack.c.l.b16 %v5327
      %v5374 = vunpack.c.h.b16 %v5327
      %v5375 = vunpack.c.l.b16 %v5328
      %v5376 = vunpack.c.h.b16 %v5328
      %v5377 = vpack.c.b16 %v5345, %v5345
      %v5378 = vpack.c.b16 %v5346, %v5346
      %v5379 = vpack.c.b16 %v5347, %v5347
      %v5380 = vpack.c.b16 %v5348, %v5348
      %v5381 = vpack.c.b16 %v5349, %v5349
      %v5382 = vpack.c.b16 %v5350, %v5350
      %v5383 = vpack.c.b16 %v5351, %v5351
      %v5384 = vpack.c.b16 %v5352, %v5352
      %v5385 = vpack.c.b16 %v5353, %v5353
      %v5386 = vpack.c.b16 %v5354, %v5354
      %v5387 = vpack.c.b16 %v5355, %v5355
      %v5388 = vpack.c.b16 %v5356, %v5356
      %v5389 = vpack.c.b16 %v5357, %v5357
      %v5390 = vpack.c.b16 %v5358, %v5358
      %v5391 = vpack.c.b16 %v5359, %v5359
      %v5392 = vpack.c.b16 %v5360, %v5360
      %v5393 = vpack.c.b16 %v5361, %v5361
      %v5394 = vpack.c.b16 %v5362, %v5362
      %v5395 = vpack.c.b16 %v5363, %v5363
      %v5396 = vpack.c.b16 %v5364, %v5364
      %v5397 = vpack.c.b16 %v5365, %v5365
      %v5398 = vpack.c.b16 %v5366, %v5366
      %v5399 = vpack.c.b16 %v5367, %v5367
      %v5400 = vpack.c.b16 %v5368, %v5368
      %v5401 = vpack.c.b16 %v5369, %v5369
      %v5402 = vpack.c.b16 %v5370, %v5370
      %v5403 = vpack.c.b16 %v5371, %v5371
      %v5404 = vpack.c.b16 %v5372, %v5372
      %v5405 = vpack.c.b16 %v5373, %v5373
      %v5406 = vpack.c.b16 %v5374, %v5374
      %v5407 = vpack.c.b16 %v5375, %v5375
      %v5408 = vpack.c.b16 %v5376, %v5376
      %5441 = vst.msk [vmem:[%s493] sm:$0xf] %vm508, %v5377
      %5442 = vst.msk [vmem:[%s493 + $0x4] sm:$0xf] %vm508, %v5378
      %5443 = vst.msk [vmem:[%s493 + $0x8] sm:$0xf] %vm508, %v5379
      %5444 = vst.msk [vmem:[%s493 + $0xc] sm:$0xf] %vm508, %v5380
      %5445 = vst.msk [vmem:[%s493 + $0x10] sm:$0xf] %vm508, %v5381
      %5446 = vst.msk [vmem:[%s493 + $0x14] sm:$0xf] %vm508, %v5382
      %5447 = vst.msk [vmem:[%s493 + $0x18] sm:$0xf] %vm508, %v5383
      %5448 = vst.msk [vmem:[%s493 + $0x1c] sm:$0xf] %vm508, %v5384
      %5449 = vst.msk [vmem:[%s493 + $0x20] sm:$0xf] %vm508, %v5385
      %5450 = vst.msk [vmem:[%s493 + $0x24] sm:$0xf] %vm508, %v5386
      %5451 = vst.msk [vmem:[%s493 + $0x28] sm:$0xf] %vm508, %v5387
      %5452 = vst.msk [vmem:[%s493 + $0x2c] sm:$0xf] %vm508, %v5388
      %5453 = vst.msk [vmem:[%s493 + $0x30] sm:$0xf] %vm508, %v5389
      %5454 = vst.msk [vmem:[%s493 + $0x34] sm:$0xf] %vm508, %v5390
      %5455 = vst.msk [vmem:[%s493 + $0x38] sm:$0xf] %vm508, %v5391
      %5456 = vst.msk [vmem:[%s493 + $0x3c] sm:$0xf] %vm508, %v5392
      %5457 = vst.msk [vmem:[%s493 + $0x40] sm:$0xf] %vm508, %v5393
      %5458 = vst.msk [vmem:[%s493 + $0x44] sm:$0xf] %vm508, %v5394
      %5459 = vst.msk [vmem:[%s493 + $0x48] sm:$0xf] %vm508, %v5395
      %5460 = vst.msk [vmem:[%s493 + $0x4c] sm:$0xf] %vm508, %v5396
      %5461 = vst.msk [vmem:[%s493 + $0x50] sm:$0xf] %vm508, %v5397
      %5462 = vst.msk [vmem:[%s493 + $0x54] sm:$0xf] %vm508, %v5398
      %5463 = vst.msk [vmem:[%s493 + $0x58] sm:$0xf] %vm508, %v5399
      %5464 = vst.msk [vmem:[%s493 + $0x5c] sm:$0xf] %vm508, %v5400
      %5465 = vst.msk [vmem:[%s493 + $0x60] sm:$0xf] %vm508, %v5401
      %5466 = vst.msk [vmem:[%s493 + $0x64] sm:$0xf] %vm508, %v5402
      %5467 = vst.msk [vmem:[%s493 + $0x68] sm:$0xf] %vm508, %v5403
      %5468 = vst.msk [vmem:[%s493 + $0x6c] sm:$0xf] %vm508, %v5404
      %5469 = vst.msk [vmem:[%s493 + $0x70] sm:$0xf] %vm508, %v5405
      %5470 = vst.msk [vmem:[%s493 + $0x74] sm:$0xf] %vm508, %v5406
      %5471 = vst.msk [vmem:[%s493 + $0x78] sm:$0xf] %vm508, %v5407
      %5472 = vst.msk [vmem:[%s493 + $0x7c] sm:$0xf] %vm508, %v5408
      %s5473 = smul.u32 16, %s25
      %p5474 = scmp.lt.s32.totalorder %s24, 1
      %s5475 = scalar_select %p5474, %s24, 1
      %p5476 = scmp.lt.s32.totalorder %s5473, 15
      %s5477 = scalar_select %p5476, %s5473, 15
      %s5478 = smul.addr %s5477, 2
      %s5479 = smul.addr %s5475, 32
      %s5480 = sadd.s32 %s5478, %s5479
      %s5481 = smul.addr %s5480, 4
      %s5482 = scalar_lea.vmem %s6, %s5481
      %p5483 = scmp.lt.s32.totalorder %s24, 1
      %s5484 = scalar_select %p5483, %s24, 1
      %p5485 = scmp.lt.s32.totalorder %s25, 0
      %s5486 = scalar_select %p5485, %s25, 0
      %s5487 = sadd.s32 %s5486, %s5484
      %s5488 = scalar_lea.vmem %s7, %s5487
      %p5489 = scmp.lt.s32.totalorder %s24, 1
      %s5490 = scalar_select %p5489, %s24, 1
      %p5491 = scmp.lt.s32.totalorder %s25, 0
      %s5492 = scalar_select %p5491, %s25, 0
      %s5493 = sadd.s32 %s5492, %s5490
      %s5494 = scalar_lea.vmem %s8, %s5493
      // Predicated region
      $region45: #{double_conv_forward.4} parent=43 // pred_check
        %p5495 = pneg %p215
      $region46: #{double_conv_forward.4} parent=43 // pred_check_branch
        %5497 = sbr.rel (%p5495) target = $region48
      $region47: #{double_conv_forward.4} parent=43 // pred_region
        %s5498 = smul.u32 16, %s25
      $region48: #{double_conv_forward.4} parent=43 // pred_fallthru
        _
      // Predicated region
      $region49: #{double_conv_forward.4} parent=43 // pred_check
        %p5499 = pneg %p243
      $region50: #{double_conv_forward.4} parent=43 // pred_check_branch
        %5501 = sbr.rel (%p5499) target = $region52
      $region51: #{double_conv_forward.4} parent=43 // pred_region
        _
      $region52: #{double_conv_forward.4} parent=43 // pred_fallthru
        _
      // Predicated region
      $region53: #{double_conv_forward.4} parent=43 // pred_check
        %p5502 = pneg %p271
      $region54: #{double_conv_forward.4} parent=43 // pred_check_branch
        %5504 = sbr.rel (%p5502) target = $region56
      $region55: #{double_conv_forward.4} parent=43 // pred_region
        _
      $region56: #{double_conv_forward.4} parent=43 // pred_fallthru
        _
    $region44: #{double_conv_forward.4} parent=5 // pred_fallthru
      _
    %p5505 = scmp.le.s32.totalorder 2, %s15
    // Predicated region
    $region57: #{double_conv_forward.4} parent=5 // pred_check
      %p5506 = pneg %p5505
    $region58: #{double_conv_forward.4} parent=5 // pred_check_branch
      %5508 = sbr.rel (%p5506) target = $region60
    $region59: #{double_conv_forward.4} parent=5 // pred_region
      %s5509 = ssub.s32 %s15, 2
      // Predicated region
      $region61: #{double_conv_forward.4} parent=59 // pred_check
        %p5510 = pneg %p221
      $region62: #{double_conv_forward.4} parent=59 // pred_check_branch
        %5512 = sbr.rel (%p5510) target = $region64
      $region63: #{double_conv_forward.4} parent=59 // pred_region
        %s5513 = smul.u32 16, %s27
        %p5514 = scmp.lt.s32.totalorder %s26, 1
        %s5515 = scalar_select %p5514, %s26, 1
        %p5516 = scmp.lt.s32.totalorder %s5513, 15
        %s5517 = scalar_select %p5516, %s5513, 15
        %s5518 = smul.addr %s5517, 2
        %s5519 = smul.addr %s5515, 32
        %s5520 = sadd.s32 %s5518, %s5519
        %s5521 = smul.addr %s5520, 4
        %s5522 = scalar_lea.vmem %s6, %s5521
      $region64: #{double_conv_forward.4} parent=59 // pred_fallthru
        _
      // Predicated region
      $region65: #{double_conv_forward.4} parent=59 // pred_check
        %p5523 = pneg %p249
      $region66: #{double_conv_forward.4} parent=59 // pred_check_branch
        %5525 = sbr.rel (%p5523) target = $region68
      $region67: #{double_conv_forward.4} parent=59 // pred_region
        %p5526 = scmp.lt.s32.totalorder %s26, 1
        %s5527 = scalar_select %p5526, %s26, 1
        %p5528 = scmp.lt.s32.totalorder %s27, 0
        %s5529 = scalar_select %p5528, %s27, 0
        %s5530 = sadd.s32 %s5529, %s5527
        %s5531 = scalar_lea.vmem %s7, %s5530
      $region68: #{double_conv_forward.4} parent=59 // pred_fallthru
        _
      // Predicated region
      $region69: #{double_conv_forward.4} parent=59 // pred_check
        %p5532 = pneg %p277
      $region70: #{double_conv_forward.4} parent=59 // pred_check_branch
        %5534 = sbr.rel (%p5532) target = $region72
      $region71: #{double_conv_forward.4} parent=59 // pred_region
        %p5535 = scmp.lt.s32.totalorder %s26, 1
        %s5536 = scalar_select %p5535, %s26, 1
        %p5537 = scmp.lt.s32.totalorder %s27, 0
        %s5538 = scalar_select %p5537, %s27, 0
        %s5539 = sadd.s32 %s5538, %s5536
        %s5540 = scalar_lea.vmem %s8, %s5539
      $region72: #{double_conv_forward.4} parent=59 // pred_fallthru
        _
    $region60: #{double_conv_forward.4} parent=5 // pred_fallthru
      _
  $region6: #{double_conv_forward.4} parent=0 // loop_footer
    %s19 = sadd.s32 1, %s15
  $region7: #{double_conv_forward.4} parent=0 // loop_footer_branch
    %14 = sbr.rel target = $region3
  $region8: #{double_conv_forward.4} parent=0 // loop_exit
    _

</llo_original>
